<compile_context>
chip_gen: v5e
topology: v5e:2x2
jax: 0.10.0
libtpu: 0.0.40
codegen_flags: <defaults>
</compile_context>

<pallas_src>
import jax
import jax.numpy as jnp
from jax.experimental import pallas as pl
from jax.experimental.pallas import tpu as pltpu

IN_C = 30            # real input channels (timm in_chans)
IN_CP = 32           # input channels padded to a sublane-friendly multiple of 8
N_CLASSES = 75
STEM_CH = 16
GROWTH = 8
BN_SIZE = 4
INTER = BN_SIZE * GROWTH          # 32, bottleneck width (kept unpadded, live-K)
BLOCK_CFG = (2, 2)
CP = 128             # lane-dense padded channel width for every activation
VMEM_LIMIT = 32 * 1024 * 1024     # safe on v5e/v6e (128 MiB) and v7x (64 MiB)


def _round_up(x, m):
    return ((x + m - 1) // m) * m


# ----------------------------------------------------------------------------
# Pallas kernels
# ----------------------------------------------------------------------------
def _mm_bnrelu_kernel(p_ref, w_ref, s_ref, b_ref, o_ref):
    """Stem: im2col matmul (bf16 operands, f32 acc) -> folded BN -> ReLU."""
    t = jnp.dot(p_ref[...], w_ref[...], preferred_element_type=jnp.float32)
    o_ref[...] = jnp.maximum(t * s_ref[...] + b_ref[...], 0.0)


def _bnrelu_mm_kernel(x_ref, w_ref, s_ref, b_ref, o_ref):
    """Transition: BN-ReLU (f32) -> 1x1 conv matmul (bf16 operands, f32 acc)."""
    a = jnp.maximum(x_ref[...] * s_ref[...] + b_ref[...], 0.0)
    o_ref[...] = jnp.dot(a.astype(jnp.bfloat16), w_ref[...],
                         preferred_element_type=jnp.float32)


def _make_dense_kernel(wp, mp, guard):
    """Fully fused pre-activation DenseNet layer (single pallas_call).

    Operates on the spatially zero-padded, row-flattened activation
    xp: [mp = B*(H+2)*(W+2), 128].  In this layout a 3x3-conv neighbour is a
    pure row offset (dy*(W+2) + dx), and reads that land on padding rows pick
    up zeros (the bottleneck output t is masked to zero there), which is
    exactly the conv's zero padding.  The concat is an add because the w2 live
    output columns were packed at the concat offset."""
    offs = [dy * wp + dx for dy in (-1, 0, 1) for dx in (-1, 0, 1)]

    def kernel(x_ref, m_ref, w1_ref, s1_ref, b1_ref, s2_ref, b2_ref,
               w2_ref, o_ref, ts_ref):
        x = x_ref[...]                                            # [mp,128] f32
        a = jnp.maximum(x * s1_ref[...] + b1_ref[...], 0.0)       # BN1-ReLU
        t = jnp.dot(a.astype(jnp.bfloat16), w1_ref[...],          # 1x1 conv
                    preferred_element_type=jnp.float32)           # [mp, 32]
        t = jnp.maximum(t * s2_ref[...] + b2_ref[...], 0.0)       # BN2-ReLU
        t = t * m_ref[...]                                        # zero pad rows
        # Stage t in an 8-aligned guarded scratch so every shifted tap is a
        # plain static-offset slab load (guard rows are zero).
        ts_ref[...] = jnp.zeros((2 * guard + mp, INTER), jnp.float32)
        ts_ref[pl.ds(guard, mp), :] = t
        acc = x                                                   # concat base
        for k, off in enumerate(offs):                            # 9 taps
            tap = ts_ref[pl.ds(guard + off, mp), :]               # [mp, 32]
            acc = acc + jnp.dot(tap.astype(jnp.bfloat16), w2_ref[k],
                                preferred_element_type=jnp.float32)
        o_ref[...] = acc

    return kernel


def _make_head_kernel(inv_hw):
    """Final BN-ReLU + GAP (row-tiled partial sums) + classifier + bias."""
    def kernel(x_ref, s_ref, b_ref, w_ref, bias_ref, o_ref, acc_ref):
        step = pl.program_id(0)

        @pl.when(step == 0)
        def _init():
            acc_ref[...] = jnp.zeros_like(acc_ref)

        a = jnp.maximum(x_ref[...] * s_ref[...] + b_ref[...], 0.0)  # [B,thw,C]
        acc_ref[...] += jnp.sum(a, axis=1)                          # [B, C]

        @pl.when(step == pl.num_programs(0) - 1)
        def _fin():
            pooled = (acc_ref[...] * inv_hw).astype(jnp.bfloat16)   # [B, C]
            z = jnp.dot(pooled, w_ref[...],
                        preferred_element_type=jnp.float32)
            o_ref[...] = z + bias_ref[...]

    return kernel


# ----------------------------------------------------------------------------
# Row-tiled pallas_call wrapper (no runtime K/N/M padding, lane-dense output)
# ----------------------------------------------------------------------------
def _pick_tm(m):
    """<=512-row tiles; >=2 grid steps when M >= 512 so v7x megacore is used."""
    if m < 512:
        return m
    for tm in (512, 256, 128, 64, 32, 16, 8):
        if m % tm == 0 and m // tm >= 2:
            return tm
    return m  # pathological M: single full-extent block (still legal)


def _row_tiled_call(kernel, row_args, shared_args, n_cols):
    m = row_args[0].shape[0]
    tm = _pick_tm(m)
    in_specs = [pl.BlockSpec((tm, a.shape[1]), lambda i: (i, 0)) for a in row_args]
    in_specs += [pl.BlockSpec(s.shape, lambda i: (0, 0)) for s in shared_args]
    return pl.pallas_call(
        kernel,
        out_shape=jax.ShapeDtypeStruct((m, n_cols), jnp.float32),
        grid=(m // tm,),
        in_specs=in_specs,
        out_specs=pl.BlockSpec((tm, n_cols), lambda i: (i, 0)),
        compiler_params=pltpu.CompilerParams(
            dimension_semantics=("parallel",),
            vmem_limit_bytes=VMEM_LIMIT),
    )(*row_args, *shared_args)


# ----------------------------------------------------------------------------
# JAX glue: stem im2col and pooling windows
# ----------------------------------------------------------------------------
def _im2col(x, kh, kw, stride, pad):
    """NHWC -> [B*Ho*Wo, kh*kw*C] patches (tap-major, channel-minor)."""
    if pad:
        x = jnp.pad(x, ((0, 0), (pad, pad), (pad, pad), (0, 0)))
    B, H, W, C = x.shape
    Ho = (H - kh) // stride + 1
    Wo = (W - kw) // stride + 1
    cols = [x[:, i:i + Ho * stride:stride, j:j + Wo * stride:stride, :]
            for i in range(kh) for j in range(kw)]
    patches = jnp.concatenate(cols, axis=-1)
    return patches.reshape(B * Ho * Wo, kh * kw * C), (B, Ho, Wo)


def maxpool_3x3_s2(x):
    return jax.lax.reduce_window(
        x, -jnp.inf, jax.lax.max,
        window_dimensions=(1, 3, 3, 1), window_strides=(1, 2, 2, 1),
        padding=((0, 0), (1, 1), (1, 1), (0, 0)))


def avgpool_2x2(x):
    B, H, W, C = x.shape
    assert H % 2 == 0 and W % 2 == 0, (H, W)
    return x.reshape(B, H // 2, 2, W // 2, 2, C).mean(axis=(2, 4))


# ----------------------------------------------------------------------------
# Parameters: deterministic synthetic init, padded layout + bf16 weights baked in
# ----------------------------------------------------------------------------
def _he(key, shape, fan):
    return jax.random.normal(key, shape, jnp.float32) * (2.0 / fan) ** 0.5


def _bn_fold(key, c):
    k1, k2, k3, k4 = jax.random.split(key, 4)
    gamma = 1.0 + 0.1 * jax.random.normal(k1, (c,), jnp.float32)
    beta = 0.1 * jax.random.normal(k2, (c,), jnp.float32)
    mean = 0.1 * jax.random.normal(k3, (c,), jnp.float32)
    var = 1.0 + 0.1 * jax.random.uniform(k4, (c,), jnp.float32)
    scale = gamma / jnp.sqrt(var + 1e-5)
    shift = beta - mean * scale
    return scale, shift


def _pad_row_vec(v, width=CP):
    return jnp.zeros((1, width), jnp.float32).at[0, :v.shape[0]].set(v)


def init_params(key):
    keys = iter(jax.random.split(key, 64))
    params = {"blocks": [], "transitions": []}

    # Stem: 7x7/2 conv (30 -> 16), BN folded; weight embedded into padded layout.
    w = _he(next(keys), (7, 7, IN_C, STEM_CH), 7 * 7 * IN_C)
    wp = jnp.zeros((7, 7, IN_CP, CP), jnp.float32).at[:, :, :IN_C, :STEM_CH].set(w)
    params["stem_w"] = wp.reshape(7 * 7 * IN_CP, CP).astype(jnp.bfloat16)
    s, b = _bn_fold(next(keys), STEM_CH)
    params["stem_s"], params["stem_b"] = _pad_row_vec(s), _pad_row_vec(b)

    ch = STEM_CH
    for bi, n_layers in enumerate(BLOCK_CFG):
        layers = []
        for _ in range(n_layers):
            lp = {}
            s1, b1 = _bn_fold(next(keys), ch)
            lp["s1"], lp["b1"] = _pad_row_vec(s1), _pad_row_vec(b1)
            w1 = _he(next(keys), (ch, INTER), ch)
            lp["w1"] = (jnp.zeros((CP, INTER), jnp.float32)
                        .at[:ch, :].set(w1).astype(jnp.bfloat16))
            s2, b2 = _bn_fold(next(keys), INTER)
            lp["s2"], lp["b2"] = s2.reshape(1, INTER), b2.reshape(1, INTER)
            # 3x3 conv weight: live K only (9*32), live output cols at the
            # concat offset [ch, ch+GROWTH) -> concat becomes an add.
            w2 = _he(next(keys), (3, 3, INTER, GROWTH), 3 * 3 * INTER)
            w2p = (jnp.zeros((9, INTER, CP), jnp.float32)
                   .at[:, :, ch:ch + GROWTH].set(w2.reshape(9, INTER, GROWTH)))
            lp["w2"] = w2p.astype(jnp.bfloat16)
            layers.append(lp)
            ch += GROWTH
        params["blocks"].append(layers)
        if bi < len(BLOCK_CFG) - 1:
            out_ch = ch // 2
            s, b = _bn_fold(next(keys), ch)
            w = _he(next(keys), (ch, out_ch), ch)
            params["transitions"].append({
                "s": _pad_row_vec(s), "b": _pad_row_vec(b),
                "w": (jnp.zeros((CP, CP), jnp.float32)
                      .at[:ch, :out_ch].set(w).astype(jnp.bfloat16)),
            })
            ch = out_ch

    s, b = _bn_fold(next(keys), ch)
    params["head_s"], params["head_b"] = _pad_row_vec(s), _pad_row_vec(b)
    cls_w = jax.random.normal(next(keys), (ch, N_CLASSES), jnp.float32) * (1.0 / ch) ** 0.5
    params["cls_w"] = (jnp.zeros((CP, CP), jnp.float32)
                       .at[:ch, :N_CLASSES].set(cls_w).astype(jnp.bfloat16))
    cls_b = 0.01 * jax.random.normal(next(keys), (N_CLASSES,), jnp.float32)
    params["cls_b"] = _pad_row_vec(cls_b)
    return params


# ----------------------------------------------------------------------------
# Forward pass
# ----------------------------------------------------------------------------
def _dense_block(x, layers):
    """Run all dense layers of a block on the padded, row-flattened activation."""
    B, H, W, C = x.shape
    Hp, Wp = H + 2, W + 2
    Mp = B * Hp * Wp
    guard = _round_up(Wp + 1, 8)          # 8-aligned guard rows for the scratch
    # Interior mask: zero at spatial-padding rows (makes the shifted taps see
    # exact conv zero-padding even though BN biases are nonzero there).
    mask = jnp.zeros((B, Hp, Wp, 1), jnp.float32)
    mask = mask.at[:, 1:H + 1, 1:W + 1, :].set(1.0).reshape(Mp, 1)
    xp = jnp.pad(x, ((0, 0), (1, 1), (1, 1), (0, 0))).reshape(Mp, C)
    kernel = _make_dense_kernel(Wp, Mp, guard)
    for lp in layers:
        xp = pl.pallas_call(
            kernel,
            out_shape=jax.ShapeDtypeStruct((Mp, C), jnp.float32),
            scratch_shapes=[pltpu.VMEM((2 * guard + Mp, INTER), jnp.float32)],
            input_output_aliases={0: 0},   # concat-as-add reuses the x buffer
            compiler_params=pltpu.CompilerParams(vmem_limit_bytes=VMEM_LIMIT),
        )(xp, mask, lp["w1"], lp["s1"], lp["b1"], lp["s2"], lp["b2"], lp["w2"])
    # Drop the spatial padding rows (their contents are never used downstream).
    return xp.reshape(B, Hp, Wp, C)[:, 1:H + 1, 1:W + 1, :]


def _transition(x, p):
    B, H, W, C = x.shape
    x2 = x.reshape(B * H * W, C)
    y = _row_tiled_call(_bnrelu_mm_kernel, [x2], [p["w"], p["s"], p["b"]], CP)
    return avgpool_2x2(y.reshape(B, H, W, C))


def _pick_thw(hw):
    if hw <= 512:
        return hw
    for t in (512, 256, 128, 64, 32, 16, 8):
        if hw % t == 0:
            return t
    return hw


@jax.jit
def rsna24_forward(params, x_nchw):
    # Layout: NCHW (PyTorch) -> NHWC; activations stay channels-last, padded to
    # CP=128 lanes so every Pallas store is lane-dense/unmasked.
    x = jnp.transpose(x_nchw, (0, 2, 3, 1)).astype(jnp.float32)
    x = jnp.pad(x, ((0, 0), (0, 0), (0, 0), (0, IN_CP - IN_C)))

    # Stem: 7x7/2 conv (bf16 im2col patches) + folded BN + ReLU, then maxpool.
    patches, (B, Ho, Wo) = _im2col(x.astype(jnp.bfloat16), 7, 7, stride=2, pad=3)
    x = _row_tiled_call(
        _mm_bnrelu_kernel, [patches],
        [params["stem_w"], params["stem_s"], params["stem_b"]], CP,
    ).reshape(B, Ho, Wo, CP)
    x = maxpool_3x3_s2(x)

    # Dense blocks (1 fused pallas_call per layer) + transition.
    for bi, layers in enumerate(params["blocks"]):
        x = _dense_block(x, layers)
        if bi < len(params["blocks"]) - 1:
            x = _transition(x, params["transitions"][bi])

    # Head: row-tiled BN-ReLU + GAP accumulation, classifier on the last step.
    B, H, W, _ = x.shape
    HW = H * W
    thw = _pick_thw(HW)
    x3 = x.reshape(B, HW, CP)
    logits = pl.pallas_call(
        _make_head_kernel(1.0 / HW),
        out_shape=jax.ShapeDtypeStruct((B, CP), jnp.float32),
        grid=(HW // thw,),
        in_specs=[pl.BlockSpec((B, thw, CP), lambda i: (0, i, 0)),
                  pl.BlockSpec((1, CP), lambda i: (0, 0)),
                  pl.BlockSpec((1, CP), lambda i: (0, 0)),
                  pl.BlockSpec((CP, CP), lambda i: (0, 0)),
                  pl.BlockSpec((1, CP), lambda i: (0, 0))],
        out_specs=pl.BlockSpec((B, CP), lambda i: (0, 0)),
        scratch_shapes=[pltpu.VMEM((B, CP), jnp.float32)],
        compiler_params=pltpu.CompilerParams(
            dimension_semantics=("arbitrary",),
            vmem_limit_bytes=VMEM_LIMIT),
    )(x3, params["head_s"], params["head_b"], params["cls_w"], params["cls_b"])
    return logits[:, :N_CLASSES]                 # [B, 75]


if __name__ == "__main__":
    key = jax.random.PRNGKey(0)
    k_x, k_p = jax.random.split(key)
    # Small input consistent with the module: batch=2, in_chans=30, 32x32.
    x = jax.random.normal(k_x, (2, IN_C, 32, 32), jnp.float32)
    params = init_params(k_p)
    y = rsna24_forward(params, x)
    y = jax.block_until_ready(y)
    assert y.shape == (2, N_CLASSES), y.shape
    assert bool(jnp.all(jnp.isfinite(y)))
    print("KERNEL_OK")
</pallas_src>

<mosaic_0001>
module attributes {stable_mosaic.version = 11 : i64} {
  func.func @_mm_bnrelu_kernel(%arg0: i32, %arg1: memref<256x1568xbf16, #tpu.memory_space<vmem>>, %arg2: memref<1568x128xbf16, #tpu.memory_space<vmem>>, %arg3: memref<1x128xf32, #tpu.memory_space<vmem>>, %arg4: memref<1x128xf32, #tpu.memory_space<vmem>>, %arg5: memref<256x128xf32, #tpu.memory_space<vmem>>) attributes {dimension_semantics = [#tpu.dimension_semantics<parallel>], iteration_bounds = array<i64: 2>, scalar_prefetch = 0 : i64, scratch_operands = 0 : i64, tpu.core_type = #tpu.core_type<tc>, window_params = [{transform_indices = @transform_0, window_bounds = array<i64: 256, 1568>}, {pipeline_mode = #tpu.pipeline_mode<synchronous>, transform_indices = @transform_1, window_bounds = array<i64: 1568, 128>}, {pipeline_mode = #tpu.pipeline_mode<synchronous>, transform_indices = @transform_2, window_bounds = array<i64: 1, 128>}, {pipeline_mode = #tpu.pipeline_mode<synchronous>, transform_indices = @transform_3, window_bounds = array<i64: 1, 128>}, {transform_indices = @transform_4, window_bounds = array<i64: 256, 128>}]} {
    %c0 = arith.constant 0 : index
    %c0_0 = arith.constant 0 : index
    %0 = vector.load %arg1[%c0, %c0_0] : memref<256x1568xbf16, #tpu.memory_space<vmem>>, vector<256x1568xbf16>
    %c0_1 = arith.constant 0 : index
    %c0_2 = arith.constant 0 : index
    %1 = vector.load %arg2[%c0_1, %c0_2] : memref<1568x128xbf16, #tpu.memory_space<vmem>>, vector<1568x128xbf16>
    %cst = arith.constant dense<0.000000e+00> : vector<256x128xf32>
    %2 = tpu.matmul %0, %1, %cst {dimension_numbers = #tpu.dot_dimension_numbers<[1], [0], [0], [1], [0, 0, 1, 1], [], []>} : vector<256x1568xbf16>, vector<1568x128xbf16>, vector<256x128xf32> -> vector<256x128xf32>
    %c0_3 = arith.constant 0 : index
    %c0_4 = arith.constant 0 : index
    %3 = vector.load %arg3[%c0_3, %c0_4] : memref<1x128xf32, #tpu.memory_space<vmem>>, vector<1x128xf32>
    %4 = vector.broadcast %3 : vector<1x128xf32> to vector<256x128xf32>
    %5 = arith.mulf %2, %4 : vector<256x128xf32>
    %c0_5 = arith.constant 0 : index
    %c0_6 = arith.constant 0 : index
    %6 = vector.load %arg4[%c0_5, %c0_6] : memref<1x128xf32, #tpu.memory_space<vmem>>, vector<1x128xf32>
    %7 = vector.broadcast %6 : vector<1x128xf32> to vector<256x128xf32>
    %8 = arith.addf %5, %7 : vector<256x128xf32>
    %cst_7 = arith.constant 0.000000e+00 : f32
    %9 = vector.broadcast %cst_7 : f32 to vector<256x128xf32>
    %10 = arith.maximumf %8, %9 : vector<256x128xf32>
    %c0_8 = arith.constant 0 : index
    %c0_9 = arith.constant 0 : index
    %11 = vector.load %arg5[%c0_8, %c0_9] : memref<256x128xf32, #tpu.memory_space<vmem>>, vector<256x128xf32>
    tpu.vector_store %arg5[%c0_8, %c0_9], %10 {strides = array<i32>} : memref<256x128xf32, #tpu.memory_space<vmem>>, vector<256x128xf32>,
    return
  }
  func.func @transform_0(%arg0: i32) -> (i32, i32) {
    %c0_i32 = arith.constant 0 : i32
    %c0_i32_0 = arith.constant 0 : i32
    return %arg0, %c0_i32 : i32, i32
  }
  func.func @transform_1(%arg0: i32) -> (i32, i32) {
    %c0_i32 = arith.constant 0 : i32
    %c0_i32_0 = arith.constant 0 : i32
    %c0_i32_1 = arith.constant 0 : i32
    return %c0_i32, %c0_i32_0 : i32, i32
  }
  func.func @transform_2(%arg0: i32) -> (i32, i32) {
    %c0_i32 = arith.constant 0 : i32
    %c0_i32_0 = arith.constant 0 : i32
    %c0_i32_1 = arith.constant 0 : i32
    return %c0_i32, %c0_i32_0 : i32, i32
  }
  func.func @transform_3(%arg0: i32) -> (i32, i32) {
    %c0_i32 = arith.constant 0 : i32
    %c0_i32_0 = arith.constant 0 : i32
    %c0_i32_1 = arith.constant 0 : i32
    return %c0_i32, %c0_i32_0 : i32, i32
  }
  func.func @transform_4(%arg0: i32) -> (i32, i32) {
    %c0_i32 = arith.constant 0 : i32
    %c0_i32_0 = arith.constant 0 : i32
    return %arg0, %c0_i32 : i32, i32
  }
}

module attributes {stable_mosaic.version = 11 : i64} {
  func.func @kernel(%arg0: memref<200x128xf32, #tpu.memory_space<vmem>>, %arg1: memref<200x1xf32, #tpu.memory_space<vmem>>, %arg2: memref<128x32xbf16, #tpu.memory_space<vmem>>, %arg3: memref<1x128xf32, #tpu.memory_space<vmem>>, %arg4: memref<1x128xf32, #tpu.memory_space<vmem>>, %arg5: memref<1x32xf32, #tpu.memory_space<vmem>>, %arg6: memref<1x32xf32, #tpu.memory_space<vmem>>, %arg7: memref<9x32x128xbf16, #tpu.memory_space<vmem>>, %arg8: memref<200x128xf32, #tpu.memory_space<vmem>>, %arg9: memref<232x32xf32, #tpu.memory_space<vmem>>) attributes {dimension_semantics = [], scalar_prefetch = 0 : i64, scratch_operands = 1 : i64, tpu.core_type = #tpu.core_type<tc>} {
    %c0 = arith.constant 0 : index
    %c0_0 = arith.constant 0 : index
    %0 = vector.load %arg0[%c0, %c0_0] : memref<200x128xf32, #tpu.memory_space<vmem>>, vector<200x128xf32>
    %c0_1 = arith.constant 0 : index
    %c0_2 = arith.constant 0 : index
    %1 = vector.load %arg3[%c0_1, %c0_2] : memref<1x128xf32, #tpu.memory_space<vmem>>, vector<1x128xf32>
    %2 = vector.broadcast %1 : vector<1x128xf32> to vector<200x128xf32>
    %3 = arith.mulf %0, %2 : vector<200x128xf32>
    %c0_3 = arith.constant 0 : index
    %c0_4 = arith.constant 0 : index
    %4 = vector.load %arg4[%c0_3, %c0_4] : memref<1x128xf32, #tpu.memory_space<vmem>>, vector<1x128xf32>
    %5 = vector.broadcast %4 : vector<1x128xf32> to vector<200x128xf32>
    %6 = arith.addf %3, %5 : vector<200x128xf32>
    %cst = arith.constant 0.000000e+00 : f32
    %7 = vector.broadcast %cst : f32 to vector<200x128xf32>
    %8 = arith.maximumf %6, %7 : vector<200x128xf32>
    %9 = arith.truncf %8 : vector<200x128xf32> to vector<200x128xbf16>
    %c0_5 = arith.constant 0 : index
    %c0_6 = arith.constant 0 : index
    %10 = vector.load %arg2[%c0_5, %c0_6] : memref<128x32xbf16, #tpu.memory_space<vmem>>, vector<128x32xbf16>
    %cst_7 = arith.constant dense<0.000000e+00> : vector<200x32xf32>
    %11 = tpu.matmul %9, %10, %cst_7 {dimension_numbers = #tpu.dot_dimension_numbers<[1], [0], [0], [1], [0, 0, 1, 1], [], []>} : vector<200x128xbf16>, vector<128x32xbf16>, vector<200x32xf32> -> vector<200x32xf32>
    %c0_8 = arith.constant 0 : index
    %c0_9 = arith.constant 0 : index
    %12 = vector.load %arg5[%c0_8, %c0_9] : memref<1x32xf32, #tpu.memory_space<vmem>>, vector<1x32xf32>
    %13 = vector.broadcast %12 : vector<1x32xf32> to vector<200x32xf32>
    %14 = arith.mulf %11, %13 : vector<200x32xf32>
    %c0_10 = arith.constant 0 : index
    %c0_11 = arith.constant 0 : index
    %15 = vector.load %arg6[%c0_10, %c0_11] : memref<1x32xf32, #tpu.memory_space<vmem>>, vector<1x32xf32>
    %16 = vector.broadcast %15 : vector<1x32xf32> to vector<200x32xf32>
    %17 = arith.addf %14, %16 : vector<200x32xf32>
    %cst_12 = arith.constant 0.000000e+00 : f32
    %18 = vector.broadcast %cst_12 : f32 to vector<200x32xf32>
    %19 = arith.maximumf %17, %18 : vector<200x32xf32>
    %c0_13 = arith.constant 0 : index
    %c0_14 = arith.constant 0 : index
    %20 = vector.load %arg1[%c0_13, %c0_14] : memref<200x1xf32, #tpu.memory_space<vmem>>, vector<200x1xf32>
    %21 = vector.broadcast %20 : vector<200x1xf32> to vector<200x32xf32>
    %22 = arith.mulf %19, %21 : vector<200x32xf32>
    %cst_15 = arith.constant 0.000000e+00 : f32
    %23 = vector.broadcast %cst_15 : f32 to vector<232x32xf32>
    %c0_16 = arith.constant 0 : index
    %c0_17 = arith.constant 0 : index
    %24 = vector.load %arg9[%c0_16, %c0_17] : memref<232x32xf32, #tpu.memory_space<vmem>>, vector<232x32xf32>
    tpu.vector_store %arg9[%c0_16, %c0_17], %23 {strides = array<i32>} : memref<232x32xf32, #tpu.memory_space<vmem>>, vector<232x32xf32>,
    %c16 = arith.constant 16 : index
    %c0_18 = arith.constant 0 : index
    %25 = vector.load %arg9[%c16, %c0_18] : memref<232x32xf32, #tpu.memory_space<vmem>>, vector<200x32xf32>
    tpu.vector_store %arg9[%c16, %c0_18], %22 {strides = array<i32>} : memref<232x32xf32, #tpu.memory_space<vmem>>, vector<200x32xf32>,
    %c5 = arith.constant 5 : index
    %c0_19 = arith.constant 0 : index
    %26 = vector.load %arg9[%c5, %c0_19] : memref<232x32xf32, #tpu.memory_space<vmem>>, vector<200x32xf32>
    %27 = arith.truncf %26 : vector<200x32xf32> to vector<200x32xbf16>
    %c0_20 = arith.constant 0 : index
    %c0_21 = arith.constant 0 : index
    %c0_22 = arith.constant 0 : index
    %28 = vector.load %arg7[%c0_20, %c0_21, %c0_22] : memref<9x32x128xbf16, #tpu.memory_space<vmem>>, vector<1x32x128xbf16>
    %29 = vector.shape_cast %28 : vector<1x32x128xbf16> to vector<32x128xbf16>
    %cst_23 = arith.constant dense<0.000000e+00> : vector<200x128xf32>
    %30 = tpu.matmul %27, %29, %cst_23 {dimension_numbers = #tpu.dot_dimension_numbers<[1], [0], [0], [1], [0, 0, 1, 1], [], []>} : vector<200x32xbf16>, vector<32x128xbf16>, vector<200x128xf32> -> vector<200x128xf32>
    %31 = arith.addf %0, %30 : vector<200x128xf32>
    %c6 = arith.constant 6 : index
    %c0_24 = arith.constant 0 : index
    %32 = vector.load %arg9[%c6, %c0_24] : memref<232x32xf32, #tpu.memory_space<vmem>>, vector<200x32xf32>
    %33 = arith.truncf %32 : vector<200x32xf32> to vector<200x32xbf16>
    %c1 = arith.constant 1 : index
    %c0_25 = arith.constant 0 : index
    %c0_26 = arith.constant 0 : index
    %34 = vector.load %arg7[%c1, %c0_25, %c0_26] : memref<9x32x128xbf16, #tpu.memory_space<vmem>>, vector<1x32x128xbf16>
    %35 = vector.shape_cast %34 : vector<1x32x128xbf16> to vector<32x128xbf16>
    %cst_27 = arith.constant dense<0.000000e+00> : vector<200x128xf32>
    %36 = tpu.matmul %33, %35, %cst_27 {dimension_numbers = #tpu.dot_dimension_numbers<[1], [0], [0], [1], [0, 0, 1, 1], [], []>} : vector<200x32xbf16>, vector<32x128xbf16>, vector<200x128xf32> -> vector<200x128xf32>
    %37 = arith.addf %31, %36 : vector<200x128xf32>
    %c7 = arith.constant 7 : index
    %c0_28 = arith.constant 0 : index
    %38 = vector.load %arg9[%c7, %c0_28] : memref<232x32xf32, #tpu.memory_space<vmem>>, vector<200x32xf32>
    %39 = arith.truncf %38 : vector<200x32xf32> to vector<200x32xbf16>
    %c2 = arith.constant 2 : index
    %c0_29 = arith.constant 0 : index
    %c0_30 = arith.constant 0 : index
    %40 = vector.load %arg7[%c2, %c0_29, %c0_30] : memref<9x32x128xbf16, #tpu.memory_space<vmem>>, vector<1x32x128xbf16>
    %41 = vector.shape_cast %40 : vector<1x32x128xbf16> to vector<32x128xbf16>
    %cst_31 = arith.constant dense<0.000000e+00> : vector<200x128xf32>
    %42 = tpu.matmul %39, %41, %cst_31 {dimension_numbers = #tpu.dot_dimension_numbers<[1], [0], [0], [1], [0, 0, 1, 1], [], []>} : vector<200x32xbf16>, vector<32x128xbf16>, vector<200x128xf32> -> vector<200x128xf32>
    %43 = arith.addf %37, %42 : vector<200x128xf32>
    %c15 = arith.constant 15 : index
    %c0_32 = arith.constant 0 : index
    %44 = vector.load %arg9[%c15, %c0_32] : memref<232x32xf32, #tpu.memory_space<vmem>>, vector<200x32xf32>
    %45 = arith.truncf %44 : vector<200x32xf32> to vector<200x32xbf16>
    %c3 = arith.constant 3 : index
    %c0_33 = arith.constant 0 : index
    %c0_34 = arith.constant 0 : index
    %46 = vector.load %arg7[%c3, %c0_33, %c0_34] : memref<9x32x128xbf16, #tpu.memory_space<vmem>>, vector<1x32x128xbf16>
    %47 = vector.shape_cast %46 : vector<1x32x128xbf16> to vector<32x128xbf16>
    %cst_35 = arith.constant dense<0.000000e+00> : vector<200x128xf32>
    %48 = tpu.matmul %45, %47, %cst_35 {dimension_numbers = #tpu.dot_dimension_numbers<[1], [0], [0], [1], [0, 0, 1, 1], [], []>} : vector<200x32xbf16>, vector<32x128xbf16>, vector<200x128xf32> -> vector<200x128xf32>
    %49 = arith.addf %43, %48 : vector<200x128xf32>
    %c16_36 = arith.constant 16 : index
    %c0_37 = arith.constant 0 : index
    %50 = vector.load %arg9[%c16_36, %c0_37] : memref<232x32xf32, #tpu.memory_space<vmem>>, vector<200x32xf32>
    %51 = arith.truncf %50 : vector<200x32xf32> to vector<200x32xbf16>
    %c4 = arith.constant 4 : index
    %c0_38 = arith.constant 0 : index
    %c0_39 = arith.constant 0 : index
    %52 = vector.load %arg7[%c4, %c0_38, %c0_39] : memref<9x32x128xbf16, #tpu.memory_space<vmem>>, vector<1x32x128xbf16>
    %53 = vector.shape_cast %52 : vector<1x32x128xbf16> to vector<32x128xbf16>
    %cst_40 = arith.constant dense<0.000000e+00> : vector<200x128xf32>
    %54 = tpu.matmul %51, %53, %cst_40 {dimension_numbers = #tpu.dot_dimension_numbers<[1], [0], [0], [1], [0, 0, 1, 1], [], []>} : vector<200x32xbf16>, vector<32x128xbf16>, vector<200x128xf32> -> vector<200x128xf32>
    %55 = arith.addf %49, %54 : vector<200x128xf32>
    %c17 = arith.constant 17 : index
    %c0_41 = arith.constant 0 : index
    %56 = vector.load %arg9[%c17, %c0_41] : memref<232x32xf32, #tpu.memory_space<vmem>>, vector<200x32xf32>
    %57 = arith.truncf %56 : vector<200x32xf32> to vector<200x32xbf16>
    %c5_42 = arith.constant 5 : index
    %c0_43 = arith.constant 0 : index
    %c0_44 = arith.constant 0 : index
    %58 = vector.load %arg7[%c5_42, %c0_43, %c0_44] : memref<9x32x128xbf16, #tpu.memory_space<vmem>>, vector<1x32x128xbf16>
    %59 = vector.shape_cast %58 : vector<1x32x128xbf16> to vector<32x128xbf16>
    %cst_45 = arith.constant dense<0.000000e+00> : vector<200x128xf32>
    %60 = tpu.matmul %57, %59, %cst_45 {dimension_numbers = #tpu.dot_dimension_numbers<[1], [0], [0], [1], [0, 0, 1, 1], [], []>} : vector<200x32xbf16>, vector<32x128xbf16>, vector<200x128xf32> -> vector<200x128xf32>
    %61 = arith.addf %55, %60 : vector<200x128xf32>
    %c25 = arith.constant 25 : index
    %c0_46 = arith.constant 0 : index
    %62 = vector.load %arg9[%c25, %c0_46] : memref<232x32xf32, #tpu.memory_space<vmem>>, vector<200x32xf32>
    %63 = arith.truncf %62 : vector<200x32xf32> to vector<200x32xbf16>
    %c6_47 = arith.constant 6 : index
    %c0_48 = arith.constant 0 : index
    %c0_49 = arith.constant 0 : index
    %64 = vector.load %arg7[%c6_47, %c0_48, %c0_49] : memref<9x32x128xbf16, #tpu.memory_space<vmem>>, vector<1x32x128xbf16>
    %65 = vector.shape_cast %64 : vector<1x32x128xbf16> to vector<32x128xbf16>
    %cst_50 = arith.constant dense<0.000000e+00> : vector<200x128xf32>
    %66 = tpu.matmul %63, %65, %cst_50 {dimension_numbers = #tpu.dot_dimension_numbers<[1], [0], [0], [1], [0, 0, 1, 1], [], []>} : vector<200x32xbf16>, vector<32x128xbf16>, vector<200x128xf32> -> vector<200x128xf32>
    %67 = arith.addf %61, %66 : vector<200x128xf32>
    %c26 = arith.constant 26 : index
    %c0_51 = arith.constant 0 : index
    %68 = vector.load %arg9[%c26, %c0_51] : memref<232x32xf32, #tpu.memory_space<vmem>>, vector<200x32xf32>
    %69 = arith.truncf %68 : vector<200x32xf32> to vector<200x32xbf16>
    %c7_52 = arith.constant 7 : index
    %c0_53 = arith.constant 0 : index
    %c0_54 = arith.constant 0 : index
    %70 = vector.load %arg7[%c7_52, %c0_53, %c0_54] : memref<9x32x128xbf16, #tpu.memory_space<vmem>>, vector<1x32x128xbf16>
    %71 = vector.shape_cast %70 : vector<1x32x128xbf16> to vector<32x128xbf16>
    %cst_55 = arith.constant dense<0.000000e+00> : vector<200x128xf32>
    %72 = tpu.matmul %69, %71, %cst_55 {dimension_numbers = #tpu.dot_dimension_numbers<[1], [0], [0], [1], [0, 0, 1, 1], [], []>} : vector<200x32xbf16>, vector<32x128xbf16>, vector<200x128xf32> -> vector<200x128xf32>
    %73 = arith.addf %67, %72 : vector<200x128xf32>
    %c27 = arith.constant 27 : index
    %c0_56 = arith.constant 0 : index
    %74 = vector.load %arg9[%c27, %c0_56] : memref<232x32xf32, #tpu.memory_space<vmem>>, vector<200x32xf32>
    %75 = arith.truncf %74 : vector<200x32xf32> to vector<200x32xbf16>
    %c8 = arith.constant 8 : index
    %c0_57 = arith.constant 0 : index
    %c0_58 = arith.constant 0 : index
    %76 = vector.load %arg7[%c8, %c0_57, %c0_58] : memref<9x32x128xbf16, #tpu.memory_space<vmem>>, vector<1x32x128xbf16>
    %77 = vector.shape_cast %76 : vector<1x32x128xbf16> to vector<32x128xbf16>
    %cst_59 = arith.constant dense<0.000000e+00> : vector<200x128xf32>
    %78 = tpu.matmul %75, %77, %cst_59 {dimension_numbers = #tpu.dot_dimension_numbers<[1], [0], [0], [1], [0, 0, 1, 1], [], []>} : vector<200x32xbf16>, vector<32x128xbf16>, vector<200x128xf32> -> vector<200x128xf32>
    %79 = arith.addf %73, %78 : vector<200x128xf32>
    %c0_60 = arith.constant 0 : index
    %c0_61 = arith.constant 0 : index
    %80 = vector.load %arg8[%c0_60, %c0_61] : memref<200x128xf32, #tpu.memory_space<vmem>>, vector<200x128xf32>
    tpu.vector_store %arg8[%c0_60, %c0_61], %79 {strides = array<i32>} : memref<200x128xf32, #tpu.memory_space<vmem>>, vector<200x128xf32>,
    return
  }
}

module attributes {stable_mosaic.version = 11 : i64} {
  func.func @_bnrelu_mm_kernel(%arg0: i32, %arg1: memref<128x128xf32, #tpu.memory_space<vmem>>, %arg2: memref<128x128xbf16, #tpu.memory_space<vmem>>, %arg3: memref<1x128xf32, #tpu.memory_space<vmem>>, %arg4: memref<1x128xf32, #tpu.memory_space<vmem>>, %arg5: memref<128x128xf32, #tpu.memory_space<vmem>>) attributes {dimension_semantics = [#tpu.dimension_semantics<parallel>], iteration_bounds = array<i64: 1>, scalar_prefetch = 0 : i64, scratch_operands = 0 : i64, tpu.core_type = #tpu.core_type<tc>, window_params = [{transform_indices = @transform_0, window_bounds = array<i64: 128, 128>}, {pipeline_mode = #tpu.pipeline_mode<synchronous>, transform_indices = @transform_1, window_bounds = array<i64: 128, 128>}, {pipeline_mode = #tpu.pipeline_mode<synchronous>, transform_indices = @transform_2, window_bounds = array<i64: 1, 128>}, {pipeline_mode = #tpu.pipeline_mode<synchronous>, transform_indices = @transform_3, window_bounds = array<i64: 1, 128>}, {transform_indices = @transform_4, window_bounds = array<i64: 128, 128>}]} {
    %c0 = arith.constant 0 : index
    %c0_0 = arith.constant 0 : index
    %0 = vector.load %arg1[%c0, %c0_0] : memref<128x128xf32, #tpu.memory_space<vmem>>, vector<128x128xf32>
    %c0_1 = arith.constant 0 : index
    %c0_2 = arith.constant 0 : index
    %1 = vector.load %arg3[%c0_1, %c0_2] : memref<1x128xf32, #tpu.memory_space<vmem>>, vector<1x128xf32>
    %2 = vector.broadcast %1 : vector<1x128xf32> to vector<128x128xf32>
    %3 = arith.mulf %0, %2 : vector<128x128xf32>
    %c0_3 = arith.constant 0 : index
    %c0_4 = arith.constant 0 : index
    %4 = vector.load %arg4[%c0_3, %c0_4] : memref<1x128xf32, #tpu.memory_space<vmem>>, vector<1x128xf32>
    %5 = vector.broadcast %4 : vector<1x128xf32> to vector<128x128xf32>
    %6 = arith.addf %3, %5 : vector<128x128xf32>
    %cst = arith.constant 0.000000e+00 : f32
    %7 = vector.broadcast %cst : f32 to vector<128x128xf32>
    %8 = arith.maximumf %6, %7 : vector<128x128xf32>
    %9 = arith.truncf %8 : vector<128x128xf32> to vector<128x128xbf16>
    %c0_5 = arith.constant 0 : index
    %c0_6 = arith.constant 0 : index
    %10 = vector.load %arg2[%c0_5, %c0_6] : memref<128x128xbf16, #tpu.memory_space<vmem>>, vector<128x128xbf16>
    %cst_7 = arith.constant dense<0.000000e+00> : vector<128x128xf32>
    %11 = tpu.matmul %9, %10, %cst_7 {dimension_numbers = #tpu.dot_dimension_numbers<[1], [0], [0], [1], [0, 0, 1, 1], [], []>} : vector<128x128xbf16>, vector<128x128xbf16>, vector<128x128xf32> -> vector<128x128xf32>
    %c0_8 = arith.constant 0 : index
    %c0_9 = arith.constant 0 : index
    %12 = vector.load %arg5[%c0_8, %c0_9] : memref<128x128xf32, #tpu.memory_space<vmem>>, vector<128x128xf32>
    tpu.vector_store %arg5[%c0_8, %c0_9], %11 {strides = array<i32>} : memref<128x128xf32, #tpu.memory_space<vmem>>, vector<128x128xf32>,
    return
  }
  func.func @transform_0(%arg0: i32) -> (i32, i32) {
    %c0_i32 = arith.constant 0 : i32
    %c0_i32_0 = arith.constant 0 : i32
    return %arg0, %c0_i32 : i32, i32
  }
  func.func @transform_1(%arg0: i32) -> (i32, i32) {
    %c0_i32 = arith.constant 0 : i32
    %c0_i32_0 = arith.constant 0 : i32
    %c0_i32_1 = arith.constant 0 : i32
    return %c0_i32, %c0_i32_0 : i32, i32
  }
  func.func @transform_2(%arg0: i32) -> (i32, i32) {
    %c0_i32 = arith.constant 0 : i32
    %c0_i32_0 = arith.constant 0 : i32
    %c0_i32_1 = arith.constant 0 : i32
    return %c0_i32, %c0_i32_0 : i32, i32
  }
  func.func @transform_3(%arg0: i32) -> (i32, i32) {
    %c0_i32 = arith.constant 0 : i32
    %c0_i32_0 = arith.constant 0 : i32
    %c0_i32_1 = arith.constant 0 : i32
    return %c0_i32, %c0_i32_0 : i32, i32
  }
  func.func @transform_4(%arg0: i32) -> (i32, i32) {
    %c0_i32 = arith.constant 0 : i32
    %c0_i32_0 = arith.constant 0 : i32
    return %arg0, %c0_i32 : i32, i32
  }
}

module attributes {stable_mosaic.version = 11 : i64} {
  func.func @kernel(%arg0: memref<72x128xf32, #tpu.memory_space<vmem>>, %arg1: memref<72x1xf32, #tpu.memory_space<vmem>>, %arg2: memref<128x32xbf16, #tpu.memory_space<vmem>>, %arg3: memref<1x128xf32, #tpu.memory_space<vmem>>, %arg4: memref<1x128xf32, #tpu.memory_space<vmem>>, %arg5: memref<1x32xf32, #tpu.memory_space<vmem>>, %arg6: memref<1x32xf32, #tpu.memory_space<vmem>>, %arg7: memref<9x32x128xbf16, #tpu.memory_space<vmem>>, %arg8: memref<72x128xf32, #tpu.memory_space<vmem>>, %arg9: memref<88x32xf32, #tpu.memory_space<vmem>>) attributes {dimension_semantics = [], scalar_prefetch = 0 : i64, scratch_operands = 1 : i64, tpu.core_type = #tpu.core_type<tc>} {
    %c0 = arith.constant 0 : index
    %c0_0 = arith.constant 0 : index
    %0 = vector.load %arg0[%c0, %c0_0] : memref<72x128xf32, #tpu.memory_space<vmem>>, vector<72x128xf32>
    %c0_1 = arith.constant 0 : index
    %c0_2 = arith.constant 0 : index
    %1 = vector.load %arg3[%c0_1, %c0_2] : memref<1x128xf32, #tpu.memory_space<vmem>>, vector<1x128xf32>
    %2 = vector.broadcast %1 : vector<1x128xf32> to vector<72x128xf32>
    %3 = arith.mulf %0, %2 : vector<72x128xf32>
    %c0_3 = arith.constant 0 : index
    %c0_4 = arith.constant 0 : index
    %4 = vector.load %arg4[%c0_3, %c0_4] : memref<1x128xf32, #tpu.memory_space<vmem>>, vector<1x128xf32>
    %5 = vector.broadcast %4 : vector<1x128xf32> to vector<72x128xf32>
    %6 = arith.addf %3, %5 : vector<72x128xf32>
    %cst = arith.constant 0.000000e+00 : f32
    %7 = vector.broadcast %cst : f32 to vector<72x128xf32>
    %8 = arith.maximumf %6, %7 : vector<72x128xf32>
    %9 = arith.truncf %8 : vector<72x128xf32> to vector<72x128xbf16>
    %c0_5 = arith.constant 0 : index
    %c0_6 = arith.constant 0 : index
    %10 = vector.load %arg2[%c0_5, %c0_6] : memref<128x32xbf16, #tpu.memory_space<vmem>>, vector<128x32xbf16>
    %cst_7 = arith.constant dense<0.000000e+00> : vector<72x32xf32>
    %11 = tpu.matmul %9, %10, %cst_7 {dimension_numbers = #tpu.dot_dimension_numbers<[1], [0], [0], [1], [0, 0, 1, 1], [], []>} : vector<72x128xbf16>, vector<128x32xbf16>, vector<72x32xf32> -> vector<72x32xf32>
    %c0_8 = arith.constant 0 : index
    %c0_9 = arith.constant 0 : index
    %12 = vector.load %arg5[%c0_8, %c0_9] : memref<1x32xf32, #tpu.memory_space<vmem>>, vector<1x32xf32>
    %13 = vector.broadcast %12 : vector<1x32xf32> to vector<72x32xf32>
    %14 = arith.mulf %11, %13 : vector<72x32xf32>
    %c0_10 = arith.constant 0 : index
    %c0_11 = arith.constant 0 : index
    %15 = vector.load %arg6[%c0_10, %c0_11] : memref<1x32xf32, #tpu.memory_space<vmem>>, vector<1x32xf32>
    %16 = vector.broadcast %15 : vector<1x32xf32> to vector<72x32xf32>
    %17 = arith.addf %14, %16 : vector<72x32xf32>
    %cst_12 = arith.constant 0.000000e+00 : f32
    %18 = vector.broadcast %cst_12 : f32 to vector<72x32xf32>
    %19 = arith.maximumf %17, %18 : vector<72x32xf32>
    %c0_13 = arith.constant 0 : index
    %c0_14 = arith.constant 0 : index
    %20 = vector.load %arg1[%c0_13, %c0_14] : memref<72x1xf32, #tpu.memory_space<vmem>>, vector<72x1xf32>
    %21 = vector.broadcast %20 : vector<72x1xf32> to vector<72x32xf32>
    %22 = arith.mulf %19, %21 : vector<72x32xf32>
    %cst_15 = arith.constant 0.000000e+00 : f32
    %23 = vector.broadcast %cst_15 : f32 to vector<88x32xf32>
    %c0_16 = arith.constant 0 : index
    %c0_17 = arith.constant 0 : index
    %24 = vector.load %arg9[%c0_16, %c0_17] : memref<88x32xf32, #tpu.memory_space<vmem>>, vector<88x32xf32>
    tpu.vector_store %arg9[%c0_16, %c0_17], %23 {strides = array<i32>} : memref<88x32xf32, #tpu.memory_space<vmem>>, vector<88x32xf32>,
    %c8 = arith.constant 8 : index
    %c0_18 = arith.constant 0 : index
    %25 = vector.load %arg9[%c8, %c0_18] : memref<88x32xf32, #tpu.memory_space<vmem>>, vector<72x32xf32>
    tpu.vector_store %arg9[%c8, %c0_18], %22 {strides = array<i32>} : memref<88x32xf32, #tpu.memory_space<vmem>>, vector<72x32xf32>,
    %c1 = arith.constant 1 : index
    %c0_19 = arith.constant 0 : index
    %26 = vector.load %arg9[%c1, %c0_19] : memref<88x32xf32, #tpu.memory_space<vmem>>, vector<72x32xf32>
    %27 = arith.truncf %26 : vector<72x32xf32> to vector<72x32xbf16>
    %c0_20 = arith.constant 0 : index
    %c0_21 = arith.constant 0 : index
    %c0_22 = arith.constant 0 : index
    %28 = vector.load %arg7[%c0_20, %c0_21, %c0_22] : memref<9x32x128xbf16, #tpu.memory_space<vmem>>, vector<1x32x128xbf16>
    %29 = vector.shape_cast %28 : vector<1x32x128xbf16> to vector<32x128xbf16>
    %cst_23 = arith.constant dense<0.000000e+00> : vector<72x128xf32>
    %30 = tpu.matmul %27, %29, %cst_23 {dimension_numbers = #tpu.dot_dimension_numbers<[1], [0], [0], [1], [0, 0, 1, 1], [], []>} : vector<72x32xbf16>, vector<32x128xbf16>, vector<72x128xf32> -> vector<72x128xf32>
    %31 = arith.addf %0, %30 : vector<72x128xf32>
    %c2 = arith.constant 2 : index
    %c0_24 = arith.constant 0 : index
    %32 = vector.load %arg9[%c2, %c0_24] : memref<88x32xf32, #tpu.memory_space<vmem>>, vector<72x32xf32>
    %33 = arith.truncf %32 : vector<72x32xf32> to vector<72x32xbf16>
    %c1_25 = arith.constant 1 : index
    %c0_26 = arith.constant 0 : index
    %c0_27 = arith.constant 0 : index
    %34 = vector.load %arg7[%c1_25, %c0_26, %c0_27] : memref<9x32x128xbf16, #tpu.memory_space<vmem>>, vector<1x32x128xbf16>
    %35 = vector.shape_cast %34 : vector<1x32x128xbf16> to vector<32x128xbf16>
    %cst_28 = arith.constant dense<0.000000e+00> : vector<72x128xf32>
    %36 = tpu.matmul %33, %35, %cst_28 {dimension_numbers = #tpu.dot_dimension_numbers<[1], [0], [0], [1], [0, 0, 1, 1], [], []>} : vector<72x32xbf16>, vector<32x128xbf16>, vector<72x128xf32> -> vector<72x128xf32>
    %37 = arith.addf %31, %36 : vector<72x128xf32>
    %c3 = arith.constant 3 : index
    %c0_29 = arith.constant 0 : index
    %38 = vector.load %arg9[%c3, %c0_29] : memref<88x32xf32, #tpu.memory_space<vmem>>, vector<72x32xf32>
    %39 = arith.truncf %38 : vector<72x32xf32> to vector<72x32xbf16>
    %c2_30 = arith.constant 2 : index
    %c0_31 = arith.constant 0 : index
    %c0_32 = arith.constant 0 : index
    %40 = vector.load %arg7[%c2_30, %c0_31, %c0_32] : memref<9x32x128xbf16, #tpu.memory_space<vmem>>, vector<1x32x128xbf16>
    %41 = vector.shape_cast %40 : vector<1x32x128xbf16> to vector<32x128xbf16>
    %cst_33 = arith.constant dense<0.000000e+00> : vector<72x128xf32>
    %42 = tpu.matmul %39, %41, %cst_33 {dimension_numbers = #tpu.dot_dimension_numbers<[1], [0], [0], [1], [0, 0, 1, 1], [], []>} : vector<72x32xbf16>, vector<32x128xbf16>, vector<72x128xf32> -> vector<72x128xf32>
    %43 = arith.addf %37, %42 : vector<72x128xf32>
    %c7 = arith.constant 7 : index
    %c0_34 = arith.constant 0 : index
    %44 = vector.load %arg9[%c7, %c0_34] : memref<88x32xf32, #tpu.memory_space<vmem>>, vector<72x32xf32>
    %45 = arith.truncf %44 : vector<72x32xf32> to vector<72x32xbf16>
    %c3_35 = arith.constant 3 : index
    %c0_36 = arith.constant 0 : index
    %c0_37 = arith.constant 0 : index
    %46 = vector.load %arg7[%c3_35, %c0_36, %c0_37] : memref<9x32x128xbf16, #tpu.memory_space<vmem>>, vector<1x32x128xbf16>
    %47 = vector.shape_cast %46 : vector<1x32x128xbf16> to vector<32x128xbf16>
    %cst_38 = arith.constant dense<0.000000e+00> : vector<72x128xf32>
    %48 = tpu.matmul %45, %47, %cst_38 {dimension_numbers = #tpu.dot_dimension_numbers<[1], [0], [0], [1], [0, 0, 1, 1], [], []>} : vector<72x32xbf16>, vector<32x128xbf16>, vector<72x128xf32> -> vector<72x128xf32>
    %49 = arith.addf %43, %48 : vector<72x128xf32>
    %c8_39 = arith.constant 8 : index
    %c0_40 = arith.constant 0 : index
    %50 = vector.load %arg9[%c8_39, %c0_40] : memref<88x32xf32, #tpu.memory_space<vmem>>, vector<72x32xf32>
    %51 = arith.truncf %50 : vector<72x32xf32> to vector<72x32xbf16>
    %c4 = arith.constant 4 : index
    %c0_41 = arith.constant 0 : index
    %c0_42 = arith.constant 0 : index
    %52 = vector.load %arg7[%c4, %c0_41, %c0_42] : memref<9x32x128xbf16, #tpu.memory_space<vmem>>, vector<1x32x128xbf16>
    %53 = vector.shape_cast %52 : vector<1x32x128xbf16> to vector<32x128xbf16>
    %cst_43 = arith.constant dense<0.000000e+00> : vector<72x128xf32>
    %54 = tpu.matmul %51, %53, %cst_43 {dimension_numbers = #tpu.dot_dimension_numbers<[1], [0], [0], [1], [0, 0, 1, 1], [], []>} : vector<72x32xbf16>, vector<32x128xbf16>, vector<72x128xf32> -> vector<72x128xf32>
    %55 = arith.addf %49, %54 : vector<72x128xf32>
    %c9 = arith.constant 9 : index
    %c0_44 = arith.constant 0 : index
    %56 = vector.load %arg9[%c9, %c0_44] : memref<88x32xf32, #tpu.memory_space<vmem>>, vector<72x32xf32>
    %57 = arith.truncf %56 : vector<72x32xf32> to vector<72x32xbf16>
    %c5 = arith.constant 5 : index
    %c0_45 = arith.constant 0 : index
    %c0_46 = arith.constant 0 : index
    %58 = vector.load %arg7[%c5, %c0_45, %c0_46] : memref<9x32x128xbf16, #tpu.memory_space<vmem>>, vector<1x32x128xbf16>
    %59 = vector.shape_cast %58 : vector<1x32x128xbf16> to vector<32x128xbf16>
    %cst_47 = arith.constant dense<0.000000e+00> : vector<72x128xf32>
    %60 = tpu.matmul %57, %59, %cst_47 {dimension_numbers = #tpu.dot_dimension_numbers<[1], [0], [0], [1], [0, 0, 1, 1], [], []>} : vector<72x32xbf16>, vector<32x128xbf16>, vector<72x128xf32> -> vector<72x128xf32>
    %61 = arith.addf %55, %60 : vector<72x128xf32>
    %c13 = arith.constant 13 : index
    %c0_48 = arith.constant 0 : index
    %62 = vector.load %arg9[%c13, %c0_48] : memref<88x32xf32, #tpu.memory_space<vmem>>, vector<72x32xf32>
    %63 = arith.truncf %62 : vector<72x32xf32> to vector<72x32xbf16>
    %c6 = arith.constant 6 : index
    %c0_49 = arith.constant 0 : index
    %c0_50 = arith.constant 0 : index
    %64 = vector.load %arg7[%c6, %c0_49, %c0_50] : memref<9x32x128xbf16, #tpu.memory_space<vmem>>, vector<1x32x128xbf16>
    %65 = vector.shape_cast %64 : vector<1x32x128xbf16> to vector<32x128xbf16>
    %cst_51 = arith.constant dense<0.000000e+00> : vector<72x128xf32>
    %66 = tpu.matmul %63, %65, %cst_51 {dimension_numbers = #tpu.dot_dimension_numbers<[1], [0], [0], [1], [0, 0, 1, 1], [], []>} : vector<72x32xbf16>, vector<32x128xbf16>, vector<72x128xf32> -> vector<72x128xf32>
    %67 = arith.addf %61, %66 : vector<72x128xf32>
    %c14 = arith.constant 14 : index
    %c0_52 = arith.constant 0 : index
    %68 = vector.load %arg9[%c14, %c0_52] : memref<88x32xf32, #tpu.memory_space<vmem>>, vector<72x32xf32>
    %69 = arith.truncf %68 : vector<72x32xf32> to vector<72x32xbf16>
    %c7_53 = arith.constant 7 : index
    %c0_54 = arith.constant 0 : index
    %c0_55 = arith.constant 0 : index
    %70 = vector.load %arg7[%c7_53, %c0_54, %c0_55] : memref<9x32x128xbf16, #tpu.memory_space<vmem>>, vector<1x32x128xbf16>
    %71 = vector.shape_cast %70 : vector<1x32x128xbf16> to vector<32x128xbf16>
    %cst_56 = arith.constant dense<0.000000e+00> : vector<72x128xf32>
    %72 = tpu.matmul %69, %71, %cst_56 {dimension_numbers = #tpu.dot_dimension_numbers<[1], [0], [0], [1], [0, 0, 1, 1], [], []>} : vector<72x32xbf16>, vector<32x128xbf16>, vector<72x128xf32> -> vector<72x128xf32>
    %73 = arith.addf %67, %72 : vector<72x128xf32>
    %c15 = arith.constant 15 : index
    %c0_57 = arith.constant 0 : index
    %74 = vector.load %arg9[%c15, %c0_57] : memref<88x32xf32, #tpu.memory_space<vmem>>, vector<72x32xf32>
    %75 = arith.truncf %74 : vector<72x32xf32> to vector<72x32xbf16>
    %c8_58 = arith.constant 8 : index
    %c0_59 = arith.constant 0 : index
    %c0_60 = arith.constant 0 : index
    %76 = vector.load %arg7[%c8_58, %c0_59, %c0_60] : memref<9x32x128xbf16, #tpu.memory_space<vmem>>, vector<1x32x128xbf16>
    %77 = vector.shape_cast %76 : vector<1x32x128xbf16> to vector<32x128xbf16>
    %cst_61 = arith.constant dense<0.000000e+00> : vector<72x128xf32>
    %78 = tpu.matmul %75, %77, %cst_61 {dimension_numbers = #tpu.dot_dimension_numbers<[1], [0], [0], [1], [0, 0, 1, 1], [], []>} : vector<72x32xbf16>, vector<32x128xbf16>, vector<72x128xf32> -> vector<72x128xf32>
    %79 = arith.addf %73, %78 : vector<72x128xf32>
    %c0_62 = arith.constant 0 : index
    %c0_63 = arith.constant 0 : index
    %80 = vector.load %arg8[%c0_62, %c0_63] : memref<72x128xf32, #tpu.memory_space<vmem>>, vector<72x128xf32>
    tpu.vector_store %arg8[%c0_62, %c0_63], %79 {strides = array<i32>} : memref<72x128xf32, #tpu.memory_space<vmem>>, vector<72x128xf32>,
    return
  }
}

module attributes {stable_mosaic.version = 11 : i64} {
  func.func @kernel(%arg0: i32, %arg1: memref<2x16x128xf32, #tpu.memory_space<vmem>>, %arg2: memref<1x128xf32, #tpu.memory_space<vmem>>, %arg3: memref<1x128xf32, #tpu.memory_space<vmem>>, %arg4: memref<128x128xbf16, #tpu.memory_space<vmem>>, %arg5: memref<1x128xf32, #tpu.memory_space<vmem>>, %arg6: memref<2x128xf32, #tpu.memory_space<vmem>>, %arg7: memref<2x128xf32, #tpu.memory_space<vmem>>) attributes {dimension_semantics = [#tpu.dimension_semantics<arbitrary>], iteration_bounds = array<i64: 1>, scalar_prefetch = 0 : i64, scratch_operands = 1 : i64, tpu.core_type = #tpu.core_type<tc>, window_params = [{transform_indices = @transform_0, window_bounds = array<i64: 2, 16, 128>}, {pipeline_mode = #tpu.pipeline_mode<synchronous>, transform_indices = @transform_1, window_bounds = array<i64: 1, 128>}, {pipeline_mode = #tpu.pipeline_mode<synchronous>, transform_indices = @transform_2, window_bounds = array<i64: 1, 128>}, {pipeline_mode = #tpu.pipeline_mode<synchronous>, transform_indices = @transform_3, window_bounds = array<i64: 128, 128>}, {pipeline_mode = #tpu.pipeline_mode<synchronous>, transform_indices = @transform_4, window_bounds = array<i64: 1, 128>}, {pipeline_mode = #tpu.pipeline_mode<synchronous>, transform_indices = @transform_5, window_bounds = array<i64: 2, 128>}]} {
    %c0_i32 = arith.constant 0 : i32
    %0 = arith.cmpi eq, %arg0, %c0_i32 : i32
    %1 = arith.extui %0 : i1 to i32
    %c0_i32_0 = arith.constant 0 : i32
    %2 = arith.cmpi ne, %1, %c0_i32_0 : i32
    scf.if %2 {
      %cst_14 = arith.constant 0.000000e+00 : f32
      %21 = vector.broadcast %cst_14 : f32 to vector<2x128xf32>
      %c0_15 = arith.constant 0 : index
      %c0_16 = arith.constant 0 : index
      %22 = vector.load %arg7[%c0_15, %c0_16] : memref<2x128xf32, #tpu.memory_space<vmem>>, vector<2x128xf32>
      tpu.vector_store %arg7[%c0_15, %c0_16], %21 {strides = array<i32>} : memref<2x128xf32, #tpu.memory_space<vmem>>, vector<2x128xf32>,
    } else {
    }
    %c0 = arith.constant 0 : index
    %c0_1 = arith.constant 0 : index
    %c0_2 = arith.constant 0 : index
    %3 = vector.load %arg1[%c0, %c0_1, %c0_2] : memref<2x16x128xf32, #tpu.memory_space<vmem>>, vector<2x16x128xf32>
    %c0_3 = arith.constant 0 : index
    %c0_4 = arith.constant 0 : index
    %4 = vector.load %arg2[%c0_3, %c0_4] : memref<1x128xf32, #tpu.memory_space<vmem>>, vector<1x128xf32>
    %5 = vector.shape_cast %4 : vector<1x128xf32> to vector<1x1x128xf32>
    %6 = vector.broadcast %5 : vector<1x1x128xf32> to vector<2x16x128xf32>
    %7 = arith.mulf %3, %6 : vector<2x16x128xf32>
    %c0_5 = arith.constant 0 : index
    %c0_6 = arith.constant 0 : index
    %8 = vector.load %arg3[%c0_5, %c0_6] : memref<1x128xf32, #tpu.memory_space<vmem>>, vector<1x128xf32>
    %9 = vector.shape_cast %8 : vector<1x128xf32> to vector<1x1x128xf32>
    %10 = vector.broadcast %9 : vector<1x1x128xf32> to vector<2x16x128xf32>
    %11 = arith.addf %7, %10 : vector<2x16x128xf32>
    %cst = arith.constant 0.000000e+00 : f32
    %12 = vector.broadcast %cst : f32 to vector<2x16x128xf32>
    %13 = arith.maximumf %11, %12 : vector<2x16x128xf32>
    %c0_7 = arith.constant 0 : index
    %c0_8 = arith.constant 0 : index
    %14 = vector.load %arg7[%c0_7, %c0_8] : memref<2x128xf32, #tpu.memory_space<vmem>>, vector<2x128xf32>
    %cst_9 = arith.constant dense<0.000000e+00> : vector<2x128xf32>
    %15 = vector.multi_reduction <add>, %13, %cst_9 [1] : vector<2x16x128xf32> to vector<2x128xf32>
    %16 = arith.addf %14, %15 : vector<2x128xf32>
    %c0_10 = arith.constant 0 : index
    %c0_11 = arith.constant 0 : index
    %17 = vector.load %arg7[%c0_10, %c0_11] : memref<2x128xf32, #tpu.memory_space<vmem>>, vector<2x128xf32>
    tpu.vector_store %arg7[%c0_10, %c0_11], %16 {strides = array<i32>} : memref<2x128xf32, #tpu.memory_space<vmem>>, vector<2x128xf32>,
    %c0_i32_12 = arith.constant 0 : i32
    %18 = arith.cmpi eq, %arg0, %c0_i32_12 : i32
    %19 = arith.extui %18 : i1 to i32
    %c0_i32_13 = arith.constant 0 : i32
    %20 = arith.cmpi ne, %19, %c0_i32_13 : i32
    scf.if %20 {
      %c0_14 = arith.constant 0 : index
      %c0_15 = arith.constant 0 : index
      %21 = vector.load %arg7[%c0_14, %c0_15] : memref<2x128xf32, #tpu.memory_space<vmem>>, vector<2x128xf32>
      %cst_16 = arith.constant 6.250000e-02 : f32
      %22 = vector.broadcast %cst_16 : f32 to vector<2x128xf32>
      %23 = arith.mulf %21, %22 : vector<2x128xf32>
      %24 = arith.truncf %23 : vector<2x128xf32> to vector<2x128xbf16>
      %c0_17 = arith.constant 0 : index
      %c0_18 = arith.constant 0 : index
      %25 = vector.load %arg4[%c0_17, %c0_18] : memref<128x128xbf16, #tpu.memory_space<vmem>>, vector<128x128xbf16>
      %cst_19 = arith.constant dense<0.000000e+00> : vector<2x128xf32>
      %26 = tpu.matmul %24, %25, %cst_19 {dimension_numbers = #tpu.dot_dimension_numbers<[1], [0], [0], [1], [0, 0, 1, 1], [], []>} : vector<2x128xbf16>, vector<128x128xbf16>, vector<2x128xf32> -> vector<2x128xf32>
      %c0_20 = arith.constant 0 : index
      %c0_21 = arith.constant 0 : index
      %27 = vector.load %arg5[%c0_20, %c0_21] : memref<1x128xf32, #tpu.memory_space<vmem>>, vector<1x128xf32>
      %28 = vector.broadcast %27 : vector<1x128xf32> to vector<2x128xf32>
      %29 = arith.addf %26, %28 : vector<2x128xf32>
      %c0_22 = arith.constant 0 : index
      %c0_23 = arith.constant 0 : index
      %30 = vector.load %arg6[%c0_22, %c0_23] : memref<2x128xf32, #tpu.memory_space<vmem>>, vector<2x128xf32>
      tpu.vector_store %arg6[%c0_22, %c0_23], %29 {strides = array<i32>} : memref<2x128xf32, #tpu.memory_space<vmem>>, vector<2x128xf32>,
    } else {
    }
    return
  }
  func.func @transform_0(%arg0: i32) -> (i32, i32, i32) {
    %c0_i32 = arith.constant 0 : i32
    %c0_i32_0 = arith.constant 0 : i32
    %c0_i32_1 = arith.constant 0 : i32
    return %c0_i32, %arg0, %c0_i32_0 : i32, i32, i32
  }
  func.func @transform_1(%arg0: i32) -> (i32, i32) {
    %c0_i32 = arith.constant 0 : i32
    %c0_i32_0 = arith.constant 0 : i32
    %c0_i32_1 = arith.constant 0 : i32
    return %c0_i32, %c0_i32_0 : i32, i32
  }
  func.func @transform_2(%arg0: i32) -> (i32, i32) {
    %c0_i32 = arith.constant 0 : i32
    %c0_i32_0 = arith.constant 0 : i32
    %c0_i32_1 = arith.constant 0 : i32
    return %c0_i32, %c0_i32_0 : i32, i32
  }
  func.func @transform_3(%arg0: i32) -> (i32, i32) {
    %c0_i32 = arith.constant 0 : i32
    %c0_i32_0 = arith.constant 0 : i32
    %c0_i32_1 = arith.constant 0 : i32
    return %c0_i32, %c0_i32_0 : i32, i32
  }
  func.func @transform_4(%arg0: i32) -> (i32, i32) {
    %c0_i32 = arith.constant 0 : i32
    %c0_i32_0 = arith.constant 0 : i32
    %c0_i32_1 = arith.constant 0 : i32
    return %c0_i32, %c0_i32_0 : i32, i32
  }
  func.func @transform_5(%arg0: i32) -> (i32, i32) {
    %c0_i32 = arith.constant 0 : i32
    %c0_i32_0 = arith.constant 0 : i32
    %c0_i32_1 = arith.constant 0 : i32
    return %c0_i32, %c0_i32_0 : i32, i32
  }
}

</mosaic_0001>

<llo_original>
// kernel: rsna24_forward.7
$region0: #{rsna24_forward.7}
  #allocation0 [shape = 'u32[]', space=smem, size = 0x4, offset = 0x4, fixed_abs, tag = 'smem constant byte address 0x4 - core index']
  #allocation1 [shape = 'u32[72,128]{1,0:T(1,128)}', space=vmem, size = 0x9000, scoped, tag = 'internal scratch']
  %s0 = inlined_call_operand.vmem [shape: bf16[512,1568], index: 0, kind: input, shape index: {}]
  %s1 = inlined_call_operand.vmem [shape: bf16[1568,128], index: 1, kind: input, shape index: {}]
  %s2 = inlined_call_operand.vmem [shape: f32[1,128], index: 2, kind: input, shape index: {}]
  %s3 = inlined_call_operand.vmem [shape: f32[1,128], index: 3, kind: input, shape index: {}]
  %s4 = inlined_call_operand.vmem [shape: f32[512,128], index: 4, kind: output, shape index: {}]
  %s5 = sld [smem:[#allocation0]]
  $region49: #{rsna24_forward.7} parent=0
    _
  %s7 = ssub.s32 1, %s5
  %s8 = scalar_select 0, %s7, %s5
  loop: start=0, step=1, limit=4
  $region2: #{rsna24_forward.7} parent=0 // loop_pre_header
    _
  $region3: #{rsna24_forward.7} parent=0 // loop_header
    %s10 = sphi 0, %s14
    %p11 = scmp.ge.s32.totalorder %s10, 4
    %s20 = sphi 0, %s22
    %s23 = sphi 0, %s20
    %s24 = sphi 0, %s23
    %s40 = sphi 0, %s24
    %s44 = sphi 0, %s44
    %s46 = sphi 0, %s44
    %s47 = sphi 0, %s46
    %s61 = sphi 0, %s47
    %s65 = sphi 0, %s65
    %s67 = sphi 0, %s65
    %s68 = sphi 0, %s67
    %s82 = sphi 0, %s68
    %s86 = sphi 0, %s86
    %s88 = sphi 0, %s86
    %s89 = sphi 0, %s88
    %s103 = sphi 0, %s89
    %s109 = sphi 0, %s111
    %s112 = sphi 0, %s109
    %s113 = sphi 0, %s112
    %s129 = sphi 0, %s113
  $region4: #{rsna24_forward.7} parent=0 // loop_header_branch
    %13 = sbr.rel (%p11) target = $region8
  $region5: #{rsna24_forward.7} parent=0 // loop_body
    %s15 = ssub.s32 %s10, 1
    %s16 = ssub.s32 %s10, 2
    %s17 = sadd.s32 %s10, 1
    %s18 = ssub.s32 %s10, %s17
    %p19 = scmp.eq.s32.totalorder %s18, 0
    %s21 = sadd.s32 %s20, 1
    %s22 = scalar_select %p19, %s20, %s21
    %p25 = pneg %p19
    %p26 = scmp.eq.s32.totalorder %s10, 1
    %p27 = por %p25, %p26
    %p28 = scmp.ne.s32.totalorder %s20, %s23
    %p29 = scmp.eq.s32.totalorder %s10, 0
    %p30 = por %p28, %p29
    %p31 = scmp.ne.s32.totalorder %s20, %s23
    %p32 = scmp.eq.s32.totalorder %s15, 1
    %p33 = por %p31, %p32
    %p34 = scmp.ne.s32.totalorder %s23, %s24
    %p35 = scmp.eq.s32.totalorder %s15, 0
    %p36 = por %p34, %p35
    %p37 = scmp.ne.s32.totalorder %s23, %s24
    %p38 = scmp.eq.s32.totalorder %s16, 1
    %p39 = por %p37, %p38
    %p41 = scmp.ne.s32.totalorder %s24, %s40
    %p42 = scmp.eq.s32.totalorder %s16, 0
    %p43 = por %p41, %p42
    %s45 = sadd.s32 %s44, 1
    %p48 = scmp.eq.s32.totalorder %s10, 1
    %p49 = scmp.ne.s32.totalorder %s44, %s46
    %p50 = scmp.eq.s32.totalorder %s10, 0
    %p51 = por %p49, %p50
    %p52 = scmp.ne.s32.totalorder %s44, %s46
    %p53 = scmp.eq.s32.totalorder %s15, 1
    %p54 = por %p52, %p53
    %p55 = scmp.ne.s32.totalorder %s46, %s47
    %p56 = scmp.eq.s32.totalorder %s15, 0
    %p57 = por %p55, %p56
    %p58 = scmp.ne.s32.totalorder %s46, %s47
    %p59 = scmp.eq.s32.totalorder %s16, 1
    %p60 = por %p58, %p59
    %p62 = scmp.ne.s32.totalorder %s47, %s61
    %p63 = scmp.eq.s32.totalorder %s16, 0
    %p64 = por %p62, %p63
    %s66 = sadd.s32 %s65, 1
    %p69 = scmp.eq.s32.totalorder %s10, 1
    %p70 = scmp.ne.s32.totalorder %s65, %s67
    %p71 = scmp.eq.s32.totalorder %s10, 0
    %p72 = por %p70, %p71
    %p73 = scmp.ne.s32.totalorder %s65, %s67
    %p74 = scmp.eq.s32.totalorder %s15, 1
    %p75 = por %p73, %p74
    %p76 = scmp.ne.s32.totalorder %s67, %s68
    %p77 = scmp.eq.s32.totalorder %s15, 0
    %p78 = por %p76, %p77
    %p79 = scmp.ne.s32.totalorder %s67, %s68
    %p80 = scmp.eq.s32.totalorder %s16, 1
    %p81 = por %p79, %p80
    %p83 = scmp.ne.s32.totalorder %s68, %s82
    %p84 = scmp.eq.s32.totalorder %s16, 0
    %p85 = por %p83, %p84
    %s87 = sadd.s32 %s86, 1
    %p90 = scmp.eq.s32.totalorder %s10, 1
    %p91 = scmp.ne.s32.totalorder %s86, %s88
    %p92 = scmp.eq.s32.totalorder %s10, 0
    %p93 = por %p91, %p92
    %p94 = scmp.ne.s32.totalorder %s86, %s88
    %p95 = scmp.eq.s32.totalorder %s15, 1
    %p96 = por %p94, %p95
    %p97 = scmp.ne.s32.totalorder %s88, %s89
    %p98 = scmp.eq.s32.totalorder %s15, 0
    %p99 = por %p97, %p98
    %p100 = scmp.ne.s32.totalorder %s88, %s89
    %p101 = scmp.eq.s32.totalorder %s16, 1
    %p102 = por %p100, %p101
    %p104 = scmp.ne.s32.totalorder %s89, %s103
    %p105 = scmp.eq.s32.totalorder %s16, 0
    %p106 = por %p104, %p105
    %s107 = ssub.s32 %s10, %s17
    %p108 = scmp.eq.s32.totalorder %s107, 0
    %s110 = sadd.s32 %s109, 1
    %s111 = scalar_select %p108, %s109, %s110
    %p114 = pneg %p108
    %p115 = scmp.eq.s32.totalorder %s10, 1
    %p116 = por %p114, %p115
    %p117 = scmp.ne.s32.totalorder %s109, %s112
    %p118 = scmp.eq.s32.totalorder %s10, 0
    %p119 = por %p117, %p118
    %p120 = scmp.ne.s32.totalorder %s109, %s112
    %p121 = scmp.eq.s32.totalorder %s15, 1
    %p122 = por %p120, %p121
    %p123 = scmp.ne.s32.totalorder %s112, %s113
    %p124 = scmp.eq.s32.totalorder %s15, 0
    %p125 = por %p123, %p124
    %p126 = scmp.ne.s32.totalorder %s112, %s113
    %p127 = scmp.eq.s32.totalorder %s16, 1
    %p128 = por %p126, %p127
    %p130 = scmp.ne.s32.totalorder %s113, %s129
    %p131 = scmp.eq.s32.totalorder %s16, 0
    %p132 = por %p130, %p131
    %p133 = scmp.le.s32.totalorder 1, %s10
    %p134 = scmp.lt.s32.totalorder %s10, 3
    %p135 = pnand %p133, %p134
    %p136 = pneg %p135
    // Predicated region
    $region9: #{rsna24_forward.7} parent=5 // pred_check
      _
    $region10: #{rsna24_forward.7} parent=5 // pred_check_branch
      %138 = sbr.rel (%p135) target = $region12
    $region11: #{rsna24_forward.7} parent=5 // pred_region
      %s139 = ssub.s32 %s10, 1
      // Predicated region
      $region13: #{rsna24_forward.7} parent=11 // pred_check
        %p140 = pneg %p57
      $region14: #{rsna24_forward.7} parent=11 // pred_check_branch
        %142 = sbr.rel (%p140) target = $region16
      $region15: #{rsna24_forward.7} parent=11 // pred_region
        _
      $region16: #{rsna24_forward.7} parent=11 // pred_fallthru
        _
      // Predicated region
      $region17: #{rsna24_forward.7} parent=11 // pred_check
        %p143 = pneg %p78
      $region18: #{rsna24_forward.7} parent=11 // pred_check_branch
        %145 = sbr.rel (%p143) target = $region20
      $region19: #{rsna24_forward.7} parent=11 // pred_region
        _
      $region20: #{rsna24_forward.7} parent=11 // pred_fallthru
        _
      // Predicated region
      $region21: #{rsna24_forward.7} parent=11 // pred_check
        %p146 = pneg %p99
      $region22: #{rsna24_forward.7} parent=11 // pred_check_branch
        %148 = sbr.rel (%p146) target = $region24
      $region23: #{rsna24_forward.7} parent=11 // pred_region
        _
      $region24: #{rsna24_forward.7} parent=11 // pred_fallthru
        _
    $region12: #{rsna24_forward.7} parent=5 // pred_fallthru
      _
    %p149 = scmp.lt.s32.totalorder %s10, 2
    // Predicated region
    $region25: #{rsna24_forward.7} parent=5 // pred_check
      %p150 = pneg %p149
    $region26: #{rsna24_forward.7} parent=5 // pred_check_branch
      %152 = sbr.rel (%p150) target = $region28
    $region27: #{rsna24_forward.7} parent=5 // pred_region
      // Predicated region
      $region29: #{rsna24_forward.7} parent=27 // pred_check
        %p153 = pneg %p30
      $region30: #{rsna24_forward.7} parent=27 // pred_check_branch
        %155 = sbr.rel (%p153) target = $region32
      $region31: #{rsna24_forward.7} parent=27 // pred_region
        %s156 = smul.u32 32, %s10
        %p157 = scmp.lt.s32.totalorder %s156, 63
        %s158 = scalar_select %p157, %s156, 63
        %s159 = smul.addr %s158, 13
        %s160 = smul.addr %s159, 4
        %s161 = scalar_lea.vmem %s0, %s160
        %s162 = smul.u32 32, %s10
      $region32: #{rsna24_forward.7} parent=27 // pred_fallthru
        _
    $region28: #{rsna24_forward.7} parent=5 // pred_fallthru
      _
    %p163 = scmp.le.s32.totalorder 1, %s10
    %p164 = scmp.lt.s32.totalorder %s10, 3
    %p165 = pnand %p163, %p164
    %p166 = pneg %p165
    // Predicated region
    $region33: #{rsna24_forward.7} parent=5 // pred_check
      _
    $region34: #{rsna24_forward.7} parent=5 // pred_check_branch
      %168 = sbr.rel (%p165) target = $region36
    $region35: #{rsna24_forward.7} parent=5 // pred_region
      %s169 = ssub.s32 %s10, 1
      %s170 = smul.u32 32, %s15
      %p171 = scmp.lt.s32.totalorder %s170, 63
      %s172 = scalar_select %p171, %s170, 63
      %s173 = smul.addr %s172, 13
      %s174 = smul.addr %s173, 4
      %s175 = scalar_lea.vmem %s0, %s174
      %p176 = pneg %p36
      %p177 = pneg %p33
      %p178 = pneg %p57
      %p179 = pneg %p54
      %p180 = pneg %p78
      %p181 = pneg %p75
      %p182 = pneg %p99
      %p183 = pneg %p96
      %p184 = pneg %p125
      %p185 = pneg %p122
      %s186 = smul.u32 32, %s15
      %p187 = scmp.lt.s32.totalorder %s186, 63
      %s188 = scalar_select %p187, %s186, 63
      %s189 = smul.addr %s188, 8
      %s190 = scalar_lea.vmem %s4, %s189
      %s191 = smul.u32 32, %s15
      %p192 = scmp.lt.s32.totalorder %s191, 63
      %s193 = scalar_select %p192, %s191, 63
      %s194 = smul.addr %s193, 13
      %s195 = smul.addr %s194, 4
      %s196 = scalar_lea.vmem %s0, %s195
      %s197 = smul.u32 32, %s15
      %s198 = smul.u32 32, %s15
      %p199 = scmp.lt.s32.totalorder %s198, 63
      %s200 = scalar_select %p199, %s198, 63
      %s201 = smul.addr %s200, 8
      %s202 = scalar_lea.vmem %s4, %s201
      %s203 = smul.u32 32, %s15
      %v205 = vld [vmem:[%s196] sm:$0xff]
      %v206 = vld [vmem:[%s196 + $0x8] sm:$0xff]
      %v207 = vld [vmem:[%s196 + $0x10] sm:$0xff]
      %v208 = vld [vmem:[%s196 + $0x18] sm:$0xff]
      %v209 = vld [vmem:[%s196 + $0x20] sm:$0xff]
      %v210 = vld [vmem:[%s196 + $0x28] sm:$0xff]
      %v211 = vld [vmem:[%s196 + $0x30] sm:$0xf]
      %v212 = vld [vmem:[%s196 + $0x34] sm:$0xff]
      %v213 = vld [vmem:[%s196 + $0x3c] sm:$0xff]
      %v214 = vld [vmem:[%s196 + $0x44] sm:$0xff]
      %v215 = vld [vmem:[%s196 + $0x4c] sm:$0xff]
      %v216 = vld [vmem:[%s196 + $0x54] sm:$0xff]
      %v217 = vld [vmem:[%s196 + $0x5c] sm:$0xff]
      %v218 = vld [vmem:[%s196 + $0x64] sm:$0xf]
      %v219 = vld [vmem:[%s196 + $0x68] sm:$0xff]
      %v220 = vld [vmem:[%s196 + $0x70] sm:$0xff]
      %v221 = vld [vmem:[%s196 + $0x78] sm:$0xff]
      %v222 = vld [vmem:[%s196 + $0x80] sm:$0xff]
      %v223 = vld [vmem:[%s196 + $0x88] sm:$0xff]
      %v224 = vld [vmem:[%s196 + $0x90] sm:$0xff]
      %v225 = vld [vmem:[%s196 + $0x98] sm:$0xf]
      %v226 = vld [vmem:[%s196 + $0x9c] sm:$0xff]
      %v227 = vld [vmem:[%s196 + $0xa4] sm:$0xff]
      %v228 = vld [vmem:[%s196 + $0xac] sm:$0xff]
      %v229 = vld [vmem:[%s196 + $0xb4] sm:$0xff]
      %v230 = vld [vmem:[%s196 + $0xbc] sm:$0xff]
      %v231 = vld [vmem:[%s196 + $0xc4] sm:$0xff]
      %v232 = vld [vmem:[%s196 + $0xcc] sm:$0xf]
      %v233 = vld [vmem:[%s196 + $0xd0] sm:$0xff]
      %v234 = vld [vmem:[%s196 + $0xd8] sm:$0xff]
      %v235 = vld [vmem:[%s196 + $0xe0] sm:$0xff]
      %v236 = vld [vmem:[%s196 + $0xe8] sm:$0xff]
      %v237 = vld [vmem:[%s196 + $0xf0] sm:$0xff]
      %v238 = vld [vmem:[%s196 + $0xf8] sm:$0xff]
      %v239 = vld [vmem:[%s196 + $0x100] sm:$0xf]
      %v240 = vld [vmem:[%s196 + $0x104] sm:$0xff]
      %v241 = vld [vmem:[%s196 + $0x10c] sm:$0xff]
      %v242 = vld [vmem:[%s196 + $0x114] sm:$0xff]
      %v243 = vld [vmem:[%s196 + $0x11c] sm:$0xff]
      %v244 = vld [vmem:[%s196 + $0x124] sm:$0xff]
      %v245 = vld [vmem:[%s196 + $0x12c] sm:$0xff]
      %v246 = vld [vmem:[%s196 + $0x134] sm:$0xf]
      %v247 = vld [vmem:[%s196 + $0x138] sm:$0xff]
      %v248 = vld [vmem:[%s196 + $0x140] sm:$0xff]
      %v249 = vld [vmem:[%s196 + $0x148] sm:$0xff]
      %v250 = vld [vmem:[%s196 + $0x150] sm:$0xff]
      %v251 = vld [vmem:[%s196 + $0x158] sm:$0xff]
      %v252 = vld [vmem:[%s196 + $0x160] sm:$0xff]
      %v253 = vld [vmem:[%s196 + $0x168] sm:$0xf]
      %v254 = vld [vmem:[%s196 + $0x16c] sm:$0xff]
      %v255 = vld [vmem:[%s196 + $0x174] sm:$0xff]
      %v256 = vld [vmem:[%s196 + $0x17c] sm:$0xff]
      %v257 = vld [vmem:[%s196 + $0x184] sm:$0xff]
      %v258 = vld [vmem:[%s196 + $0x18c] sm:$0xff]
      %v259 = vld [vmem:[%s196 + $0x194] sm:$0xff]
      %v260 = vld [vmem:[%s196 + $0x19c] sm:$0xf]
      %v261 = vld [vmem:[%s196 + $0x1a0] sm:$0xff]
      %v262 = vld [vmem:[%s196 + $0x1a8] sm:$0xff]
      %v263 = vld [vmem:[%s196 + $0x1b0] sm:$0xff]
      %v264 = vld [vmem:[%s196 + $0x1b8] sm:$0xff]
      %v265 = vld [vmem:[%s196 + $0x1c0] sm:$0xff]
      %v266 = vld [vmem:[%s196 + $0x1c8] sm:$0xff]
      %v267 = vld [vmem:[%s196 + $0x1d0] sm:$0xf]
      %v268 = vld [vmem:[%s196 + $0x1d4] sm:$0xff]
      %v269 = vld [vmem:[%s196 + $0x1dc] sm:$0xff]
      %v270 = vld [vmem:[%s196 + $0x1e4] sm:$0xff]
      %v271 = vld [vmem:[%s196 + $0x1ec] sm:$0xff]
      %v272 = vld [vmem:[%s196 + $0x1f4] sm:$0xff]
      %v273 = vld [vmem:[%s196 + $0x1fc] sm:$0xff]
      %v274 = vld [vmem:[%s196 + $0x204] sm:$0xf]
      %v275 = vld [vmem:[%s196 + $0x208] sm:$0xff]
      %v276 = vld [vmem:[%s196 + $0x210] sm:$0xff]
      %v277 = vld [vmem:[%s196 + $0x218] sm:$0xff]
      %v278 = vld [vmem:[%s196 + $0x220] sm:$0xff]
      %v279 = vld [vmem:[%s196 + $0x228] sm:$0xff]
      %v280 = vld [vmem:[%s196 + $0x230] sm:$0xff]
      %v281 = vld [vmem:[%s196 + $0x238] sm:$0xf]
      %v282 = vld [vmem:[%s196 + $0x23c] sm:$0xff]
      %v283 = vld [vmem:[%s196 + $0x244] sm:$0xff]
      %v284 = vld [vmem:[%s196 + $0x24c] sm:$0xff]
      %v285 = vld [vmem:[%s196 + $0x254] sm:$0xff]
      %v286 = vld [vmem:[%s196 + $0x25c] sm:$0xff]
      %v287 = vld [vmem:[%s196 + $0x264] sm:$0xff]
      %v288 = vld [vmem:[%s196 + $0x26c] sm:$0xf]
      %v289 = vld [vmem:[%s196 + $0x270] sm:$0xff]
      %v290 = vld [vmem:[%s196 + $0x278] sm:$0xff]
      %v291 = vld [vmem:[%s196 + $0x280] sm:$0xff]
      %v292 = vld [vmem:[%s196 + $0x288] sm:$0xff]
      %v293 = vld [vmem:[%s196 + $0x290] sm:$0xff]
      %v294 = vld [vmem:[%s196 + $0x298] sm:$0xff]
      %v295 = vld [vmem:[%s196 + $0x2a0] sm:$0xf]
      %v296 = vld [vmem:[%s196 + $0x2a4] sm:$0xff]
      %v297 = vld [vmem:[%s196 + $0x2ac] sm:$0xff]
      %v298 = vld [vmem:[%s196 + $0x2b4] sm:$0xff]
      %v299 = vld [vmem:[%s196 + $0x2bc] sm:$0xff]
      %v300 = vld [vmem:[%s196 + $0x2c4] sm:$0xff]
      %v301 = vld [vmem:[%s196 + $0x2cc] sm:$0xff]
      %v302 = vld [vmem:[%s196 + $0x2d4] sm:$0xf]
      %v303 = vld [vmem:[%s196 + $0x2d8] sm:$0xff]
      %v304 = vld [vmem:[%s196 + $0x2e0] sm:$0xff]
      %v305 = vld [vmem:[%s196 + $0x2e8] sm:$0xff]
      %v306 = vld [vmem:[%s196 + $0x2f0] sm:$0xff]
      %v307 = vld [vmem:[%s196 + $0x2f8] sm:$0xff]
      %v308 = vld [vmem:[%s196 + $0x300] sm:$0xff]
      %v309 = vld [vmem:[%s196 + $0x308] sm:$0xf]
      %v310 = vld [vmem:[%s196 + $0x30c] sm:$0xff]
      %v311 = vld [vmem:[%s196 + $0x314] sm:$0xff]
      %v312 = vld [vmem:[%s196 + $0x31c] sm:$0xff]
      %v313 = vld [vmem:[%s196 + $0x324] sm:$0xff]
      %v314 = vld [vmem:[%s196 + $0x32c] sm:$0xff]
      %v315 = vld [vmem:[%s196 + $0x334] sm:$0xff]
      %v316 = vld [vmem:[%s196 + $0x33c] sm:$0xf]
      %v317 = vld [vmem:[%s196 + $0x340] sm:$0xff]
      %v318 = vld [vmem:[%s196 + $0x348] sm:$0xff]
      %v319 = vld [vmem:[%s196 + $0x350] sm:$0xff]
      %v320 = vld [vmem:[%s196 + $0x358] sm:$0xff]
      %v321 = vld [vmem:[%s196 + $0x360] sm:$0xff]
      %v322 = vld [vmem:[%s196 + $0x368] sm:$0xff]
      %v323 = vld [vmem:[%s196 + $0x370] sm:$0xf]
      %v324 = vld [vmem:[%s196 + $0x374] sm:$0xff]
      %v325 = vld [vmem:[%s196 + $0x37c] sm:$0xff]
      %v326 = vld [vmem:[%s196 + $0x384] sm:$0xff]
      %v327 = vld [vmem:[%s196 + $0x38c] sm:$0xff]
      %v328 = vld [vmem:[%s196 + $0x394] sm:$0xff]
      %v329 = vld [vmem:[%s196 + $0x39c] sm:$0xff]
      %v330 = vld [vmem:[%s196 + $0x3a4] sm:$0xf]
      %v331 = vld [vmem:[%s196 + $0x3a8] sm:$0xff]
      %v332 = vld [vmem:[%s196 + $0x3b0] sm:$0xff]
      %v333 = vld [vmem:[%s196 + $0x3b8] sm:$0xff]
      %v334 = vld [vmem:[%s196 + $0x3c0] sm:$0xff]
      %v335 = vld [vmem:[%s196 + $0x3c8] sm:$0xff]
      %v336 = vld [vmem:[%s196 + $0x3d0] sm:$0xff]
      %v337 = vld [vmem:[%s196 + $0x3d8] sm:$0xf]
      %v338 = vld [vmem:[%s196 + $0x3dc] sm:$0xff]
      %v339 = vld [vmem:[%s196 + $0x3e4] sm:$0xff]
      %v340 = vld [vmem:[%s196 + $0x3ec] sm:$0xff]
      %v341 = vld [vmem:[%s196 + $0x3f4] sm:$0xff]
      %v342 = vld [vmem:[%s196 + $0x3fc] sm:$0xff]
      %v343 = vld [vmem:[%s196 + $0x404] sm:$0xff]
      %v344 = vld [vmem:[%s196 + $0x40c] sm:$0xf]
      %v345 = vld [vmem:[%s196 + $0x410] sm:$0xff]
      %v346 = vld [vmem:[%s196 + $0x418] sm:$0xff]
      %v347 = vld [vmem:[%s196 + $0x420] sm:$0xff]
      %v348 = vld [vmem:[%s196 + $0x428] sm:$0xff]
      %v349 = vld [vmem:[%s196 + $0x430] sm:$0xff]
      %v350 = vld [vmem:[%s196 + $0x438] sm:$0xff]
      %v351 = vld [vmem:[%s196 + $0x440] sm:$0xf]
      %v352 = vld [vmem:[%s196 + $0x444] sm:$0xff]
      %v353 = vld [vmem:[%s196 + $0x44c] sm:$0xff]
      %v354 = vld [vmem:[%s196 + $0x454] sm:$0xff]
      %v355 = vld [vmem:[%s196 + $0x45c] sm:$0xff]
      %v356 = vld [vmem:[%s196 + $0x464] sm:$0xff]
      %v357 = vld [vmem:[%s196 + $0x46c] sm:$0xff]
      %v358 = vld [vmem:[%s196 + $0x474] sm:$0xf]
      %v359 = vld [vmem:[%s196 + $0x478] sm:$0xff]
      %v360 = vld [vmem:[%s196 + $0x480] sm:$0xff]
      %v361 = vld [vmem:[%s196 + $0x488] sm:$0xff]
      %v362 = vld [vmem:[%s196 + $0x490] sm:$0xff]
      %v363 = vld [vmem:[%s196 + $0x498] sm:$0xff]
      %v364 = vld [vmem:[%s196 + $0x4a0] sm:$0xff]
      %v365 = vld [vmem:[%s196 + $0x4a8] sm:$0xf]
      %v366 = vld [vmem:[%s196 + $0x4ac] sm:$0xff]
      %v367 = vld [vmem:[%s196 + $0x4b4] sm:$0xff]
      %v368 = vld [vmem:[%s196 + $0x4bc] sm:$0xff]
      %v369 = vld [vmem:[%s196 + $0x4c4] sm:$0xff]
      %v370 = vld [vmem:[%s196 + $0x4cc] sm:$0xff]
      %v371 = vld [vmem:[%s196 + $0x4d4] sm:$0xff]
      %v372 = vld [vmem:[%s196 + $0x4dc] sm:$0xf]
      %v373 = vld [vmem:[%s196 + $0x4e0] sm:$0xff]
      %v374 = vld [vmem:[%s196 + $0x4e8] sm:$0xff]
      %v375 = vld [vmem:[%s196 + $0x4f0] sm:$0xff]
      %v376 = vld [vmem:[%s196 + $0x4f8] sm:$0xff]
      %v377 = vld [vmem:[%s196 + $0x500] sm:$0xff]
      %v378 = vld [vmem:[%s196 + $0x508] sm:$0xff]
      %v379 = vld [vmem:[%s196 + $0x510] sm:$0xf]
      %v380 = vld [vmem:[%s196 + $0x514] sm:$0xff]
      %v381 = vld [vmem:[%s196 + $0x51c] sm:$0xff]
      %v382 = vld [vmem:[%s196 + $0x524] sm:$0xff]
      %v383 = vld [vmem:[%s196 + $0x52c] sm:$0xff]
      %v384 = vld [vmem:[%s196 + $0x534] sm:$0xff]
      %v385 = vld [vmem:[%s196 + $0x53c] sm:$0xff]
      %v386 = vld [vmem:[%s196 + $0x544] sm:$0xf]
      %v387 = vld [vmem:[%s196 + $0x548] sm:$0xff]
      %v388 = vld [vmem:[%s196 + $0x550] sm:$0xff]
      %v389 = vld [vmem:[%s196 + $0x558] sm:$0xff]
      %v390 = vld [vmem:[%s196 + $0x560] sm:$0xff]
      %v391 = vld [vmem:[%s196 + $0x568] sm:$0xff]
      %v392 = vld [vmem:[%s196 + $0x570] sm:$0xff]
      %v393 = vld [vmem:[%s196 + $0x578] sm:$0xf]
      %v394 = vld [vmem:[%s196 + $0x57c] sm:$0xff]
      %v395 = vld [vmem:[%s196 + $0x584] sm:$0xff]
      %v396 = vld [vmem:[%s196 + $0x58c] sm:$0xff]
      %v397 = vld [vmem:[%s196 + $0x594] sm:$0xff]
      %v398 = vld [vmem:[%s196 + $0x59c] sm:$0xff]
      %v399 = vld [vmem:[%s196 + $0x5a4] sm:$0xff]
      %v400 = vld [vmem:[%s196 + $0x5ac] sm:$0xf]
      %v401 = vld [vmem:[%s196 + $0x5b0] sm:$0xff]
      %v402 = vld [vmem:[%s196 + $0x5b8] sm:$0xff]
      %v403 = vld [vmem:[%s196 + $0x5c0] sm:$0xff]
      %v404 = vld [vmem:[%s196 + $0x5c8] sm:$0xff]
      %v405 = vld [vmem:[%s196 + $0x5d0] sm:$0xff]
      %v406 = vld [vmem:[%s196 + $0x5d8] sm:$0xff]
      %v407 = vld [vmem:[%s196 + $0x5e0] sm:$0xf]
      %v408 = vld [vmem:[%s196 + $0x5e4] sm:$0xff]
      %v409 = vld [vmem:[%s196 + $0x5ec] sm:$0xff]
      %v410 = vld [vmem:[%s196 + $0x5f4] sm:$0xff]
      %v411 = vld [vmem:[%s196 + $0x5fc] sm:$0xff]
      %v412 = vld [vmem:[%s196 + $0x604] sm:$0xff]
      %v413 = vld [vmem:[%s196 + $0x60c] sm:$0xff]
      %v414 = vld [vmem:[%s196 + $0x614] sm:$0xf]
      %v415 = vld [vmem:[%s196 + $0x618] sm:$0xff]
      %v416 = vld [vmem:[%s196 + $0x620] sm:$0xff]
      %v417 = vld [vmem:[%s196 + $0x628] sm:$0xff]
      %v418 = vld [vmem:[%s196 + $0x630] sm:$0xff]
      %v419 = vld [vmem:[%s196 + $0x638] sm:$0xff]
      %v420 = vld [vmem:[%s196 + $0x640] sm:$0xff]
      %v421 = vld [vmem:[%s196 + $0x648] sm:$0xf]
      %v422 = vld [vmem:[%s196 + $0x64c] sm:$0xff]
      %v423 = vld [vmem:[%s196 + $0x654] sm:$0xff]
      %v424 = vld [vmem:[%s196 + $0x65c] sm:$0xff]
      %v425 = vld [vmem:[%s196 + $0x664] sm:$0xff]
      %v426 = vld [vmem:[%s196 + $0x66c] sm:$0xff]
      %v427 = vld [vmem:[%s196 + $0x674] sm:$0xff]
      %v428 = vld [vmem:[%s196 + $0x67c] sm:$0xf]
      %v429 = vld [vmem:[%s1] sm:$0xf]
      %v430 = vld [vmem:[%s1 + $0x4] sm:$0xf]
      %v431 = vld [vmem:[%s1 + $0x8] sm:$0xf]
      %v432 = vld [vmem:[%s1 + $0xc] sm:$0xf]
      %v433 = vld [vmem:[%s1 + $0x10] sm:$0xf]
      %v434 = vld [vmem:[%s1 + $0x14] sm:$0xf]
      %v435 = vld [vmem:[%s1 + $0x18] sm:$0xf]
      %v436 = vld [vmem:[%s1 + $0x1c] sm:$0xf]
      %v437 = vld [vmem:[%s1 + $0x20] sm:$0xf]
      %v438 = vld [vmem:[%s1 + $0x24] sm:$0xf]
      %v439 = vld [vmem:[%s1 + $0x28] sm:$0xf]
      %v440 = vld [vmem:[%s1 + $0x2c] sm:$0xf]
      %v441 = vld [vmem:[%s1 + $0x30] sm:$0xf]
      %v442 = vld [vmem:[%s1 + $0x34] sm:$0xf]
      %v443 = vld [vmem:[%s1 + $0x38] sm:$0xf]
      %v444 = vld [vmem:[%s1 + $0x3c] sm:$0xf]
      %v445 = vld [vmem:[%s1 + $0x40] sm:$0xf]
      %v446 = vld [vmem:[%s1 + $0x44] sm:$0xf]
      %v447 = vld [vmem:[%s1 + $0x48] sm:$0xf]
      %v448 = vld [vmem:[%s1 + $0x4c] sm:$0xf]
      %v449 = vld [vmem:[%s1 + $0x50] sm:$0xf]
      %v450 = vld [vmem:[%s1 + $0x54] sm:$0xf]
      %v451 = vld [vmem:[%s1 + $0x58] sm:$0xf]
      %v452 = vld [vmem:[%s1 + $0x5c] sm:$0xf]
      %v453 = vld [vmem:[%s1 + $0x60] sm:$0xf]
      %v454 = vld [vmem:[%s1 + $0x64] sm:$0xf]
      %v455 = vld [vmem:[%s1 + $0x68] sm:$0xf]
      %v456 = vld [vmem:[%s1 + $0x6c] sm:$0xf]
      %v457 = vld [vmem:[%s1 + $0x70] sm:$0xf]
      %v458 = vld [vmem:[%s1 + $0x74] sm:$0xf]
      %v459 = vld [vmem:[%s1 + $0x78] sm:$0xf]
      %v460 = vld [vmem:[%s1 + $0x7c] sm:$0xf]
      %v461 = vld [vmem:[%s1 + $0x80] sm:$0xf]
      %v462 = vld [vmem:[%s1 + $0x84] sm:$0xf]
      %v463 = vld [vmem:[%s1 + $0x88] sm:$0xf]
      %v464 = vld [vmem:[%s1 + $0x8c] sm:$0xf]
      %v465 = vld [vmem:[%s1 + $0x90] sm:$0xf]
      %v466 = vld [vmem:[%s1 + $0x94] sm:$0xf]
      %v467 = vld [vmem:[%s1 + $0x98] sm:$0xf]
      %v468 = vld [vmem:[%s1 + $0x9c] sm:$0xf]
      %v469 = vld [vmem:[%s1 + $0xa0] sm:$0xf]
      %v470 = vld [vmem:[%s1 + $0xa4] sm:$0xf]
      %v471 = vld [vmem:[%s1 + $0xa8] sm:$0xf]
      %v472 = vld [vmem:[%s1 + $0xac] sm:$0xf]
      %v473 = vld [vmem:[%s1 + $0xb0] sm:$0xf]
      %v474 = vld [vmem:[%s1 + $0xb4] sm:$0xf]
      %v475 = vld [vmem:[%s1 + $0xb8] sm:$0xf]
      %v476 = vld [vmem:[%s1 + $0xbc] sm:$0xf]
      %v477 = vld [vmem:[%s1 + $0xc0] sm:$0xf]
      %v478 = vld [vmem:[%s1 + $0xc4] sm:$0xf]
      %v479 = vld [vmem:[%s1 + $0xc8] sm:$0xf]
      %v480 = vld [vmem:[%s1 + $0xcc] sm:$0xf]
      %v481 = vld [vmem:[%s1 + $0xd0] sm:$0xf]
      %v482 = vld [vmem:[%s1 + $0xd4] sm:$0xf]
      %v483 = vld [vmem:[%s1 + $0xd8] sm:$0xf]
      %v484 = vld [vmem:[%s1 + $0xdc] sm:$0xf]
      %v485 = vld [vmem:[%s1 + $0xe0] sm:$0xf]
      %v486 = vld [vmem:[%s1 + $0xe4] sm:$0xf]
      %v487 = vld [vmem:[%s1 + $0xe8] sm:$0xf]
      %v488 = vld [vmem:[%s1 + $0xec] sm:$0xf]
      %v489 = vld [vmem:[%s1 + $0xf0] sm:$0xf]
      %v490 = vld [vmem:[%s1 + $0xf4] sm:$0xf]
      %v491 = vld [vmem:[%s1 + $0xf8] sm:$0xf]
      %v492 = vld [vmem:[%s1 + $0xfc] sm:$0xf]
      %v493 = vld [vmem:[%s1 + $0x100] sm:$0xf]
      %v494 = vld [vmem:[%s1 + $0x104] sm:$0xf]
      %v495 = vld [vmem:[%s1 + $0x108] sm:$0xf]
      %v496 = vld [vmem:[%s1 + $0x10c] sm:$0xf]
      %v497 = vld [vmem:[%s1 + $0x110] sm:$0xf]
      %v498 = vld [vmem:[%s1 + $0x114] sm:$0xf]
      %v499 = vld [vmem:[%s1 + $0x118] sm:$0xf]
      %v500 = vld [vmem:[%s1 + $0x11c] sm:$0xf]
      %v501 = vld [vmem:[%s1 + $0x120] sm:$0xf]
      %v502 = vld [vmem:[%s1 + $0x124] sm:$0xf]
      %v503 = vld [vmem:[%s1 + $0x128] sm:$0xf]
      %v504 = vld [vmem:[%s1 + $0x12c] sm:$0xf]
      %v505 = vld [vmem:[%s1 + $0x130] sm:$0xf]
      %v506 = vld [vmem:[%s1 + $0x134] sm:$0xf]
      %v507 = vld [vmem:[%s1 + $0x138] sm:$0xf]
      %v508 = vld [vmem:[%s1 + $0x13c] sm:$0xf]
      %v509 = vld [vmem:[%s1 + $0x140] sm:$0xf]
      %v510 = vld [vmem:[%s1 + $0x144] sm:$0xf]
      %v511 = vld [vmem:[%s1 + $0x148] sm:$0xf]
      %v512 = vld [vmem:[%s1 + $0x14c] sm:$0xf]
      %v513 = vld [vmem:[%s1 + $0x150] sm:$0xf]
      %v514 = vld [vmem:[%s1 + $0x154] sm:$0xf]
      %v515 = vld [vmem:[%s1 + $0x158] sm:$0xf]
      %v516 = vld [vmem:[%s1 + $0x15c] sm:$0xf]
      %v517 = vld [vmem:[%s1 + $0x160] sm:$0xf]
      %v518 = vld [vmem:[%s1 + $0x164] sm:$0xf]
      %v519 = vld [vmem:[%s1 + $0x168] sm:$0xf]
      %v520 = vld [vmem:[%s1 + $0x16c] sm:$0xf]
      %v521 = vld [vmem:[%s1 + $0x170] sm:$0xf]
      %v522 = vld [vmem:[%s1 + $0x174] sm:$0xf]
      %v523 = vld [vmem:[%s1 + $0x178] sm:$0xf]
      %v524 = vld [vmem:[%s1 + $0x17c] sm:$0xf]
      %v525 = vld [vmem:[%s1 + $0x180] sm:$0xf]
      %v526 = vld [vmem:[%s1 + $0x184] sm:$0xf]
      %v527 = vld [vmem:[%s1 + $0x188] sm:$0xf]
      %v528 = vld [vmem:[%s1 + $0x18c] sm:$0xf]
      %v529 = vld [vmem:[%s1 + $0x190] sm:$0xf]
      %v530 = vld [vmem:[%s1 + $0x194] sm:$0xf]
      %v531 = vld [vmem:[%s1 + $0x198] sm:$0xf]
      %v532 = vld [vmem:[%s1 + $0x19c] sm:$0xf]
      %v533 = vld [vmem:[%s1 + $0x1a0] sm:$0xf]
      %v534 = vld [vmem:[%s1 + $0x1a4] sm:$0xf]
      %v535 = vld [vmem:[%s1 + $0x1a8] sm:$0xf]
      %v536 = vld [vmem:[%s1 + $0x1ac] sm:$0xf]
      %v537 = vld [vmem:[%s1 + $0x1b0] sm:$0xf]
      %v538 = vld [vmem:[%s1 + $0x1b4] sm:$0xf]
      %v539 = vld [vmem:[%s1 + $0x1b8] sm:$0xf]
      %v540 = vld [vmem:[%s1 + $0x1bc] sm:$0xf]
      %v541 = vld [vmem:[%s1 + $0x1c0] sm:$0xf]
      %v542 = vld [vmem:[%s1 + $0x1c4] sm:$0xf]
      %v543 = vld [vmem:[%s1 + $0x1c8] sm:$0xf]
      %v544 = vld [vmem:[%s1 + $0x1cc] sm:$0xf]
      %v545 = vld [vmem:[%s1 + $0x1d0] sm:$0xf]
      %v546 = vld [vmem:[%s1 + $0x1d4] sm:$0xf]
      %v547 = vld [vmem:[%s1 + $0x1d8] sm:$0xf]
      %v548 = vld [vmem:[%s1 + $0x1dc] sm:$0xf]
      %v549 = vld [vmem:[%s1 + $0x1e0] sm:$0xf]
      %v550 = vld [vmem:[%s1 + $0x1e4] sm:$0xf]
      %v551 = vld [vmem:[%s1 + $0x1e8] sm:$0xf]
      %v552 = vld [vmem:[%s1 + $0x1ec] sm:$0xf]
      %v553 = vld [vmem:[%s1 + $0x1f0] sm:$0xf]
      %v554 = vld [vmem:[%s1 + $0x1f4] sm:$0xf]
      %v555 = vld [vmem:[%s1 + $0x1f8] sm:$0xf]
      %v556 = vld [vmem:[%s1 + $0x1fc] sm:$0xf]
      %v557 = vld [vmem:[%s1 + $0x200] sm:$0xf]
      %v558 = vld [vmem:[%s1 + $0x204] sm:$0xf]
      %v559 = vld [vmem:[%s1 + $0x208] sm:$0xf]
      %v560 = vld [vmem:[%s1 + $0x20c] sm:$0xf]
      %v561 = vld [vmem:[%s1 + $0x210] sm:$0xf]
      %v562 = vld [vmem:[%s1 + $0x214] sm:$0xf]
      %v563 = vld [vmem:[%s1 + $0x218] sm:$0xf]
      %v564 = vld [vmem:[%s1 + $0x21c] sm:$0xf]
      %v565 = vld [vmem:[%s1 + $0x220] sm:$0xf]
      %v566 = vld [vmem:[%s1 + $0x224] sm:$0xf]
      %v567 = vld [vmem:[%s1 + $0x228] sm:$0xf]
      %v568 = vld [vmem:[%s1 + $0x22c] sm:$0xf]
      %v569 = vld [vmem:[%s1 + $0x230] sm:$0xf]
      %v570 = vld [vmem:[%s1 + $0x234] sm:$0xf]
      %v571 = vld [vmem:[%s1 + $0x238] sm:$0xf]
      %v572 = vld [vmem:[%s1 + $0x23c] sm:$0xf]
      %v573 = vld [vmem:[%s1 + $0x240] sm:$0xf]
      %v574 = vld [vmem:[%s1 + $0x244] sm:$0xf]
      %v575 = vld [vmem:[%s1 + $0x248] sm:$0xf]
      %v576 = vld [vmem:[%s1 + $0x24c] sm:$0xf]
      %v577 = vld [vmem:[%s1 + $0x250] sm:$0xf]
      %v578 = vld [vmem:[%s1 + $0x254] sm:$0xf]
      %v579 = vld [vmem:[%s1 + $0x258] sm:$0xf]
      %v580 = vld [vmem:[%s1 + $0x25c] sm:$0xf]
      %v581 = vld [vmem:[%s1 + $0x260] sm:$0xf]
      %v582 = vld [vmem:[%s1 + $0x264] sm:$0xf]
      %v583 = vld [vmem:[%s1 + $0x268] sm:$0xf]
      %v584 = vld [vmem:[%s1 + $0x26c] sm:$0xf]
      %v585 = vld [vmem:[%s1 + $0x270] sm:$0xf]
      %v586 = vld [vmem:[%s1 + $0x274] sm:$0xf]
      %v587 = vld [vmem:[%s1 + $0x278] sm:$0xf]
      %v588 = vld [vmem:[%s1 + $0x27c] sm:$0xf]
      %v589 = vld [vmem:[%s1 + $0x280] sm:$0xf]
      %v590 = vld [vmem:[%s1 + $0x284] sm:$0xf]
      %v591 = vld [vmem:[%s1 + $0x288] sm:$0xf]
      %v592 = vld [vmem:[%s1 + $0x28c] sm:$0xf]
      %v593 = vld [vmem:[%s1 + $0x290] sm:$0xf]
      %v594 = vld [vmem:[%s1 + $0x294] sm:$0xf]
      %v595 = vld [vmem:[%s1 + $0x298] sm:$0xf]
      %v596 = vld [vmem:[%s1 + $0x29c] sm:$0xf]
      %v597 = vld [vmem:[%s1 + $0x2a0] sm:$0xf]
      %v598 = vld [vmem:[%s1 + $0x2a4] sm:$0xf]
      %v599 = vld [vmem:[%s1 + $0x2a8] sm:$0xf]
      %v600 = vld [vmem:[%s1 + $0x2ac] sm:$0xf]
      %v601 = vld [vmem:[%s1 + $0x2b0] sm:$0xf]
      %v602 = vld [vmem:[%s1 + $0x2b4] sm:$0xf]
      %v603 = vld [vmem:[%s1 + $0x2b8] sm:$0xf]
      %v604 = vld [vmem:[%s1 + $0x2bc] sm:$0xf]
      %v605 = vld [vmem:[%s1 + $0x2c0] sm:$0xf]
      %v606 = vld [vmem:[%s1 + $0x2c4] sm:$0xf]
      %v607 = vld [vmem:[%s1 + $0x2c8] sm:$0xf]
      %v608 = vld [vmem:[%s1 + $0x2cc] sm:$0xf]
      %v609 = vld [vmem:[%s1 + $0x2d0] sm:$0xf]
      %v610 = vld [vmem:[%s1 + $0x2d4] sm:$0xf]
      %v611 = vld [vmem:[%s1 + $0x2d8] sm:$0xf]
      %v612 = vld [vmem:[%s1 + $0x2dc] sm:$0xf]
      %v613 = vld [vmem:[%s1 + $0x2e0] sm:$0xf]
      %v614 = vld [vmem:[%s1 + $0x2e4] sm:$0xf]
      %v615 = vld [vmem:[%s1 + $0x2e8] sm:$0xf]
      %v616 = vld [vmem:[%s1 + $0x2ec] sm:$0xf]
      %v617 = vld [vmem:[%s1 + $0x2f0] sm:$0xf]
      %v618 = vld [vmem:[%s1 + $0x2f4] sm:$0xf]
      %v619 = vld [vmem:[%s1 + $0x2f8] sm:$0xf]
      %v620 = vld [vmem:[%s1 + $0x2fc] sm:$0xf]
      %v621 = vld [vmem:[%s1 + $0x300] sm:$0xf]
      %v622 = vld [vmem:[%s1 + $0x304] sm:$0xf]
      %v623 = vld [vmem:[%s1 + $0x308] sm:$0xf]
      %v624 = vld [vmem:[%s1 + $0x30c] sm:$0xf]
      %v849 = vunpack.c.l.b16 %v205
      %v850 = vunpack.c.h.b16 %v205
      %v851 = vunpack.c.l.b16 %v206
      %v852 = vunpack.c.h.b16 %v206
      %v853 = vunpack.c.l.b16 %v207
      %v854 = vunpack.c.h.b16 %v207
      %v855 = vunpack.c.l.b16 %v208
      %v856 = vunpack.c.h.b16 %v208
      %v857 = vunpack.c.l.b16 %v209
      %v858 = vunpack.c.h.b16 %v209
      %v859 = vunpack.c.l.b16 %v210
      %v860 = vunpack.c.h.b16 %v210
      %v861 = vunpack.c.l.b16 %v211
      %v862 = vunpack.c.l.b16 %v212
      %v863 = vunpack.c.h.b16 %v212
      %v864 = vunpack.c.l.b16 %v213
      %v865 = vunpack.c.h.b16 %v213
      %v866 = vunpack.c.l.b16 %v214
      %v867 = vunpack.c.h.b16 %v214
      %v868 = vunpack.c.l.b16 %v215
      %v869 = vunpack.c.h.b16 %v215
      %v870 = vunpack.c.l.b16 %v216
      %v871 = vunpack.c.h.b16 %v216
      %v872 = vunpack.c.l.b16 %v217
      %v873 = vunpack.c.h.b16 %v217
      %v874 = vunpack.c.l.b16 %v218
      %v875 = vunpack.c.l.b16 %v219
      %v876 = vunpack.c.h.b16 %v219
      %v877 = vunpack.c.l.b16 %v220
      %v878 = vunpack.c.h.b16 %v220
      %v879 = vunpack.c.l.b16 %v221
      %v880 = vunpack.c.h.b16 %v221
      %v881 = vunpack.c.l.b16 %v222
      %v882 = vunpack.c.h.b16 %v222
      %v883 = vunpack.c.l.b16 %v223
      %v884 = vunpack.c.h.b16 %v223
      %v885 = vunpack.c.l.b16 %v224
      %v886 = vunpack.c.h.b16 %v224
      %v887 = vunpack.c.l.b16 %v225
      %v888 = vunpack.c.l.b16 %v226
      %v889 = vunpack.c.h.b16 %v226
      %v890 = vunpack.c.l.b16 %v227
      %v891 = vunpack.c.h.b16 %v227
      %v892 = vunpack.c.l.b16 %v228
      %v893 = vunpack.c.h.b16 %v228
      %v894 = vunpack.c.l.b16 %v229
      %v895 = vunpack.c.h.b16 %v229
      %v896 = vunpack.c.l.b16 %v230
      %v897 = vunpack.c.h.b16 %v230
      %v898 = vunpack.c.l.b16 %v231
      %v899 = vunpack.c.h.b16 %v231
      %v900 = vunpack.c.l.b16 %v232
      %v901 = vunpack.c.l.b16 %v233
      %v902 = vunpack.c.h.b16 %v233
      %v903 = vunpack.c.l.b16 %v234
      %v904 = vunpack.c.h.b16 %v234
      %v905 = vunpack.c.l.b16 %v235
      %v906 = vunpack.c.h.b16 %v235
      %v907 = vunpack.c.l.b16 %v236
      %v908 = vunpack.c.h.b16 %v236
      %v909 = vunpack.c.l.b16 %v237
      %v910 = vunpack.c.h.b16 %v237
      %v911 = vunpack.c.l.b16 %v238
      %v912 = vunpack.c.h.b16 %v238
      %v913 = vunpack.c.l.b16 %v239
      %v914 = vunpack.c.l.b16 %v240
      %v915 = vunpack.c.h.b16 %v240
      %v916 = vunpack.c.l.b16 %v241
      %v917 = vunpack.c.h.b16 %v241
      %v918 = vunpack.c.l.b16 %v242
      %v919 = vunpack.c.h.b16 %v242
      %v920 = vunpack.c.l.b16 %v243
      %v921 = vunpack.c.h.b16 %v243
      %v922 = vunpack.c.l.b16 %v244
      %v923 = vunpack.c.h.b16 %v244
      %v924 = vunpack.c.l.b16 %v245
      %v925 = vunpack.c.h.b16 %v245
      %v926 = vunpack.c.l.b16 %v246
      %v927 = vunpack.c.l.b16 %v247
      %v928 = vunpack.c.h.b16 %v247
      %v929 = vunpack.c.l.b16 %v248
      %v930 = vunpack.c.h.b16 %v248
      %v931 = vunpack.c.l.b16 %v249
      %v932 = vunpack.c.h.b16 %v249
      %v933 = vunpack.c.l.b16 %v250
      %v934 = vunpack.c.h.b16 %v250
      %v935 = vunpack.c.l.b16 %v251
      %v936 = vunpack.c.h.b16 %v251
      %v937 = vunpack.c.l.b16 %v252
      %v938 = vunpack.c.h.b16 %v252
      %v939 = vunpack.c.l.b16 %v253
      %v940 = vunpack.c.l.b16 %v254
      %v941 = vunpack.c.h.b16 %v254
      %v942 = vunpack.c.l.b16 %v255
      %v943 = vunpack.c.h.b16 %v255
      %v944 = vunpack.c.l.b16 %v256
      %v945 = vunpack.c.h.b16 %v256
      %v946 = vunpack.c.l.b16 %v257
      %v947 = vunpack.c.h.b16 %v257
      %v948 = vunpack.c.l.b16 %v258
      %v949 = vunpack.c.h.b16 %v258
      %v950 = vunpack.c.l.b16 %v259
      %v951 = vunpack.c.h.b16 %v259
      %v952 = vunpack.c.l.b16 %v260
      %v953 = vunpack.c.l.b16 %v261
      %v954 = vunpack.c.h.b16 %v261
      %v955 = vunpack.c.l.b16 %v262
      %v956 = vunpack.c.h.b16 %v262
      %v957 = vunpack.c.l.b16 %v263
      %v958 = vunpack.c.h.b16 %v263
      %v959 = vunpack.c.l.b16 %v264
      %v960 = vunpack.c.h.b16 %v264
      %v961 = vunpack.c.l.b16 %v265
      %v962 = vunpack.c.h.b16 %v265
      %v963 = vunpack.c.l.b16 %v266
      %v964 = vunpack.c.h.b16 %v266
      %v965 = vunpack.c.l.b16 %v267
      %v966 = vunpack.c.l.b16 %v268
      %v967 = vunpack.c.h.b16 %v268
      %v968 = vunpack.c.l.b16 %v269
      %v969 = vunpack.c.h.b16 %v269
      %v970 = vunpack.c.l.b16 %v270
      %v971 = vunpack.c.h.b16 %v270
      %v972 = vunpack.c.l.b16 %v271
      %v973 = vunpack.c.h.b16 %v271
      %v974 = vunpack.c.l.b16 %v272
      %v975 = vunpack.c.h.b16 %v272
      %v976 = vunpack.c.l.b16 %v273
      %v977 = vunpack.c.h.b16 %v273
      %v978 = vunpack.c.l.b16 %v274
      %v979 = vunpack.c.l.b16 %v275
      %v980 = vunpack.c.h.b16 %v275
      %v981 = vunpack.c.l.b16 %v276
      %v982 = vunpack.c.h.b16 %v276
      %v983 = vunpack.c.l.b16 %v277
      %v984 = vunpack.c.h.b16 %v277
      %v985 = vunpack.c.l.b16 %v278
      %v986 = vunpack.c.h.b16 %v278
      %v987 = vunpack.c.l.b16 %v279
      %v988 = vunpack.c.h.b16 %v279
      %v989 = vunpack.c.l.b16 %v280
      %v990 = vunpack.c.h.b16 %v280
      %v991 = vunpack.c.l.b16 %v281
      %v992 = vunpack.c.l.b16 %v282
      %v993 = vunpack.c.h.b16 %v282
      %v994 = vunpack.c.l.b16 %v283
      %v995 = vunpack.c.h.b16 %v283
      %v996 = vunpack.c.l.b16 %v284
      %v997 = vunpack.c.h.b16 %v284
      %v998 = vunpack.c.l.b16 %v285
      %v999 = vunpack.c.h.b16 %v285
      %v1000 = vunpack.c.l.b16 %v286
      %v1001 = vunpack.c.h.b16 %v286
      %v1002 = vunpack.c.l.b16 %v287
      %v1003 = vunpack.c.h.b16 %v287
      %v1004 = vunpack.c.l.b16 %v288
      %v1005 = vunpack.c.l.b16 %v289
      %v1006 = vunpack.c.h.b16 %v289
      %v1007 = vunpack.c.l.b16 %v290
      %v1008 = vunpack.c.h.b16 %v290
      %v1009 = vunpack.c.l.b16 %v291
      %v1010 = vunpack.c.h.b16 %v291
      %v1011 = vunpack.c.l.b16 %v292
      %v1012 = vunpack.c.h.b16 %v292
      %v1013 = vunpack.c.l.b16 %v293
      %v1014 = vunpack.c.h.b16 %v293
      %v1015 = vunpack.c.l.b16 %v294
      %v1016 = vunpack.c.h.b16 %v294
      %v1017 = vunpack.c.l.b16 %v295
      %v1018 = vunpack.c.l.b16 %v296
      %v1019 = vunpack.c.h.b16 %v296
      %v1020 = vunpack.c.l.b16 %v297
      %v1021 = vunpack.c.h.b16 %v297
      %v1022 = vunpack.c.l.b16 %v298
      %v1023 = vunpack.c.h.b16 %v298
      %v1024 = vunpack.c.l.b16 %v299
      %v1025 = vunpack.c.h.b16 %v299
      %v1026 = vunpack.c.l.b16 %v300
      %v1027 = vunpack.c.h.b16 %v300
      %v1028 = vunpack.c.l.b16 %v301
      %v1029 = vunpack.c.h.b16 %v301
      %v1030 = vunpack.c.l.b16 %v302
      %v1031 = vunpack.c.l.b16 %v303
      %v1032 = vunpack.c.h.b16 %v303
      %v1033 = vunpack.c.l.b16 %v304
      %v1034 = vunpack.c.h.b16 %v304
      %v1035 = vunpack.c.l.b16 %v305
      %v1036 = vunpack.c.h.b16 %v305
      %v1037 = vunpack.c.l.b16 %v306
      %v1038 = vunpack.c.h.b16 %v306
      %v1039 = vunpack.c.l.b16 %v307
      %v1040 = vunpack.c.h.b16 %v307
      %v1041 = vunpack.c.l.b16 %v308
      %v1042 = vunpack.c.h.b16 %v308
      %v1043 = vunpack.c.l.b16 %v309
      %v1044 = vunpack.c.l.b16 %v310
      %v1045 = vunpack.c.h.b16 %v310
      %v1046 = vunpack.c.l.b16 %v311
      %v1047 = vunpack.c.h.b16 %v311
      %v1048 = vunpack.c.l.b16 %v312
      %v1049 = vunpack.c.h.b16 %v312
      %v1050 = vunpack.c.l.b16 %v313
      %v1051 = vunpack.c.h.b16 %v313
      %v1052 = vunpack.c.l.b16 %v314
      %v1053 = vunpack.c.h.b16 %v314
      %v1054 = vunpack.c.l.b16 %v315
      %v1055 = vunpack.c.h.b16 %v315
      %v1056 = vunpack.c.l.b16 %v316
      %v1057 = vunpack.c.l.b16 %v317
      %v1058 = vunpack.c.h.b16 %v317
      %v1059 = vunpack.c.l.b16 %v318
      %v1060 = vunpack.c.h.b16 %v318
      %v1061 = vunpack.c.l.b16 %v319
      %v1062 = vunpack.c.h.b16 %v319
      %v1063 = vunpack.c.l.b16 %v320
      %v1064 = vunpack.c.h.b16 %v320
      %v1065 = vunpack.c.l.b16 %v321
      %v1066 = vunpack.c.h.b16 %v321
      %v1067 = vunpack.c.l.b16 %v322
      %v1068 = vunpack.c.h.b16 %v322
      %v1069 = vunpack.c.l.b16 %v323
      %v1070 = vunpack.c.l.b16 %v324
      %v1071 = vunpack.c.h.b16 %v324
      %v1072 = vunpack.c.l.b16 %v325
      %v1073 = vunpack.c.h.b16 %v325
      %v1074 = vunpack.c.l.b16 %v326
      %v1075 = vunpack.c.h.b16 %v326
      %v1076 = vunpack.c.l.b16 %v327
      %v1077 = vunpack.c.h.b16 %v327
      %v1078 = vunpack.c.l.b16 %v328
      %v1079 = vunpack.c.h.b16 %v328
      %v1080 = vunpack.c.l.b16 %v329
      %v1081 = vunpack.c.h.b16 %v329
      %v1082 = vunpack.c.l.b16 %v330
      %v1083 = vunpack.c.l.b16 %v331
      %v1084 = vunpack.c.h.b16 %v331
      %v1085 = vunpack.c.l.b16 %v332
      %v1086 = vunpack.c.h.b16 %v332
      %v1087 = vunpack.c.l.b16 %v333
      %v1088 = vunpack.c.h.b16 %v333
      %v1089 = vunpack.c.l.b16 %v334
      %v1090 = vunpack.c.h.b16 %v334
      %v1091 = vunpack.c.l.b16 %v335
      %v1092 = vunpack.c.h.b16 %v335
      %v1093 = vunpack.c.l.b16 %v336
      %v1094 = vunpack.c.h.b16 %v336
      %v1095 = vunpack.c.l.b16 %v337
      %v1096 = vunpack.c.l.b16 %v338
      %v1097 = vunpack.c.h.b16 %v338
      %v1098 = vunpack.c.l.b16 %v339
      %v1099 = vunpack.c.h.b16 %v339
      %v1100 = vunpack.c.l.b16 %v340
      %v1101 = vunpack.c.h.b16 %v340
      %v1102 = vunpack.c.l.b16 %v341
      %v1103 = vunpack.c.h.b16 %v341
      %v1104 = vunpack.c.l.b16 %v342
      %v1105 = vunpack.c.h.b16 %v342
      %v1106 = vunpack.c.l.b16 %v343
      %v1107 = vunpack.c.h.b16 %v343
      %v1108 = vunpack.c.l.b16 %v344
      %v1109 = vunpack.c.l.b16 %v345
      %v1110 = vunpack.c.h.b16 %v345
      %v1111 = vunpack.c.l.b16 %v346
      %v1112 = vunpack.c.h.b16 %v346
      %v1113 = vunpack.c.l.b16 %v347
      %v1114 = vunpack.c.h.b16 %v347
      %v1115 = vunpack.c.l.b16 %v348
      %v1116 = vunpack.c.h.b16 %v348
      %v1117 = vunpack.c.l.b16 %v349
      %v1118 = vunpack.c.h.b16 %v349
      %v1119 = vunpack.c.l.b16 %v350
      %v1120 = vunpack.c.h.b16 %v350
      %v1121 = vunpack.c.l.b16 %v351
      %v1122 = vunpack.c.l.b16 %v352
      %v1123 = vunpack.c.h.b16 %v352
      %v1124 = vunpack.c.l.b16 %v353
      %v1125 = vunpack.c.h.b16 %v353
      %v1126 = vunpack.c.l.b16 %v354
      %v1127 = vunpack.c.h.b16 %v354
      %v1128 = vunpack.c.l.b16 %v355
      %v1129 = vunpack.c.h.b16 %v355
      %v1130 = vunpack.c.l.b16 %v356
      %v1131 = vunpack.c.h.b16 %v356
      %v1132 = vunpack.c.l.b16 %v357
      %v1133 = vunpack.c.h.b16 %v357
      %v1134 = vunpack.c.l.b16 %v358
      %v1135 = vunpack.c.l.b16 %v359
      %v1136 = vunpack.c.h.b16 %v359
      %v1137 = vunpack.c.l.b16 %v360
      %v1138 = vunpack.c.h.b16 %v360
      %v1139 = vunpack.c.l.b16 %v361
      %v1140 = vunpack.c.h.b16 %v361
      %v1141 = vunpack.c.l.b16 %v362
      %v1142 = vunpack.c.h.b16 %v362
      %v1143 = vunpack.c.l.b16 %v363
      %v1144 = vunpack.c.h.b16 %v363
      %v1145 = vunpack.c.l.b16 %v364
      %v1146 = vunpack.c.h.b16 %v364
      %v1147 = vunpack.c.l.b16 %v365
      %v1148 = vunpack.c.l.b16 %v366
      %v1149 = vunpack.c.h.b16 %v366
      %v1150 = vunpack.c.l.b16 %v367
      %v1151 = vunpack.c.h.b16 %v367
      %v1152 = vunpack.c.l.b16 %v368
      %v1153 = vunpack.c.h.b16 %v368
      %v1154 = vunpack.c.l.b16 %v369
      %v1155 = vunpack.c.h.b16 %v369
      %v1156 = vunpack.c.l.b16 %v370
      %v1157 = vunpack.c.h.b16 %v370
      %v1158 = vunpack.c.l.b16 %v371
      %v1159 = vunpack.c.h.b16 %v371
      %v1160 = vunpack.c.l.b16 %v372
      %v1161 = vunpack.c.l.b16 %v373
      %v1162 = vunpack.c.h.b16 %v373
      %v1163 = vunpack.c.l.b16 %v374
      %v1164 = vunpack.c.h.b16 %v374
      %v1165 = vunpack.c.l.b16 %v375
      %v1166 = vunpack.c.h.b16 %v375
      %v1167 = vunpack.c.l.b16 %v376
      %v1168 = vunpack.c.h.b16 %v376
      %v1169 = vunpack.c.l.b16 %v377
      %v1170 = vunpack.c.h.b16 %v377
      %v1171 = vunpack.c.l.b16 %v378
      %v1172 = vunpack.c.h.b16 %v378
      %v1173 = vunpack.c.l.b16 %v379
      %v1174 = vunpack.c.l.b16 %v380
      %v1175 = vunpack.c.h.b16 %v380
      %v1176 = vunpack.c.l.b16 %v381
      %v1177 = vunpack.c.h.b16 %v381
      %v1178 = vunpack.c.l.b16 %v382
      %v1179 = vunpack.c.h.b16 %v382
      %v1180 = vunpack.c.l.b16 %v383
      %v1181 = vunpack.c.h.b16 %v383
      %v1182 = vunpack.c.l.b16 %v384
      %v1183 = vunpack.c.h.b16 %v384
      %v1184 = vunpack.c.l.b16 %v385
      %v1185 = vunpack.c.h.b16 %v385
      %v1186 = vunpack.c.l.b16 %v386
      %v1187 = vunpack.c.l.b16 %v387
      %v1188 = vunpack.c.h.b16 %v387
      %v1189 = vunpack.c.l.b16 %v388
      %v1190 = vunpack.c.h.b16 %v388
      %v1191 = vunpack.c.l.b16 %v389
      %v1192 = vunpack.c.h.b16 %v389
      %v1193 = vunpack.c.l.b16 %v390
      %v1194 = vunpack.c.h.b16 %v390
      %v1195 = vunpack.c.l.b16 %v391
      %v1196 = vunpack.c.h.b16 %v391
      %v1197 = vunpack.c.l.b16 %v392
      %v1198 = vunpack.c.h.b16 %v392
      %v1199 = vunpack.c.l.b16 %v393
      %v1200 = vunpack.c.l.b16 %v394
      %v1201 = vunpack.c.h.b16 %v394
      %v1202 = vunpack.c.l.b16 %v395
      %v1203 = vunpack.c.h.b16 %v395
      %v1204 = vunpack.c.l.b16 %v396
      %v1205 = vunpack.c.h.b16 %v396
      %v1206 = vunpack.c.l.b16 %v397
      %v1207 = vunpack.c.h.b16 %v397
      %v1208 = vunpack.c.l.b16 %v398
      %v1209 = vunpack.c.h.b16 %v398
      %v1210 = vunpack.c.l.b16 %v399
      %v1211 = vunpack.c.h.b16 %v399
      %v1212 = vunpack.c.l.b16 %v400
      %v1213 = vunpack.c.l.b16 %v401
      %v1214 = vunpack.c.h.b16 %v401
      %v1215 = vunpack.c.l.b16 %v402
      %v1216 = vunpack.c.h.b16 %v402
      %v1217 = vunpack.c.l.b16 %v403
      %v1218 = vunpack.c.h.b16 %v403
      %v1219 = vunpack.c.l.b16 %v404
      %v1220 = vunpack.c.h.b16 %v404
      %v1221 = vunpack.c.l.b16 %v405
      %v1222 = vunpack.c.h.b16 %v405
      %v1223 = vunpack.c.l.b16 %v406
      %v1224 = vunpack.c.h.b16 %v406
      %v1225 = vunpack.c.l.b16 %v407
      %v1226 = vunpack.c.l.b16 %v408
      %v1227 = vunpack.c.h.b16 %v408
      %v1228 = vunpack.c.l.b16 %v409
      %v1229 = vunpack.c.h.b16 %v409
      %v1230 = vunpack.c.l.b16 %v410
      %v1231 = vunpack.c.h.b16 %v410
      %v1232 = vunpack.c.l.b16 %v411
      %v1233 = vunpack.c.h.b16 %v411
      %v1234 = vunpack.c.l.b16 %v412
      %v1235 = vunpack.c.h.b16 %v412
      %v1236 = vunpack.c.l.b16 %v413
      %v1237 = vunpack.c.h.b16 %v413
      %v1238 = vunpack.c.l.b16 %v414
      %v1239 = vunpack.c.l.b16 %v415
      %v1240 = vunpack.c.h.b16 %v415
      %v1241 = vunpack.c.l.b16 %v416
      %v1242 = vunpack.c.h.b16 %v416
      %v1243 = vunpack.c.l.b16 %v417
      %v1244 = vunpack.c.h.b16 %v417
      %v1245 = vunpack.c.l.b16 %v418
      %v1246 = vunpack.c.h.b16 %v418
      %v1247 = vunpack.c.l.b16 %v419
      %v1248 = vunpack.c.h.b16 %v419
      %v1249 = vunpack.c.l.b16 %v420
      %v1250 = vunpack.c.h.b16 %v420
      %v1251 = vunpack.c.l.b16 %v421
      %v1252 = vunpack.c.l.b16 %v422
      %v1253 = vunpack.c.h.b16 %v422
      %v1254 = vunpack.c.l.b16 %v423
      %v1255 = vunpack.c.h.b16 %v423
      %v1256 = vunpack.c.l.b16 %v424
      %v1257 = vunpack.c.h.b16 %v424
      %v1258 = vunpack.c.l.b16 %v425
      %v1259 = vunpack.c.h.b16 %v425
      %v1260 = vunpack.c.l.b16 %v426
      %v1261 = vunpack.c.h.b16 %v426
      %v1262 = vunpack.c.l.b16 %v427
      %v1263 = vunpack.c.h.b16 %v427
      %v1264 = vunpack.c.l.b16 %v428
      %v1265 = vpack.c.b16 %v862, %v849
      %v1266 = vpack.c.b16 %v863, %v850
      %v1267 = vpack.c.b16 %v864, %v851
      %v1268 = vpack.c.b16 %v865, %v852
      %v1269 = vpack.c.b16 %v866, %v853
      %v1270 = vpack.c.b16 %v867, %v854
      %v1271 = vpack.c.b16 %v868, %v855
      %v1272 = vpack.c.b16 %v869, %v856
      %v1273 = vpack.c.b16 %v870, %v857
      %v1274 = vpack.c.b16 %v871, %v858
      %v1275 = vpack.c.b16 %v872, %v859
      %v1276 = vpack.c.b16 %v873, %v860
      %v1277 = vpack.c.b16 %v874, %v861
      %v1278 = vpack.c.b16 %v888, %v875
      %v1279 = vpack.c.b16 %v889, %v876
      %v1280 = vpack.c.b16 %v890, %v877
      %v1281 = vpack.c.b16 %v891, %v878
      %v1282 = vpack.c.b16 %v892, %v879
      %v1283 = vpack.c.b16 %v893, %v880
      %v1284 = vpack.c.b16 %v894, %v881
      %v1285 = vpack.c.b16 %v895, %v882
      %v1286 = vpack.c.b16 %v896, %v883
      %v1287 = vpack.c.b16 %v897, %v884
      %v1288 = vpack.c.b16 %v898, %v885
      %v1289 = vpack.c.b16 %v899, %v886
      %v1290 = vpack.c.b16 %v900, %v887
      %v1291 = vpack.c.b16 %v914, %v901
      %v1292 = vpack.c.b16 %v915, %v902
      %v1293 = vpack.c.b16 %v916, %v903
      %v1294 = vpack.c.b16 %v917, %v904
      %v1295 = vpack.c.b16 %v918, %v905
      %v1296 = vpack.c.b16 %v919, %v906
      %v1297 = vpack.c.b16 %v920, %v907
      %v1298 = vpack.c.b16 %v921, %v908
      %v1299 = vpack.c.b16 %v922, %v909
      %v1300 = vpack.c.b16 %v923, %v910
      %v1301 = vpack.c.b16 %v924, %v911
      %v1302 = vpack.c.b16 %v925, %v912
      %v1303 = vpack.c.b16 %v926, %v913
      %v1304 = vpack.c.b16 %v940, %v927
      %v1305 = vpack.c.b16 %v941, %v928
      %v1306 = vpack.c.b16 %v942, %v929
      %v1307 = vpack.c.b16 %v943, %v930
      %v1308 = vpack.c.b16 %v944, %v931
      %v1309 = vpack.c.b16 %v945, %v932
      %v1310 = vpack.c.b16 %v946, %v933
      %v1311 = vpack.c.b16 %v947, %v934
      %v1312 = vpack.c.b16 %v948, %v935
      %v1313 = vpack.c.b16 %v949, %v936
      %v1314 = vpack.c.b16 %v950, %v937
      %v1315 = vpack.c.b16 %v951, %v938
      %v1316 = vpack.c.b16 %v952, %v939
      %v1317 = vpack.c.b16 %v966, %v953
      %v1318 = vpack.c.b16 %v967, %v954
      %v1319 = vpack.c.b16 %v968, %v955
      %v1320 = vpack.c.b16 %v969, %v956
      %v1321 = vpack.c.b16 %v970, %v957
      %v1322 = vpack.c.b16 %v971, %v958
      %v1323 = vpack.c.b16 %v972, %v959
      %v1324 = vpack.c.b16 %v973, %v960
      %v1325 = vpack.c.b16 %v974, %v961
      %v1326 = vpack.c.b16 %v975, %v962
      %v1327 = vpack.c.b16 %v976, %v963
      %v1328 = vpack.c.b16 %v977, %v964
      %v1329 = vpack.c.b16 %v978, %v965
      %v1330 = vpack.c.b16 %v992, %v979
      %v1331 = vpack.c.b16 %v993, %v980
      %v1332 = vpack.c.b16 %v994, %v981
      %v1333 = vpack.c.b16 %v995, %v982
      %v1334 = vpack.c.b16 %v996, %v983
      %v1335 = vpack.c.b16 %v997, %v984
      %v1336 = vpack.c.b16 %v998, %v985
      %v1337 = vpack.c.b16 %v999, %v986
      %v1338 = vpack.c.b16 %v1000, %v987
      %v1339 = vpack.c.b16 %v1001, %v988
      %v1340 = vpack.c.b16 %v1002, %v989
      %v1341 = vpack.c.b16 %v1003, %v990
      %v1342 = vpack.c.b16 %v1004, %v991
      %v1343 = vpack.c.b16 %v1018, %v1005
      %v1344 = vpack.c.b16 %v1019, %v1006
      %v1345 = vpack.c.b16 %v1020, %v1007
      %v1346 = vpack.c.b16 %v1021, %v1008
      %v1347 = vpack.c.b16 %v1022, %v1009
      %v1348 = vpack.c.b16 %v1023, %v1010
      %v1349 = vpack.c.b16 %v1024, %v1011
      %v1350 = vpack.c.b16 %v1025, %v1012
      %v1351 = vpack.c.b16 %v1026, %v1013
      %v1352 = vpack.c.b16 %v1027, %v1014
      %v1353 = vpack.c.b16 %v1028, %v1015
      %v1354 = vpack.c.b16 %v1029, %v1016
      %v1355 = vpack.c.b16 %v1030, %v1017
      %v1356 = vpack.c.b16 %v1044, %v1031
      %v1357 = vpack.c.b16 %v1045, %v1032
      %v1358 = vpack.c.b16 %v1046, %v1033
      %v1359 = vpack.c.b16 %v1047, %v1034
      %v1360 = vpack.c.b16 %v1048, %v1035
      %v1361 = vpack.c.b16 %v1049, %v1036
      %v1362 = vpack.c.b16 %v1050, %v1037
      %v1363 = vpack.c.b16 %v1051, %v1038
      %v1364 = vpack.c.b16 %v1052, %v1039
      %v1365 = vpack.c.b16 %v1053, %v1040
      %v1366 = vpack.c.b16 %v1054, %v1041
      %v1367 = vpack.c.b16 %v1055, %v1042
      %v1368 = vpack.c.b16 %v1056, %v1043
      %v1369 = vpack.c.b16 %v1070, %v1057
      %v1370 = vpack.c.b16 %v1071, %v1058
      %v1371 = vpack.c.b16 %v1072, %v1059
      %v1372 = vpack.c.b16 %v1073, %v1060
      %v1373 = vpack.c.b16 %v1074, %v1061
      %v1374 = vpack.c.b16 %v1075, %v1062
      %v1375 = vpack.c.b16 %v1076, %v1063
      %v1376 = vpack.c.b16 %v1077, %v1064
      %v1377 = vpack.c.b16 %v1078, %v1065
      %v1378 = vpack.c.b16 %v1079, %v1066
      %v1379 = vpack.c.b16 %v1080, %v1067
      %v1380 = vpack.c.b16 %v1081, %v1068
      %v1381 = vpack.c.b16 %v1082, %v1069
      %v1382 = vpack.c.b16 %v1096, %v1083
      %v1383 = vpack.c.b16 %v1097, %v1084
      %v1384 = vpack.c.b16 %v1098, %v1085
      %v1385 = vpack.c.b16 %v1099, %v1086
      %v1386 = vpack.c.b16 %v1100, %v1087
      %v1387 = vpack.c.b16 %v1101, %v1088
      %v1388 = vpack.c.b16 %v1102, %v1089
      %v1389 = vpack.c.b16 %v1103, %v1090
      %v1390 = vpack.c.b16 %v1104, %v1091
      %v1391 = vpack.c.b16 %v1105, %v1092
      %v1392 = vpack.c.b16 %v1106, %v1093
      %v1393 = vpack.c.b16 %v1107, %v1094
      %v1394 = vpack.c.b16 %v1108, %v1095
      %v1395 = vpack.c.b16 %v1122, %v1109
      %v1396 = vpack.c.b16 %v1123, %v1110
      %v1397 = vpack.c.b16 %v1124, %v1111
      %v1398 = vpack.c.b16 %v1125, %v1112
      %v1399 = vpack.c.b16 %v1126, %v1113
      %v1400 = vpack.c.b16 %v1127, %v1114
      %v1401 = vpack.c.b16 %v1128, %v1115
      %v1402 = vpack.c.b16 %v1129, %v1116
      %v1403 = vpack.c.b16 %v1130, %v1117
      %v1404 = vpack.c.b16 %v1131, %v1118
      %v1405 = vpack.c.b16 %v1132, %v1119
      %v1406 = vpack.c.b16 %v1133, %v1120
      %v1407 = vpack.c.b16 %v1134, %v1121
      %v1408 = vpack.c.b16 %v1148, %v1135
      %v1409 = vpack.c.b16 %v1149, %v1136
      %v1410 = vpack.c.b16 %v1150, %v1137
      %v1411 = vpack.c.b16 %v1151, %v1138
      %v1412 = vpack.c.b16 %v1152, %v1139
      %v1413 = vpack.c.b16 %v1153, %v1140
      %v1414 = vpack.c.b16 %v1154, %v1141
      %v1415 = vpack.c.b16 %v1155, %v1142
      %v1416 = vpack.c.b16 %v1156, %v1143
      %v1417 = vpack.c.b16 %v1157, %v1144
      %v1418 = vpack.c.b16 %v1158, %v1145
      %v1419 = vpack.c.b16 %v1159, %v1146
      %v1420 = vpack.c.b16 %v1160, %v1147
      %v1421 = vpack.c.b16 %v1174, %v1161
      %v1422 = vpack.c.b16 %v1175, %v1162
      %v1423 = vpack.c.b16 %v1176, %v1163
      %v1424 = vpack.c.b16 %v1177, %v1164
      %v1425 = vpack.c.b16 %v1178, %v1165
      %v1426 = vpack.c.b16 %v1179, %v1166
      %v1427 = vpack.c.b16 %v1180, %v1167
      %v1428 = vpack.c.b16 %v1181, %v1168
      %v1429 = vpack.c.b16 %v1182, %v1169
      %v1430 = vpack.c.b16 %v1183, %v1170
      %v1431 = vpack.c.b16 %v1184, %v1171
      %v1432 = vpack.c.b16 %v1185, %v1172
      %v1433 = vpack.c.b16 %v1186, %v1173
      %v1434 = vpack.c.b16 %v1200, %v1187
      %v1435 = vpack.c.b16 %v1201, %v1188
      %v1436 = vpack.c.b16 %v1202, %v1189
      %v1437 = vpack.c.b16 %v1203, %v1190
      %v1438 = vpack.c.b16 %v1204, %v1191
      %v1439 = vpack.c.b16 %v1205, %v1192
      %v1440 = vpack.c.b16 %v1206, %v1193
      %v1441 = vpack.c.b16 %v1207, %v1194
      %v1442 = vpack.c.b16 %v1208, %v1195
      %v1443 = vpack.c.b16 %v1209, %v1196
      %v1444 = vpack.c.b16 %v1210, %v1197
      %v1445 = vpack.c.b16 %v1211, %v1198
      %v1446 = vpack.c.b16 %v1212, %v1199
      %v1447 = vpack.c.b16 %v1226, %v1213
      %v1448 = vpack.c.b16 %v1227, %v1214
      %v1449 = vpack.c.b16 %v1228, %v1215
      %v1450 = vpack.c.b16 %v1229, %v1216
      %v1451 = vpack.c.b16 %v1230, %v1217
      %v1452 = vpack.c.b16 %v1231, %v1218
      %v1453 = vpack.c.b16 %v1232, %v1219
      %v1454 = vpack.c.b16 %v1233, %v1220
      %v1455 = vpack.c.b16 %v1234, %v1221
      %v1456 = vpack.c.b16 %v1235, %v1222
      %v1457 = vpack.c.b16 %v1236, %v1223
      %v1458 = vpack.c.b16 %v1237, %v1224
      %v1459 = vpack.c.b16 %v1238, %v1225
      %v1460 = vpack.c.b16 %v1252, %v1239
      %v1461 = vpack.c.b16 %v1253, %v1240
      %v1462 = vpack.c.b16 %v1254, %v1241
      %v1463 = vpack.c.b16 %v1255, %v1242
      %v1464 = vpack.c.b16 %v1256, %v1243
      %v1465 = vpack.c.b16 %v1257, %v1244
      %v1466 = vpack.c.b16 %v1258, %v1245
      %v1467 = vpack.c.b16 %v1259, %v1246
      %v1468 = vpack.c.b16 %v1260, %v1247
      %v1469 = vpack.c.b16 %v1261, %v1248
      %v1470 = vpack.c.b16 %v1262, %v1249
      %v1471 = vpack.c.b16 %v1263, %v1250
      %v1472 = vpack.c.b16 %v1264, %v1251
      %v1861 = vunpack.c.l.b16 %v429
      %v1862 = vunpack.c.l.b16 %v430
      %v1863 = vunpack.c.l.b16 %v431
      %v1864 = vunpack.c.l.b16 %v432
      %v1865 = vunpack.c.l.b16 %v433
      %v1866 = vunpack.c.l.b16 %v434
      %v1867 = vunpack.c.l.b16 %v435
      %v1868 = vunpack.c.l.b16 %v436
      %v1869 = vunpack.c.l.b16 %v437
      %v1870 = vunpack.c.l.b16 %v438
      %v1871 = vunpack.c.l.b16 %v439
      %v1872 = vunpack.c.l.b16 %v440
      %v1873 = vunpack.c.l.b16 %v441
      %v1874 = vunpack.c.l.b16 %v442
      %v1875 = vunpack.c.l.b16 %v443
      %v1876 = vunpack.c.l.b16 %v444
      %v1877 = vunpack.c.l.b16 %v445
      %v1878 = vunpack.c.l.b16 %v446
      %v1879 = vunpack.c.l.b16 %v447
      %v1880 = vunpack.c.l.b16 %v448
      %v1881 = vunpack.c.l.b16 %v449
      %v1882 = vunpack.c.l.b16 %v450
      %v1883 = vunpack.c.l.b16 %v451
      %v1884 = vunpack.c.l.b16 %v452
      %v1885 = vunpack.c.l.b16 %v453
      %v1886 = vunpack.c.l.b16 %v454
      %v1887 = vunpack.c.l.b16 %v455
      %v1888 = vunpack.c.l.b16 %v456
      %v1889 = vunpack.c.l.b16 %v457
      %v1890 = vunpack.c.l.b16 %v458
      %v1891 = vunpack.c.l.b16 %v459
      %v1892 = vunpack.c.l.b16 %v460
      %v1893 = vunpack.c.l.b16 %v461
      %v1894 = vunpack.c.l.b16 %v462
      %v1895 = vunpack.c.l.b16 %v463
      %v1896 = vunpack.c.l.b16 %v464
      %v1897 = vunpack.c.l.b16 %v465
      %v1898 = vunpack.c.l.b16 %v466
      %v1899 = vunpack.c.l.b16 %v467
      %v1900 = vunpack.c.l.b16 %v468
      %v1901 = vunpack.c.l.b16 %v469
      %v1902 = vunpack.c.l.b16 %v470
      %v1903 = vunpack.c.l.b16 %v471
      %v1904 = vunpack.c.l.b16 %v472
      %v1905 = vunpack.c.l.b16 %v473
      %v1906 = vunpack.c.l.b16 %v474
      %v1907 = vunpack.c.l.b16 %v475
      %v1908 = vunpack.c.l.b16 %v476
      %v1909 = vunpack.c.l.b16 %v477
      %v1910 = vunpack.c.l.b16 %v478
      %v1911 = vunpack.c.l.b16 %v479
      %v1912 = vunpack.c.l.b16 %v480
      %v1913 = vunpack.c.l.b16 %v481
      %v1914 = vunpack.c.l.b16 %v482
      %v1915 = vunpack.c.l.b16 %v483
      %v1916 = vunpack.c.l.b16 %v484
      %v1917 = vunpack.c.l.b16 %v485
      %v1918 = vunpack.c.l.b16 %v486
      %v1919 = vunpack.c.l.b16 %v487
      %v1920 = vunpack.c.l.b16 %v488
      %v1921 = vunpack.c.l.b16 %v489
      %v1922 = vunpack.c.l.b16 %v490
      %v1923 = vunpack.c.l.b16 %v491
      %v1924 = vunpack.c.l.b16 %v492
      %v1925 = vunpack.c.l.b16 %v493
      %v1926 = vunpack.c.l.b16 %v494
      %v1927 = vunpack.c.l.b16 %v495
      %v1928 = vunpack.c.l.b16 %v496
      %v1929 = vunpack.c.l.b16 %v497
      %v1930 = vunpack.c.l.b16 %v498
      %v1931 = vunpack.c.l.b16 %v499
      %v1932 = vunpack.c.l.b16 %v500
      %v1933 = vunpack.c.l.b16 %v501
      %v1934 = vunpack.c.l.b16 %v502
      %v1935 = vunpack.c.l.b16 %v503
      %v1936 = vunpack.c.l.b16 %v504
      %v1937 = vunpack.c.l.b16 %v505
      %v1938 = vunpack.c.l.b16 %v506
      %v1939 = vunpack.c.l.b16 %v507
      %v1940 = vunpack.c.l.b16 %v508
      %v1941 = vunpack.c.l.b16 %v509
      %v1942 = vunpack.c.l.b16 %v510
      %v1943 = vunpack.c.l.b16 %v511
      %v1944 = vunpack.c.l.b16 %v512
      %v1945 = vunpack.c.l.b16 %v513
      %v1946 = vunpack.c.l.b16 %v514
      %v1947 = vunpack.c.l.b16 %v515
      %v1948 = vunpack.c.l.b16 %v516
      %v1949 = vunpack.c.l.b16 %v517
      %v1950 = vunpack.c.l.b16 %v518
      %v1951 = vunpack.c.l.b16 %v519
      %v1952 = vunpack.c.l.b16 %v520
      %v1953 = vunpack.c.l.b16 %v521
      %v1954 = vunpack.c.l.b16 %v522
      %v1955 = vunpack.c.l.b16 %v523
      %v1956 = vunpack.c.l.b16 %v524
      %v1957 = vunpack.c.l.b16 %v525
      %v1958 = vunpack.c.l.b16 %v526
      %v1959 = vunpack.c.l.b16 %v527
      %v1960 = vunpack.c.l.b16 %v528
      %v1961 = vunpack.c.l.b16 %v529
      %v1962 = vunpack.c.l.b16 %v530
      %v1963 = vunpack.c.l.b16 %v531
      %v1964 = vunpack.c.l.b16 %v532
      %v1965 = vunpack.c.l.b16 %v533
      %v1966 = vunpack.c.l.b16 %v534
      %v1967 = vunpack.c.l.b16 %v535
      %v1968 = vunpack.c.l.b16 %v536
      %v1969 = vunpack.c.l.b16 %v537
      %v1970 = vunpack.c.l.b16 %v538
      %v1971 = vunpack.c.l.b16 %v539
      %v1972 = vunpack.c.l.b16 %v540
      %v1973 = vunpack.c.l.b16 %v541
      %v1974 = vunpack.c.l.b16 %v542
      %v1975 = vunpack.c.l.b16 %v543
      %v1976 = vunpack.c.l.b16 %v544
      %v1977 = vunpack.c.l.b16 %v545
      %v1978 = vunpack.c.l.b16 %v546
      %v1979 = vunpack.c.l.b16 %v547
      %v1980 = vunpack.c.l.b16 %v548
      %v1981 = vunpack.c.l.b16 %v549
      %v1982 = vunpack.c.l.b16 %v550
      %v1983 = vunpack.c.l.b16 %v551
      %v1984 = vunpack.c.l.b16 %v552
      %v1985 = vunpack.c.l.b16 %v553
      %v1986 = vunpack.c.l.b16 %v554
      %v1987 = vunpack.c.l.b16 %v555
      %v1988 = vunpack.c.l.b16 %v556
      %v1989 = vunpack.c.l.b16 %v557
      %v1990 = vunpack.c.l.b16 %v558
      %v1991 = vunpack.c.l.b16 %v559
      %v1992 = vunpack.c.l.b16 %v560
      %v1993 = vunpack.c.l.b16 %v561
      %v1994 = vunpack.c.l.b16 %v562
      %v1995 = vunpack.c.l.b16 %v563
      %v1996 = vunpack.c.l.b16 %v564
      %v1997 = vunpack.c.l.b16 %v565
      %v1998 = vunpack.c.l.b16 %v566
      %v1999 = vunpack.c.l.b16 %v567
      %v2000 = vunpack.c.l.b16 %v568
      %v2001 = vunpack.c.l.b16 %v569
      %v2002 = vunpack.c.l.b16 %v570
      %v2003 = vunpack.c.l.b16 %v571
      %v2004 = vunpack.c.l.b16 %v572
      %v2005 = vunpack.c.l.b16 %v573
      %v2006 = vunpack.c.l.b16 %v574
      %v2007 = vunpack.c.l.b16 %v575
      %v2008 = vunpack.c.l.b16 %v576
      %v2009 = vunpack.c.l.b16 %v577
      %v2010 = vunpack.c.l.b16 %v578
      %v2011 = vunpack.c.l.b16 %v579
      %v2012 = vunpack.c.l.b16 %v580
      %v2013 = vunpack.c.l.b16 %v581
      %v2014 = vunpack.c.l.b16 %v582
      %v2015 = vunpack.c.l.b16 %v583
      %v2016 = vunpack.c.l.b16 %v584
      %v2017 = vunpack.c.l.b16 %v585
      %v2018 = vunpack.c.l.b16 %v586
      %v2019 = vunpack.c.l.b16 %v587
      %v2020 = vunpack.c.l.b16 %v588
      %v2021 = vunpack.c.l.b16 %v589
      %v2022 = vunpack.c.l.b16 %v590
      %v2023 = vunpack.c.l.b16 %v591
      %v2024 = vunpack.c.l.b16 %v592
      %v2025 = vunpack.c.l.b16 %v593
      %v2026 = vunpack.c.l.b16 %v594
      %v2027 = vunpack.c.l.b16 %v595
      %v2028 = vunpack.c.l.b16 %v596
      %v2029 = vunpack.c.l.b16 %v597
      %v2030 = vunpack.c.l.b16 %v598
      %v2031 = vunpack.c.l.b16 %v599
      %v2032 = vunpack.c.l.b16 %v600
      %v2033 = vunpack.c.l.b16 %v601
      %v2034 = vunpack.c.l.b16 %v602
      %v2035 = vunpack.c.l.b16 %v603
      %v2036 = vunpack.c.l.b16 %v604
      %v2037 = vunpack.c.l.b16 %v605
      %v2038 = vunpack.c.l.b16 %v606
      %v2039 = vunpack.c.l.b16 %v607
      %v2040 = vunpack.c.l.b16 %v608
      %v2041 = vunpack.c.l.b16 %v609
      %v2042 = vunpack.c.l.b16 %v610
      %v2043 = vunpack.c.l.b16 %v611
      %v2044 = vunpack.c.l.b16 %v612
      %v2045 = vunpack.c.l.b16 %v613
      %v2046 = vunpack.c.l.b16 %v614
      %v2047 = vunpack.c.l.b16 %v615
      %v2048 = vunpack.c.l.b16 %v616
      %v2049 = vunpack.c.l.b16 %v617
      %v2050 = vunpack.c.l.b16 %v618
      %v2051 = vunpack.c.l.b16 %v619
      %v2052 = vunpack.c.l.b16 %v620
      %v2053 = vunpack.c.l.b16 %v621
      %v2054 = vunpack.c.l.b16 %v622
      %v2055 = vunpack.c.l.b16 %v623
      %v2056 = vunpack.c.l.b16 %v624
      %v2057 = vpack.c.b16 %v1862, %v1861
      %v2058 = vpack.c.b16 %v1864, %v1863
      %v2059 = vpack.c.b16 %v1866, %v1865
      %v2060 = vpack.c.b16 %v1868, %v1867
      %v2061 = vpack.c.b16 %v1870, %v1869
      %v2062 = vpack.c.b16 %v1872, %v1871
      %v2063 = vpack.c.b16 %v1874, %v1873
      %v2064 = vpack.c.b16 %v1876, %v1875
      %v2065 = vpack.c.b16 %v1878, %v1877
      %v2066 = vpack.c.b16 %v1880, %v1879
      %v2067 = vpack.c.b16 %v1882, %v1881
      %v2068 = vpack.c.b16 %v1884, %v1883
      %v2069 = vpack.c.b16 %v1886, %v1885
      %v2070 = vpack.c.b16 %v1888, %v1887
      %v2071 = vpack.c.b16 %v1890, %v1889
      %v2072 = vpack.c.b16 %v1892, %v1891
      %v2073 = vpack.c.b16 %v1894, %v1893
      %v2074 = vpack.c.b16 %v1896, %v1895
      %v2075 = vpack.c.b16 %v1898, %v1897
      %v2076 = vpack.c.b16 %v1900, %v1899
      %v2077 = vpack.c.b16 %v1902, %v1901
      %v2078 = vpack.c.b16 %v1904, %v1903
      %v2079 = vpack.c.b16 %v1906, %v1905
      %v2080 = vpack.c.b16 %v1908, %v1907
      %v2081 = vpack.c.b16 %v1910, %v1909
      %v2082 = vpack.c.b16 %v1912, %v1911
      %v2083 = vpack.c.b16 %v1914, %v1913
      %v2084 = vpack.c.b16 %v1916, %v1915
      %v2085 = vpack.c.b16 %v1918, %v1917
      %v2086 = vpack.c.b16 %v1920, %v1919
      %v2087 = vpack.c.b16 %v1922, %v1921
      %v2088 = vpack.c.b16 %v1924, %v1923
      %v2089 = vpack.c.b16 %v1926, %v1925
      %v2090 = vpack.c.b16 %v1928, %v1927
      %v2091 = vpack.c.b16 %v1930, %v1929
      %v2092 = vpack.c.b16 %v1932, %v1931
      %v2093 = vpack.c.b16 %v1934, %v1933
      %v2094 = vpack.c.b16 %v1936, %v1935
      %v2095 = vpack.c.b16 %v1938, %v1937
      %v2096 = vpack.c.b16 %v1940, %v1939
      %v2097 = vpack.c.b16 %v1942, %v1941
      %v2098 = vpack.c.b16 %v1944, %v1943
      %v2099 = vpack.c.b16 %v1946, %v1945
      %v2100 = vpack.c.b16 %v1948, %v1947
      %v2101 = vpack.c.b16 %v1950, %v1949
      %v2102 = vpack.c.b16 %v1952, %v1951
      %v2103 = vpack.c.b16 %v1954, %v1953
      %v2104 = vpack.c.b16 %v1956, %v1955
      %v2105 = vpack.c.b16 %v1958, %v1957
      %v2106 = vpack.c.b16 %v1960, %v1959
      %v2107 = vpack.c.b16 %v1962, %v1961
      %v2108 = vpack.c.b16 %v1964, %v1963
      %v2109 = vpack.c.b16 %v1966, %v1965
      %v2110 = vpack.c.b16 %v1968, %v1967
      %v2111 = vpack.c.b16 %v1970, %v1969
      %v2112 = vpack.c.b16 %v1972, %v1971
      %v2113 = vpack.c.b16 %v1974, %v1973
      %v2114 = vpack.c.b16 %v1976, %v1975
      %v2115 = vpack.c.b16 %v1978, %v1977
      %v2116 = vpack.c.b16 %v1980, %v1979
      %v2117 = vpack.c.b16 %v1982, %v1981
      %v2118 = vpack.c.b16 %v1984, %v1983
      %v2119 = vpack.c.b16 %v1986, %v1985
      %v2120 = vpack.c.b16 %v1988, %v1987
      %v2121 = vpack.c.b16 %v1990, %v1989
      %v2122 = vpack.c.b16 %v1992, %v1991
      %v2123 = vpack.c.b16 %v1994, %v1993
      %v2124 = vpack.c.b16 %v1996, %v1995
      %v2125 = vpack.c.b16 %v1998, %v1997
      %v2126 = vpack.c.b16 %v2000, %v1999
      %v2127 = vpack.c.b16 %v2002, %v2001
      %v2128 = vpack.c.b16 %v2004, %v2003
      %v2129 = vpack.c.b16 %v2006, %v2005
      %v2130 = vpack.c.b16 %v2008, %v2007
      %v2131 = vpack.c.b16 %v2010, %v2009
      %v2132 = vpack.c.b16 %v2012, %v2011
      %v2133 = vpack.c.b16 %v2014, %v2013
      %v2134 = vpack.c.b16 %v2016, %v2015
      %v2135 = vpack.c.b16 %v2018, %v2017
      %v2136 = vpack.c.b16 %v2020, %v2019
      %v2137 = vpack.c.b16 %v2022, %v2021
      %v2138 = vpack.c.b16 %v2024, %v2023
      %v2139 = vpack.c.b16 %v2026, %v2025
      %v2140 = vpack.c.b16 %v2028, %v2027
      %v2141 = vpack.c.b16 %v2030, %v2029
      %v2142 = vpack.c.b16 %v2032, %v2031
      %v2143 = vpack.c.b16 %v2034, %v2033
      %v2144 = vpack.c.b16 %v2036, %v2035
      %v2145 = vpack.c.b16 %v2038, %v2037
      %v2146 = vpack.c.b16 %v2040, %v2039
      %v2147 = vpack.c.b16 %v2042, %v2041
      %v2148 = vpack.c.b16 %v2044, %v2043
      %v2149 = vpack.c.b16 %v2046, %v2045
      %v2150 = vpack.c.b16 %v2048, %v2047
      %v2151 = vpack.c.b16 %v2050, %v2049
      %v2152 = vpack.c.b16 %v2052, %v2051
      %v2153 = vpack.c.b16 %v2054, %v2053
      %v2154 = vpack.c.b16 %v2056, %v2055
      %vm2253 = vcmask 261120
      %v2255 = vsel %vm2253, %v1277, 0
      %v2258 = vsel %vm2253, %v1290, 0
      %v2261 = vsel %vm2253, %v1303, 0
      %v2264 = vsel %vm2253, %v1316, 0
      %v2267 = vsel %vm2253, %v1329, 0
      %v2270 = vsel %vm2253, %v1342, 0
      %v2273 = vsel %vm2253, %v1355, 0
      %v2276 = vsel %vm2253, %v1368, 0
      %v2279 = vsel %vm2253, %v1381, 0
      %v2282 = vsel %vm2253, %v1394, 0
      %v2285 = vsel %vm2253, %v1407, 0
      %v2288 = vsel %vm2253, %v1420, 0
      %v2291 = vsel %vm2253, %v1433, 0
      %v2294 = vsel %vm2253, %v1446, 0
      %v2297 = vsel %vm2253, %v1459, 0
      %v2300 = vsel %vm2253, %v1472, 0
      %2302 = vmatpush.bf16.msra.mxu0 %v2064
      %2303 = vmatpush.bf16.msra.mxu0 %v2063
      %2304 = vmatpush.bf16.msra.mxu0 %v2062
      %2305 = vmatpush.bf16.msra.mxu0 %v2061
      %2306 = vmatpush.bf16.msra.mxu0 %v2060
      %2307 = vmatpush.bf16.msra.mxu0 %v2059
      %2308 = vmatpush.bf16.msra.mxu0 %v2058
      %2309 = vmatpush.bf16.msra.mxu0 %v2057
      %2310 = vmatmul.bf16.gmra.mxu0 %v1265
      %v2311 = vpop.f32.mrf.mxu0
      %v2312 = vadd.f32 0.0, %v2311
      %v2313 = vpop.f32.mrf.mxu0
      %v2314 = vadd.f32 0.0, %v2313
      %2315 = vmatmul.bf16.gmra.mxu0 %v1278
      %v2316 = vpop.f32.mrf.mxu0
      %v2317 = vadd.f32 0.0, %v2316
      %v2318 = vpop.f32.mrf.mxu0
      %v2319 = vadd.f32 0.0, %v2318
      %2320 = vmatmul.bf16.gmra.mxu0 %v1291
      %v2321 = vpop.f32.mrf.mxu0
      %v2322 = vadd.f32 0.0, %v2321
      %v2323 = vpop.f32.mrf.mxu0
      %v2324 = vadd.f32 0.0, %v2323
      %2325 = vmatmul.bf16.gmra.mxu0 %v1304
      %v2326 = vpop.f32.mrf.mxu0
      %v2327 = vadd.f32 0.0, %v2326
      %v2328 = vpop.f32.mrf.mxu0
      %v2329 = vadd.f32 0.0, %v2328
      %2330 = vmatmul.bf16.gmra.mxu0 %v1317
      %v2331 = vpop.f32.mrf.mxu0
      %v2332 = vadd.f32 0.0, %v2331
      %v2333 = vpop.f32.mrf.mxu0
      %v2334 = vadd.f32 0.0, %v2333
      %2335 = vmatmul.bf16.gmra.mxu0 %v1330
      %v2336 = vpop.f32.mrf.mxu0
      %v2337 = vadd.f32 0.0, %v2336
      %v2338 = vpop.f32.mrf.mxu0
      %v2339 = vadd.f32 0.0, %v2338
      %2340 = vmatmul.bf16.gmra.mxu0 %v1343
      %v2341 = vpop.f32.mrf.mxu0
      %v2342 = vadd.f32 0.0, %v2341
      %v2343 = vpop.f32.mrf.mxu0
      %v2344 = vadd.f32 0.0, %v2343
      %2345 = vmatmul.bf16.gmra.mxu0 %v1356
      %v2346 = vpop.f32.mrf.mxu0
      %v2347 = vadd.f32 0.0, %v2346
      %v2348 = vpop.f32.mrf.mxu0
      %v2349 = vadd.f32 0.0, %v2348
      %2350 = vmatmul.bf16.gmra.mxu0 %v1369
      %v2351 = vpop.f32.mrf.mxu0
      %v2352 = vadd.f32 0.0, %v2351
      %v2353 = vpop.f32.mrf.mxu0
      %v2354 = vadd.f32 0.0, %v2353
      %2355 = vmatmul.bf16.gmra.mxu0 %v1382
      %v2356 = vpop.f32.mrf.mxu0
      %v2357 = vadd.f32 0.0, %v2356
      %v2358 = vpop.f32.mrf.mxu0
      %v2359 = vadd.f32 0.0, %v2358
      %2360 = vmatmul.bf16.gmra.mxu0 %v1395
      %v2361 = vpop.f32.mrf.mxu0
      %v2362 = vadd.f32 0.0, %v2361
      %v2363 = vpop.f32.mrf.mxu0
      %v2364 = vadd.f32 0.0, %v2363
      %2365 = vmatmul.bf16.gmra.mxu0 %v1408
      %v2366 = vpop.f32.mrf.mxu0
      %v2367 = vadd.f32 0.0, %v2366
      %v2368 = vpop.f32.mrf.mxu0
      %v2369 = vadd.f32 0.0, %v2368
      %2370 = vmatmul.bf16.gmra.mxu0 %v1421
      %v2371 = vpop.f32.mrf.mxu0
      %v2372 = vadd.f32 0.0, %v2371
      %v2373 = vpop.f32.mrf.mxu0
      %v2374 = vadd.f32 0.0, %v2373
      %2375 = vmatmul.bf16.gmra.mxu0 %v1434
      %v2376 = vpop.f32.mrf.mxu0
      %v2377 = vadd.f32 0.0, %v2376
      %v2378 = vpop.f32.mrf.mxu0
      %v2379 = vadd.f32 0.0, %v2378
      %2380 = vmatmul.bf16.gmra.mxu0 %v1447
      %v2381 = vpop.f32.mrf.mxu0
      %v2382 = vadd.f32 0.0, %v2381
      %v2383 = vpop.f32.mrf.mxu0
      %v2384 = vadd.f32 0.0, %v2383
      %2385 = vmatmul.bf16.gmra.mxu0 %v1460
      %v2386 = vpop.f32.mrf.mxu0
      %v2387 = vadd.f32 0.0, %v2386
      %v2388 = vpop.f32.mrf.mxu0
      %v2389 = vadd.f32 0.0, %v2388
      %2390 = vdwg.mxu0
      %2391 = vmatpush.bf16.msra.mxu0 %v2072
      %2392 = vmatpush.bf16.msra.mxu0 %v2071
      %2393 = vmatpush.bf16.msra.mxu0 %v2070
      %2394 = vmatpush.bf16.msra.mxu0 %v2069
      %2395 = vmatpush.bf16.msra.mxu0 %v2068
      %2396 = vmatpush.bf16.msra.mxu0 %v2067
      %2397 = vmatpush.bf16.msra.mxu0 %v2066
      %2398 = vmatpush.bf16.msra.mxu0 %v2065
      %2399 = vmatmul.bf16.gmra.mxu0 %v1266
      %v2400 = vpop.f32.mrf.mxu0
      %v2401 = vadd.f32 %v2312, %v2400
      %v2402 = vpop.f32.mrf.mxu0
      %v2403 = vadd.f32 %v2314, %v2402
      %2404 = vmatmul.bf16.gmra.mxu0 %v1279
      %v2405 = vpop.f32.mrf.mxu0
      %v2406 = vadd.f32 %v2317, %v2405
      %v2407 = vpop.f32.mrf.mxu0
      %v2408 = vadd.f32 %v2319, %v2407
      %2409 = vmatmul.bf16.gmra.mxu0 %v1292
      %v2410 = vpop.f32.mrf.mxu0
      %v2411 = vadd.f32 %v2322, %v2410
      %v2412 = vpop.f32.mrf.mxu0
      %v2413 = vadd.f32 %v2324, %v2412
      %2414 = vmatmul.bf16.gmra.mxu0 %v1305
      %v2415 = vpop.f32.mrf.mxu0
      %v2416 = vadd.f32 %v2327, %v2415
      %v2417 = vpop.f32.mrf.mxu0
      %v2418 = vadd.f32 %v2329, %v2417
      %2419 = vmatmul.bf16.gmra.mxu0 %v1318
      %v2420 = vpop.f32.mrf.mxu0
      %v2421 = vadd.f32 %v2332, %v2420
      %v2422 = vpop.f32.mrf.mxu0
      %v2423 = vadd.f32 %v2334, %v2422
      %2424 = vmatmul.bf16.gmra.mxu0 %v1331
      %v2425 = vpop.f32.mrf.mxu0
      %v2426 = vadd.f32 %v2337, %v2425
      %v2427 = vpop.f32.mrf.mxu0
      %v2428 = vadd.f32 %v2339, %v2427
      %2429 = vmatmul.bf16.gmra.mxu0 %v1344
      %v2430 = vpop.f32.mrf.mxu0
      %v2431 = vadd.f32 %v2342, %v2430
      %v2432 = vpop.f32.mrf.mxu0
      %v2433 = vadd.f32 %v2344, %v2432
      %2434 = vmatmul.bf16.gmra.mxu0 %v1357
      %v2435 = vpop.f32.mrf.mxu0
      %v2436 = vadd.f32 %v2347, %v2435
      %v2437 = vpop.f32.mrf.mxu0
      %v2438 = vadd.f32 %v2349, %v2437
      %2439 = vmatmul.bf16.gmra.mxu0 %v1370
      %v2440 = vpop.f32.mrf.mxu0
      %v2441 = vadd.f32 %v2352, %v2440
      %v2442 = vpop.f32.mrf.mxu0
      %v2443 = vadd.f32 %v2354, %v2442
      %2444 = vmatmul.bf16.gmra.mxu0 %v1383
      %v2445 = vpop.f32.mrf.mxu0
      %v2446 = vadd.f32 %v2357, %v2445
      %v2447 = vpop.f32.mrf.mxu0
      %v2448 = vadd.f32 %v2359, %v2447
      %2449 = vmatmul.bf16.gmra.mxu0 %v1396
      %v2450 = vpop.f32.mrf.mxu0
      %v2451 = vadd.f32 %v2362, %v2450
      %v2452 = vpop.f32.mrf.mxu0
      %v2453 = vadd.f32 %v2364, %v2452
      %2454 = vmatmul.bf16.gmra.mxu0 %v1409
      %v2455 = vpop.f32.mrf.mxu0
      %v2456 = vadd.f32 %v2367, %v2455
      %v2457 = vpop.f32.mrf.mxu0
      %v2458 = vadd.f32 %v2369, %v2457
      %2459 = vmatmul.bf16.gmra.mxu0 %v1422
      %v2460 = vpop.f32.mrf.mxu0
      %v2461 = vadd.f32 %v2372, %v2460
      %v2462 = vpop.f32.mrf.mxu0
      %v2463 = vadd.f32 %v2374, %v2462
      %2464 = vmatmul.bf16.gmra.mxu0 %v1435
      %v2465 = vpop.f32.mrf.mxu0
      %v2466 = vadd.f32 %v2377, %v2465
      %v2467 = vpop.f32.mrf.mxu0
      %v2468 = vadd.f32 %v2379, %v2467
      %2469 = vmatmul.bf16.gmra.mxu0 %v1448
      %v2470 = vpop.f32.mrf.mxu0
      %v2471 = vadd.f32 %v2382, %v2470
      %v2472 = vpop.f32.mrf.mxu0
      %v2473 = vadd.f32 %v2384, %v2472
      %2474 = vmatmul.bf16.gmra.mxu0 %v1461
      %v2475 = vpop.f32.mrf.mxu0
      %v2476 = vadd.f32 %v2387, %v2475
      %v2477 = vpop.f32.mrf.mxu0
      %v2478 = vadd.f32 %v2389, %v2477
      %2479 = vdwg.mxu0
      %2480 = vmatpush.bf16.msra.mxu0 %v2080
      %2481 = vmatpush.bf16.msra.mxu0 %v2079
      %2482 = vmatpush.bf16.msra.mxu0 %v2078
      %2483 = vmatpush.bf16.msra.mxu0 %v2077
      %2484 = vmatpush.bf16.msra.mxu0 %v2076
      %2485 = vmatpush.bf16.msra.mxu0 %v2075
      %2486 = vmatpush.bf16.msra.mxu0 %v2074
      %2487 = vmatpush.bf16.msra.mxu0 %v2073
      %2488 = vmatmul.bf16.gmra.mxu0 %v1267
      %v2489 = vpop.f32.mrf.mxu0
      %v2490 = vadd.f32 %v2401, %v2489
      %v2491 = vpop.f32.mrf.mxu0
      %v2492 = vadd.f32 %v2403, %v2491
      %2493 = vmatmul.bf16.gmra.mxu0 %v1280
      %v2494 = vpop.f32.mrf.mxu0
      %v2495 = vadd.f32 %v2406, %v2494
      %v2496 = vpop.f32.mrf.mxu0
      %v2497 = vadd.f32 %v2408, %v2496
      %2498 = vmatmul.bf16.gmra.mxu0 %v1293
      %v2499 = vpop.f32.mrf.mxu0
      %v2500 = vadd.f32 %v2411, %v2499
      %v2501 = vpop.f32.mrf.mxu0
      %v2502 = vadd.f32 %v2413, %v2501
      %2503 = vmatmul.bf16.gmra.mxu0 %v1306
      %v2504 = vpop.f32.mrf.mxu0
      %v2505 = vadd.f32 %v2416, %v2504
      %v2506 = vpop.f32.mrf.mxu0
      %v2507 = vadd.f32 %v2418, %v2506
      %2508 = vmatmul.bf16.gmra.mxu0 %v1319
      %v2509 = vpop.f32.mrf.mxu0
      %v2510 = vadd.f32 %v2421, %v2509
      %v2511 = vpop.f32.mrf.mxu0
      %v2512 = vadd.f32 %v2423, %v2511
      %2513 = vmatmul.bf16.gmra.mxu0 %v1332
      %v2514 = vpop.f32.mrf.mxu0
      %v2515 = vadd.f32 %v2426, %v2514
      %v2516 = vpop.f32.mrf.mxu0
      %v2517 = vadd.f32 %v2428, %v2516
      %2518 = vmatmul.bf16.gmra.mxu0 %v1345
      %v2519 = vpop.f32.mrf.mxu0
      %v2520 = vadd.f32 %v2431, %v2519
      %v2521 = vpop.f32.mrf.mxu0
      %v2522 = vadd.f32 %v2433, %v2521
      %2523 = vmatmul.bf16.gmra.mxu0 %v1358
      %v2524 = vpop.f32.mrf.mxu0
      %v2525 = vadd.f32 %v2436, %v2524
      %v2526 = vpop.f32.mrf.mxu0
      %v2527 = vadd.f32 %v2438, %v2526
      %2528 = vmatmul.bf16.gmra.mxu0 %v1371
      %v2529 = vpop.f32.mrf.mxu0
      %v2530 = vadd.f32 %v2441, %v2529
      %v2531 = vpop.f32.mrf.mxu0
      %v2532 = vadd.f32 %v2443, %v2531
      %2533 = vmatmul.bf16.gmra.mxu0 %v1384
      %v2534 = vpop.f32.mrf.mxu0
      %v2535 = vadd.f32 %v2446, %v2534
      %v2536 = vpop.f32.mrf.mxu0
      %v2537 = vadd.f32 %v2448, %v2536
      %2538 = vmatmul.bf16.gmra.mxu0 %v1397
      %v2539 = vpop.f32.mrf.mxu0
      %v2540 = vadd.f32 %v2451, %v2539
      %v2541 = vpop.f32.mrf.mxu0
      %v2542 = vadd.f32 %v2453, %v2541
      %2543 = vmatmul.bf16.gmra.mxu0 %v1410
      %v2544 = vpop.f32.mrf.mxu0
      %v2545 = vadd.f32 %v2456, %v2544
      %v2546 = vpop.f32.mrf.mxu0
      %v2547 = vadd.f32 %v2458, %v2546
      %2548 = vmatmul.bf16.gmra.mxu0 %v1423
      %v2549 = vpop.f32.mrf.mxu0
      %v2550 = vadd.f32 %v2461, %v2549
      %v2551 = vpop.f32.mrf.mxu0
      %v2552 = vadd.f32 %v2463, %v2551
      %2553 = vmatmul.bf16.gmra.mxu0 %v1436
      %v2554 = vpop.f32.mrf.mxu0
      %v2555 = vadd.f32 %v2466, %v2554
      %v2556 = vpop.f32.mrf.mxu0
      %v2557 = vadd.f32 %v2468, %v2556
      %2558 = vmatmul.bf16.gmra.mxu0 %v1449
      %v2559 = vpop.f32.mrf.mxu0
      %v2560 = vadd.f32 %v2471, %v2559
      %v2561 = vpop.f32.mrf.mxu0
      %v2562 = vadd.f32 %v2473, %v2561
      %2563 = vmatmul.bf16.gmra.mxu0 %v1462
      %v2564 = vpop.f32.mrf.mxu0
      %v2565 = vadd.f32 %v2476, %v2564
      %v2566 = vpop.f32.mrf.mxu0
      %v2567 = vadd.f32 %v2478, %v2566
      %2568 = vdwg.mxu0
      %2569 = vmatpush.bf16.msra.mxu0 %v2088
      %2570 = vmatpush.bf16.msra.mxu0 %v2087
      %2571 = vmatpush.bf16.msra.mxu0 %v2086
      %2572 = vmatpush.bf16.msra.mxu0 %v2085
      %2573 = vmatpush.bf16.msra.mxu0 %v2084
      %2574 = vmatpush.bf16.msra.mxu0 %v2083
      %2575 = vmatpush.bf16.msra.mxu0 %v2082
      %2576 = vmatpush.bf16.msra.mxu0 %v2081
      %2577 = vmatmul.bf16.gmra.mxu0 %v1268
      %v2578 = vpop.f32.mrf.mxu0
      %v2579 = vadd.f32 %v2490, %v2578
      %v2580 = vpop.f32.mrf.mxu0
      %v2581 = vadd.f32 %v2492, %v2580
      %2582 = vmatmul.bf16.gmra.mxu0 %v1281
      %v2583 = vpop.f32.mrf.mxu0
      %v2584 = vadd.f32 %v2495, %v2583
      %v2585 = vpop.f32.mrf.mxu0
      %v2586 = vadd.f32 %v2497, %v2585
      %2587 = vmatmul.bf16.gmra.mxu0 %v1294
      %v2588 = vpop.f32.mrf.mxu0
      %v2589 = vadd.f32 %v2500, %v2588
      %v2590 = vpop.f32.mrf.mxu0
      %v2591 = vadd.f32 %v2502, %v2590
      %2592 = vmatmul.bf16.gmra.mxu0 %v1307
      %v2593 = vpop.f32.mrf.mxu0
      %v2594 = vadd.f32 %v2505, %v2593
      %v2595 = vpop.f32.mrf.mxu0
      %v2596 = vadd.f32 %v2507, %v2595
      %2597 = vmatmul.bf16.gmra.mxu0 %v1320
      %v2598 = vpop.f32.mrf.mxu0
      %v2599 = vadd.f32 %v2510, %v2598
      %v2600 = vpop.f32.mrf.mxu0
      %v2601 = vadd.f32 %v2512, %v2600
      %2602 = vmatmul.bf16.gmra.mxu0 %v1333
      %v2603 = vpop.f32.mrf.mxu0
      %v2604 = vadd.f32 %v2515, %v2603
      %v2605 = vpop.f32.mrf.mxu0
      %v2606 = vadd.f32 %v2517, %v2605
      %2607 = vmatmul.bf16.gmra.mxu0 %v1346
      %v2608 = vpop.f32.mrf.mxu0
      %v2609 = vadd.f32 %v2520, %v2608
      %v2610 = vpop.f32.mrf.mxu0
      %v2611 = vadd.f32 %v2522, %v2610
      %2612 = vmatmul.bf16.gmra.mxu0 %v1359
      %v2613 = vpop.f32.mrf.mxu0
      %v2614 = vadd.f32 %v2525, %v2613
      %v2615 = vpop.f32.mrf.mxu0
      %v2616 = vadd.f32 %v2527, %v2615
      %2617 = vmatmul.bf16.gmra.mxu0 %v1372
      %v2618 = vpop.f32.mrf.mxu0
      %v2619 = vadd.f32 %v2530, %v2618
      %v2620 = vpop.f32.mrf.mxu0
      %v2621 = vadd.f32 %v2532, %v2620
      %2622 = vmatmul.bf16.gmra.mxu0 %v1385
      %v2623 = vpop.f32.mrf.mxu0
      %v2624 = vadd.f32 %v2535, %v2623
      %v2625 = vpop.f32.mrf.mxu0
      %v2626 = vadd.f32 %v2537, %v2625
      %2627 = vmatmul.bf16.gmra.mxu0 %v1398
      %v2628 = vpop.f32.mrf.mxu0
      %v2629 = vadd.f32 %v2540, %v2628
      %v2630 = vpop.f32.mrf.mxu0
      %v2631 = vadd.f32 %v2542, %v2630
      %2632 = vmatmul.bf16.gmra.mxu0 %v1411
      %v2633 = vpop.f32.mrf.mxu0
      %v2634 = vadd.f32 %v2545, %v2633
      %v2635 = vpop.f32.mrf.mxu0
      %v2636 = vadd.f32 %v2547, %v2635
      %2637 = vmatmul.bf16.gmra.mxu0 %v1424
      %v2638 = vpop.f32.mrf.mxu0
      %v2639 = vadd.f32 %v2550, %v2638
      %v2640 = vpop.f32.mrf.mxu0
      %v2641 = vadd.f32 %v2552, %v2640
      %2642 = vmatmul.bf16.gmra.mxu0 %v1437
      %v2643 = vpop.f32.mrf.mxu0
      %v2644 = vadd.f32 %v2555, %v2643
      %v2645 = vpop.f32.mrf.mxu0
      %v2646 = vadd.f32 %v2557, %v2645
      %2647 = vmatmul.bf16.gmra.mxu0 %v1450
      %v2648 = vpop.f32.mrf.mxu0
      %v2649 = vadd.f32 %v2560, %v2648
      %v2650 = vpop.f32.mrf.mxu0
      %v2651 = vadd.f32 %v2562, %v2650
      %2652 = vmatmul.bf16.gmra.mxu0 %v1463
      %v2653 = vpop.f32.mrf.mxu0
      %v2654 = vadd.f32 %v2565, %v2653
      %v2655 = vpop.f32.mrf.mxu0
      %v2656 = vadd.f32 %v2567, %v2655
      %2657 = vdwg.mxu0
      %2658 = vmatpush.bf16.msra.mxu0 %v2096
      %2659 = vmatpush.bf16.msra.mxu0 %v2095
      %2660 = vmatpush.bf16.msra.mxu0 %v2094
      %2661 = vmatpush.bf16.msra.mxu0 %v2093
      %2662 = vmatpush.bf16.msra.mxu0 %v2092
      %2663 = vmatpush.bf16.msra.mxu0 %v2091
      %2664 = vmatpush.bf16.msra.mxu0 %v2090
      %2665 = vmatpush.bf16.msra.mxu0 %v2089
      %2666 = vmatmul.bf16.gmra.mxu0 %v1269
      %v2667 = vpop.f32.mrf.mxu0
      %v2668 = vadd.f32 %v2579, %v2667
      %v2669 = vpop.f32.mrf.mxu0
      %v2670 = vadd.f32 %v2581, %v2669
      %2671 = vmatmul.bf16.gmra.mxu0 %v1282
      %v2672 = vpop.f32.mrf.mxu0
      %v2673 = vadd.f32 %v2584, %v2672
      %v2674 = vpop.f32.mrf.mxu0
      %v2675 = vadd.f32 %v2586, %v2674
      %2676 = vmatmul.bf16.gmra.mxu0 %v1295
      %v2677 = vpop.f32.mrf.mxu0
      %v2678 = vadd.f32 %v2589, %v2677
      %v2679 = vpop.f32.mrf.mxu0
      %v2680 = vadd.f32 %v2591, %v2679
      %2681 = vmatmul.bf16.gmra.mxu0 %v1308
      %v2682 = vpop.f32.mrf.mxu0
      %v2683 = vadd.f32 %v2594, %v2682
      %v2684 = vpop.f32.mrf.mxu0
      %v2685 = vadd.f32 %v2596, %v2684
      %2686 = vmatmul.bf16.gmra.mxu0 %v1321
      %v2687 = vpop.f32.mrf.mxu0
      %v2688 = vadd.f32 %v2599, %v2687
      %v2689 = vpop.f32.mrf.mxu0
      %v2690 = vadd.f32 %v2601, %v2689
      %2691 = vmatmul.bf16.gmra.mxu0 %v1334
      %v2692 = vpop.f32.mrf.mxu0
      %v2693 = vadd.f32 %v2604, %v2692
      %v2694 = vpop.f32.mrf.mxu0
      %v2695 = vadd.f32 %v2606, %v2694
      %2696 = vmatmul.bf16.gmra.mxu0 %v1347
      %v2697 = vpop.f32.mrf.mxu0
      %v2698 = vadd.f32 %v2609, %v2697
      %v2699 = vpop.f32.mrf.mxu0
      %v2700 = vadd.f32 %v2611, %v2699
      %2701 = vmatmul.bf16.gmra.mxu0 %v1360
      %v2702 = vpop.f32.mrf.mxu0
      %v2703 = vadd.f32 %v2614, %v2702
      %v2704 = vpop.f32.mrf.mxu0
      %v2705 = vadd.f32 %v2616, %v2704
      %2706 = vmatmul.bf16.gmra.mxu0 %v1373
      %v2707 = vpop.f32.mrf.mxu0
      %v2708 = vadd.f32 %v2619, %v2707
      %v2709 = vpop.f32.mrf.mxu0
      %v2710 = vadd.f32 %v2621, %v2709
      %2711 = vmatmul.bf16.gmra.mxu0 %v1386
      %v2712 = vpop.f32.mrf.mxu0
      %v2713 = vadd.f32 %v2624, %v2712
      %v2714 = vpop.f32.mrf.mxu0
      %v2715 = vadd.f32 %v2626, %v2714
      %2716 = vmatmul.bf16.gmra.mxu0 %v1399
      %v2717 = vpop.f32.mrf.mxu0
      %v2718 = vadd.f32 %v2629, %v2717
      %v2719 = vpop.f32.mrf.mxu0
      %v2720 = vadd.f32 %v2631, %v2719
      %2721 = vmatmul.bf16.gmra.mxu0 %v1412
      %v2722 = vpop.f32.mrf.mxu0
      %v2723 = vadd.f32 %v2634, %v2722
      %v2724 = vpop.f32.mrf.mxu0
      %v2725 = vadd.f32 %v2636, %v2724
      %2726 = vmatmul.bf16.gmra.mxu0 %v1425
      %v2727 = vpop.f32.mrf.mxu0
      %v2728 = vadd.f32 %v2639, %v2727
      %v2729 = vpop.f32.mrf.mxu0
      %v2730 = vadd.f32 %v2641, %v2729
      %2731 = vmatmul.bf16.gmra.mxu0 %v1438
      %v2732 = vpop.f32.mrf.mxu0
      %v2733 = vadd.f32 %v2644, %v2732
      %v2734 = vpop.f32.mrf.mxu0
      %v2735 = vadd.f32 %v2646, %v2734
      %2736 = vmatmul.bf16.gmra.mxu0 %v1451
      %v2737 = vpop.f32.mrf.mxu0
      %v2738 = vadd.f32 %v2649, %v2737
      %v2739 = vpop.f32.mrf.mxu0
      %v2740 = vadd.f32 %v2651, %v2739
      %2741 = vmatmul.bf16.gmra.mxu0 %v1464
      %v2742 = vpop.f32.mrf.mxu0
      %v2743 = vadd.f32 %v2654, %v2742
      %v2744 = vpop.f32.mrf.mxu0
      %v2745 = vadd.f32 %v2656, %v2744
      %2746 = vdwg.mxu0
      %2747 = vmatpush.bf16.msra.mxu0 %v2104
      %2748 = vmatpush.bf16.msra.mxu0 %v2103
      %2749 = vmatpush.bf16.msra.mxu0 %v2102
      %2750 = vmatpush.bf16.msra.mxu0 %v2101
      %2751 = vmatpush.bf16.msra.mxu0 %v2100
      %2752 = vmatpush.bf16.msra.mxu0 %v2099
      %2753 = vmatpush.bf16.msra.mxu0 %v2098
      %2754 = vmatpush.bf16.msra.mxu0 %v2097
      %2755 = vmatmul.bf16.gmra.mxu0 %v1270
      %v2756 = vpop.f32.mrf.mxu0
      %v2757 = vadd.f32 %v2668, %v2756
      %v2758 = vpop.f32.mrf.mxu0
      %v2759 = vadd.f32 %v2670, %v2758
      %2760 = vmatmul.bf16.gmra.mxu0 %v1283
      %v2761 = vpop.f32.mrf.mxu0
      %v2762 = vadd.f32 %v2673, %v2761
      %v2763 = vpop.f32.mrf.mxu0
      %v2764 = vadd.f32 %v2675, %v2763
      %2765 = vmatmul.bf16.gmra.mxu0 %v1296
      %v2766 = vpop.f32.mrf.mxu0
      %v2767 = vadd.f32 %v2678, %v2766
      %v2768 = vpop.f32.mrf.mxu0
      %v2769 = vadd.f32 %v2680, %v2768
      %2770 = vmatmul.bf16.gmra.mxu0 %v1309
      %v2771 = vpop.f32.mrf.mxu0
      %v2772 = vadd.f32 %v2683, %v2771
      %v2773 = vpop.f32.mrf.mxu0
      %v2774 = vadd.f32 %v2685, %v2773
      %2775 = vmatmul.bf16.gmra.mxu0 %v1322
      %v2776 = vpop.f32.mrf.mxu0
      %v2777 = vadd.f32 %v2688, %v2776
      %v2778 = vpop.f32.mrf.mxu0
      %v2779 = vadd.f32 %v2690, %v2778
      %2780 = vmatmul.bf16.gmra.mxu0 %v1335
      %v2781 = vpop.f32.mrf.mxu0
      %v2782 = vadd.f32 %v2693, %v2781
      %v2783 = vpop.f32.mrf.mxu0
      %v2784 = vadd.f32 %v2695, %v2783
      %2785 = vmatmul.bf16.gmra.mxu0 %v1348
      %v2786 = vpop.f32.mrf.mxu0
      %v2787 = vadd.f32 %v2698, %v2786
      %v2788 = vpop.f32.mrf.mxu0
      %v2789 = vadd.f32 %v2700, %v2788
      %2790 = vmatmul.bf16.gmra.mxu0 %v1361
      %v2791 = vpop.f32.mrf.mxu0
      %v2792 = vadd.f32 %v2703, %v2791
      %v2793 = vpop.f32.mrf.mxu0
      %v2794 = vadd.f32 %v2705, %v2793
      %2795 = vmatmul.bf16.gmra.mxu0 %v1374
      %v2796 = vpop.f32.mrf.mxu0
      %v2797 = vadd.f32 %v2708, %v2796
      %v2798 = vpop.f32.mrf.mxu0
      %v2799 = vadd.f32 %v2710, %v2798
      %2800 = vmatmul.bf16.gmra.mxu0 %v1387
      %v2801 = vpop.f32.mrf.mxu0
      %v2802 = vadd.f32 %v2713, %v2801
      %v2803 = vpop.f32.mrf.mxu0
      %v2804 = vadd.f32 %v2715, %v2803
      %2805 = vmatmul.bf16.gmra.mxu0 %v1400
      %v2806 = vpop.f32.mrf.mxu0
      %v2807 = vadd.f32 %v2718, %v2806
      %v2808 = vpop.f32.mrf.mxu0
      %v2809 = vadd.f32 %v2720, %v2808
      %2810 = vmatmul.bf16.gmra.mxu0 %v1413
      %v2811 = vpop.f32.mrf.mxu0
      %v2812 = vadd.f32 %v2723, %v2811
      %v2813 = vpop.f32.mrf.mxu0
      %v2814 = vadd.f32 %v2725, %v2813
      %2815 = vmatmul.bf16.gmra.mxu0 %v1426
      %v2816 = vpop.f32.mrf.mxu0
      %v2817 = vadd.f32 %v2728, %v2816
      %v2818 = vpop.f32.mrf.mxu0
      %v2819 = vadd.f32 %v2730, %v2818
      %2820 = vmatmul.bf16.gmra.mxu0 %v1439
      %v2821 = vpop.f32.mrf.mxu0
      %v2822 = vadd.f32 %v2733, %v2821
      %v2823 = vpop.f32.mrf.mxu0
      %v2824 = vadd.f32 %v2735, %v2823
      %2825 = vmatmul.bf16.gmra.mxu0 %v1452
      %v2826 = vpop.f32.mrf.mxu0
      %v2827 = vadd.f32 %v2738, %v2826
      %v2828 = vpop.f32.mrf.mxu0
      %v2829 = vadd.f32 %v2740, %v2828
      %2830 = vmatmul.bf16.gmra.mxu0 %v1465
      %v2831 = vpop.f32.mrf.mxu0
      %v2832 = vadd.f32 %v2743, %v2831
      %v2833 = vpop.f32.mrf.mxu0
      %v2834 = vadd.f32 %v2745, %v2833
      %2835 = vdwg.mxu0
      %2836 = vmatpush.bf16.msra.mxu0 %v2112
      %2837 = vmatpush.bf16.msra.mxu0 %v2111
      %2838 = vmatpush.bf16.msra.mxu0 %v2110
      %2839 = vmatpush.bf16.msra.mxu0 %v2109
      %2840 = vmatpush.bf16.msra.mxu0 %v2108
      %2841 = vmatpush.bf16.msra.mxu0 %v2107
      %2842 = vmatpush.bf16.msra.mxu0 %v2106
      %2843 = vmatpush.bf16.msra.mxu0 %v2105
      %2844 = vmatmul.bf16.gmra.mxu0 %v1271
      %v2845 = vpop.f32.mrf.mxu0
      %v2846 = vadd.f32 %v2757, %v2845
      %v2847 = vpop.f32.mrf.mxu0
      %v2848 = vadd.f32 %v2759, %v2847
      %2849 = vmatmul.bf16.gmra.mxu0 %v1284
      %v2850 = vpop.f32.mrf.mxu0
      %v2851 = vadd.f32 %v2762, %v2850
      %v2852 = vpop.f32.mrf.mxu0
      %v2853 = vadd.f32 %v2764, %v2852
      %2854 = vmatmul.bf16.gmra.mxu0 %v1297
      %v2855 = vpop.f32.mrf.mxu0
      %v2856 = vadd.f32 %v2767, %v2855
      %v2857 = vpop.f32.mrf.mxu0
      %v2858 = vadd.f32 %v2769, %v2857
      %2859 = vmatmul.bf16.gmra.mxu0 %v1310
      %v2860 = vpop.f32.mrf.mxu0
      %v2861 = vadd.f32 %v2772, %v2860
      %v2862 = vpop.f32.mrf.mxu0
      %v2863 = vadd.f32 %v2774, %v2862
      %2864 = vmatmul.bf16.gmra.mxu0 %v1323
      %v2865 = vpop.f32.mrf.mxu0
      %v2866 = vadd.f32 %v2777, %v2865
      %v2867 = vpop.f32.mrf.mxu0
      %v2868 = vadd.f32 %v2779, %v2867
      %2869 = vmatmul.bf16.gmra.mxu0 %v1336
      %v2870 = vpop.f32.mrf.mxu0
      %v2871 = vadd.f32 %v2782, %v2870
      %v2872 = vpop.f32.mrf.mxu0
      %v2873 = vadd.f32 %v2784, %v2872
      %2874 = vmatmul.bf16.gmra.mxu0 %v1349
      %v2875 = vpop.f32.mrf.mxu0
      %v2876 = vadd.f32 %v2787, %v2875
      %v2877 = vpop.f32.mrf.mxu0
      %v2878 = vadd.f32 %v2789, %v2877
      %2879 = vmatmul.bf16.gmra.mxu0 %v1362
      %v2880 = vpop.f32.mrf.mxu0
      %v2881 = vadd.f32 %v2792, %v2880
      %v2882 = vpop.f32.mrf.mxu0
      %v2883 = vadd.f32 %v2794, %v2882
      %2884 = vmatmul.bf16.gmra.mxu0 %v1375
      %v2885 = vpop.f32.mrf.mxu0
      %v2886 = vadd.f32 %v2797, %v2885
      %v2887 = vpop.f32.mrf.mxu0
      %v2888 = vadd.f32 %v2799, %v2887
      %2889 = vmatmul.bf16.gmra.mxu0 %v1388
      %v2890 = vpop.f32.mrf.mxu0
      %v2891 = vadd.f32 %v2802, %v2890
      %v2892 = vpop.f32.mrf.mxu0
      %v2893 = vadd.f32 %v2804, %v2892
      %2894 = vmatmul.bf16.gmra.mxu0 %v1401
      %v2895 = vpop.f32.mrf.mxu0
      %v2896 = vadd.f32 %v2807, %v2895
      %v2897 = vpop.f32.mrf.mxu0
      %v2898 = vadd.f32 %v2809, %v2897
      %2899 = vmatmul.bf16.gmra.mxu0 %v1414
      %v2900 = vpop.f32.mrf.mxu0
      %v2901 = vadd.f32 %v2812, %v2900
      %v2902 = vpop.f32.mrf.mxu0
      %v2903 = vadd.f32 %v2814, %v2902
      %2904 = vmatmul.bf16.gmra.mxu0 %v1427
      %v2905 = vpop.f32.mrf.mxu0
      %v2906 = vadd.f32 %v2817, %v2905
      %v2907 = vpop.f32.mrf.mxu0
      %v2908 = vadd.f32 %v2819, %v2907
      %2909 = vmatmul.bf16.gmra.mxu0 %v1440
      %v2910 = vpop.f32.mrf.mxu0
      %v2911 = vadd.f32 %v2822, %v2910
      %v2912 = vpop.f32.mrf.mxu0
      %v2913 = vadd.f32 %v2824, %v2912
      %2914 = vmatmul.bf16.gmra.mxu0 %v1453
      %v2915 = vpop.f32.mrf.mxu0
      %v2916 = vadd.f32 %v2827, %v2915
      %v2917 = vpop.f32.mrf.mxu0
      %v2918 = vadd.f32 %v2829, %v2917
      %2919 = vmatmul.bf16.gmra.mxu0 %v1466
      %v2920 = vpop.f32.mrf.mxu0
      %v2921 = vadd.f32 %v2832, %v2920
      %v2922 = vpop.f32.mrf.mxu0
      %v2923 = vadd.f32 %v2834, %v2922
      %2924 = vdwg.mxu0
      %2925 = vmatpush.bf16.msra.mxu0 %v2120
      %2926 = vmatpush.bf16.msra.mxu0 %v2119
      %2927 = vmatpush.bf16.msra.mxu0 %v2118
      %2928 = vmatpush.bf16.msra.mxu0 %v2117
      %2929 = vmatpush.bf16.msra.mxu0 %v2116
      %2930 = vmatpush.bf16.msra.mxu0 %v2115
      %2931 = vmatpush.bf16.msra.mxu0 %v2114
      %2932 = vmatpush.bf16.msra.mxu0 %v2113
      %2933 = vmatmul.bf16.gmra.mxu0 %v1272
      %v2934 = vpop.f32.mrf.mxu0
      %v2935 = vadd.f32 %v2846, %v2934
      %v2936 = vpop.f32.mrf.mxu0
      %v2937 = vadd.f32 %v2848, %v2936
      %2938 = vmatmul.bf16.gmra.mxu0 %v1285
      %v2939 = vpop.f32.mrf.mxu0
      %v2940 = vadd.f32 %v2851, %v2939
      %v2941 = vpop.f32.mrf.mxu0
      %v2942 = vadd.f32 %v2853, %v2941
      %2943 = vmatmul.bf16.gmra.mxu0 %v1298
      %v2944 = vpop.f32.mrf.mxu0
      %v2945 = vadd.f32 %v2856, %v2944
      %v2946 = vpop.f32.mrf.mxu0
      %v2947 = vadd.f32 %v2858, %v2946
      %2948 = vmatmul.bf16.gmra.mxu0 %v1311
      %v2949 = vpop.f32.mrf.mxu0
      %v2950 = vadd.f32 %v2861, %v2949
      %v2951 = vpop.f32.mrf.mxu0
      %v2952 = vadd.f32 %v2863, %v2951
      %2953 = vmatmul.bf16.gmra.mxu0 %v1324
      %v2954 = vpop.f32.mrf.mxu0
      %v2955 = vadd.f32 %v2866, %v2954
      %v2956 = vpop.f32.mrf.mxu0
      %v2957 = vadd.f32 %v2868, %v2956
      %2958 = vmatmul.bf16.gmra.mxu0 %v1337
      %v2959 = vpop.f32.mrf.mxu0
      %v2960 = vadd.f32 %v2871, %v2959
      %v2961 = vpop.f32.mrf.mxu0
      %v2962 = vadd.f32 %v2873, %v2961
      %2963 = vmatmul.bf16.gmra.mxu0 %v1350
      %v2964 = vpop.f32.mrf.mxu0
      %v2965 = vadd.f32 %v2876, %v2964
      %v2966 = vpop.f32.mrf.mxu0
      %v2967 = vadd.f32 %v2878, %v2966
      %2968 = vmatmul.bf16.gmra.mxu0 %v1363
      %v2969 = vpop.f32.mrf.mxu0
      %v2970 = vadd.f32 %v2881, %v2969
      %v2971 = vpop.f32.mrf.mxu0
      %v2972 = vadd.f32 %v2883, %v2971
      %2973 = vmatmul.bf16.gmra.mxu0 %v1376
      %v2974 = vpop.f32.mrf.mxu0
      %v2975 = vadd.f32 %v2886, %v2974
      %v2976 = vpop.f32.mrf.mxu0
      %v2977 = vadd.f32 %v2888, %v2976
      %2978 = vmatmul.bf16.gmra.mxu0 %v1389
      %v2979 = vpop.f32.mrf.mxu0
      %v2980 = vadd.f32 %v2891, %v2979
      %v2981 = vpop.f32.mrf.mxu0
      %v2982 = vadd.f32 %v2893, %v2981
      %2983 = vmatmul.bf16.gmra.mxu0 %v1402
      %v2984 = vpop.f32.mrf.mxu0
      %v2985 = vadd.f32 %v2896, %v2984
      %v2986 = vpop.f32.mrf.mxu0
      %v2987 = vadd.f32 %v2898, %v2986
      %2988 = vmatmul.bf16.gmra.mxu0 %v1415
      %v2989 = vpop.f32.mrf.mxu0
      %v2990 = vadd.f32 %v2901, %v2989
      %v2991 = vpop.f32.mrf.mxu0
      %v2992 = vadd.f32 %v2903, %v2991
      %2993 = vmatmul.bf16.gmra.mxu0 %v1428
      %v2994 = vpop.f32.mrf.mxu0
      %v2995 = vadd.f32 %v2906, %v2994
      %v2996 = vpop.f32.mrf.mxu0
      %v2997 = vadd.f32 %v2908, %v2996
      %2998 = vmatmul.bf16.gmra.mxu0 %v1441
      %v2999 = vpop.f32.mrf.mxu0
      %v3000 = vadd.f32 %v2911, %v2999
      %v3001 = vpop.f32.mrf.mxu0
      %v3002 = vadd.f32 %v2913, %v3001
      %3003 = vmatmul.bf16.gmra.mxu0 %v1454
      %v3004 = vpop.f32.mrf.mxu0
      %v3005 = vadd.f32 %v2916, %v3004
      %v3006 = vpop.f32.mrf.mxu0
      %v3007 = vadd.f32 %v2918, %v3006
      %3008 = vmatmul.bf16.gmra.mxu0 %v1467
      %v3009 = vpop.f32.mrf.mxu0
      %v3010 = vadd.f32 %v2921, %v3009
      %v3011 = vpop.f32.mrf.mxu0
      %v3012 = vadd.f32 %v2923, %v3011
      %3013 = vdwg.mxu0
      %3014 = vmatpush.bf16.msra.mxu0 %v2128
      %3015 = vmatpush.bf16.msra.mxu0 %v2127
      %3016 = vmatpush.bf16.msra.mxu0 %v2126
      %3017 = vmatpush.bf16.msra.mxu0 %v2125
      %3018 = vmatpush.bf16.msra.mxu0 %v2124
      %3019 = vmatpush.bf16.msra.mxu0 %v2123
      %3020 = vmatpush.bf16.msra.mxu0 %v2122
      %3021 = vmatpush.bf16.msra.mxu0 %v2121
      %3022 = vmatmul.bf16.gmra.mxu0 %v1273
      %v3023 = vpop.f32.mrf.mxu0
      %v3024 = vadd.f32 %v2935, %v3023
      %v3025 = vpop.f32.mrf.mxu0
      %v3026 = vadd.f32 %v2937, %v3025
      %3027 = vmatmul.bf16.gmra.mxu0 %v1286
      %v3028 = vpop.f32.mrf.mxu0
      %v3029 = vadd.f32 %v2940, %v3028
      %v3030 = vpop.f32.mrf.mxu0
      %v3031 = vadd.f32 %v2942, %v3030
      %3032 = vmatmul.bf16.gmra.mxu0 %v1299
      %v3033 = vpop.f32.mrf.mxu0
      %v3034 = vadd.f32 %v2945, %v3033
      %v3035 = vpop.f32.mrf.mxu0
      %v3036 = vadd.f32 %v2947, %v3035
      %3037 = vmatmul.bf16.gmra.mxu0 %v1312
      %v3038 = vpop.f32.mrf.mxu0
      %v3039 = vadd.f32 %v2950, %v3038
      %v3040 = vpop.f32.mrf.mxu0
      %v3041 = vadd.f32 %v2952, %v3040
      %3042 = vmatmul.bf16.gmra.mxu0 %v1325
      %v3043 = vpop.f32.mrf.mxu0
      %v3044 = vadd.f32 %v2955, %v3043
      %v3045 = vpop.f32.mrf.mxu0
      %v3046 = vadd.f32 %v2957, %v3045
      %3047 = vmatmul.bf16.gmra.mxu0 %v1338
      %v3048 = vpop.f32.mrf.mxu0
      %v3049 = vadd.f32 %v2960, %v3048
      %v3050 = vpop.f32.mrf.mxu0
      %v3051 = vadd.f32 %v2962, %v3050
      %3052 = vmatmul.bf16.gmra.mxu0 %v1351
      %v3053 = vpop.f32.mrf.mxu0
      %v3054 = vadd.f32 %v2965, %v3053
      %v3055 = vpop.f32.mrf.mxu0
      %v3056 = vadd.f32 %v2967, %v3055
      %3057 = vmatmul.bf16.gmra.mxu0 %v1364
      %v3058 = vpop.f32.mrf.mxu0
      %v3059 = vadd.f32 %v2970, %v3058
      %v3060 = vpop.f32.mrf.mxu0
      %v3061 = vadd.f32 %v2972, %v3060
      %3062 = vmatmul.bf16.gmra.mxu0 %v1377
      %v3063 = vpop.f32.mrf.mxu0
      %v3064 = vadd.f32 %v2975, %v3063
      %v3065 = vpop.f32.mrf.mxu0
      %v3066 = vadd.f32 %v2977, %v3065
      %3067 = vmatmul.bf16.gmra.mxu0 %v1390
      %v3068 = vpop.f32.mrf.mxu0
      %v3069 = vadd.f32 %v2980, %v3068
      %v3070 = vpop.f32.mrf.mxu0
      %v3071 = vadd.f32 %v2982, %v3070
      %3072 = vmatmul.bf16.gmra.mxu0 %v1403
      %v3073 = vpop.f32.mrf.mxu0
      %v3074 = vadd.f32 %v2985, %v3073
      %v3075 = vpop.f32.mrf.mxu0
      %v3076 = vadd.f32 %v2987, %v3075
      %3077 = vmatmul.bf16.gmra.mxu0 %v1416
      %v3078 = vpop.f32.mrf.mxu0
      %v3079 = vadd.f32 %v2990, %v3078
      %v3080 = vpop.f32.mrf.mxu0
      %v3081 = vadd.f32 %v2992, %v3080
      %3082 = vmatmul.bf16.gmra.mxu0 %v1429
      %v3083 = vpop.f32.mrf.mxu0
      %v3084 = vadd.f32 %v2995, %v3083
      %v3085 = vpop.f32.mrf.mxu0
      %v3086 = vadd.f32 %v2997, %v3085
      %3087 = vmatmul.bf16.gmra.mxu0 %v1442
      %v3088 = vpop.f32.mrf.mxu0
      %v3089 = vadd.f32 %v3000, %v3088
      %v3090 = vpop.f32.mrf.mxu0
      %v3091 = vadd.f32 %v3002, %v3090
      %3092 = vmatmul.bf16.gmra.mxu0 %v1455
      %v3093 = vpop.f32.mrf.mxu0
      %v3094 = vadd.f32 %v3005, %v3093
      %v3095 = vpop.f32.mrf.mxu0
      %v3096 = vadd.f32 %v3007, %v3095
      %3097 = vmatmul.bf16.gmra.mxu0 %v1468
      %v3098 = vpop.f32.mrf.mxu0
      %v3099 = vadd.f32 %v3010, %v3098
      %v3100 = vpop.f32.mrf.mxu0
      %v3101 = vadd.f32 %v3012, %v3100
      %3102 = vdwg.mxu0
      %3103 = vmatpush.bf16.msra.mxu0 %v2136
      %3104 = vmatpush.bf16.msra.mxu0 %v2135
      %3105 = vmatpush.bf16.msra.mxu0 %v2134
      %3106 = vmatpush.bf16.msra.mxu0 %v2133
      %3107 = vmatpush.bf16.msra.mxu0 %v2132
      %3108 = vmatpush.bf16.msra.mxu0 %v2131
      %3109 = vmatpush.bf16.msra.mxu0 %v2130
      %3110 = vmatpush.bf16.msra.mxu0 %v2129
      %3111 = vmatmul.bf16.gmra.mxu0 %v1274
      %v3112 = vpop.f32.mrf.mxu0
      %v3113 = vadd.f32 %v3024, %v3112
      %v3114 = vpop.f32.mrf.mxu0
      %v3115 = vadd.f32 %v3026, %v3114
      %3116 = vmatmul.bf16.gmra.mxu0 %v1287
      %v3117 = vpop.f32.mrf.mxu0
      %v3118 = vadd.f32 %v3029, %v3117
      %v3119 = vpop.f32.mrf.mxu0
      %v3120 = vadd.f32 %v3031, %v3119
      %3121 = vmatmul.bf16.gmra.mxu0 %v1300
      %v3122 = vpop.f32.mrf.mxu0
      %v3123 = vadd.f32 %v3034, %v3122
      %v3124 = vpop.f32.mrf.mxu0
      %v3125 = vadd.f32 %v3036, %v3124
      %3126 = vmatmul.bf16.gmra.mxu0 %v1313
      %v3127 = vpop.f32.mrf.mxu0
      %v3128 = vadd.f32 %v3039, %v3127
      %v3129 = vpop.f32.mrf.mxu0
      %v3130 = vadd.f32 %v3041, %v3129
      %3131 = vmatmul.bf16.gmra.mxu0 %v1326
      %v3132 = vpop.f32.mrf.mxu0
      %v3133 = vadd.f32 %v3044, %v3132
      %v3134 = vpop.f32.mrf.mxu0
      %v3135 = vadd.f32 %v3046, %v3134
      %3136 = vmatmul.bf16.gmra.mxu0 %v1339
      %v3137 = vpop.f32.mrf.mxu0
      %v3138 = vadd.f32 %v3049, %v3137
      %v3139 = vpop.f32.mrf.mxu0
      %v3140 = vadd.f32 %v3051, %v3139
      %3141 = vmatmul.bf16.gmra.mxu0 %v1352
      %v3142 = vpop.f32.mrf.mxu0
      %v3143 = vadd.f32 %v3054, %v3142
      %v3144 = vpop.f32.mrf.mxu0
      %v3145 = vadd.f32 %v3056, %v3144
      %3146 = vmatmul.bf16.gmra.mxu0 %v1365
      %v3147 = vpop.f32.mrf.mxu0
      %v3148 = vadd.f32 %v3059, %v3147
      %v3149 = vpop.f32.mrf.mxu0
      %v3150 = vadd.f32 %v3061, %v3149
      %3151 = vmatmul.bf16.gmra.mxu0 %v1378
      %v3152 = vpop.f32.mrf.mxu0
      %v3153 = vadd.f32 %v3064, %v3152
      %v3154 = vpop.f32.mrf.mxu0
      %v3155 = vadd.f32 %v3066, %v3154
      %3156 = vmatmul.bf16.gmra.mxu0 %v1391
      %v3157 = vpop.f32.mrf.mxu0
      %v3158 = vadd.f32 %v3069, %v3157
      %v3159 = vpop.f32.mrf.mxu0
      %v3160 = vadd.f32 %v3071, %v3159
      %3161 = vmatmul.bf16.gmra.mxu0 %v1404
      %v3162 = vpop.f32.mrf.mxu0
      %v3163 = vadd.f32 %v3074, %v3162
      %v3164 = vpop.f32.mrf.mxu0
      %v3165 = vadd.f32 %v3076, %v3164
      %3166 = vmatmul.bf16.gmra.mxu0 %v1417
      %v3167 = vpop.f32.mrf.mxu0
      %v3168 = vadd.f32 %v3079, %v3167
      %v3169 = vpop.f32.mrf.mxu0
      %v3170 = vadd.f32 %v3081, %v3169
      %3171 = vmatmul.bf16.gmra.mxu0 %v1430
      %v3172 = vpop.f32.mrf.mxu0
      %v3173 = vadd.f32 %v3084, %v3172
      %v3174 = vpop.f32.mrf.mxu0
      %v3175 = vadd.f32 %v3086, %v3174
      %3176 = vmatmul.bf16.gmra.mxu0 %v1443
      %v3177 = vpop.f32.mrf.mxu0
      %v3178 = vadd.f32 %v3089, %v3177
      %v3179 = vpop.f32.mrf.mxu0
      %v3180 = vadd.f32 %v3091, %v3179
      %3181 = vmatmul.bf16.gmra.mxu0 %v1456
      %v3182 = vpop.f32.mrf.mxu0
      %v3183 = vadd.f32 %v3094, %v3182
      %v3184 = vpop.f32.mrf.mxu0
      %v3185 = vadd.f32 %v3096, %v3184
      %3186 = vmatmul.bf16.gmra.mxu0 %v1469
      %v3187 = vpop.f32.mrf.mxu0
      %v3188 = vadd.f32 %v3099, %v3187
      %v3189 = vpop.f32.mrf.mxu0
      %v3190 = vadd.f32 %v3101, %v3189
      %3191 = vdwg.mxu0
      %3192 = vmatpush.bf16.msra.mxu0 %v2144
      %3193 = vmatpush.bf16.msra.mxu0 %v2143
      %3194 = vmatpush.bf16.msra.mxu0 %v2142
      %3195 = vmatpush.bf16.msra.mxu0 %v2141
      %3196 = vmatpush.bf16.msra.mxu0 %v2140
      %3197 = vmatpush.bf16.msra.mxu0 %v2139
      %3198 = vmatpush.bf16.msra.mxu0 %v2138
      %3199 = vmatpush.bf16.msra.mxu0 %v2137
      %3200 = vmatmul.bf16.gmra.mxu0 %v1275
      %v3201 = vpop.f32.mrf.mxu0
      %v3202 = vadd.f32 %v3113, %v3201
      %v3203 = vpop.f32.mrf.mxu0
      %v3204 = vadd.f32 %v3115, %v3203
      %3205 = vmatmul.bf16.gmra.mxu0 %v1288
      %v3206 = vpop.f32.mrf.mxu0
      %v3207 = vadd.f32 %v3118, %v3206
      %v3208 = vpop.f32.mrf.mxu0
      %v3209 = vadd.f32 %v3120, %v3208
      %3210 = vmatmul.bf16.gmra.mxu0 %v1301
      %v3211 = vpop.f32.mrf.mxu0
      %v3212 = vadd.f32 %v3123, %v3211
      %v3213 = vpop.f32.mrf.mxu0
      %v3214 = vadd.f32 %v3125, %v3213
      %3215 = vmatmul.bf16.gmra.mxu0 %v1314
      %v3216 = vpop.f32.mrf.mxu0
      %v3217 = vadd.f32 %v3128, %v3216
      %v3218 = vpop.f32.mrf.mxu0
      %v3219 = vadd.f32 %v3130, %v3218
      %3220 = vmatmul.bf16.gmra.mxu0 %v1327
      %v3221 = vpop.f32.mrf.mxu0
      %v3222 = vadd.f32 %v3133, %v3221
      %v3223 = vpop.f32.mrf.mxu0
      %v3224 = vadd.f32 %v3135, %v3223
      %3225 = vmatmul.bf16.gmra.mxu0 %v1340
      %v3226 = vpop.f32.mrf.mxu0
      %v3227 = vadd.f32 %v3138, %v3226
      %v3228 = vpop.f32.mrf.mxu0
      %v3229 = vadd.f32 %v3140, %v3228
      %3230 = vmatmul.bf16.gmra.mxu0 %v1353
      %v3231 = vpop.f32.mrf.mxu0
      %v3232 = vadd.f32 %v3143, %v3231
      %v3233 = vpop.f32.mrf.mxu0
      %v3234 = vadd.f32 %v3145, %v3233
      %3235 = vmatmul.bf16.gmra.mxu0 %v1366
      %v3236 = vpop.f32.mrf.mxu0
      %v3237 = vadd.f32 %v3148, %v3236
      %v3238 = vpop.f32.mrf.mxu0
      %v3239 = vadd.f32 %v3150, %v3238
      %3240 = vmatmul.bf16.gmra.mxu0 %v1379
      %v3241 = vpop.f32.mrf.mxu0
      %v3242 = vadd.f32 %v3153, %v3241
      %v3243 = vpop.f32.mrf.mxu0
      %v3244 = vadd.f32 %v3155, %v3243
      %3245 = vmatmul.bf16.gmra.mxu0 %v1392
      %v3246 = vpop.f32.mrf.mxu0
      %v3247 = vadd.f32 %v3158, %v3246
      %v3248 = vpop.f32.mrf.mxu0
      %v3249 = vadd.f32 %v3160, %v3248
      %3250 = vmatmul.bf16.gmra.mxu0 %v1405
      %v3251 = vpop.f32.mrf.mxu0
      %v3252 = vadd.f32 %v3163, %v3251
      %v3253 = vpop.f32.mrf.mxu0
      %v3254 = vadd.f32 %v3165, %v3253
      %3255 = vmatmul.bf16.gmra.mxu0 %v1418
      %v3256 = vpop.f32.mrf.mxu0
      %v3257 = vadd.f32 %v3168, %v3256
      %v3258 = vpop.f32.mrf.mxu0
      %v3259 = vadd.f32 %v3170, %v3258
      %3260 = vmatmul.bf16.gmra.mxu0 %v1431
      %v3261 = vpop.f32.mrf.mxu0
      %v3262 = vadd.f32 %v3173, %v3261
      %v3263 = vpop.f32.mrf.mxu0
      %v3264 = vadd.f32 %v3175, %v3263
      %3265 = vmatmul.bf16.gmra.mxu0 %v1444
      %v3266 = vpop.f32.mrf.mxu0
      %v3267 = vadd.f32 %v3178, %v3266
      %v3268 = vpop.f32.mrf.mxu0
      %v3269 = vadd.f32 %v3180, %v3268
      %3270 = vmatmul.bf16.gmra.mxu0 %v1457
      %v3271 = vpop.f32.mrf.mxu0
      %v3272 = vadd.f32 %v3183, %v3271
      %v3273 = vpop.f32.mrf.mxu0
      %v3274 = vadd.f32 %v3185, %v3273
      %3275 = vmatmul.bf16.gmra.mxu0 %v1470
      %v3276 = vpop.f32.mrf.mxu0
      %v3277 = vadd.f32 %v3188, %v3276
      %v3278 = vpop.f32.mrf.mxu0
      %v3279 = vadd.f32 %v3190, %v3278
      %3280 = vdwg.mxu0
      %3281 = vmatpush.bf16.msra.mxu0 %v2152
      %3282 = vmatpush.bf16.msra.mxu0 %v2151
      %3283 = vmatpush.bf16.msra.mxu0 %v2150
      %3284 = vmatpush.bf16.msra.mxu0 %v2149
      %3285 = vmatpush.bf16.msra.mxu0 %v2148
      %3286 = vmatpush.bf16.msra.mxu0 %v2147
      %3287 = vmatpush.bf16.msra.mxu0 %v2146
      %3288 = vmatpush.bf16.msra.mxu0 %v2145
      %3289 = vmatmul.bf16.gmra.mxu0 %v1276
      %v3290 = vpop.f32.mrf.mxu0
      %v3291 = vadd.f32 %v3202, %v3290
      %v3292 = vpop.f32.mrf.mxu0
      %v3293 = vadd.f32 %v3204, %v3292
      %3294 = vmatmul.bf16.gmra.mxu0 %v1289
      %v3295 = vpop.f32.mrf.mxu0
      %v3296 = vadd.f32 %v3207, %v3295
      %v3297 = vpop.f32.mrf.mxu0
      %v3298 = vadd.f32 %v3209, %v3297
      %3299 = vmatmul.bf16.gmra.mxu0 %v1302
      %v3300 = vpop.f32.mrf.mxu0
      %v3301 = vadd.f32 %v3212, %v3300
      %v3302 = vpop.f32.mrf.mxu0
      %v3303 = vadd.f32 %v3214, %v3302
      %3304 = vmatmul.bf16.gmra.mxu0 %v1315
      %v3305 = vpop.f32.mrf.mxu0
      %v3306 = vadd.f32 %v3217, %v3305
      %v3307 = vpop.f32.mrf.mxu0
      %v3308 = vadd.f32 %v3219, %v3307
      %3309 = vmatmul.bf16.gmra.mxu0 %v1328
      %v3310 = vpop.f32.mrf.mxu0
      %v3311 = vadd.f32 %v3222, %v3310
      %v3312 = vpop.f32.mrf.mxu0
      %v3313 = vadd.f32 %v3224, %v3312
      %3314 = vmatmul.bf16.gmra.mxu0 %v1341
      %v3315 = vpop.f32.mrf.mxu0
      %v3316 = vadd.f32 %v3227, %v3315
      %v3317 = vpop.f32.mrf.mxu0
      %v3318 = vadd.f32 %v3229, %v3317
      %3319 = vmatmul.bf16.gmra.mxu0 %v1354
      %v3320 = vpop.f32.mrf.mxu0
      %v3321 = vadd.f32 %v3232, %v3320
      %v3322 = vpop.f32.mrf.mxu0
      %v3323 = vadd.f32 %v3234, %v3322
      %3324 = vmatmul.bf16.gmra.mxu0 %v1367
      %v3325 = vpop.f32.mrf.mxu0
      %v3326 = vadd.f32 %v3237, %v3325
      %v3327 = vpop.f32.mrf.mxu0
      %v3328 = vadd.f32 %v3239, %v3327
      %3329 = vmatmul.bf16.gmra.mxu0 %v1380
      %v3330 = vpop.f32.mrf.mxu0
      %v3331 = vadd.f32 %v3242, %v3330
      %v3332 = vpop.f32.mrf.mxu0
      %v3333 = vadd.f32 %v3244, %v3332
      %3334 = vmatmul.bf16.gmra.mxu0 %v1393
      %v3335 = vpop.f32.mrf.mxu0
      %v3336 = vadd.f32 %v3247, %v3335
      %v3337 = vpop.f32.mrf.mxu0
      %v3338 = vadd.f32 %v3249, %v3337
      %3339 = vmatmul.bf16.gmra.mxu0 %v1406
      %v3340 = vpop.f32.mrf.mxu0
      %v3341 = vadd.f32 %v3252, %v3340
      %v3342 = vpop.f32.mrf.mxu0
      %v3343 = vadd.f32 %v3254, %v3342
      %3344 = vmatmul.bf16.gmra.mxu0 %v1419
      %v3345 = vpop.f32.mrf.mxu0
      %v3346 = vadd.f32 %v3257, %v3345
      %v3347 = vpop.f32.mrf.mxu0
      %v3348 = vadd.f32 %v3259, %v3347
      %3349 = vmatmul.bf16.gmra.mxu0 %v1432
      %v3350 = vpop.f32.mrf.mxu0
      %v3351 = vadd.f32 %v3262, %v3350
      %v3352 = vpop.f32.mrf.mxu0
      %v3353 = vadd.f32 %v3264, %v3352
      %3354 = vmatmul.bf16.gmra.mxu0 %v1445
      %v3355 = vpop.f32.mrf.mxu0
      %v3356 = vadd.f32 %v3267, %v3355
      %v3357 = vpop.f32.mrf.mxu0
      %v3358 = vadd.f32 %v3269, %v3357
      %3359 = vmatmul.bf16.gmra.mxu0 %v1458
      %v3360 = vpop.f32.mrf.mxu0
      %v3361 = vadd.f32 %v3272, %v3360
      %v3362 = vpop.f32.mrf.mxu0
      %v3363 = vadd.f32 %v3274, %v3362
      %3364 = vmatmul.bf16.gmra.mxu0 %v1471
      %v3365 = vpop.f32.mrf.mxu0
      %v3366 = vadd.f32 %v3277, %v3365
      %v3367 = vpop.f32.mrf.mxu0
      %v3368 = vadd.f32 %v3279, %v3367
      %3369 = vdwg.mxu0
      %3370 = vmatpush.bf16.msra.mxu0 0
      %3371 = vmatpush.bf16.msra.mxu0 0
      %3372 = vmatpush.bf16.msra.mxu0 0
      %3373 = vmatpush.bf16.msra.mxu0 0
      %3374 = vmatpush.bf16.msra.mxu0 0
      %3375 = vmatpush.bf16.msra.mxu0 0
      %3376 = vmatpush.bf16.msra.mxu0 %v2154
      %3377 = vmatpush.bf16.msra.mxu0 %v2153
      %3378 = vmatmul.bf16.gmra.mxu0 %v2255
      %v3379 = vpop.f32.mrf.mxu0
      %v3380 = vadd.f32 %v3291, %v3379
      %v3381 = vpop.f32.mrf.mxu0
      %v3382 = vadd.f32 %v3293, %v3381
      %3383 = vmatmul.bf16.gmra.mxu0 %v2258
      %v3384 = vpop.f32.mrf.mxu0
      %v3385 = vadd.f32 %v3296, %v3384
      %v3386 = vpop.f32.mrf.mxu0
      %v3387 = vadd.f32 %v3298, %v3386
      %3388 = vmatmul.bf16.gmra.mxu0 %v2261
      %v3389 = vpop.f32.mrf.mxu0
      %v3390 = vadd.f32 %v3301, %v3389
      %v3391 = vpop.f32.mrf.mxu0
      %v3392 = vadd.f32 %v3303, %v3391
      %3393 = vmatmul.bf16.gmra.mxu0 %v2264
      %v3394 = vpop.f32.mrf.mxu0
      %v3395 = vadd.f32 %v3306, %v3394
      %v3396 = vpop.f32.mrf.mxu0
      %v3397 = vadd.f32 %v3308, %v3396
      %3398 = vmatmul.bf16.gmra.mxu0 %v2267
      %v3399 = vpop.f32.mrf.mxu0
      %v3400 = vadd.f32 %v3311, %v3399
      %v3401 = vpop.f32.mrf.mxu0
      %v3402 = vadd.f32 %v3313, %v3401
      %3403 = vmatmul.bf16.gmra.mxu0 %v2270
      %v3404 = vpop.f32.mrf.mxu0
      %v3405 = vadd.f32 %v3316, %v3404
      %v3406 = vpop.f32.mrf.mxu0
      %v3407 = vadd.f32 %v3318, %v3406
      %3408 = vmatmul.bf16.gmra.mxu0 %v2273
      %v3409 = vpop.f32.mrf.mxu0
      %v3410 = vadd.f32 %v3321, %v3409
      %v3411 = vpop.f32.mrf.mxu0
      %v3412 = vadd.f32 %v3323, %v3411
      %3413 = vmatmul.bf16.gmra.mxu0 %v2276
      %v3414 = vpop.f32.mrf.mxu0
      %v3415 = vadd.f32 %v3326, %v3414
      %v3416 = vpop.f32.mrf.mxu0
      %v3417 = vadd.f32 %v3328, %v3416
      %3418 = vmatmul.bf16.gmra.mxu0 %v2279
      %v3419 = vpop.f32.mrf.mxu0
      %v3420 = vadd.f32 %v3331, %v3419
      %v3421 = vpop.f32.mrf.mxu0
      %v3422 = vadd.f32 %v3333, %v3421
      %3423 = vmatmul.bf16.gmra.mxu0 %v2282
      %v3424 = vpop.f32.mrf.mxu0
      %v3425 = vadd.f32 %v3336, %v3424
      %v3426 = vpop.f32.mrf.mxu0
      %v3427 = vadd.f32 %v3338, %v3426
      %3428 = vmatmul.bf16.gmra.mxu0 %v2285
      %v3429 = vpop.f32.mrf.mxu0
      %v3430 = vadd.f32 %v3341, %v3429
      %v3431 = vpop.f32.mrf.mxu0
      %v3432 = vadd.f32 %v3343, %v3431
      %3433 = vmatmul.bf16.gmra.mxu0 %v2288
      %v3434 = vpop.f32.mrf.mxu0
      %v3435 = vadd.f32 %v3346, %v3434
      %v3436 = vpop.f32.mrf.mxu0
      %v3437 = vadd.f32 %v3348, %v3436
      %3438 = vmatmul.bf16.gmra.mxu0 %v2291
      %v3439 = vpop.f32.mrf.mxu0
      %v3440 = vadd.f32 %v3351, %v3439
      %v3441 = vpop.f32.mrf.mxu0
      %v3442 = vadd.f32 %v3353, %v3441
      %3443 = vmatmul.bf16.gmra.mxu0 %v2294
      %v3444 = vpop.f32.mrf.mxu0
      %v3445 = vadd.f32 %v3356, %v3444
      %v3446 = vpop.f32.mrf.mxu0
      %v3447 = vadd.f32 %v3358, %v3446
      %3448 = vmatmul.bf16.gmra.mxu0 %v2297
      %v3449 = vpop.f32.mrf.mxu0
      %v3450 = vadd.f32 %v3361, %v3449
      %v3451 = vpop.f32.mrf.mxu0
      %v3452 = vadd.f32 %v3363, %v3451
      %3453 = vmatmul.bf16.gmra.mxu0 %v2300
      %v3454 = vpop.f32.mrf.mxu0
      %v3455 = vadd.f32 %v3366, %v3454
      %v3456 = vpop.f32.mrf.mxu0
      %v3457 = vadd.f32 %v3368, %v3456
      %3458 = vdwg.mxu0
      %v3459 = vld [vmem:[%s2] sm:$0x1]
      %v3461 = vperm.slane %v3459, 0
      %v3463 = vmul.f32 %v3380, %v3461
      %v3464 = vmul.f32 %v3382, %v3461
      %v3465 = vmul.f32 %v3385, %v3461
      %v3466 = vmul.f32 %v3387, %v3461
      %v3467 = vmul.f32 %v3390, %v3461
      %v3468 = vmul.f32 %v3392, %v3461
      %v3469 = vmul.f32 %v3395, %v3461
      %v3470 = vmul.f32 %v3397, %v3461
      %v3471 = vmul.f32 %v3400, %v3461
      %v3472 = vmul.f32 %v3402, %v3461
      %v3473 = vmul.f32 %v3405, %v3461
      %v3474 = vmul.f32 %v3407, %v3461
      %v3475 = vmul.f32 %v3410, %v3461
      %v3476 = vmul.f32 %v3412, %v3461
      %v3477 = vmul.f32 %v3415, %v3461
      %v3478 = vmul.f32 %v3417, %v3461
      %v3479 = vmul.f32 %v3420, %v3461
      %v3480 = vmul.f32 %v3422, %v3461
      %v3481 = vmul.f32 %v3425, %v3461
      %v3482 = vmul.f32 %v3427, %v3461
      %v3483 = vmul.f32 %v3430, %v3461
      %v3484 = vmul.f32 %v3432, %v3461
      %v3485 = vmul.f32 %v3435, %v3461
      %v3486 = vmul.f32 %v3437, %v3461
      %v3487 = vmul.f32 %v3440, %v3461
      %v3488 = vmul.f32 %v3442, %v3461
      %v3489 = vmul.f32 %v3445, %v3461
      %v3490 = vmul.f32 %v3447, %v3461
      %v3491 = vmul.f32 %v3450, %v3461
      %v3492 = vmul.f32 %v3452, %v3461
      %v3493 = vmul.f32 %v3455, %v3461
      %v3494 = vmul.f32 %v3457, %v3461
      %v3495 = vld [vmem:[%s3] sm:$0x1]
      %v3497 = vperm.slane %v3495, 0
      %v3499 = vadd.f32 %v3463, %v3497
      %v3500 = vadd.f32 %v3464, %v3497
      %v3501 = vadd.f32 %v3465, %v3497
      %v3502 = vadd.f32 %v3466, %v3497
      %v3503 = vadd.f32 %v3467, %v3497
      %v3504 = vadd.f32 %v3468, %v3497
      %v3505 = vadd.f32 %v3469, %v3497
      %v3506 = vadd.f32 %v3470, %v3497
      %v3507 = vadd.f32 %v3471, %v3497
      %v3508 = vadd.f32 %v3472, %v3497
      %v3509 = vadd.f32 %v3473, %v3497
      %v3510 = vadd.f32 %v3474, %v3497
      %v3511 = vadd.f32 %v3475, %v3497
      %v3512 = vadd.f32 %v3476, %v3497
      %v3513 = vadd.f32 %v3477, %v3497
      %v3514 = vadd.f32 %v3478, %v3497
      %v3515 = vadd.f32 %v3479, %v3497
      %v3516 = vadd.f32 %v3480, %v3497
      %v3517 = vadd.f32 %v3481, %v3497
      %v3518 = vadd.f32 %v3482, %v3497
      %v3519 = vadd.f32 %v3483, %v3497
      %v3520 = vadd.f32 %v3484, %v3497
      %v3521 = vadd.f32 %v3485, %v3497
      %v3522 = vadd.f32 %v3486, %v3497
      %v3523 = vadd.f32 %v3487, %v3497
      %v3524 = vadd.f32 %v3488, %v3497
      %v3525 = vadd.f32 %v3489, %v3497
      %v3526 = vadd.f32 %v3490, %v3497
      %v3527 = vadd.f32 %v3491, %v3497
      %v3528 = vadd.f32 %v3492, %v3497
      %v3529 = vadd.f32 %v3493, %v3497
      %v3530 = vadd.f32 %v3494, %v3497
      %v3531 = vmax.f32 %v3499, 0.0
      %v3532 = vmax.f32 %v3500, 0.0
      %v3533 = vmax.f32 %v3501, 0.0
      %v3534 = vmax.f32 %v3502, 0.0
      %v3535 = vmax.f32 %v3503, 0.0
      %v3536 = vmax.f32 %v3504, 0.0
      %v3537 = vmax.f32 %v3505, 0.0
      %v3538 = vmax.f32 %v3506, 0.0
      %v3539 = vmax.f32 %v3507, 0.0
      %v3540 = vmax.f32 %v3508, 0.0
      %v3541 = vmax.f32 %v3509, 0.0
      %v3542 = vmax.f32 %v3510, 0.0
      %v3543 = vmax.f32 %v3511, 0.0
      %v3544 = vmax.f32 %v3512, 0.0
      %v3545 = vmax.f32 %v3513, 0.0
      %v3546 = vmax.f32 %v3514, 0.0
      %v3547 = vmax.f32 %v3515, 0.0
      %v3548 = vmax.f32 %v3516, 0.0
      %v3549 = vmax.f32 %v3517, 0.0
      %v3550 = vmax.f32 %v3518, 0.0
      %v3551 = vmax.f32 %v3519, 0.0
      %v3552 = vmax.f32 %v3520, 0.0
      %v3553 = vmax.f32 %v3521, 0.0
      %v3554 = vmax.f32 %v3522, 0.0
      %v3555 = vmax.f32 %v3523, 0.0
      %v3556 = vmax.f32 %v3524, 0.0
      %v3557 = vmax.f32 %v3525, 0.0
      %v3558 = vmax.f32 %v3526, 0.0
      %v3559 = vmax.f32 %v3527, 0.0
      %v3560 = vmax.f32 %v3528, 0.0
      %v3561 = vmax.f32 %v3529, 0.0
      %v3562 = vmax.f32 %v3530, 0.0
      %3563 = vst [vmem:[%s202] sm:$0xff] %v3531
      %3564 = vst [vmem:[%s202 + $0x8] sm:$0xff] %v3532
      %3565 = vst [vmem:[%s202 + $0x10] sm:$0xff] %v3533
      %3566 = vst [vmem:[%s202 + $0x18] sm:$0xff] %v3534
      %3567 = vst [vmem:[%s202 + $0x20] sm:$0xff] %v3535
      %3568 = vst [vmem:[%s202 + $0x28] sm:$0xff] %v3536
      %3569 = vst [vmem:[%s202 + $0x30] sm:$0xff] %v3537
      %3570 = vst [vmem:[%s202 + $0x38] sm:$0xff] %v3538
      %3571 = vst [vmem:[%s202 + $0x40] sm:$0xff] %v3539
      %3572 = vst [vmem:[%s202 + $0x48] sm:$0xff] %v3540
      %3573 = vst [vmem:[%s202 + $0x50] sm:$0xff] %v3541
      %3574 = vst [vmem:[%s202 + $0x58] sm:$0xff] %v3542
      %3575 = vst [vmem:[%s202 + $0x60] sm:$0xff] %v3543
      %3576 = vst [vmem:[%s202 + $0x68] sm:$0xff] %v3544
      %3577 = vst [vmem:[%s202 + $0x70] sm:$0xff] %v3545
      %3578 = vst [vmem:[%s202 + $0x78] sm:$0xff] %v3546
      %3579 = vst [vmem:[%s202 + $0x80] sm:$0xff] %v3547
      %3580 = vst [vmem:[%s202 + $0x88] sm:$0xff] %v3548
      %3581 = vst [vmem:[%s202 + $0x90] sm:$0xff] %v3549
      %3582 = vst [vmem:[%s202 + $0x98] sm:$0xff] %v3550
      %3583 = vst [vmem:[%s202 + $0xa0] sm:$0xff] %v3551
      %3584 = vst [vmem:[%s202 + $0xa8] sm:$0xff] %v3552
      %3585 = vst [vmem:[%s202 + $0xb0] sm:$0xff] %v3553
      %3586 = vst [vmem:[%s202 + $0xb8] sm:$0xff] %v3554
      %3587 = vst [vmem:[%s202 + $0xc0] sm:$0xff] %v3555
      %3588 = vst [vmem:[%s202 + $0xc8] sm:$0xff] %v3556
      %3589 = vst [vmem:[%s202 + $0xd0] sm:$0xff] %v3557
      %3590 = vst [vmem:[%s202 + $0xd8] sm:$0xff] %v3558
      %3591 = vst [vmem:[%s202 + $0xe0] sm:$0xff] %v3559
      %3592 = vst [vmem:[%s202 + $0xe8] sm:$0xff] %v3560
      %3593 = vst [vmem:[%s202 + $0xf0] sm:$0xff] %v3561
      %3594 = vst [vmem:[%s202 + $0xf8] sm:$0xff] %v3562
      %s3595 = smul.u32 32, %s15
      %p3596 = scmp.lt.s32.totalorder %s3595, 63
      %s3597 = scalar_select %p3596, %s3595, 63
      %s3598 = smul.addr %s3597, 8
      %s3599 = scalar_lea.vmem %s4, %s3598
      // Predicated region
      $region37: #{rsna24_forward.7} parent=35 // pred_check
        %p3600 = pneg %p122
      $region38: #{rsna24_forward.7} parent=35 // pred_check_branch
        %3602 = sbr.rel (%p3600) target = $region40
      $region39: #{rsna24_forward.7} parent=35 // pred_region
        %s3603 = smul.u32 32, %s15
      $region40: #{rsna24_forward.7} parent=35 // pred_fallthru
        _
    $region36: #{rsna24_forward.7} parent=5 // pred_fallthru
      _
    %p3604 = scmp.le.s32.totalorder 2, %s10
    // Predicated region
    $region41: #{rsna24_forward.7} parent=5 // pred_check
      %p3605 = pneg %p3604
    $region42: #{rsna24_forward.7} parent=5 // pred_check_branch
      %3607 = sbr.rel (%p3605) target = $region44
    $region43: #{rsna24_forward.7} parent=5 // pred_region
      %s3608 = ssub.s32 %s10, 2
      // Predicated region
      $region45: #{rsna24_forward.7} parent=43 // pred_check
        %p3609 = pneg %p128
      $region46: #{rsna24_forward.7} parent=43 // pred_check_branch
        %3611 = sbr.rel (%p3609) target = $region48
      $region47: #{rsna24_forward.7} parent=43 // pred_region
        %s3612 = smul.u32 32, %s16
        %p3613 = scmp.lt.s32.totalorder %s3612, 63
        %s3614 = scalar_select %p3613, %s3612, 63
        %s3615 = smul.addr %s3614, 8
        %s3616 = scalar_lea.vmem %s4, %s3615
      $region48: #{rsna24_forward.7} parent=43 // pred_fallthru
        _
    $region44: #{rsna24_forward.7} parent=5 // pred_fallthru
      _
  $region6: #{rsna24_forward.7} parent=0 // loop_footer
    %s14 = sadd.s32 1, %s10
  $region7: #{rsna24_forward.7} parent=0 // loop_footer_branch
    %9 = sbr.rel target = $region3
  $region8: #{rsna24_forward.7} parent=0 // loop_exit
    _

// kernel: rsna24_forward.10
$region0: #{rsna24_forward.10}
  #allocation0 [shape = 'u32[]', space=smem, size = 0x4, offset = 0x4, fixed_abs, tag = 'smem constant byte address 0x4 - core index']
  #allocation1 [shape = 'u32[72,128]{1,0:T(1,128)}', space=vmem, size = 0x9000, scoped, tag = 'internal scratch']
  %s0 = inlined_call_operand.vmem [shape: f32[128,128], index: 0, kind: input, shape index: {}]
  %s1 = inlined_call_operand.vmem [shape: bf16[128,128], index: 1, kind: input, shape index: {}]
  %s2 = inlined_call_operand.vmem [shape: f32[1,128], index: 2, kind: input, shape index: {}]
  %s3 = inlined_call_operand.vmem [shape: f32[1,128], index: 3, kind: input, shape index: {}]
  %s4 = inlined_call_operand.vmem [shape: f32[128,128], index: 4, kind: output, shape index: {}]
  %s5 = sld [smem:[#allocation0]]
  $region26: #{rsna24_forward.10} parent=0
    _
  %s7 = ssub.s32 1, %s5
  %s8 = scalar_select 0, %s7, %s5
  // Predicated region
  $region2: #{rsna24_forward.10} parent=0 // pred_check
    _
  $region3: #{rsna24_forward.10} parent=0 // pred_check_branch
    %10 = sbr.rel (0) target = $region5
  $region4: #{rsna24_forward.10} parent=0 // pred_region
    _
  $region5: #{rsna24_forward.10} parent=0 // pred_fallthru
    _
  // Predicated region
  $region6: #{rsna24_forward.10} parent=0 // pred_check
    _
  $region7: #{rsna24_forward.10} parent=0 // pred_check_branch
    %12 = sbr.rel (0) target = $region9
  $region8: #{rsna24_forward.10} parent=0 // pred_region
    _
  $region9: #{rsna24_forward.10} parent=0 // pred_fallthru
    _
  // Predicated region
  $region10: #{rsna24_forward.10} parent=0 // pred_check
    _
  $region11: #{rsna24_forward.10} parent=0 // pred_check_branch
    %14 = sbr.rel (0) target = $region13
  $region12: #{rsna24_forward.10} parent=0 // pred_region
    _
  $region13: #{rsna24_forward.10} parent=0 // pred_fallthru
    _
  // Predicated region
  $region14: #{rsna24_forward.10} parent=0 // pred_check
    _
  $region15: #{rsna24_forward.10} parent=0 // pred_check_branch
    %16 = sbr.rel (0) target = $region17
  $region16: #{rsna24_forward.10} parent=0 // pred_region
    _
  $region17: #{rsna24_forward.10} parent=0 // pred_fallthru
    _
  %v17 = vld [vmem:[%s0] sm:$0xff]
  %v18 = vld [vmem:[%s0 + $0x8] sm:$0xff]
  %v19 = vld [vmem:[%s0 + $0x10] sm:$0xff]
  %v20 = vld [vmem:[%s0 + $0x18] sm:$0xff]
  %v21 = vld [vmem:[%s0 + $0x20] sm:$0xff]
  %v22 = vld [vmem:[%s0 + $0x28] sm:$0xff]
  %v23 = vld [vmem:[%s0 + $0x30] sm:$0xff]
  %v24 = vld [vmem:[%s0 + $0x38] sm:$0xff]
  %v25 = vld [vmem:[%s0 + $0x40] sm:$0xff]
  %v26 = vld [vmem:[%s0 + $0x48] sm:$0xff]
  %v27 = vld [vmem:[%s0 + $0x50] sm:$0xff]
  %v28 = vld [vmem:[%s0 + $0x58] sm:$0xff]
  %v29 = vld [vmem:[%s0 + $0x60] sm:$0xff]
  %v30 = vld [vmem:[%s0 + $0x68] sm:$0xff]
  %v31 = vld [vmem:[%s0 + $0x70] sm:$0xff]
  %v32 = vld [vmem:[%s0 + $0x78] sm:$0xff]
  %v33 = vld [vmem:[%s2] sm:$0x1]
  %v35 = vperm.slane %v33, 0
  %v37 = vmul.f32 %v17, %v35
  %v38 = vmul.f32 %v18, %v35
  %v39 = vmul.f32 %v19, %v35
  %v40 = vmul.f32 %v20, %v35
  %v41 = vmul.f32 %v21, %v35
  %v42 = vmul.f32 %v22, %v35
  %v43 = vmul.f32 %v23, %v35
  %v44 = vmul.f32 %v24, %v35
  %v45 = vmul.f32 %v25, %v35
  %v46 = vmul.f32 %v26, %v35
  %v47 = vmul.f32 %v27, %v35
  %v48 = vmul.f32 %v28, %v35
  %v49 = vmul.f32 %v29, %v35
  %v50 = vmul.f32 %v30, %v35
  %v51 = vmul.f32 %v31, %v35
  %v52 = vmul.f32 %v32, %v35
  %v53 = vld [vmem:[%s3] sm:$0x1]
  %v55 = vperm.slane %v53, 0
  %v57 = vadd.f32 %v37, %v55
  %v58 = vadd.f32 %v38, %v55
  %v59 = vadd.f32 %v39, %v55
  %v60 = vadd.f32 %v40, %v55
  %v61 = vadd.f32 %v41, %v55
  %v62 = vadd.f32 %v42, %v55
  %v63 = vadd.f32 %v43, %v55
  %v64 = vadd.f32 %v44, %v55
  %v65 = vadd.f32 %v45, %v55
  %v66 = vadd.f32 %v46, %v55
  %v67 = vadd.f32 %v47, %v55
  %v68 = vadd.f32 %v48, %v55
  %v69 = vadd.f32 %v49, %v55
  %v70 = vadd.f32 %v50, %v55
  %v71 = vadd.f32 %v51, %v55
  %v72 = vadd.f32 %v52, %v55
  %v73 = vmax.f32 %v57, 0.0
  %v74 = vmax.f32 %v58, 0.0
  %v75 = vmax.f32 %v59, 0.0
  %v76 = vmax.f32 %v60, 0.0
  %v77 = vmax.f32 %v61, 0.0
  %v78 = vmax.f32 %v62, 0.0
  %v79 = vmax.f32 %v63, 0.0
  %v80 = vmax.f32 %v64, 0.0
  %v81 = vmax.f32 %v65, 0.0
  %v82 = vmax.f32 %v66, 0.0
  %v83 = vmax.f32 %v67, 0.0
  %v84 = vmax.f32 %v68, 0.0
  %v85 = vmax.f32 %v69, 0.0
  %v86 = vmax.f32 %v70, 0.0
  %v87 = vmax.f32 %v71, 0.0
  %v88 = vmax.f32 %v72, 0.0
  %v89 = vpack.c.bf16 %v74, %v73
  %v90 = vpack.c.bf16 %v76, %v75
  %v91 = vpack.c.bf16 %v78, %v77
  %v92 = vpack.c.bf16 %v80, %v79
  %v93 = vpack.c.bf16 %v82, %v81
  %v94 = vpack.c.bf16 %v84, %v83
  %v95 = vpack.c.bf16 %v86, %v85
  %v96 = vpack.c.bf16 %v88, %v87
  %v97 = vld [vmem:[%s1] sm:$0xf]
  %v98 = vld [vmem:[%s1 + $0x4] sm:$0xf]
  %v99 = vld [vmem:[%s1 + $0x8] sm:$0xf]
  %v100 = vld [vmem:[%s1 + $0xc] sm:$0xf]
  %v101 = vld [vmem:[%s1 + $0x10] sm:$0xf]
  %v102 = vld [vmem:[%s1 + $0x14] sm:$0xf]
  %v103 = vld [vmem:[%s1 + $0x18] sm:$0xf]
  %v104 = vld [vmem:[%s1 + $0x1c] sm:$0xf]
  %v105 = vld [vmem:[%s1 + $0x20] sm:$0xf]
  %v106 = vld [vmem:[%s1 + $0x24] sm:$0xf]
  %v107 = vld [vmem:[%s1 + $0x28] sm:$0xf]
  %v108 = vld [vmem:[%s1 + $0x2c] sm:$0xf]
  %v109 = vld [vmem:[%s1 + $0x30] sm:$0xf]
  %v110 = vld [vmem:[%s1 + $0x34] sm:$0xf]
  %v111 = vld [vmem:[%s1 + $0x38] sm:$0xf]
  %v112 = vld [vmem:[%s1 + $0x3c] sm:$0xf]
  %v129 = vunpack.c.l.b16 %v97
  %v130 = vunpack.c.l.b16 %v98
  %v131 = vunpack.c.l.b16 %v99
  %v132 = vunpack.c.l.b16 %v100
  %v133 = vunpack.c.l.b16 %v101
  %v134 = vunpack.c.l.b16 %v102
  %v135 = vunpack.c.l.b16 %v103
  %v136 = vunpack.c.l.b16 %v104
  %v137 = vunpack.c.l.b16 %v105
  %v138 = vunpack.c.l.b16 %v106
  %v139 = vunpack.c.l.b16 %v107
  %v140 = vunpack.c.l.b16 %v108
  %v141 = vunpack.c.l.b16 %v109
  %v142 = vunpack.c.l.b16 %v110
  %v143 = vunpack.c.l.b16 %v111
  %v144 = vunpack.c.l.b16 %v112
  %v145 = vpack.c.b16 %v130, %v129
  %v146 = vpack.c.b16 %v132, %v131
  %v147 = vpack.c.b16 %v134, %v133
  %v148 = vpack.c.b16 %v136, %v135
  %v149 = vpack.c.b16 %v138, %v137
  %v150 = vpack.c.b16 %v140, %v139
  %v151 = vpack.c.b16 %v142, %v141
  %v152 = vpack.c.b16 %v144, %v143
  %161 = vmatpush.bf16.msra.mxu0 %v152
  %162 = vmatpush.bf16.msra.mxu0 %v151
  %163 = vmatpush.bf16.msra.mxu0 %v150
  %164 = vmatpush.bf16.msra.mxu0 %v149
  %165 = vmatpush.bf16.msra.mxu0 %v148
  %166 = vmatpush.bf16.msra.mxu0 %v147
  %167 = vmatpush.bf16.msra.mxu0 %v146
  %168 = vmatpush.bf16.msra.mxu0 %v145
  %169 = vmatmul.bf16.gmra.mxu0 %v89
  %v170 = vpop.f32.mrf.mxu0
  %v171 = vadd.f32 0.0, %v170
  %v172 = vpop.f32.mrf.mxu0
  %v173 = vadd.f32 0.0, %v172
  %174 = vmatmul.bf16.gmra.mxu0 %v90
  %v175 = vpop.f32.mrf.mxu0
  %v176 = vadd.f32 0.0, %v175
  %v177 = vpop.f32.mrf.mxu0
  %v178 = vadd.f32 0.0, %v177
  %179 = vmatmul.bf16.gmra.mxu0 %v91
  %v180 = vpop.f32.mrf.mxu0
  %v181 = vadd.f32 0.0, %v180
  %v182 = vpop.f32.mrf.mxu0
  %v183 = vadd.f32 0.0, %v182
  %184 = vmatmul.bf16.gmra.mxu0 %v92
  %v185 = vpop.f32.mrf.mxu0
  %v186 = vadd.f32 0.0, %v185
  %v187 = vpop.f32.mrf.mxu0
  %v188 = vadd.f32 0.0, %v187
  %189 = vmatmul.bf16.gmra.mxu0 %v93
  %v190 = vpop.f32.mrf.mxu0
  %v191 = vadd.f32 0.0, %v190
  %v192 = vpop.f32.mrf.mxu0
  %v193 = vadd.f32 0.0, %v192
  %194 = vmatmul.bf16.gmra.mxu0 %v94
  %v195 = vpop.f32.mrf.mxu0
  %v196 = vadd.f32 0.0, %v195
  %v197 = vpop.f32.mrf.mxu0
  %v198 = vadd.f32 0.0, %v197
  %199 = vmatmul.bf16.gmra.mxu0 %v95
  %v200 = vpop.f32.mrf.mxu0
  %v201 = vadd.f32 0.0, %v200
  %v202 = vpop.f32.mrf.mxu0
  %v203 = vadd.f32 0.0, %v202
  %204 = vmatmul.bf16.gmra.mxu0 %v96
  %v205 = vpop.f32.mrf.mxu0
  %v206 = vadd.f32 0.0, %v205
  %v207 = vpop.f32.mrf.mxu0
  %v208 = vadd.f32 0.0, %v207
  %209 = vdwg.mxu0
  %210 = vst [vmem:[%s4] sm:$0xff] %v171
  %211 = vst [vmem:[%s4 + $0x8] sm:$0xff] %v173
  %212 = vst [vmem:[%s4 + $0x10] sm:$0xff] %v176
  %213 = vst [vmem:[%s4 + $0x18] sm:$0xff] %v178
  %214 = vst [vmem:[%s4 + $0x20] sm:$0xff] %v181
  %215 = vst [vmem:[%s4 + $0x28] sm:$0xff] %v183
  %216 = vst [vmem:[%s4 + $0x30] sm:$0xff] %v186
  %217 = vst [vmem:[%s4 + $0x38] sm:$0xff] %v188
  %218 = vst [vmem:[%s4 + $0x40] sm:$0xff] %v191
  %219 = vst [vmem:[%s4 + $0x48] sm:$0xff] %v193
  %220 = vst [vmem:[%s4 + $0x50] sm:$0xff] %v196
  %221 = vst [vmem:[%s4 + $0x58] sm:$0xff] %v198
  %222 = vst [vmem:[%s4 + $0x60] sm:$0xff] %v201
  %223 = vst [vmem:[%s4 + $0x68] sm:$0xff] %v203
  %224 = vst [vmem:[%s4 + $0x70] sm:$0xff] %v206
  %225 = vst [vmem:[%s4 + $0x78] sm:$0xff] %v208
  // Predicated region
  $region18: #{rsna24_forward.10} parent=0 // pred_check
    _
  $region19: #{rsna24_forward.10} parent=0 // pred_check_branch
    %227 = sbr.rel (0) target = $region21
  $region20: #{rsna24_forward.10} parent=0 // pred_region
    _
  $region21: #{rsna24_forward.10} parent=0 // pred_fallthru
    _
  // Predicated region
  $region22: #{rsna24_forward.10} parent=0 // pred_check
    _
  $region23: #{rsna24_forward.10} parent=0 // pred_check_branch
    %229 = sbr.rel (0) target = $region25
  $region24: #{rsna24_forward.10} parent=0 // pred_region
    _
  $region25: #{rsna24_forward.10} parent=0 // pred_fallthru
    _

// kernel: rsna24_forward.8
$region0: #{rsna24_forward.8}
  #allocation0 [shape = 'u32[]', space=smem, size = 0x4, offset = 0x4, fixed_abs, tag = 'smem constant byte address 0x4 - core index']
  #allocation1 [shape = 'u32[72,128]{1,0:T(1,128)}', space=vmem, size = 0x9000, scoped, tag = 'internal scratch']
  #allocation2 [shape = 'f32[232,32]{1,0:T(8,128)}', space=vmem, size = 0x1d000, scoped, tag = 'scratch operand']
  %s0 = inlined_call_operand.vmem [shape: f32[200,128], index: 0, kind: input, shape index: {}, may-alias: {0,8}]
  %s1 = inlined_call_operand.vmem [shape: f32[200,1], index: 1, kind: input, shape index: {}]
  %s2 = inlined_call_operand.vmem [shape: bf16[128,32], index: 2, kind: input, shape index: {}]
  %s3 = inlined_call_operand.vmem [shape: f32[1,128], index: 3, kind: input, shape index: {}]
  %s4 = inlined_call_operand.vmem [shape: f32[1,128], index: 4, kind: input, shape index: {}]
  %s5 = inlined_call_operand.vmem [shape: f32[1,32], index: 5, kind: input, shape index: {}]
  %s6 = inlined_call_operand.vmem [shape: f32[1,32], index: 6, kind: input, shape index: {}]
  %s7 = inlined_call_operand.vmem [shape: bf16[9,32,128], index: 7, kind: input, shape index: {}]
  %s8 = inlined_call_operand.vmem [shape: f32[200,128], index: 8, kind: output, shape index: {}, may-alias: {0,8}]
  %s9 = sld [smem:[#allocation0]]
  $region42: #{rsna24_forward.8} parent=0
    _
  %s11 = ssub.s32 1, %s9
  %s12 = scalar_select 0, %s11, %s9
  // Predicated region
  $region2: #{rsna24_forward.8} parent=0 // pred_check
    _
  $region3: #{rsna24_forward.8} parent=0 // pred_check_branch
    %14 = sbr.rel (0) target = $region5
  $region4: #{rsna24_forward.8} parent=0 // pred_region
    _
  $region5: #{rsna24_forward.8} parent=0 // pred_fallthru
    _
  // Predicated region
  $region6: #{rsna24_forward.8} parent=0 // pred_check
    _
  $region7: #{rsna24_forward.8} parent=0 // pred_check_branch
    %16 = sbr.rel (0) target = $region9
  $region8: #{rsna24_forward.8} parent=0 // pred_region
    _
  $region9: #{rsna24_forward.8} parent=0 // pred_fallthru
    _
  // Predicated region
  $region10: #{rsna24_forward.8} parent=0 // pred_check
    _
  $region11: #{rsna24_forward.8} parent=0 // pred_check_branch
    %18 = sbr.rel (0) target = $region13
  $region12: #{rsna24_forward.8} parent=0 // pred_region
    _
  $region13: #{rsna24_forward.8} parent=0 // pred_fallthru
    _
  // Predicated region
  $region14: #{rsna24_forward.8} parent=0 // pred_check
    _
  $region15: #{rsna24_forward.8} parent=0 // pred_check_branch
    %20 = sbr.rel (0) target = $region17
  $region16: #{rsna24_forward.8} parent=0 // pred_region
    _
  $region17: #{rsna24_forward.8} parent=0 // pred_fallthru
    _
  // Predicated region
  $region18: #{rsna24_forward.8} parent=0 // pred_check
    _
  $region19: #{rsna24_forward.8} parent=0 // pred_check_branch
    %22 = sbr.rel (0) target = $region21
  $region20: #{rsna24_forward.8} parent=0 // pred_region
    _
  $region21: #{rsna24_forward.8} parent=0 // pred_fallthru
    _
  // Predicated region
  $region22: #{rsna24_forward.8} parent=0 // pred_check
    _
  $region23: #{rsna24_forward.8} parent=0 // pred_check_branch
    %24 = sbr.rel (0) target = $region25
  $region24: #{rsna24_forward.8} parent=0 // pred_region
    _
  $region25: #{rsna24_forward.8} parent=0 // pred_fallthru
    _
  // Predicated region
  $region26: #{rsna24_forward.8} parent=0 // pred_check
    _
  $region27: #{rsna24_forward.8} parent=0 // pred_check_branch
    %26 = sbr.rel (0) target = $region29
  $region28: #{rsna24_forward.8} parent=0 // pred_region
    _
  $region29: #{rsna24_forward.8} parent=0 // pred_fallthru
    _
  // Predicated region
  $region30: #{rsna24_forward.8} parent=0 // pred_check
    _
  $region31: #{rsna24_forward.8} parent=0 // pred_check_branch
    %28 = sbr.rel (0) target = $region33
  $region32: #{rsna24_forward.8} parent=0 // pred_region
    _
  $region33: #{rsna24_forward.8} parent=0 // pred_fallthru
    _
  %v30 = vld [vmem:[%s0] sm:$0xff]
  %v31 = vld [vmem:[%s0 + $0x8] sm:$0xff]
  %v32 = vld [vmem:[%s0 + $0x10] sm:$0xff]
  %v33 = vld [vmem:[%s0 + $0x18] sm:$0xff]
  %v34 = vld [vmem:[%s0 + $0x20] sm:$0xff]
  %v35 = vld [vmem:[%s0 + $0x28] sm:$0xff]
  %v36 = vld [vmem:[%s0 + $0x30] sm:$0xff]
  %v37 = vld [vmem:[%s0 + $0x38] sm:$0xff]
  %v38 = vld [vmem:[%s0 + $0x40] sm:$0xff]
  %v39 = vld [vmem:[%s0 + $0x48] sm:$0xff]
  %v40 = vld [vmem:[%s0 + $0x50] sm:$0xff]
  %v41 = vld [vmem:[%s0 + $0x58] sm:$0xff]
  %v42 = vld [vmem:[%s0 + $0x60] sm:$0xff]
  %v43 = vld [vmem:[%s0 + $0x68] sm:$0xff]
  %v44 = vld [vmem:[%s0 + $0x70] sm:$0xff]
  %v45 = vld [vmem:[%s0 + $0x78] sm:$0xff]
  %v46 = vld [vmem:[%s0 + $0x80] sm:$0xff]
  %v47 = vld [vmem:[%s0 + $0x88] sm:$0xff]
  %v48 = vld [vmem:[%s0 + $0x90] sm:$0xff]
  %v49 = vld [vmem:[%s0 + $0x98] sm:$0xff]
  %v50 = vld [vmem:[%s0 + $0xa0] sm:$0xff]
  %v51 = vld [vmem:[%s0 + $0xa8] sm:$0xff]
  %v52 = vld [vmem:[%s0 + $0xb0] sm:$0xff]
  %v53 = vld [vmem:[%s0 + $0xb8] sm:$0xff]
  %v54 = vld [vmem:[%s0 + $0xc0] sm:$0xff]
  %v55 = vld [vmem:[%s3] sm:$0x1]
  %v57 = vperm.slane %v55, 0
  %v59 = vmul.f32 %v30, %v57
  %v60 = vmul.f32 %v31, %v57
  %v61 = vmul.f32 %v32, %v57
  %v62 = vmul.f32 %v33, %v57
  %v63 = vmul.f32 %v34, %v57
  %v64 = vmul.f32 %v35, %v57
  %v65 = vmul.f32 %v36, %v57
  %v66 = vmul.f32 %v37, %v57
  %v67 = vmul.f32 %v38, %v57
  %v68 = vmul.f32 %v39, %v57
  %v69 = vmul.f32 %v40, %v57
  %v70 = vmul.f32 %v41, %v57
  %v71 = vmul.f32 %v42, %v57
  %v72 = vmul.f32 %v43, %v57
  %v73 = vmul.f32 %v44, %v57
  %v74 = vmul.f32 %v45, %v57
  %v75 = vmul.f32 %v46, %v57
  %v76 = vmul.f32 %v47, %v57
  %v77 = vmul.f32 %v48, %v57
  %v78 = vmul.f32 %v49, %v57
  %v79 = vmul.f32 %v50, %v57
  %v80 = vmul.f32 %v51, %v57
  %v81 = vmul.f32 %v52, %v57
  %v82 = vmul.f32 %v53, %v57
  %v83 = vmul.f32 %v54, %v57
  %v84 = vld [vmem:[%s4] sm:$0x1]
  %v86 = vperm.slane %v84, 0
  %v88 = vadd.f32 %v59, %v86
  %v89 = vadd.f32 %v60, %v86
  %v90 = vadd.f32 %v61, %v86
  %v91 = vadd.f32 %v62, %v86
  %v92 = vadd.f32 %v63, %v86
  %v93 = vadd.f32 %v64, %v86
  %v94 = vadd.f32 %v65, %v86
  %v95 = vadd.f32 %v66, %v86
  %v96 = vadd.f32 %v67, %v86
  %v97 = vadd.f32 %v68, %v86
  %v98 = vadd.f32 %v69, %v86
  %v99 = vadd.f32 %v70, %v86
  %v100 = vadd.f32 %v71, %v86
  %v101 = vadd.f32 %v72, %v86
  %v102 = vadd.f32 %v73, %v86
  %v103 = vadd.f32 %v74, %v86
  %v104 = vadd.f32 %v75, %v86
  %v105 = vadd.f32 %v76, %v86
  %v106 = vadd.f32 %v77, %v86
  %v107 = vadd.f32 %v78, %v86
  %v108 = vadd.f32 %v79, %v86
  %v109 = vadd.f32 %v80, %v86
  %v110 = vadd.f32 %v81, %v86
  %v111 = vadd.f32 %v82, %v86
  %v112 = vadd.f32 %v83, %v86
  %v113 = vmax.f32 %v88, 0.0
  %v114 = vmax.f32 %v89, 0.0
  %v115 = vmax.f32 %v90, 0.0
  %v116 = vmax.f32 %v91, 0.0
  %v117 = vmax.f32 %v92, 0.0
  %v118 = vmax.f32 %v93, 0.0
  %v119 = vmax.f32 %v94, 0.0
  %v120 = vmax.f32 %v95, 0.0
  %v121 = vmax.f32 %v96, 0.0
  %v122 = vmax.f32 %v97, 0.0
  %v123 = vmax.f32 %v98, 0.0
  %v124 = vmax.f32 %v99, 0.0
  %v125 = vmax.f32 %v100, 0.0
  %v126 = vmax.f32 %v101, 0.0
  %v127 = vmax.f32 %v102, 0.0
  %v128 = vmax.f32 %v103, 0.0
  %v129 = vmax.f32 %v104, 0.0
  %v130 = vmax.f32 %v105, 0.0
  %v131 = vmax.f32 %v106, 0.0
  %v132 = vmax.f32 %v107, 0.0
  %v133 = vmax.f32 %v108, 0.0
  %v134 = vmax.f32 %v109, 0.0
  %v135 = vmax.f32 %v110, 0.0
  %v136 = vmax.f32 %v111, 0.0
  %v137 = vmax.f32 %v112, 0.0
  %v138 = vpack.c.bf16 %v114, %v113
  %v139 = vpack.c.bf16 %v116, %v115
  %v140 = vpack.c.bf16 %v118, %v117
  %v141 = vpack.c.bf16 %v120, %v119
  %v142 = vpack.c.bf16 %v122, %v121
  %v143 = vpack.c.bf16 %v124, %v123
  %v144 = vpack.c.bf16 %v126, %v125
  %v145 = vpack.c.bf16 %v128, %v127
  %v146 = vpack.c.bf16 %v130, %v129
  %v147 = vpack.c.bf16 %v132, %v131
  %v148 = vpack.c.bf16 %v134, %v133
  %v149 = vpack.c.bf16 %v136, %v135
  %v150 = vpack.c.bf16 %v137, %v137
  %v151 = vld [vmem:[%s2] sm:$0xf]
  %v152 = vld [vmem:[%s2 + $0x4] sm:$0xf]
  %v153 = vld [vmem:[%s2 + $0x8] sm:$0xf]
  %v154 = vld [vmem:[%s2 + $0xc] sm:$0xf]
  %v155 = vld [vmem:[%s2 + $0x10] sm:$0xf]
  %v156 = vld [vmem:[%s2 + $0x14] sm:$0xf]
  %v157 = vld [vmem:[%s2 + $0x18] sm:$0xf]
  %v158 = vld [vmem:[%s2 + $0x1c] sm:$0xf]
  %v159 = vld [vmem:[%s2 + $0x20] sm:$0xf]
  %v160 = vld [vmem:[%s2 + $0x24] sm:$0xf]
  %v161 = vld [vmem:[%s2 + $0x28] sm:$0xf]
  %v162 = vld [vmem:[%s2 + $0x2c] sm:$0xf]
  %v163 = vld [vmem:[%s2 + $0x30] sm:$0xf]
  %v164 = vld [vmem:[%s2 + $0x34] sm:$0xf]
  %v165 = vld [vmem:[%s2 + $0x38] sm:$0xf]
  %v166 = vld [vmem:[%s2 + $0x3c] sm:$0xf]
  %v183 = vunpack.c.l.b16 %v151
  %v184 = vunpack.c.l.b16 %v152
  %v185 = vunpack.c.l.b16 %v153
  %v186 = vunpack.c.l.b16 %v154
  %v187 = vunpack.c.l.b16 %v155
  %v188 = vunpack.c.l.b16 %v156
  %v189 = vunpack.c.l.b16 %v157
  %v190 = vunpack.c.l.b16 %v158
  %v191 = vunpack.c.l.b16 %v159
  %v192 = vunpack.c.l.b16 %v160
  %v193 = vunpack.c.l.b16 %v161
  %v194 = vunpack.c.l.b16 %v162
  %v195 = vunpack.c.l.b16 %v163
  %v196 = vunpack.c.l.b16 %v164
  %v197 = vunpack.c.l.b16 %v165
  %v198 = vunpack.c.l.b16 %v166
  %v199 = vpack.c.b16 %v184, %v183
  %v200 = vpack.c.b16 %v186, %v185
  %v201 = vpack.c.b16 %v188, %v187
  %v202 = vpack.c.b16 %v190, %v189
  %v203 = vpack.c.b16 %v192, %v191
  %v204 = vpack.c.b16 %v194, %v193
  %v205 = vpack.c.b16 %v196, %v195
  %v206 = vpack.c.b16 %v198, %v197
  %215 = vmatpush.bf16.msra.mxu0 %v206
  %216 = vmatpush.bf16.msra.mxu0 %v205
  %217 = vmatpush.bf16.msra.mxu0 %v204
  %218 = vmatpush.bf16.msra.mxu0 %v203
  %219 = vmatpush.bf16.msra.mxu0 %v202
  %220 = vmatpush.bf16.msra.mxu0 %v201
  %221 = vmatpush.bf16.msra.mxu0 %v200
  %222 = vmatpush.bf16.msra.mxu0 %v199
  %223 = vmatmul.bf16.gmra.mxu0 %v138
  %v224 = vpop.f32.mrf.mxu0
  %v225 = vadd.f32 0.0, %v224
  %v226 = vpop.f32.mrf.mxu0
  %v227 = vadd.f32 0.0, %v226
  %228 = vmatmul.bf16.gmra.mxu0 %v139
  %v229 = vpop.f32.mrf.mxu0
  %v230 = vadd.f32 0.0, %v229
  %v231 = vpop.f32.mrf.mxu0
  %v232 = vadd.f32 0.0, %v231
  %233 = vmatmul.bf16.gmra.mxu0 %v140
  %v234 = vpop.f32.mrf.mxu0
  %v235 = vadd.f32 0.0, %v234
  %v236 = vpop.f32.mrf.mxu0
  %v237 = vadd.f32 0.0, %v236
  %238 = vmatmul.bf16.gmra.mxu0 %v141
  %v239 = vpop.f32.mrf.mxu0
  %v240 = vadd.f32 0.0, %v239
  %v241 = vpop.f32.mrf.mxu0
  %v242 = vadd.f32 0.0, %v241
  %243 = vmatmul.bf16.gmra.mxu0 %v142
  %v244 = vpop.f32.mrf.mxu0
  %v245 = vadd.f32 0.0, %v244
  %v246 = vpop.f32.mrf.mxu0
  %v247 = vadd.f32 0.0, %v246
  %248 = vmatmul.bf16.gmra.mxu0 %v143
  %v249 = vpop.f32.mrf.mxu0
  %v250 = vadd.f32 0.0, %v249
  %v251 = vpop.f32.mrf.mxu0
  %v252 = vadd.f32 0.0, %v251
  %253 = vmatmul.bf16.gmra.mxu0 %v144
  %v254 = vpop.f32.mrf.mxu0
  %v255 = vadd.f32 0.0, %v254
  %v256 = vpop.f32.mrf.mxu0
  %v257 = vadd.f32 0.0, %v256
  %258 = vmatmul.bf16.gmra.mxu0 %v145
  %v259 = vpop.f32.mrf.mxu0
  %v260 = vadd.f32 0.0, %v259
  %v261 = vpop.f32.mrf.mxu0
  %v262 = vadd.f32 0.0, %v261
  %263 = vmatmul.bf16.gmra.mxu0 %v146
  %v264 = vpop.f32.mrf.mxu0
  %v265 = vadd.f32 0.0, %v264
  %v266 = vpop.f32.mrf.mxu0
  %v267 = vadd.f32 0.0, %v266
  %268 = vmatmul.bf16.gmra.mxu0 %v147
  %v269 = vpop.f32.mrf.mxu0
  %v270 = vadd.f32 0.0, %v269
  %v271 = vpop.f32.mrf.mxu0
  %v272 = vadd.f32 0.0, %v271
  %273 = vmatmul.bf16.gmra.mxu0 %v148
  %v274 = vpop.f32.mrf.mxu0
  %v275 = vadd.f32 0.0, %v274
  %v276 = vpop.f32.mrf.mxu0
  %v277 = vadd.f32 0.0, %v276
  %278 = vmatmul.bf16.gmra.mxu0 %v149
  %v279 = vpop.f32.mrf.mxu0
  %v280 = vadd.f32 0.0, %v279
  %v281 = vpop.f32.mrf.mxu0
  %v282 = vadd.f32 0.0, %v281
  %283 = vmatmul.bf16.gmra.mxu0 %v150
  %v284 = vpop.f32.mrf.mxu0
  %v285 = vadd.f32 0.0, %v284
  %v286 = vpop.f32.mrf.mxu0
  %287 = vdwg.mxu0
  %v288 = vld [vmem:[%s5] sm:$0x1]
  %v290 = vperm.slane %v288, 0
  %v292 = vmul.f32 %v225, %v290
  %v293 = vmul.f32 %v227, %v290
  %v294 = vmul.f32 %v230, %v290
  %v295 = vmul.f32 %v232, %v290
  %v296 = vmul.f32 %v235, %v290
  %v297 = vmul.f32 %v237, %v290
  %v298 = vmul.f32 %v240, %v290
  %v299 = vmul.f32 %v242, %v290
  %v300 = vmul.f32 %v245, %v290
  %v301 = vmul.f32 %v247, %v290
  %v302 = vmul.f32 %v250, %v290
  %v303 = vmul.f32 %v252, %v290
  %v304 = vmul.f32 %v255, %v290
  %v305 = vmul.f32 %v257, %v290
  %v306 = vmul.f32 %v260, %v290
  %v307 = vmul.f32 %v262, %v290
  %v308 = vmul.f32 %v265, %v290
  %v309 = vmul.f32 %v267, %v290
  %v310 = vmul.f32 %v270, %v290
  %v311 = vmul.f32 %v272, %v290
  %v312 = vmul.f32 %v275, %v290
  %v313 = vmul.f32 %v277, %v290
  %v314 = vmul.f32 %v280, %v290
  %v315 = vmul.f32 %v282, %v290
  %v316 = vmul.f32 %v285, %v290
  %v317 = vld [vmem:[%s6] sm:$0x1]
  %v319 = vperm.slane %v317, 0
  %v321 = vadd.f32 %v292, %v319
  %v322 = vadd.f32 %v293, %v319
  %v323 = vadd.f32 %v294, %v319
  %v324 = vadd.f32 %v295, %v319
  %v325 = vadd.f32 %v296, %v319
  %v326 = vadd.f32 %v297, %v319
  %v327 = vadd.f32 %v298, %v319
  %v328 = vadd.f32 %v299, %v319
  %v329 = vadd.f32 %v300, %v319
  %v330 = vadd.f32 %v301, %v319
  %v331 = vadd.f32 %v302, %v319
  %v332 = vadd.f32 %v303, %v319
  %v333 = vadd.f32 %v304, %v319
  %v334 = vadd.f32 %v305, %v319
  %v335 = vadd.f32 %v306, %v319
  %v336 = vadd.f32 %v307, %v319
  %v337 = vadd.f32 %v308, %v319
  %v338 = vadd.f32 %v309, %v319
  %v339 = vadd.f32 %v310, %v319
  %v340 = vadd.f32 %v311, %v319
  %v341 = vadd.f32 %v312, %v319
  %v342 = vadd.f32 %v313, %v319
  %v343 = vadd.f32 %v314, %v319
  %v344 = vadd.f32 %v315, %v319
  %v345 = vadd.f32 %v316, %v319
  %v346 = vmax.f32 %v321, 0.0
  %v347 = vmax.f32 %v322, 0.0
  %v348 = vmax.f32 %v323, 0.0
  %v349 = vmax.f32 %v324, 0.0
  %v350 = vmax.f32 %v325, 0.0
  %v351 = vmax.f32 %v326, 0.0
  %v352 = vmax.f32 %v327, 0.0
  %v353 = vmax.f32 %v328, 0.0
  %v354 = vmax.f32 %v329, 0.0
  %v355 = vmax.f32 %v330, 0.0
  %v356 = vmax.f32 %v331, 0.0
  %v357 = vmax.f32 %v332, 0.0
  %v358 = vmax.f32 %v333, 0.0
  %v359 = vmax.f32 %v334, 0.0
  %v360 = vmax.f32 %v335, 0.0
  %v361 = vmax.f32 %v336, 0.0
  %v362 = vmax.f32 %v337, 0.0
  %v363 = vmax.f32 %v338, 0.0
  %v364 = vmax.f32 %v339, 0.0
  %v365 = vmax.f32 %v340, 0.0
  %v366 = vmax.f32 %v341, 0.0
  %v367 = vmax.f32 %v342, 0.0
  %v368 = vmax.f32 %v343, 0.0
  %v369 = vmax.f32 %v344, 0.0
  %v370 = vmax.f32 %v345, 0.0
  %v371 = vld [vmem:[%s1] sm:$0xff]
  %v372 = vld [vmem:[%s1 + $0x8] sm:$0xff]
  %v373 = vld [vmem:[%s1 + $0x10] sm:$0xff]
  %v374 = vld [vmem:[%s1 + $0x18] sm:$0xff]
  %v375 = vld [vmem:[%s1 + $0x20] sm:$0xff]
  %v376 = vld [vmem:[%s1 + $0x28] sm:$0xff]
  %v377 = vld [vmem:[%s1 + $0x30] sm:$0xff]
  %v378 = vld [vmem:[%s1 + $0x38] sm:$0xff]
  %v379 = vld [vmem:[%s1 + $0x40] sm:$0xff]
  %v380 = vld [vmem:[%s1 + $0x48] sm:$0xff]
  %v381 = vld [vmem:[%s1 + $0x50] sm:$0xff]
  %v382 = vld [vmem:[%s1 + $0x58] sm:$0xff]
  %v383 = vld [vmem:[%s1 + $0x60] sm:$0xff]
  %v384 = vld [vmem:[%s1 + $0x68] sm:$0xff]
  %v385 = vld [vmem:[%s1 + $0x70] sm:$0xff]
  %v386 = vld [vmem:[%s1 + $0x78] sm:$0xff]
  %v387 = vld [vmem:[%s1 + $0x80] sm:$0xff]
  %v388 = vld [vmem:[%s1 + $0x88] sm:$0xff]
  %v389 = vld [vmem:[%s1 + $0x90] sm:$0xff]
  %v390 = vld [vmem:[%s1 + $0x98] sm:$0xff]
  %v391 = vld [vmem:[%s1 + $0xa0] sm:$0xff]
  %v392 = vld [vmem:[%s1 + $0xa8] sm:$0xff]
  %v393 = vld [vmem:[%s1 + $0xb0] sm:$0xff]
  %v394 = vld [vmem:[%s1 + $0xb8] sm:$0xff]
  %v395 = vld [vmem:[%s1 + $0xc0] sm:$0xff]
  %397 = vset.pattern.permute.xlu0 0
  %398 = vperm.xlu0 %397, %v371
  %v399 = vpop.permute.xlu0 %398
  %402 = vset.pattern.permute.xlu0 0
  %403 = vperm.xlu0 %402, %v372
  %v404 = vpop.permute.xlu0 %403
  %407 = vset.pattern.permute.xlu0 0
  %408 = vperm.xlu0 %407, %v373
  %v409 = vpop.permute.xlu0 %408
  %412 = vset.pattern.permute.xlu0 0
  %413 = vperm.xlu0 %412, %v374
  %v414 = vpop.permute.xlu0 %413
  %417 = vset.pattern.permute.xlu0 0
  %418 = vperm.xlu0 %417, %v375
  %v419 = vpop.permute.xlu0 %418
  %422 = vset.pattern.permute.xlu0 0
  %423 = vperm.xlu0 %422, %v376
  %v424 = vpop.permute.xlu0 %423
  %427 = vset.pattern.permute.xlu0 0
  %428 = vperm.xlu0 %427, %v377
  %v429 = vpop.permute.xlu0 %428
  %432 = vset.pattern.permute.xlu0 0
  %433 = vperm.xlu0 %432, %v378
  %v434 = vpop.permute.xlu0 %433
  %437 = vset.pattern.permute.xlu0 0
  %438 = vperm.xlu0 %437, %v379
  %v439 = vpop.permute.xlu0 %438
  %442 = vset.pattern.permute.xlu0 0
  %443 = vperm.xlu0 %442, %v380
  %v444 = vpop.permute.xlu0 %443
  %447 = vset.pattern.permute.xlu0 0
  %448 = vperm.xlu0 %447, %v381
  %v449 = vpop.permute.xlu0 %448
  %452 = vset.pattern.permute.xlu0 0
  %453 = vperm.xlu0 %452, %v382
  %v454 = vpop.permute.xlu0 %453
  %457 = vset.pattern.permute.xlu0 0
  %458 = vperm.xlu0 %457, %v383
  %v459 = vpop.permute.xlu0 %458
  %462 = vset.pattern.permute.xlu0 0
  %463 = vperm.xlu0 %462, %v384
  %v464 = vpop.permute.xlu0 %463
  %467 = vset.pattern.permute.xlu0 0
  %468 = vperm.xlu0 %467, %v385
  %v469 = vpop.permute.xlu0 %468
  %472 = vset.pattern.permute.xlu0 0
  %473 = vperm.xlu0 %472, %v386
  %v474 = vpop.permute.xlu0 %473
  %477 = vset.pattern.permute.xlu0 0
  %478 = vperm.xlu0 %477, %v387
  %v479 = vpop.permute.xlu0 %478
  %482 = vset.pattern.permute.xlu0 0
  %483 = vperm.xlu0 %482, %v388
  %v484 = vpop.permute.xlu0 %483
  %487 = vset.pattern.permute.xlu0 0
  %488 = vperm.xlu0 %487, %v389
  %v489 = vpop.permute.xlu0 %488
  %492 = vset.pattern.permute.xlu0 0
  %493 = vperm.xlu0 %492, %v390
  %v494 = vpop.permute.xlu0 %493
  %497 = vset.pattern.permute.xlu0 0
  %498 = vperm.xlu0 %497, %v391
  %v499 = vpop.permute.xlu0 %498
  %502 = vset.pattern.permute.xlu0 0
  %503 = vperm.xlu0 %502, %v392
  %v504 = vpop.permute.xlu0 %503
  %507 = vset.pattern.permute.xlu0 0
  %508 = vperm.xlu0 %507, %v393
  %v509 = vpop.permute.xlu0 %508
  %512 = vset.pattern.permute.xlu0 0
  %513 = vperm.xlu0 %512, %v394
  %v514 = vpop.permute.xlu0 %513
  %517 = vset.pattern.permute.xlu0 0
  %518 = vperm.xlu0 %517, %v395
  %v519 = vpop.permute.xlu0 %518
  %v521 = vmul.f32 %v346, %v399
  %v522 = vmul.f32 %v347, %v404
  %v523 = vmul.f32 %v348, %v409
  %v524 = vmul.f32 %v349, %v414
  %v525 = vmul.f32 %v350, %v419
  %v526 = vmul.f32 %v351, %v424
  %v527 = vmul.f32 %v352, %v429
  %v528 = vmul.f32 %v353, %v434
  %v529 = vmul.f32 %v354, %v439
  %v530 = vmul.f32 %v355, %v444
  %v531 = vmul.f32 %v356, %v449
  %v532 = vmul.f32 %v357, %v454
  %v533 = vmul.f32 %v358, %v459
  %v534 = vmul.f32 %v359, %v464
  %v535 = vmul.f32 %v360, %v469
  %v536 = vmul.f32 %v361, %v474
  %v537 = vmul.f32 %v362, %v479
  %v538 = vmul.f32 %v363, %v484
  %v539 = vmul.f32 %v364, %v489
  %v540 = vmul.f32 %v365, %v494
  %v541 = vmul.f32 %v366, %v499
  %v542 = vmul.f32 %v367, %v504
  %v543 = vmul.f32 %v368, %v509
  %v544 = vmul.f32 %v369, %v514
  %v545 = vmul.f32 %v370, %v519
  %vm546 = vcmask 261120
  %547 = vst.msk [vmem:[#allocation2] sm:$0xff] %vm546, 0.0
  %548 = vst.msk [vmem:[#allocation2 + $0x8] sm:$0xff] %vm546, 0.0
  %549 = vst.msk [vmem:[#allocation2 + $0x10] sm:$0xff] %vm546, 0.0
  %550 = vst.msk [vmem:[#allocation2 + $0x18] sm:$0xff] %vm546, 0.0
  %551 = vst.msk [vmem:[#allocation2 + $0x20] sm:$0xff] %vm546, 0.0
  %552 = vst.msk [vmem:[#allocation2 + $0x28] sm:$0xff] %vm546, 0.0
  %553 = vst.msk [vmem:[#allocation2 + $0x30] sm:$0xff] %vm546, 0.0
  %554 = vst.msk [vmem:[#allocation2 + $0x38] sm:$0xff] %vm546, 0.0
  %555 = vst.msk [vmem:[#allocation2 + $0x40] sm:$0xff] %vm546, 0.0
  %556 = vst.msk [vmem:[#allocation2 + $0x48] sm:$0xff] %vm546, 0.0
  %557 = vst.msk [vmem:[#allocation2 + $0x50] sm:$0xff] %vm546, 0.0
  %558 = vst.msk [vmem:[#allocation2 + $0x58] sm:$0xff] %vm546, 0.0
  %559 = vst.msk [vmem:[#allocation2 + $0x60] sm:$0xff] %vm546, 0.0
  %560 = vst.msk [vmem:[#allocation2 + $0x68] sm:$0xff] %vm546, 0.0
  %561 = vst.msk [vmem:[#allocation2 + $0x70] sm:$0xff] %vm546, 0.0
  %562 = vst.msk [vmem:[#allocation2 + $0x78] sm:$0xff] %vm546, 0.0
  %563 = vst.msk [vmem:[#allocation2 + $0x80] sm:$0xff] %vm546, 0.0
  %564 = vst.msk [vmem:[#allocation2 + $0x88] sm:$0xff] %vm546, 0.0
  %565 = vst.msk [vmem:[#allocation2 + $0x90] sm:$0xff] %vm546, 0.0
  %566 = vst.msk [vmem:[#allocation2 + $0x98] sm:$0xff] %vm546, 0.0
  %567 = vst.msk [vmem:[#allocation2 + $0xa0] sm:$0xff] %vm546, 0.0
  %568 = vst.msk [vmem:[#allocation2 + $0xa8] sm:$0xff] %vm546, 0.0
  %569 = vst.msk [vmem:[#allocation2 + $0xb0] sm:$0xff] %vm546, 0.0
  %570 = vst.msk [vmem:[#allocation2 + $0xb8] sm:$0xff] %vm546, 0.0
  %571 = vst.msk [vmem:[#allocation2 + $0xc0] sm:$0xff] %vm546, 0.0
  %572 = vst.msk [vmem:[#allocation2 + $0xc8] sm:$0xff] %vm546, 0.0
  %573 = vst.msk [vmem:[#allocation2 + $0xd0] sm:$0xff] %vm546, 0.0
  %574 = vst.msk [vmem:[#allocation2 + $0xd8] sm:$0xff] %vm546, 0.0
  %575 = vst.msk [vmem:[#allocation2 + $0xe0] sm:$0xff] %vm546, 0.0
  %576 = vst.msk [vmem:[#allocation2 + $0x10] sm:$0xff] %vm546, %v521
  %577 = vst.msk [vmem:[#allocation2 + $0x18] sm:$0xff] %vm546, %v522
  %578 = vst.msk [vmem:[#allocation2 + $0x20] sm:$0xff] %vm546, %v523
  %579 = vst.msk [vmem:[#allocation2 + $0x28] sm:$0xff] %vm546, %v524
  %580 = vst.msk [vmem:[#allocation2 + $0x30] sm:$0xff] %vm546, %v525
  %581 = vst.msk [vmem:[#allocation2 + $0x38] sm:$0xff] %vm546, %v526
  %582 = vst.msk [vmem:[#allocation2 + $0x40] sm:$0xff] %vm546, %v527
  %583 = vst.msk [vmem:[#allocation2 + $0x48] sm:$0xff] %vm546, %v528
  %584 = vst.msk [vmem:[#allocation2 + $0x50] sm:$0xff] %vm546, %v529
  %585 = vst.msk [vmem:[#allocation2 + $0x58] sm:$0xff] %vm546, %v530
  %586 = vst.msk [vmem:[#allocation2 + $0x60] sm:$0xff] %vm546, %v531
  %587 = vst.msk [vmem:[#allocation2 + $0x68] sm:$0xff] %vm546, %v532
  %588 = vst.msk [vmem:[#allocation2 + $0x70] sm:$0xff] %vm546, %v533
  %589 = vst.msk [vmem:[#allocation2 + $0x78] sm:$0xff] %vm546, %v534
  %590 = vst.msk [vmem:[#allocation2 + $0x80] sm:$0xff] %vm546, %v535
  %591 = vst.msk [vmem:[#allocation2 + $0x88] sm:$0xff] %vm546, %v536
  %592 = vst.msk [vmem:[#allocation2 + $0x90] sm:$0xff] %vm546, %v537
  %593 = vst.msk [vmem:[#allocation2 + $0x98] sm:$0xff] %vm546, %v538
  %594 = vst.msk [vmem:[#allocation2 + $0xa0] sm:$0xff] %vm546, %v539
  %595 = vst.msk [vmem:[#allocation2 + $0xa8] sm:$0xff] %vm546, %v540
  %596 = vst.msk [vmem:[#allocation2 + $0xb0] sm:$0xff] %vm546, %v541
  %597 = vst.msk [vmem:[#allocation2 + $0xb8] sm:$0xff] %vm546, %v542
  %598 = vst.msk [vmem:[#allocation2 + $0xc0] sm:$0xff] %vm546, %v543
  %599 = vst.msk [vmem:[#allocation2 + $0xc8] sm:$0xff] %vm546, %v544
  %600 = vst.msk [vmem:[#allocation2 + $0xd0] sm:$0xff] %vm546, %v545
  %v601 = vld [vmem:[#allocation2 + $0x5] sm:$0xff]
  %v602 = vld [vmem:[#allocation2 + $0xd] sm:$0xff]
  %v603 = vld [vmem:[#allocation2 + $0x15] sm:$0xff]
  %v604 = vld [vmem:[#allocation2 + $0x1d] sm:$0xff]
  %v605 = vld [vmem:[#allocation2 + $0x25] sm:$0xff]
  %v606 = vld [vmem:[#allocation2 + $0x2d] sm:$0xff]
  %v607 = vld [vmem:[#allocation2 + $0x35] sm:$0xff]
  %v608 = vld [vmem:[#allocation2 + $0x3d] sm:$0xff]
  %v609 = vld [vmem:[#allocation2 + $0x45] sm:$0xff]
  %v610 = vld [vmem:[#allocation2 + $0x4d] sm:$0xff]
  %v611 = vld [vmem:[#allocation2 + $0x55] sm:$0xff]
  %v612 = vld [vmem:[#allocation2 + $0x5d] sm:$0xff]
  %v613 = vld [vmem:[#allocation2 + $0x65] sm:$0xff]
  %v614 = vld [vmem:[#allocation2 + $0x6d] sm:$0xff]
  %v615 = vld [vmem:[#allocation2 + $0x75] sm:$0xff]
  %v616 = vld [vmem:[#allocation2 + $0x7d] sm:$0xff]
  %v617 = vld [vmem:[#allocation2 + $0x85] sm:$0xff]
  %v618 = vld [vmem:[#allocation2 + $0x8d] sm:$0xff]
  %v619 = vld [vmem:[#allocation2 + $0x95] sm:$0xff]
  %v620 = vld [vmem:[#allocation2 + $0x9d] sm:$0xff]
  %v621 = vld [vmem:[#allocation2 + $0xa5] sm:$0xff]
  %v622 = vld [vmem:[#allocation2 + $0xad] sm:$0xff]
  %v623 = vld [vmem:[#allocation2 + $0xb5] sm:$0xff]
  %v624 = vld [vmem:[#allocation2 + $0xbd] sm:$0xff]
  %v625 = vld [vmem:[#allocation2 + $0xc5] sm:$0xff]
  %v626 = vpack.c.bf16 %v602, %v601
  %v627 = vpack.c.bf16 %v604, %v603
  %v628 = vpack.c.bf16 %v606, %v605
  %v629 = vpack.c.bf16 %v608, %v607
  %v630 = vpack.c.bf16 %v610, %v609
  %v631 = vpack.c.bf16 %v612, %v611
  %v632 = vpack.c.bf16 %v614, %v613
  %v633 = vpack.c.bf16 %v616, %v615
  %v634 = vpack.c.bf16 %v618, %v617
  %v635 = vpack.c.bf16 %v620, %v619
  %v636 = vpack.c.bf16 %v622, %v621
  %v637 = vpack.c.bf16 %v624, %v623
  %v638 = vpack.c.bf16 %v625, %v625
  %v639 = vld [vmem:[%s7] sm:$0xf]
  %v640 = vld [vmem:[%s7 + $0x4] sm:$0xf]
  %v641 = vld [vmem:[%s7 + $0x8] sm:$0xf]
  %v642 = vld [vmem:[%s7 + $0xc] sm:$0xf]
  %v647 = vunpack.c.l.b16 %v639
  %v648 = vunpack.c.l.b16 %v640
  %v649 = vunpack.c.l.b16 %v641
  %v650 = vunpack.c.l.b16 %v642
  %v651 = vpack.c.b16 %v648, %v647
  %v652 = vpack.c.b16 %v650, %v649
  %v656 = vsel %vm546, %v626, 0
  %v659 = vsel %vm546, %v627, 0
  %v662 = vsel %vm546, %v628, 0
  %v665 = vsel %vm546, %v629, 0
  %v668 = vsel %vm546, %v630, 0
  %v671 = vsel %vm546, %v631, 0
  %v674 = vsel %vm546, %v632, 0
  %v677 = vsel %vm546, %v633, 0
  %v680 = vsel %vm546, %v634, 0
  %v683 = vsel %vm546, %v635, 0
  %v686 = vsel %vm546, %v636, 0
  %v689 = vsel %vm546, %v637, 0
  %v692 = vsel %vm546, %v638, 0
  %694 = vmatpush.bf16.msra.mxu0 0
  %695 = vmatpush.bf16.msra.mxu0 0
  %696 = vmatpush.bf16.msra.mxu0 0
  %697 = vmatpush.bf16.msra.mxu0 0
  %698 = vmatpush.bf16.msra.mxu0 0
  %699 = vmatpush.bf16.msra.mxu0 0
  %700 = vmatpush.bf16.msra.mxu0 %v652
  %701 = vmatpush.bf16.msra.mxu0 %v651
  %702 = vmatmul.bf16.gmra.mxu0 %v656
  %v703 = vpop.f32.mrf.mxu0
  %v704 = vadd.f32 0.0, %v703
  %v705 = vpop.f32.mrf.mxu0
  %v706 = vadd.f32 0.0, %v705
  %707 = vmatmul.bf16.gmra.mxu0 %v659
  %v708 = vpop.f32.mrf.mxu0
  %v709 = vadd.f32 0.0, %v708
  %v710 = vpop.f32.mrf.mxu0
  %v711 = vadd.f32 0.0, %v710
  %712 = vmatmul.bf16.gmra.mxu0 %v662
  %v713 = vpop.f32.mrf.mxu0
  %v714 = vadd.f32 0.0, %v713
  %v715 = vpop.f32.mrf.mxu0
  %v716 = vadd.f32 0.0, %v715
  %717 = vmatmul.bf16.gmra.mxu0 %v665
  %v718 = vpop.f32.mrf.mxu0
  %v719 = vadd.f32 0.0, %v718
  %v720 = vpop.f32.mrf.mxu0
  %v721 = vadd.f32 0.0, %v720
  %722 = vmatmul.bf16.gmra.mxu0 %v668
  %v723 = vpop.f32.mrf.mxu0
  %v724 = vadd.f32 0.0, %v723
  %v725 = vpop.f32.mrf.mxu0
  %v726 = vadd.f32 0.0, %v725
  %727 = vmatmul.bf16.gmra.mxu0 %v671
  %v728 = vpop.f32.mrf.mxu0
  %v729 = vadd.f32 0.0, %v728
  %v730 = vpop.f32.mrf.mxu0
  %v731 = vadd.f32 0.0, %v730
  %732 = vmatmul.bf16.gmra.mxu0 %v674
  %v733 = vpop.f32.mrf.mxu0
  %v734 = vadd.f32 0.0, %v733
  %v735 = vpop.f32.mrf.mxu0
  %v736 = vadd.f32 0.0, %v735
  %737 = vmatmul.bf16.gmra.mxu0 %v677
  %v738 = vpop.f32.mrf.mxu0
  %v739 = vadd.f32 0.0, %v738
  %v740 = vpop.f32.mrf.mxu0
  %v741 = vadd.f32 0.0, %v740
  %742 = vmatmul.bf16.gmra.mxu0 %v680
  %v743 = vpop.f32.mrf.mxu0
  %v744 = vadd.f32 0.0, %v743
  %v745 = vpop.f32.mrf.mxu0
  %v746 = vadd.f32 0.0, %v745
  %747 = vmatmul.bf16.gmra.mxu0 %v683
  %v748 = vpop.f32.mrf.mxu0
  %v749 = vadd.f32 0.0, %v748
  %v750 = vpop.f32.mrf.mxu0
  %v751 = vadd.f32 0.0, %v750
  %752 = vmatmul.bf16.gmra.mxu0 %v686
  %v753 = vpop.f32.mrf.mxu0
  %v754 = vadd.f32 0.0, %v753
  %v755 = vpop.f32.mrf.mxu0
  %v756 = vadd.f32 0.0, %v755
  %757 = vmatmul.bf16.gmra.mxu0 %v689
  %v758 = vpop.f32.mrf.mxu0
  %v759 = vadd.f32 0.0, %v758
  %v760 = vpop.f32.mrf.mxu0
  %v761 = vadd.f32 0.0, %v760
  %762 = vmatmul.bf16.gmra.mxu0 %v692
  %v763 = vpop.f32.mrf.mxu0
  %v764 = vadd.f32 0.0, %v763
  %v765 = vpop.f32.mrf.mxu0
  %766 = vdwg.mxu0
  %v767 = vadd.f32 %v30, %v704
  %v768 = vadd.f32 %v31, %v706
  %v769 = vadd.f32 %v32, %v709
  %v770 = vadd.f32 %v33, %v711
  %v771 = vadd.f32 %v34, %v714
  %v772 = vadd.f32 %v35, %v716
  %v773 = vadd.f32 %v36, %v719
  %v774 = vadd.f32 %v37, %v721
  %v775 = vadd.f32 %v38, %v724
  %v776 = vadd.f32 %v39, %v726
  %v777 = vadd.f32 %v40, %v729
  %v778 = vadd.f32 %v41, %v731
  %v779 = vadd.f32 %v42, %v734
  %v780 = vadd.f32 %v43, %v736
  %v781 = vadd.f32 %v44, %v739
  %v782 = vadd.f32 %v45, %v741
  %v783 = vadd.f32 %v46, %v744
  %v784 = vadd.f32 %v47, %v746
  %v785 = vadd.f32 %v48, %v749
  %v786 = vadd.f32 %v49, %v751
  %v787 = vadd.f32 %v50, %v754
  %v788 = vadd.f32 %v51, %v756
  %v789 = vadd.f32 %v52, %v759
  %v790 = vadd.f32 %v53, %v761
  %v791 = vadd.f32 %v54, %v764
  %v792 = vld [vmem:[#allocation2 + $0x6] sm:$0xff]
  %v793 = vld [vmem:[#allocation2 + $0xe] sm:$0xff]
  %v794 = vld [vmem:[#allocation2 + $0x16] sm:$0xff]
  %v795 = vld [vmem:[#allocation2 + $0x1e] sm:$0xff]
  %v796 = vld [vmem:[#allocation2 + $0x26] sm:$0xff]
  %v797 = vld [vmem:[#allocation2 + $0x2e] sm:$0xff]
  %v798 = vld [vmem:[#allocation2 + $0x36] sm:$0xff]
  %v799 = vld [vmem:[#allocation2 + $0x3e] sm:$0xff]
  %v800 = vld [vmem:[#allocation2 + $0x46] sm:$0xff]
  %v801 = vld [vmem:[#allocation2 + $0x4e] sm:$0xff]
  %v802 = vld [vmem:[#allocation2 + $0x56] sm:$0xff]
  %v803 = vld [vmem:[#allocation2 + $0x5e] sm:$0xff]
  %v804 = vld [vmem:[#allocation2 + $0x66] sm:$0xff]
  %v805 = vld [vmem:[#allocation2 + $0x6e] sm:$0xff]
  %v806 = vld [vmem:[#allocation2 + $0x76] sm:$0xff]
  %v807 = vld [vmem:[#allocation2 + $0x7e] sm:$0xff]
  %v808 = vld [vmem:[#allocation2 + $0x86] sm:$0xff]
  %v809 = vld [vmem:[#allocation2 + $0x8e] sm:$0xff]
  %v810 = vld [vmem:[#allocation2 + $0x96] sm:$0xff]
  %v811 = vld [vmem:[#allocation2 + $0x9e] sm:$0xff]
  %v812 = vld [vmem:[#allocation2 + $0xa6] sm:$0xff]
  %v813 = vld [vmem:[#allocation2 + $0xae] sm:$0xff]
  %v814 = vld [vmem:[#allocation2 + $0xb6] sm:$0xff]
  %v815 = vld [vmem:[#allocation2 + $0xbe] sm:$0xff]
  %v816 = vld [vmem:[#allocation2 + $0xc6] sm:$0xff]
  %v817 = vpack.c.bf16 %v793, %v792
  %v818 = vpack.c.bf16 %v795, %v794
  %v819 = vpack.c.bf16 %v797, %v796
  %v820 = vpack.c.bf16 %v799, %v798
  %v821 = vpack.c.bf16 %v801, %v800
  %v822 = vpack.c.bf16 %v803, %v802
  %v823 = vpack.c.bf16 %v805, %v804
  %v824 = vpack.c.bf16 %v807, %v806
  %v825 = vpack.c.bf16 %v809, %v808
  %v826 = vpack.c.bf16 %v811, %v810
  %v827 = vpack.c.bf16 %v813, %v812
  %v828 = vpack.c.bf16 %v815, %v814
  %v829 = vpack.c.bf16 %v816, %v816
  %s830 = scalar_lea.vmem %s7, 16
  %v831 = vld [vmem:[%s830] sm:$0xf]
  %v832 = vld [vmem:[%s830 + $0x4] sm:$0xf]
  %v833 = vld [vmem:[%s830 + $0x8] sm:$0xf]
  %v834 = vld [vmem:[%s830 + $0xc] sm:$0xf]
  %v839 = vunpack.c.l.b16 %v831
  %v840 = vunpack.c.l.b16 %v832
  %v841 = vunpack.c.l.b16 %v833
  %v842 = vunpack.c.l.b16 %v834
  %v843 = vpack.c.b16 %v840, %v839
  %v844 = vpack.c.b16 %v842, %v841
  %v848 = vsel %vm546, %v817, 0
  %v851 = vsel %vm546, %v818, 0
  %v854 = vsel %vm546, %v819, 0
  %v857 = vsel %vm546, %v820, 0
  %v860 = vsel %vm546, %v821, 0
  %v863 = vsel %vm546, %v822, 0
  %v866 = vsel %vm546, %v823, 0
  %v869 = vsel %vm546, %v824, 0
  %v872 = vsel %vm546, %v825, 0
  %v875 = vsel %vm546, %v826, 0
  %v878 = vsel %vm546, %v827, 0
  %v881 = vsel %vm546, %v828, 0
  %v884 = vsel %vm546, %v829, 0
  %886 = vmatpush.bf16.msra.mxu0 0
  %887 = vmatpush.bf16.msra.mxu0 0
  %888 = vmatpush.bf16.msra.mxu0 0
  %889 = vmatpush.bf16.msra.mxu0 0
  %890 = vmatpush.bf16.msra.mxu0 0
  %891 = vmatpush.bf16.msra.mxu0 0
  %892 = vmatpush.bf16.msra.mxu0 %v844
  %893 = vmatpush.bf16.msra.mxu0 %v843
  %894 = vmatmul.bf16.gmra.mxu0 %v848
  %v895 = vpop.f32.mrf.mxu0
  %v896 = vadd.f32 0.0, %v895
  %v897 = vpop.f32.mrf.mxu0
  %v898 = vadd.f32 0.0, %v897
  %899 = vmatmul.bf16.gmra.mxu0 %v851
  %v900 = vpop.f32.mrf.mxu0
  %v901 = vadd.f32 0.0, %v900
  %v902 = vpop.f32.mrf.mxu0
  %v903 = vadd.f32 0.0, %v902
  %904 = vmatmul.bf16.gmra.mxu0 %v854
  %v905 = vpop.f32.mrf.mxu0
  %v906 = vadd.f32 0.0, %v905
  %v907 = vpop.f32.mrf.mxu0
  %v908 = vadd.f32 0.0, %v907
  %909 = vmatmul.bf16.gmra.mxu0 %v857
  %v910 = vpop.f32.mrf.mxu0
  %v911 = vadd.f32 0.0, %v910
  %v912 = vpop.f32.mrf.mxu0
  %v913 = vadd.f32 0.0, %v912
  %914 = vmatmul.bf16.gmra.mxu0 %v860
  %v915 = vpop.f32.mrf.mxu0
  %v916 = vadd.f32 0.0, %v915
  %v917 = vpop.f32.mrf.mxu0
  %v918 = vadd.f32 0.0, %v917
  %919 = vmatmul.bf16.gmra.mxu0 %v863
  %v920 = vpop.f32.mrf.mxu0
  %v921 = vadd.f32 0.0, %v920
  %v922 = vpop.f32.mrf.mxu0
  %v923 = vadd.f32 0.0, %v922
  %924 = vmatmul.bf16.gmra.mxu0 %v866
  %v925 = vpop.f32.mrf.mxu0
  %v926 = vadd.f32 0.0, %v925
  %v927 = vpop.f32.mrf.mxu0
  %v928 = vadd.f32 0.0, %v927
  %929 = vmatmul.bf16.gmra.mxu0 %v869
  %v930 = vpop.f32.mrf.mxu0
  %v931 = vadd.f32 0.0, %v930
  %v932 = vpop.f32.mrf.mxu0
  %v933 = vadd.f32 0.0, %v932
  %934 = vmatmul.bf16.gmra.mxu0 %v872
  %v935 = vpop.f32.mrf.mxu0
  %v936 = vadd.f32 0.0, %v935
  %v937 = vpop.f32.mrf.mxu0
  %v938 = vadd.f32 0.0, %v937
  %939 = vmatmul.bf16.gmra.mxu0 %v875
  %v940 = vpop.f32.mrf.mxu0
  %v941 = vadd.f32 0.0, %v940
  %v942 = vpop.f32.mrf.mxu0
  %v943 = vadd.f32 0.0, %v942
  %944 = vmatmul.bf16.gmra.mxu0 %v878
  %v945 = vpop.f32.mrf.mxu0
  %v946 = vadd.f32 0.0, %v945
  %v947 = vpop.f32.mrf.mxu0
  %v948 = vadd.f32 0.0, %v947
  %949 = vmatmul.bf16.gmra.mxu0 %v881
  %v950 = vpop.f32.mrf.mxu0
  %v951 = vadd.f32 0.0, %v950
  %v952 = vpop.f32.mrf.mxu0
  %v953 = vadd.f32 0.0, %v952
  %954 = vmatmul.bf16.gmra.mxu0 %v884
  %v955 = vpop.f32.mrf.mxu0
  %v956 = vadd.f32 0.0, %v955
  %v957 = vpop.f32.mrf.mxu0
  %958 = vdwg.mxu0
  %v959 = vadd.f32 %v767, %v896
  %v960 = vadd.f32 %v768, %v898
  %v961 = vadd.f32 %v769, %v901
  %v962 = vadd.f32 %v770, %v903
  %v963 = vadd.f32 %v771, %v906
  %v964 = vadd.f32 %v772, %v908
  %v965 = vadd.f32 %v773, %v911
  %v966 = vadd.f32 %v774, %v913
  %v967 = vadd.f32 %v775, %v916
  %v968 = vadd.f32 %v776, %v918
  %v969 = vadd.f32 %v777, %v921
  %v970 = vadd.f32 %v778, %v923
  %v971 = vadd.f32 %v779, %v926
  %v972 = vadd.f32 %v780, %v928
  %v973 = vadd.f32 %v781, %v931
  %v974 = vadd.f32 %v782, %v933
  %v975 = vadd.f32 %v783, %v936
  %v976 = vadd.f32 %v784, %v938
  %v977 = vadd.f32 %v785, %v941
  %v978 = vadd.f32 %v786, %v943
  %v979 = vadd.f32 %v787, %v946
  %v980 = vadd.f32 %v788, %v948
  %v981 = vadd.f32 %v789, %v951
  %v982 = vadd.f32 %v790, %v953
  %v983 = vadd.f32 %v791, %v956
  %v984 = vld [vmem:[#allocation2 + $0x7] sm:$0xff]
  %v985 = vld [vmem:[#allocation2 + $0xf] sm:$0xff]
  %v986 = vld [vmem:[#allocation2 + $0x17] sm:$0xff]
  %v987 = vld [vmem:[#allocation2 + $0x1f] sm:$0xff]
  %v988 = vld [vmem:[#allocation2 + $0x27] sm:$0xff]
  %v989 = vld [vmem:[#allocation2 + $0x2f] sm:$0xff]
  %v990 = vld [vmem:[#allocation2 + $0x37] sm:$0xff]
  %v991 = vld [vmem:[#allocation2 + $0x3f] sm:$0xff]
  %v992 = vld [vmem:[#allocation2 + $0x47] sm:$0xff]
  %v993 = vld [vmem:[#allocation2 + $0x4f] sm:$0xff]
  %v994 = vld [vmem:[#allocation2 + $0x57] sm:$0xff]
  %v995 = vld [vmem:[#allocation2 + $0x5f] sm:$0xff]
  %v996 = vld [vmem:[#allocation2 + $0x67] sm:$0xff]
  %v997 = vld [vmem:[#allocation2 + $0x6f] sm:$0xff]
  %v998 = vld [vmem:[#allocation2 + $0x77] sm:$0xff]
  %v999 = vld [vmem:[#allocation2 + $0x7f] sm:$0xff]
  %v1000 = vld [vmem:[#allocation2 + $0x87] sm:$0xff]
  %v1001 = vld [vmem:[#allocation2 + $0x8f] sm:$0xff]
  %v1002 = vld [vmem:[#allocation2 + $0x97] sm:$0xff]
  %v1003 = vld [vmem:[#allocation2 + $0x9f] sm:$0xff]
  %v1004 = vld [vmem:[#allocation2 + $0xa7] sm:$0xff]
  %v1005 = vld [vmem:[#allocation2 + $0xaf] sm:$0xff]
  %v1006 = vld [vmem:[#allocation2 + $0xb7] sm:$0xff]
  %v1007 = vld [vmem:[#allocation2 + $0xbf] sm:$0xff]
  %v1008 = vld [vmem:[#allocation2 + $0xc7] sm:$0xff]
  %v1009 = vpack.c.bf16 %v985, %v984
  %v1010 = vpack.c.bf16 %v987, %v986
  %v1011 = vpack.c.bf16 %v989, %v988
  %v1012 = vpack.c.bf16 %v991, %v990
  %v1013 = vpack.c.bf16 %v993, %v992
  %v1014 = vpack.c.bf16 %v995, %v994
  %v1015 = vpack.c.bf16 %v997, %v996
  %v1016 = vpack.c.bf16 %v999, %v998
  %v1017 = vpack.c.bf16 %v1001, %v1000
  %v1018 = vpack.c.bf16 %v1003, %v1002
  %v1019 = vpack.c.bf16 %v1005, %v1004
  %v1020 = vpack.c.bf16 %v1007, %v1006
  %v1021 = vpack.c.bf16 %v1008, %v1008
  %s1022 = scalar_lea.vmem %s7, 32
  %v1023 = vld [vmem:[%s1022] sm:$0xf]
  %v1024 = vld [vmem:[%s1022 + $0x4] sm:$0xf]
  %v1025 = vld [vmem:[%s1022 + $0x8] sm:$0xf]
  %v1026 = vld [vmem:[%s1022 + $0xc] sm:$0xf]
  %v1031 = vunpack.c.l.b16 %v1023
  %v1032 = vunpack.c.l.b16 %v1024
  %v1033 = vunpack.c.l.b16 %v1025
  %v1034 = vunpack.c.l.b16 %v1026
  %v1035 = vpack.c.b16 %v1032, %v1031
  %v1036 = vpack.c.b16 %v1034, %v1033
  %v1040 = vsel %vm546, %v1009, 0
  %v1043 = vsel %vm546, %v1010, 0
  %v1046 = vsel %vm546, %v1011, 0
  %v1049 = vsel %vm546, %v1012, 0
  %v1052 = vsel %vm546, %v1013, 0
  %v1055 = vsel %vm546, %v1014, 0
  %v1058 = vsel %vm546, %v1015, 0
  %v1061 = vsel %vm546, %v1016, 0
  %v1064 = vsel %vm546, %v1017, 0
  %v1067 = vsel %vm546, %v1018, 0
  %v1070 = vsel %vm546, %v1019, 0
  %v1073 = vsel %vm546, %v1020, 0
  %v1076 = vsel %vm546, %v1021, 0
  %1078 = vmatpush.bf16.msra.mxu0 0
  %1079 = vmatpush.bf16.msra.mxu0 0
  %1080 = vmatpush.bf16.msra.mxu0 0
  %1081 = vmatpush.bf16.msra.mxu0 0
  %1082 = vmatpush.bf16.msra.mxu0 0
  %1083 = vmatpush.bf16.msra.mxu0 0
  %1084 = vmatpush.bf16.msra.mxu0 %v1036
  %1085 = vmatpush.bf16.msra.mxu0 %v1035
  %1086 = vmatmul.bf16.gmra.mxu0 %v1040
  %v1087 = vpop.f32.mrf.mxu0
  %v1088 = vadd.f32 0.0, %v1087
  %v1089 = vpop.f32.mrf.mxu0
  %v1090 = vadd.f32 0.0, %v1089
  %1091 = vmatmul.bf16.gmra.mxu0 %v1043
  %v1092 = vpop.f32.mrf.mxu0
  %v1093 = vadd.f32 0.0, %v1092
  %v1094 = vpop.f32.mrf.mxu0
  %v1095 = vadd.f32 0.0, %v1094
  %1096 = vmatmul.bf16.gmra.mxu0 %v1046
  %v1097 = vpop.f32.mrf.mxu0
  %v1098 = vadd.f32 0.0, %v1097
  %v1099 = vpop.f32.mrf.mxu0
  %v1100 = vadd.f32 0.0, %v1099
  %1101 = vmatmul.bf16.gmra.mxu0 %v1049
  %v1102 = vpop.f32.mrf.mxu0
  %v1103 = vadd.f32 0.0, %v1102
  %v1104 = vpop.f32.mrf.mxu0
  %v1105 = vadd.f32 0.0, %v1104
  %1106 = vmatmul.bf16.gmra.mxu0 %v1052
  %v1107 = vpop.f32.mrf.mxu0
  %v1108 = vadd.f32 0.0, %v1107
  %v1109 = vpop.f32.mrf.mxu0
  %v1110 = vadd.f32 0.0, %v1109
  %1111 = vmatmul.bf16.gmra.mxu0 %v1055
  %v1112 = vpop.f32.mrf.mxu0
  %v1113 = vadd.f32 0.0, %v1112
  %v1114 = vpop.f32.mrf.mxu0
  %v1115 = vadd.f32 0.0, %v1114
  %1116 = vmatmul.bf16.gmra.mxu0 %v1058
  %v1117 = vpop.f32.mrf.mxu0
  %v1118 = vadd.f32 0.0, %v1117
  %v1119 = vpop.f32.mrf.mxu0
  %v1120 = vadd.f32 0.0, %v1119
  %1121 = vmatmul.bf16.gmra.mxu0 %v1061
  %v1122 = vpop.f32.mrf.mxu0
  %v1123 = vadd.f32 0.0, %v1122
  %v1124 = vpop.f32.mrf.mxu0
  %v1125 = vadd.f32 0.0, %v1124
  %1126 = vmatmul.bf16.gmra.mxu0 %v1064
  %v1127 = vpop.f32.mrf.mxu0
  %v1128 = vadd.f32 0.0, %v1127
  %v1129 = vpop.f32.mrf.mxu0
  %v1130 = vadd.f32 0.0, %v1129
  %1131 = vmatmul.bf16.gmra.mxu0 %v1067
  %v1132 = vpop.f32.mrf.mxu0
  %v1133 = vadd.f32 0.0, %v1132
  %v1134 = vpop.f32.mrf.mxu0
  %v1135 = vadd.f32 0.0, %v1134
  %1136 = vmatmul.bf16.gmra.mxu0 %v1070
  %v1137 = vpop.f32.mrf.mxu0
  %v1138 = vadd.f32 0.0, %v1137
  %v1139 = vpop.f32.mrf.mxu0
  %v1140 = vadd.f32 0.0, %v1139
  %1141 = vmatmul.bf16.gmra.mxu0 %v1073
  %v1142 = vpop.f32.mrf.mxu0
  %v1143 = vadd.f32 0.0, %v1142
  %v1144 = vpop.f32.mrf.mxu0
  %v1145 = vadd.f32 0.0, %v1144
  %1146 = vmatmul.bf16.gmra.mxu0 %v1076
  %v1147 = vpop.f32.mrf.mxu0
  %v1148 = vadd.f32 0.0, %v1147
  %v1149 = vpop.f32.mrf.mxu0
  %1150 = vdwg.mxu0
  %v1151 = vadd.f32 %v959, %v1088
  %v1152 = vadd.f32 %v960, %v1090
  %v1153 = vadd.f32 %v961, %v1093
  %v1154 = vadd.f32 %v962, %v1095
  %v1155 = vadd.f32 %v963, %v1098
  %v1156 = vadd.f32 %v964, %v1100
  %v1157 = vadd.f32 %v965, %v1103
  %v1158 = vadd.f32 %v966, %v1105
  %v1159 = vadd.f32 %v967, %v1108
  %v1160 = vadd.f32 %v968, %v1110
  %v1161 = vadd.f32 %v969, %v1113
  %v1162 = vadd.f32 %v970, %v1115
  %v1163 = vadd.f32 %v971, %v1118
  %v1164 = vadd.f32 %v972, %v1120
  %v1165 = vadd.f32 %v973, %v1123
  %v1166 = vadd.f32 %v974, %v1125
  %v1167 = vadd.f32 %v975, %v1128
  %v1168 = vadd.f32 %v976, %v1130
  %v1169 = vadd.f32 %v977, %v1133
  %v1170 = vadd.f32 %v978, %v1135
  %v1171 = vadd.f32 %v979, %v1138
  %v1172 = vadd.f32 %v980, %v1140
  %v1173 = vadd.f32 %v981, %v1143
  %v1174 = vadd.f32 %v982, %v1145
  %v1175 = vadd.f32 %v983, %v1148
  %v1176 = vld [vmem:[#allocation2 + $0xf] sm:$0xff]
  %v1177 = vld [vmem:[#allocation2 + $0x17] sm:$0xff]
  %v1178 = vld [vmem:[#allocation2 + $0x1f] sm:$0xff]
  %v1179 = vld [vmem:[#allocation2 + $0x27] sm:$0xff]
  %v1180 = vld [vmem:[#allocation2 + $0x2f] sm:$0xff]
  %v1181 = vld [vmem:[#allocation2 + $0x37] sm:$0xff]
  %v1182 = vld [vmem:[#allocation2 + $0x3f] sm:$0xff]
  %v1183 = vld [vmem:[#allocation2 + $0x47] sm:$0xff]
  %v1184 = vld [vmem:[#allocation2 + $0x4f] sm:$0xff]
  %v1185 = vld [vmem:[#allocation2 + $0x57] sm:$0xff]
  %v1186 = vld [vmem:[#allocation2 + $0x5f] sm:$0xff]
  %v1187 = vld [vmem:[#allocation2 + $0x67] sm:$0xff]
  %v1188 = vld [vmem:[#allocation2 + $0x6f] sm:$0xff]
  %v1189 = vld [vmem:[#allocation2 + $0x77] sm:$0xff]
  %v1190 = vld [vmem:[#allocation2 + $0x7f] sm:$0xff]
  %v1191 = vld [vmem:[#allocation2 + $0x87] sm:$0xff]
  %v1192 = vld [vmem:[#allocation2 + $0x8f] sm:$0xff]
  %v1193 = vld [vmem:[#allocation2 + $0x97] sm:$0xff]
  %v1194 = vld [vmem:[#allocation2 + $0x9f] sm:$0xff]
  %v1195 = vld [vmem:[#allocation2 + $0xa7] sm:$0xff]
  %v1196 = vld [vmem:[#allocation2 + $0xaf] sm:$0xff]
  %v1197 = vld [vmem:[#allocation2 + $0xb7] sm:$0xff]
  %v1198 = vld [vmem:[#allocation2 + $0xbf] sm:$0xff]
  %v1199 = vld [vmem:[#allocation2 + $0xc7] sm:$0xff]
  %v1200 = vld [vmem:[#allocation2 + $0xcf] sm:$0xff]
  %v1201 = vpack.c.bf16 %v1177, %v1176
  %v1202 = vpack.c.bf16 %v1179, %v1178
  %v1203 = vpack.c.bf16 %v1181, %v1180
  %v1204 = vpack.c.bf16 %v1183, %v1182
  %v1205 = vpack.c.bf16 %v1185, %v1184
  %v1206 = vpack.c.bf16 %v1187, %v1186
  %v1207 = vpack.c.bf16 %v1189, %v1188
  %v1208 = vpack.c.bf16 %v1191, %v1190
  %v1209 = vpack.c.bf16 %v1193, %v1192
  %v1210 = vpack.c.bf16 %v1195, %v1194
  %v1211 = vpack.c.bf16 %v1197, %v1196
  %v1212 = vpack.c.bf16 %v1199, %v1198
  %v1213 = vpack.c.bf16 %v1200, %v1200
  %s1214 = scalar_lea.vmem %s7, 48
  %v1215 = vld [vmem:[%s1214] sm:$0xf]
  %v1216 = vld [vmem:[%s1214 + $0x4] sm:$0xf]
  %v1217 = vld [vmem:[%s1214 + $0x8] sm:$0xf]
  %v1218 = vld [vmem:[%s1214 + $0xc] sm:$0xf]
  %v1223 = vunpack.c.l.b16 %v1215
  %v1224 = vunpack.c.l.b16 %v1216
  %v1225 = vunpack.c.l.b16 %v1217
  %v1226 = vunpack.c.l.b16 %v1218
  %v1227 = vpack.c.b16 %v1224, %v1223
  %v1228 = vpack.c.b16 %v1226, %v1225
  %v1232 = vsel %vm546, %v1201, 0
  %v1235 = vsel %vm546, %v1202, 0
  %v1238 = vsel %vm546, %v1203, 0
  %v1241 = vsel %vm546, %v1204, 0
  %v1244 = vsel %vm546, %v1205, 0
  %v1247 = vsel %vm546, %v1206, 0
  %v1250 = vsel %vm546, %v1207, 0
  %v1253 = vsel %vm546, %v1208, 0
  %v1256 = vsel %vm546, %v1209, 0
  %v1259 = vsel %vm546, %v1210, 0
  %v1262 = vsel %vm546, %v1211, 0
  %v1265 = vsel %vm546, %v1212, 0
  %v1268 = vsel %vm546, %v1213, 0
  %1270 = vmatpush.bf16.msra.mxu0 0
  %1271 = vmatpush.bf16.msra.mxu0 0
  %1272 = vmatpush.bf16.msra.mxu0 0
  %1273 = vmatpush.bf16.msra.mxu0 0
  %1274 = vmatpush.bf16.msra.mxu0 0
  %1275 = vmatpush.bf16.msra.mxu0 0
  %1276 = vmatpush.bf16.msra.mxu0 %v1228
  %1277 = vmatpush.bf16.msra.mxu0 %v1227
  %1278 = vmatmul.bf16.gmra.mxu0 %v1232
  %v1279 = vpop.f32.mrf.mxu0
  %v1280 = vadd.f32 0.0, %v1279
  %v1281 = vpop.f32.mrf.mxu0
  %v1282 = vadd.f32 0.0, %v1281
  %1283 = vmatmul.bf16.gmra.mxu0 %v1235
  %v1284 = vpop.f32.mrf.mxu0
  %v1285 = vadd.f32 0.0, %v1284
  %v1286 = vpop.f32.mrf.mxu0
  %v1287 = vadd.f32 0.0, %v1286
  %1288 = vmatmul.bf16.gmra.mxu0 %v1238
  %v1289 = vpop.f32.mrf.mxu0
  %v1290 = vadd.f32 0.0, %v1289
  %v1291 = vpop.f32.mrf.mxu0
  %v1292 = vadd.f32 0.0, %v1291
  %1293 = vmatmul.bf16.gmra.mxu0 %v1241
  %v1294 = vpop.f32.mrf.mxu0
  %v1295 = vadd.f32 0.0, %v1294
  %v1296 = vpop.f32.mrf.mxu0
  %v1297 = vadd.f32 0.0, %v1296
  %1298 = vmatmul.bf16.gmra.mxu0 %v1244
  %v1299 = vpop.f32.mrf.mxu0
  %v1300 = vadd.f32 0.0, %v1299
  %v1301 = vpop.f32.mrf.mxu0
  %v1302 = vadd.f32 0.0, %v1301
  %1303 = vmatmul.bf16.gmra.mxu0 %v1247
  %v1304 = vpop.f32.mrf.mxu0
  %v1305 = vadd.f32 0.0, %v1304
  %v1306 = vpop.f32.mrf.mxu0
  %v1307 = vadd.f32 0.0, %v1306
  %1308 = vmatmul.bf16.gmra.mxu0 %v1250
  %v1309 = vpop.f32.mrf.mxu0
  %v1310 = vadd.f32 0.0, %v1309
  %v1311 = vpop.f32.mrf.mxu0
  %v1312 = vadd.f32 0.0, %v1311
  %1313 = vmatmul.bf16.gmra.mxu0 %v1253
  %v1314 = vpop.f32.mrf.mxu0
  %v1315 = vadd.f32 0.0, %v1314
  %v1316 = vpop.f32.mrf.mxu0
  %v1317 = vadd.f32 0.0, %v1316
  %1318 = vmatmul.bf16.gmra.mxu0 %v1256
  %v1319 = vpop.f32.mrf.mxu0
  %v1320 = vadd.f32 0.0, %v1319
  %v1321 = vpop.f32.mrf.mxu0
  %v1322 = vadd.f32 0.0, %v1321
  %1323 = vmatmul.bf16.gmra.mxu0 %v1259
  %v1324 = vpop.f32.mrf.mxu0
  %v1325 = vadd.f32 0.0, %v1324
  %v1326 = vpop.f32.mrf.mxu0
  %v1327 = vadd.f32 0.0, %v1326
  %1328 = vmatmul.bf16.gmra.mxu0 %v1262
  %v1329 = vpop.f32.mrf.mxu0
  %v1330 = vadd.f32 0.0, %v1329
  %v1331 = vpop.f32.mrf.mxu0
  %v1332 = vadd.f32 0.0, %v1331
  %1333 = vmatmul.bf16.gmra.mxu0 %v1265
  %v1334 = vpop.f32.mrf.mxu0
  %v1335 = vadd.f32 0.0, %v1334
  %v1336 = vpop.f32.mrf.mxu0
  %v1337 = vadd.f32 0.0, %v1336
  %1338 = vmatmul.bf16.gmra.mxu0 %v1268
  %v1339 = vpop.f32.mrf.mxu0
  %v1340 = vadd.f32 0.0, %v1339
  %v1341 = vpop.f32.mrf.mxu0
  %1342 = vdwg.mxu0
  %v1343 = vadd.f32 %v1151, %v1280
  %v1344 = vadd.f32 %v1152, %v1282
  %v1345 = vadd.f32 %v1153, %v1285
  %v1346 = vadd.f32 %v1154, %v1287
  %v1347 = vadd.f32 %v1155, %v1290
  %v1348 = vadd.f32 %v1156, %v1292
  %v1349 = vadd.f32 %v1157, %v1295
  %v1350 = vadd.f32 %v1158, %v1297
  %v1351 = vadd.f32 %v1159, %v1300
  %v1352 = vadd.f32 %v1160, %v1302
  %v1353 = vadd.f32 %v1161, %v1305
  %v1354 = vadd.f32 %v1162, %v1307
  %v1355 = vadd.f32 %v1163, %v1310
  %v1356 = vadd.f32 %v1164, %v1312
  %v1357 = vadd.f32 %v1165, %v1315
  %v1358 = vadd.f32 %v1166, %v1317
  %v1359 = vadd.f32 %v1167, %v1320
  %v1360 = vadd.f32 %v1168, %v1322
  %v1361 = vadd.f32 %v1169, %v1325
  %v1362 = vadd.f32 %v1170, %v1327
  %v1363 = vadd.f32 %v1171, %v1330
  %v1364 = vadd.f32 %v1172, %v1332
  %v1365 = vadd.f32 %v1173, %v1335
  %v1366 = vadd.f32 %v1174, %v1337
  %v1367 = vadd.f32 %v1175, %v1340
  %v1368 = vld [vmem:[#allocation2 + $0x10] sm:$0xff]
  %v1369 = vld [vmem:[#allocation2 + $0x18] sm:$0xff]
  %v1370 = vld [vmem:[#allocation2 + $0x20] sm:$0xff]
  %v1371 = vld [vmem:[#allocation2 + $0x28] sm:$0xff]
  %v1372 = vld [vmem:[#allocation2 + $0x30] sm:$0xff]
  %v1373 = vld [vmem:[#allocation2 + $0x38] sm:$0xff]
  %v1374 = vld [vmem:[#allocation2 + $0x40] sm:$0xff]
  %v1375 = vld [vmem:[#allocation2 + $0x48] sm:$0xff]
  %v1376 = vld [vmem:[#allocation2 + $0x50] sm:$0xff]
  %v1377 = vld [vmem:[#allocation2 + $0x58] sm:$0xff]
  %v1378 = vld [vmem:[#allocation2 + $0x60] sm:$0xff]
  %v1379 = vld [vmem:[#allocation2 + $0x68] sm:$0xff]
  %v1380 = vld [vmem:[#allocation2 + $0x70] sm:$0xff]
  %v1381 = vld [vmem:[#allocation2 + $0x78] sm:$0xff]
  %v1382 = vld [vmem:[#allocation2 + $0x80] sm:$0xff]
  %v1383 = vld [vmem:[#allocation2 + $0x88] sm:$0xff]
  %v1384 = vld [vmem:[#allocation2 + $0x90] sm:$0xff]
  %v1385 = vld [vmem:[#allocation2 + $0x98] sm:$0xff]
  %v1386 = vld [vmem:[#allocation2 + $0xa0] sm:$0xff]
  %v1387 = vld [vmem:[#allocation2 + $0xa8] sm:$0xff]
  %v1388 = vld [vmem:[#allocation2 + $0xb0] sm:$0xff]
  %v1389 = vld [vmem:[#allocation2 + $0xb8] sm:$0xff]
  %v1390 = vld [vmem:[#allocation2 + $0xc0] sm:$0xff]
  %v1391 = vld [vmem:[#allocation2 + $0xc8] sm:$0xff]
  %v1392 = vld [vmem:[#allocation2 + $0xd0] sm:$0xff]
  %v1393 = vpack.c.bf16 %v1369, %v1368
  %v1394 = vpack.c.bf16 %v1371, %v1370
  %v1395 = vpack.c.bf16 %v1373, %v1372
  %v1396 = vpack.c.bf16 %v1375, %v1374
  %v1397 = vpack.c.bf16 %v1377, %v1376
  %v1398 = vpack.c.bf16 %v1379, %v1378
  %v1399 = vpack.c.bf16 %v1381, %v1380
  %v1400 = vpack.c.bf16 %v1383, %v1382
  %v1401 = vpack.c.bf16 %v1385, %v1384
  %v1402 = vpack.c.bf16 %v1387, %v1386
  %v1403 = vpack.c.bf16 %v1389, %v1388
  %v1404 = vpack.c.bf16 %v1391, %v1390
  %v1405 = vpack.c.bf16 %v1392, %v1392
  %s1406 = scalar_lea.vmem %s7, 64
  %v1407 = vld [vmem:[%s1406] sm:$0xf]
  %v1408 = vld [vmem:[%s1406 + $0x4] sm:$0xf]
  %v1409 = vld [vmem:[%s1406 + $0x8] sm:$0xf]
  %v1410 = vld [vmem:[%s1406 + $0xc] sm:$0xf]
  %v1415 = vunpack.c.l.b16 %v1407
  %v1416 = vunpack.c.l.b16 %v1408
  %v1417 = vunpack.c.l.b16 %v1409
  %v1418 = vunpack.c.l.b16 %v1410
  %v1419 = vpack.c.b16 %v1416, %v1415
  %v1420 = vpack.c.b16 %v1418, %v1417
  %v1424 = vsel %vm546, %v1393, 0
  %v1427 = vsel %vm546, %v1394, 0
  %v1430 = vsel %vm546, %v1395, 0
  %v1433 = vsel %vm546, %v1396, 0
  %v1436 = vsel %vm546, %v1397, 0
  %v1439 = vsel %vm546, %v1398, 0
  %v1442 = vsel %vm546, %v1399, 0
  %v1445 = vsel %vm546, %v1400, 0
  %v1448 = vsel %vm546, %v1401, 0
  %v1451 = vsel %vm546, %v1402, 0
  %v1454 = vsel %vm546, %v1403, 0
  %v1457 = vsel %vm546, %v1404, 0
  %v1460 = vsel %vm546, %v1405, 0
  %1462 = vmatpush.bf16.msra.mxu0 0
  %1463 = vmatpush.bf16.msra.mxu0 0
  %1464 = vmatpush.bf16.msra.mxu0 0
  %1465 = vmatpush.bf16.msra.mxu0 0
  %1466 = vmatpush.bf16.msra.mxu0 0
  %1467 = vmatpush.bf16.msra.mxu0 0
  %1468 = vmatpush.bf16.msra.mxu0 %v1420
  %1469 = vmatpush.bf16.msra.mxu0 %v1419
  %1470 = vmatmul.bf16.gmra.mxu0 %v1424
  %v1471 = vpop.f32.mrf.mxu0
  %v1472 = vadd.f32 0.0, %v1471
  %v1473 = vpop.f32.mrf.mxu0
  %v1474 = vadd.f32 0.0, %v1473
  %1475 = vmatmul.bf16.gmra.mxu0 %v1427
  %v1476 = vpop.f32.mrf.mxu0
  %v1477 = vadd.f32 0.0, %v1476
  %v1478 = vpop.f32.mrf.mxu0
  %v1479 = vadd.f32 0.0, %v1478
  %1480 = vmatmul.bf16.gmra.mxu0 %v1430
  %v1481 = vpop.f32.mrf.mxu0
  %v1482 = vadd.f32 0.0, %v1481
  %v1483 = vpop.f32.mrf.mxu0
  %v1484 = vadd.f32 0.0, %v1483
  %1485 = vmatmul.bf16.gmra.mxu0 %v1433
  %v1486 = vpop.f32.mrf.mxu0
  %v1487 = vadd.f32 0.0, %v1486
  %v1488 = vpop.f32.mrf.mxu0
  %v1489 = vadd.f32 0.0, %v1488
  %1490 = vmatmul.bf16.gmra.mxu0 %v1436
  %v1491 = vpop.f32.mrf.mxu0
  %v1492 = vadd.f32 0.0, %v1491
  %v1493 = vpop.f32.mrf.mxu0
  %v1494 = vadd.f32 0.0, %v1493
  %1495 = vmatmul.bf16.gmra.mxu0 %v1439
  %v1496 = vpop.f32.mrf.mxu0
  %v1497 = vadd.f32 0.0, %v1496
  %v1498 = vpop.f32.mrf.mxu0
  %v1499 = vadd.f32 0.0, %v1498
  %1500 = vmatmul.bf16.gmra.mxu0 %v1442
  %v1501 = vpop.f32.mrf.mxu0
  %v1502 = vadd.f32 0.0, %v1501
  %v1503 = vpop.f32.mrf.mxu0
  %v1504 = vadd.f32 0.0, %v1503
  %1505 = vmatmul.bf16.gmra.mxu0 %v1445
  %v1506 = vpop.f32.mrf.mxu0
  %v1507 = vadd.f32 0.0, %v1506
  %v1508 = vpop.f32.mrf.mxu0
  %v1509 = vadd.f32 0.0, %v1508
  %1510 = vmatmul.bf16.gmra.mxu0 %v1448
  %v1511 = vpop.f32.mrf.mxu0
  %v1512 = vadd.f32 0.0, %v1511
  %v1513 = vpop.f32.mrf.mxu0
  %v1514 = vadd.f32 0.0, %v1513
  %1515 = vmatmul.bf16.gmra.mxu0 %v1451
  %v1516 = vpop.f32.mrf.mxu0
  %v1517 = vadd.f32 0.0, %v1516
  %v1518 = vpop.f32.mrf.mxu0
  %v1519 = vadd.f32 0.0, %v1518
  %1520 = vmatmul.bf16.gmra.mxu0 %v1454
  %v1521 = vpop.f32.mrf.mxu0
  %v1522 = vadd.f32 0.0, %v1521
  %v1523 = vpop.f32.mrf.mxu0
  %v1524 = vadd.f32 0.0, %v1523
  %1525 = vmatmul.bf16.gmra.mxu0 %v1457
  %v1526 = vpop.f32.mrf.mxu0
  %v1527 = vadd.f32 0.0, %v1526
  %v1528 = vpop.f32.mrf.mxu0
  %v1529 = vadd.f32 0.0, %v1528
  %1530 = vmatmul.bf16.gmra.mxu0 %v1460
  %v1531 = vpop.f32.mrf.mxu0
  %v1532 = vadd.f32 0.0, %v1531
  %v1533 = vpop.f32.mrf.mxu0
  %1534 = vdwg.mxu0
  %v1535 = vadd.f32 %v1343, %v1472
  %v1536 = vadd.f32 %v1344, %v1474
  %v1537 = vadd.f32 %v1345, %v1477
  %v1538 = vadd.f32 %v1346, %v1479
  %v1539 = vadd.f32 %v1347, %v1482
  %v1540 = vadd.f32 %v1348, %v1484
  %v1541 = vadd.f32 %v1349, %v1487
  %v1542 = vadd.f32 %v1350, %v1489
  %v1543 = vadd.f32 %v1351, %v1492
  %v1544 = vadd.f32 %v1352, %v1494
  %v1545 = vadd.f32 %v1353, %v1497
  %v1546 = vadd.f32 %v1354, %v1499
  %v1547 = vadd.f32 %v1355, %v1502
  %v1548 = vadd.f32 %v1356, %v1504
  %v1549 = vadd.f32 %v1357, %v1507
  %v1550 = vadd.f32 %v1358, %v1509
  %v1551 = vadd.f32 %v1359, %v1512
  %v1552 = vadd.f32 %v1360, %v1514
  %v1553 = vadd.f32 %v1361, %v1517
  %v1554 = vadd.f32 %v1362, %v1519
  %v1555 = vadd.f32 %v1363, %v1522
  %v1556 = vadd.f32 %v1364, %v1524
  %v1557 = vadd.f32 %v1365, %v1527
  %v1558 = vadd.f32 %v1366, %v1529
  %v1559 = vadd.f32 %v1367, %v1532
  %v1560 = vld [vmem:[#allocation2 + $0x11] sm:$0xff]
  %v1561 = vld [vmem:[#allocation2 + $0x19] sm:$0xff]
  %v1562 = vld [vmem:[#allocation2 + $0x21] sm:$0xff]
  %v1563 = vld [vmem:[#allocation2 + $0x29] sm:$0xff]
  %v1564 = vld [vmem:[#allocation2 + $0x31] sm:$0xff]
  %v1565 = vld [vmem:[#allocation2 + $0x39] sm:$0xff]
  %v1566 = vld [vmem:[#allocation2 + $0x41] sm:$0xff]
  %v1567 = vld [vmem:[#allocation2 + $0x49] sm:$0xff]
  %v1568 = vld [vmem:[#allocation2 + $0x51] sm:$0xff]
  %v1569 = vld [vmem:[#allocation2 + $0x59] sm:$0xff]
  %v1570 = vld [vmem:[#allocation2 + $0x61] sm:$0xff]
  %v1571 = vld [vmem:[#allocation2 + $0x69] sm:$0xff]
  %v1572 = vld [vmem:[#allocation2 + $0x71] sm:$0xff]
  %v1573 = vld [vmem:[#allocation2 + $0x79] sm:$0xff]
  %v1574 = vld [vmem:[#allocation2 + $0x81] sm:$0xff]
  %v1575 = vld [vmem:[#allocation2 + $0x89] sm:$0xff]
  %v1576 = vld [vmem:[#allocation2 + $0x91] sm:$0xff]
  %v1577 = vld [vmem:[#allocation2 + $0x99] sm:$0xff]
  %v1578 = vld [vmem:[#allocation2 + $0xa1] sm:$0xff]
  %v1579 = vld [vmem:[#allocation2 + $0xa9] sm:$0xff]
  %v1580 = vld [vmem:[#allocation2 + $0xb1] sm:$0xff]
  %v1581 = vld [vmem:[#allocation2 + $0xb9] sm:$0xff]
  %v1582 = vld [vmem:[#allocation2 + $0xc1] sm:$0xff]
  %v1583 = vld [vmem:[#allocation2 + $0xc9] sm:$0xff]
  %v1584 = vld [vmem:[#allocation2 + $0xd1] sm:$0xff]
  %v1585 = vpack.c.bf16 %v1561, %v1560
  %v1586 = vpack.c.bf16 %v1563, %v1562
  %v1587 = vpack.c.bf16 %v1565, %v1564
  %v1588 = vpack.c.bf16 %v1567, %v1566
  %v1589 = vpack.c.bf16 %v1569, %v1568
  %v1590 = vpack.c.bf16 %v1571, %v1570
  %v1591 = vpack.c.bf16 %v1573, %v1572
  %v1592 = vpack.c.bf16 %v1575, %v1574
  %v1593 = vpack.c.bf16 %v1577, %v1576
  %v1594 = vpack.c.bf16 %v1579, %v1578
  %v1595 = vpack.c.bf16 %v1581, %v1580
  %v1596 = vpack.c.bf16 %v1583, %v1582
  %v1597 = vpack.c.bf16 %v1584, %v1584
  %s1598 = scalar_lea.vmem %s7, 80
  %v1599 = vld [vmem:[%s1598] sm:$0xf]
  %v1600 = vld [vmem:[%s1598 + $0x4] sm:$0xf]
  %v1601 = vld [vmem:[%s1598 + $0x8] sm:$0xf]
  %v1602 = vld [vmem:[%s1598 + $0xc] sm:$0xf]
  %v1607 = vunpack.c.l.b16 %v1599
  %v1608 = vunpack.c.l.b16 %v1600
  %v1609 = vunpack.c.l.b16 %v1601
  %v1610 = vunpack.c.l.b16 %v1602
  %v1611 = vpack.c.b16 %v1608, %v1607
  %v1612 = vpack.c.b16 %v1610, %v1609
  %v1616 = vsel %vm546, %v1585, 0
  %v1619 = vsel %vm546, %v1586, 0
  %v1622 = vsel %vm546, %v1587, 0
  %v1625 = vsel %vm546, %v1588, 0
  %v1628 = vsel %vm546, %v1589, 0
  %v1631 = vsel %vm546, %v1590, 0
  %v1634 = vsel %vm546, %v1591, 0
  %v1637 = vsel %vm546, %v1592, 0
  %v1640 = vsel %vm546, %v1593, 0
  %v1643 = vsel %vm546, %v1594, 0
  %v1646 = vsel %vm546, %v1595, 0
  %v1649 = vsel %vm546, %v1596, 0
  %v1652 = vsel %vm546, %v1597, 0
  %1654 = vmatpush.bf16.msra.mxu0 0
  %1655 = vmatpush.bf16.msra.mxu0 0
  %1656 = vmatpush.bf16.msra.mxu0 0
  %1657 = vmatpush.bf16.msra.mxu0 0
  %1658 = vmatpush.bf16.msra.mxu0 0
  %1659 = vmatpush.bf16.msra.mxu0 0
  %1660 = vmatpush.bf16.msra.mxu0 %v1612
  %1661 = vmatpush.bf16.msra.mxu0 %v1611
  %1662 = vmatmul.bf16.gmra.mxu0 %v1616
  %v1663 = vpop.f32.mrf.mxu0
  %v1664 = vadd.f32 0.0, %v1663
  %v1665 = vpop.f32.mrf.mxu0
  %v1666 = vadd.f32 0.0, %v1665
  %1667 = vmatmul.bf16.gmra.mxu0 %v1619
  %v1668 = vpop.f32.mrf.mxu0
  %v1669 = vadd.f32 0.0, %v1668
  %v1670 = vpop.f32.mrf.mxu0
  %v1671 = vadd.f32 0.0, %v1670
  %1672 = vmatmul.bf16.gmra.mxu0 %v1622
  %v1673 = vpop.f32.mrf.mxu0
  %v1674 = vadd.f32 0.0, %v1673
  %v1675 = vpop.f32.mrf.mxu0
  %v1676 = vadd.f32 0.0, %v1675
  %1677 = vmatmul.bf16.gmra.mxu0 %v1625
  %v1678 = vpop.f32.mrf.mxu0
  %v1679 = vadd.f32 0.0, %v1678
  %v1680 = vpop.f32.mrf.mxu0
  %v1681 = vadd.f32 0.0, %v1680
  %1682 = vmatmul.bf16.gmra.mxu0 %v1628
  %v1683 = vpop.f32.mrf.mxu0
  %v1684 = vadd.f32 0.0, %v1683
  %v1685 = vpop.f32.mrf.mxu0
  %v1686 = vadd.f32 0.0, %v1685
  %1687 = vmatmul.bf16.gmra.mxu0 %v1631
  %v1688 = vpop.f32.mrf.mxu0
  %v1689 = vadd.f32 0.0, %v1688
  %v1690 = vpop.f32.mrf.mxu0
  %v1691 = vadd.f32 0.0, %v1690
  %1692 = vmatmul.bf16.gmra.mxu0 %v1634
  %v1693 = vpop.f32.mrf.mxu0
  %v1694 = vadd.f32 0.0, %v1693
  %v1695 = vpop.f32.mrf.mxu0
  %v1696 = vadd.f32 0.0, %v1695
  %1697 = vmatmul.bf16.gmra.mxu0 %v1637
  %v1698 = vpop.f32.mrf.mxu0
  %v1699 = vadd.f32 0.0, %v1698
  %v1700 = vpop.f32.mrf.mxu0
  %v1701 = vadd.f32 0.0, %v1700
  %1702 = vmatmul.bf16.gmra.mxu0 %v1640
  %v1703 = vpop.f32.mrf.mxu0
  %v1704 = vadd.f32 0.0, %v1703
  %v1705 = vpop.f32.mrf.mxu0
  %v1706 = vadd.f32 0.0, %v1705
  %1707 = vmatmul.bf16.gmra.mxu0 %v1643
  %v1708 = vpop.f32.mrf.mxu0
  %v1709 = vadd.f32 0.0, %v1708
  %v1710 = vpop.f32.mrf.mxu0
  %v1711 = vadd.f32 0.0, %v1710
  %1712 = vmatmul.bf16.gmra.mxu0 %v1646
  %v1713 = vpop.f32.mrf.mxu0
  %v1714 = vadd.f32 0.0, %v1713
  %v1715 = vpop.f32.mrf.mxu0
  %v1716 = vadd.f32 0.0, %v1715
  %1717 = vmatmul.bf16.gmra.mxu0 %v1649
  %v1718 = vpop.f32.mrf.mxu0
  %v1719 = vadd.f32 0.0, %v1718
  %v1720 = vpop.f32.mrf.mxu0
  %v1721 = vadd.f32 0.0, %v1720
  %1722 = vmatmul.bf16.gmra.mxu0 %v1652
  %v1723 = vpop.f32.mrf.mxu0
  %v1724 = vadd.f32 0.0, %v1723
  %v1725 = vpop.f32.mrf.mxu0
  %1726 = vdwg.mxu0
  %v1727 = vadd.f32 %v1535, %v1664
  %v1728 = vadd.f32 %v1536, %v1666
  %v1729 = vadd.f32 %v1537, %v1669
  %v1730 = vadd.f32 %v1538, %v1671
  %v1731 = vadd.f32 %v1539, %v1674
  %v1732 = vadd.f32 %v1540, %v1676
  %v1733 = vadd.f32 %v1541, %v1679
  %v1734 = vadd.f32 %v1542, %v1681
  %v1735 = vadd.f32 %v1543, %v1684
  %v1736 = vadd.f32 %v1544, %v1686
  %v1737 = vadd.f32 %v1545, %v1689
  %v1738 = vadd.f32 %v1546, %v1691
  %v1739 = vadd.f32 %v1547, %v1694
  %v1740 = vadd.f32 %v1548, %v1696
  %v1741 = vadd.f32 %v1549, %v1699
  %v1742 = vadd.f32 %v1550, %v1701
  %v1743 = vadd.f32 %v1551, %v1704
  %v1744 = vadd.f32 %v1552, %v1706
  %v1745 = vadd.f32 %v1553, %v1709
  %v1746 = vadd.f32 %v1554, %v1711
  %v1747 = vadd.f32 %v1555, %v1714
  %v1748 = vadd.f32 %v1556, %v1716
  %v1749 = vadd.f32 %v1557, %v1719
  %v1750 = vadd.f32 %v1558, %v1721
  %v1751 = vadd.f32 %v1559, %v1724
  %v1752 = vld [vmem:[#allocation2 + $0x19] sm:$0xff]
  %v1753 = vld [vmem:[#allocation2 + $0x21] sm:$0xff]
  %v1754 = vld [vmem:[#allocation2 + $0x29] sm:$0xff]
  %v1755 = vld [vmem:[#allocation2 + $0x31] sm:$0xff]
  %v1756 = vld [vmem:[#allocation2 + $0x39] sm:$0xff]
  %v1757 = vld [vmem:[#allocation2 + $0x41] sm:$0xff]
  %v1758 = vld [vmem:[#allocation2 + $0x49] sm:$0xff]
  %v1759 = vld [vmem:[#allocation2 + $0x51] sm:$0xff]
  %v1760 = vld [vmem:[#allocation2 + $0x59] sm:$0xff]
  %v1761 = vld [vmem:[#allocation2 + $0x61] sm:$0xff]
  %v1762 = vld [vmem:[#allocation2 + $0x69] sm:$0xff]
  %v1763 = vld [vmem:[#allocation2 + $0x71] sm:$0xff]
  %v1764 = vld [vmem:[#allocation2 + $0x79] sm:$0xff]
  %v1765 = vld [vmem:[#allocation2 + $0x81] sm:$0xff]
  %v1766 = vld [vmem:[#allocation2 + $0x89] sm:$0xff]
  %v1767 = vld [vmem:[#allocation2 + $0x91] sm:$0xff]
  %v1768 = vld [vmem:[#allocation2 + $0x99] sm:$0xff]
  %v1769 = vld [vmem:[#allocation2 + $0xa1] sm:$0xff]
  %v1770 = vld [vmem:[#allocation2 + $0xa9] sm:$0xff]
  %v1771 = vld [vmem:[#allocation2 + $0xb1] sm:$0xff]
  %v1772 = vld [vmem:[#allocation2 + $0xb9] sm:$0xff]
  %v1773 = vld [vmem:[#allocation2 + $0xc1] sm:$0xff]
  %v1774 = vld [vmem:[#allocation2 + $0xc9] sm:$0xff]
  %v1775 = vld [vmem:[#allocation2 + $0xd1] sm:$0xff]
  %v1776 = vld [vmem:[#allocation2 + $0xd9] sm:$0xff]
  %v1777 = vpack.c.bf16 %v1753, %v1752
  %v1778 = vpack.c.bf16 %v1755, %v1754
  %v1779 = vpack.c.bf16 %v1757, %v1756
  %v1780 = vpack.c.bf16 %v1759, %v1758
  %v1781 = vpack.c.bf16 %v1761, %v1760
  %v1782 = vpack.c.bf16 %v1763, %v1762
  %v1783 = vpack.c.bf16 %v1765, %v1764
  %v1784 = vpack.c.bf16 %v1767, %v1766
  %v1785 = vpack.c.bf16 %v1769, %v1768
  %v1786 = vpack.c.bf16 %v1771, %v1770
  %v1787 = vpack.c.bf16 %v1773, %v1772
  %v1788 = vpack.c.bf16 %v1775, %v1774
  %v1789 = vpack.c.bf16 %v1776, %v1776
  %s1790 = scalar_lea.vmem %s7, 96
  %v1791 = vld [vmem:[%s1790] sm:$0xf]
  %v1792 = vld [vmem:[%s1790 + $0x4] sm:$0xf]
  %v1793 = vld [vmem:[%s1790 + $0x8] sm:$0xf]
  %v1794 = vld [vmem:[%s1790 + $0xc] sm:$0xf]
  %v1799 = vunpack.c.l.b16 %v1791
  %v1800 = vunpack.c.l.b16 %v1792
  %v1801 = vunpack.c.l.b16 %v1793
  %v1802 = vunpack.c.l.b16 %v1794
  %v1803 = vpack.c.b16 %v1800, %v1799
  %v1804 = vpack.c.b16 %v1802, %v1801
  %v1808 = vsel %vm546, %v1777, 0
  %v1811 = vsel %vm546, %v1778, 0
  %v1814 = vsel %vm546, %v1779, 0
  %v1817 = vsel %vm546, %v1780, 0
  %v1820 = vsel %vm546, %v1781, 0
  %v1823 = vsel %vm546, %v1782, 0
  %v1826 = vsel %vm546, %v1783, 0
  %v1829 = vsel %vm546, %v1784, 0
  %v1832 = vsel %vm546, %v1785, 0
  %v1835 = vsel %vm546, %v1786, 0
  %v1838 = vsel %vm546, %v1787, 0
  %v1841 = vsel %vm546, %v1788, 0
  %v1844 = vsel %vm546, %v1789, 0
  %1846 = vmatpush.bf16.msra.mxu0 0
  %1847 = vmatpush.bf16.msra.mxu0 0
  %1848 = vmatpush.bf16.msra.mxu0 0
  %1849 = vmatpush.bf16.msra.mxu0 0
  %1850 = vmatpush.bf16.msra.mxu0 0
  %1851 = vmatpush.bf16.msra.mxu0 0
  %1852 = vmatpush.bf16.msra.mxu0 %v1804
  %1853 = vmatpush.bf16.msra.mxu0 %v1803
  %1854 = vmatmul.bf16.gmra.mxu0 %v1808
  %v1855 = vpop.f32.mrf.mxu0
  %v1856 = vadd.f32 0.0, %v1855
  %v1857 = vpop.f32.mrf.mxu0
  %v1858 = vadd.f32 0.0, %v1857
  %1859 = vmatmul.bf16.gmra.mxu0 %v1811
  %v1860 = vpop.f32.mrf.mxu0
  %v1861 = vadd.f32 0.0, %v1860
  %v1862 = vpop.f32.mrf.mxu0
  %v1863 = vadd.f32 0.0, %v1862
  %1864 = vmatmul.bf16.gmra.mxu0 %v1814
  %v1865 = vpop.f32.mrf.mxu0
  %v1866 = vadd.f32 0.0, %v1865
  %v1867 = vpop.f32.mrf.mxu0
  %v1868 = vadd.f32 0.0, %v1867
  %1869 = vmatmul.bf16.gmra.mxu0 %v1817
  %v1870 = vpop.f32.mrf.mxu0
  %v1871 = vadd.f32 0.0, %v1870
  %v1872 = vpop.f32.mrf.mxu0
  %v1873 = vadd.f32 0.0, %v1872
  %1874 = vmatmul.bf16.gmra.mxu0 %v1820
  %v1875 = vpop.f32.mrf.mxu0
  %v1876 = vadd.f32 0.0, %v1875
  %v1877 = vpop.f32.mrf.mxu0
  %v1878 = vadd.f32 0.0, %v1877
  %1879 = vmatmul.bf16.gmra.mxu0 %v1823
  %v1880 = vpop.f32.mrf.mxu0
  %v1881 = vadd.f32 0.0, %v1880
  %v1882 = vpop.f32.mrf.mxu0
  %v1883 = vadd.f32 0.0, %v1882
  %1884 = vmatmul.bf16.gmra.mxu0 %v1826
  %v1885 = vpop.f32.mrf.mxu0
  %v1886 = vadd.f32 0.0, %v1885
  %v1887 = vpop.f32.mrf.mxu0
  %v1888 = vadd.f32 0.0, %v1887
  %1889 = vmatmul.bf16.gmra.mxu0 %v1829
  %v1890 = vpop.f32.mrf.mxu0
  %v1891 = vadd.f32 0.0, %v1890
  %v1892 = vpop.f32.mrf.mxu0
  %v1893 = vadd.f32 0.0, %v1892
  %1894 = vmatmul.bf16.gmra.mxu0 %v1832
  %v1895 = vpop.f32.mrf.mxu0
  %v1896 = vadd.f32 0.0, %v1895
  %v1897 = vpop.f32.mrf.mxu0
  %v1898 = vadd.f32 0.0, %v1897
  %1899 = vmatmul.bf16.gmra.mxu0 %v1835
  %v1900 = vpop.f32.mrf.mxu0
  %v1901 = vadd.f32 0.0, %v1900
  %v1902 = vpop.f32.mrf.mxu0
  %v1903 = vadd.f32 0.0, %v1902
  %1904 = vmatmul.bf16.gmra.mxu0 %v1838
  %v1905 = vpop.f32.mrf.mxu0
  %v1906 = vadd.f32 0.0, %v1905
  %v1907 = vpop.f32.mrf.mxu0
  %v1908 = vadd.f32 0.0, %v1907
  %1909 = vmatmul.bf16.gmra.mxu0 %v1841
  %v1910 = vpop.f32.mrf.mxu0
  %v1911 = vadd.f32 0.0, %v1910
  %v1912 = vpop.f32.mrf.mxu0
  %v1913 = vadd.f32 0.0, %v1912
  %1914 = vmatmul.bf16.gmra.mxu0 %v1844
  %v1915 = vpop.f32.mrf.mxu0
  %v1916 = vadd.f32 0.0, %v1915
  %v1917 = vpop.f32.mrf.mxu0
  %1918 = vdwg.mxu0
  %v1919 = vadd.f32 %v1727, %v1856
  %v1920 = vadd.f32 %v1728, %v1858
  %v1921 = vadd.f32 %v1729, %v1861
  %v1922 = vadd.f32 %v1730, %v1863
  %v1923 = vadd.f32 %v1731, %v1866
  %v1924 = vadd.f32 %v1732, %v1868
  %v1925 = vadd.f32 %v1733, %v1871
  %v1926 = vadd.f32 %v1734, %v1873
  %v1927 = vadd.f32 %v1735, %v1876
  %v1928 = vadd.f32 %v1736, %v1878
  %v1929 = vadd.f32 %v1737, %v1881
  %v1930 = vadd.f32 %v1738, %v1883
  %v1931 = vadd.f32 %v1739, %v1886
  %v1932 = vadd.f32 %v1740, %v1888
  %v1933 = vadd.f32 %v1741, %v1891
  %v1934 = vadd.f32 %v1742, %v1893
  %v1935 = vadd.f32 %v1743, %v1896
  %v1936 = vadd.f32 %v1744, %v1898
  %v1937 = vadd.f32 %v1745, %v1901
  %v1938 = vadd.f32 %v1746, %v1903
  %v1939 = vadd.f32 %v1747, %v1906
  %v1940 = vadd.f32 %v1748, %v1908
  %v1941 = vadd.f32 %v1749, %v1911
  %v1942 = vadd.f32 %v1750, %v1913
  %v1943 = vadd.f32 %v1751, %v1916
  %v1944 = vld [vmem:[#allocation2 + $0x1a] sm:$0xff]
  %v1945 = vld [vmem:[#allocation2 + $0x22] sm:$0xff]
  %v1946 = vld [vmem:[#allocation2 + $0x2a] sm:$0xff]
  %v1947 = vld [vmem:[#allocation2 + $0x32] sm:$0xff]
  %v1948 = vld [vmem:[#allocation2 + $0x3a] sm:$0xff]
  %v1949 = vld [vmem:[#allocation2 + $0x42] sm:$0xff]
  %v1950 = vld [vmem:[#allocation2 + $0x4a] sm:$0xff]
  %v1951 = vld [vmem:[#allocation2 + $0x52] sm:$0xff]
  %v1952 = vld [vmem:[#allocation2 + $0x5a] sm:$0xff]
  %v1953 = vld [vmem:[#allocation2 + $0x62] sm:$0xff]
  %v1954 = vld [vmem:[#allocation2 + $0x6a] sm:$0xff]
  %v1955 = vld [vmem:[#allocation2 + $0x72] sm:$0xff]
  %v1956 = vld [vmem:[#allocation2 + $0x7a] sm:$0xff]
  %v1957 = vld [vmem:[#allocation2 + $0x82] sm:$0xff]
  %v1958 = vld [vmem:[#allocation2 + $0x8a] sm:$0xff]
  %v1959 = vld [vmem:[#allocation2 + $0x92] sm:$0xff]
  %v1960 = vld [vmem:[#allocation2 + $0x9a] sm:$0xff]
  %v1961 = vld [vmem:[#allocation2 + $0xa2] sm:$0xff]
  %v1962 = vld [vmem:[#allocation2 + $0xaa] sm:$0xff]
  %v1963 = vld [vmem:[#allocation2 + $0xb2] sm:$0xff]
  %v1964 = vld [vmem:[#allocation2 + $0xba] sm:$0xff]
  %v1965 = vld [vmem:[#allocation2 + $0xc2] sm:$0xff]
  %v1966 = vld [vmem:[#allocation2 + $0xca] sm:$0xff]
  %v1967 = vld [vmem:[#allocation2 + $0xd2] sm:$0xff]
  %v1968 = vld [vmem:[#allocation2 + $0xda] sm:$0xff]
  %v1969 = vpack.c.bf16 %v1945, %v1944
  %v1970 = vpack.c.bf16 %v1947, %v1946
  %v1971 = vpack.c.bf16 %v1949, %v1948
  %v1972 = vpack.c.bf16 %v1951, %v1950
  %v1973 = vpack.c.bf16 %v1953, %v1952
  %v1974 = vpack.c.bf16 %v1955, %v1954
  %v1975 = vpack.c.bf16 %v1957, %v1956
  %v1976 = vpack.c.bf16 %v1959, %v1958
  %v1977 = vpack.c.bf16 %v1961, %v1960
  %v1978 = vpack.c.bf16 %v1963, %v1962
  %v1979 = vpack.c.bf16 %v1965, %v1964
  %v1980 = vpack.c.bf16 %v1967, %v1966
  %v1981 = vpack.c.bf16 %v1968, %v1968
  %s1982 = scalar_lea.vmem %s7, 112
  %v1983 = vld [vmem:[%s1982] sm:$0xf]
  %v1984 = vld [vmem:[%s1982 + $0x4] sm:$0xf]
  %v1985 = vld [vmem:[%s1982 + $0x8] sm:$0xf]
  %v1986 = vld [vmem:[%s1982 + $0xc] sm:$0xf]
  %v1991 = vunpack.c.l.b16 %v1983
  %v1992 = vunpack.c.l.b16 %v1984
  %v1993 = vunpack.c.l.b16 %v1985
  %v1994 = vunpack.c.l.b16 %v1986
  %v1995 = vpack.c.b16 %v1992, %v1991
  %v1996 = vpack.c.b16 %v1994, %v1993
  %v2000 = vsel %vm546, %v1969, 0
  %v2003 = vsel %vm546, %v1970, 0
  %v2006 = vsel %vm546, %v1971, 0
  %v2009 = vsel %vm546, %v1972, 0
  %v2012 = vsel %vm546, %v1973, 0
  %v2015 = vsel %vm546, %v1974, 0
  %v2018 = vsel %vm546, %v1975, 0
  %v2021 = vsel %vm546, %v1976, 0
  %v2024 = vsel %vm546, %v1977, 0
  %v2027 = vsel %vm546, %v1978, 0
  %v2030 = vsel %vm546, %v1979, 0
  %v2033 = vsel %vm546, %v1980, 0
  %v2036 = vsel %vm546, %v1981, 0
  %2038 = vmatpush.bf16.msra.mxu0 0
  %2039 = vmatpush.bf16.msra.mxu0 0
  %2040 = vmatpush.bf16.msra.mxu0 0
  %2041 = vmatpush.bf16.msra.mxu0 0
  %2042 = vmatpush.bf16.msra.mxu0 0
  %2043 = vmatpush.bf16.msra.mxu0 0
  %2044 = vmatpush.bf16.msra.mxu0 %v1996
  %2045 = vmatpush.bf16.msra.mxu0 %v1995
  %2046 = vmatmul.bf16.gmra.mxu0 %v2000
  %v2047 = vpop.f32.mrf.mxu0
  %v2048 = vadd.f32 0.0, %v2047
  %v2049 = vpop.f32.mrf.mxu0
  %v2050 = vadd.f32 0.0, %v2049
  %2051 = vmatmul.bf16.gmra.mxu0 %v2003
  %v2052 = vpop.f32.mrf.mxu0
  %v2053 = vadd.f32 0.0, %v2052
  %v2054 = vpop.f32.mrf.mxu0
  %v2055 = vadd.f32 0.0, %v2054
  %2056 = vmatmul.bf16.gmra.mxu0 %v2006
  %v2057 = vpop.f32.mrf.mxu0
  %v2058 = vadd.f32 0.0, %v2057
  %v2059 = vpop.f32.mrf.mxu0
  %v2060 = vadd.f32 0.0, %v2059
  %2061 = vmatmul.bf16.gmra.mxu0 %v2009
  %v2062 = vpop.f32.mrf.mxu0
  %v2063 = vadd.f32 0.0, %v2062
  %v2064 = vpop.f32.mrf.mxu0
  %v2065 = vadd.f32 0.0, %v2064
  %2066 = vmatmul.bf16.gmra.mxu0 %v2012
  %v2067 = vpop.f32.mrf.mxu0
  %v2068 = vadd.f32 0.0, %v2067
  %v2069 = vpop.f32.mrf.mxu0
  %v2070 = vadd.f32 0.0, %v2069
  %2071 = vmatmul.bf16.gmra.mxu0 %v2015
  %v2072 = vpop.f32.mrf.mxu0
  %v2073 = vadd.f32 0.0, %v2072
  %v2074 = vpop.f32.mrf.mxu0
  %v2075 = vadd.f32 0.0, %v2074
  %2076 = vmatmul.bf16.gmra.mxu0 %v2018
  %v2077 = vpop.f32.mrf.mxu0
  %v2078 = vadd.f32 0.0, %v2077
  %v2079 = vpop.f32.mrf.mxu0
  %v2080 = vadd.f32 0.0, %v2079
  %2081 = vmatmul.bf16.gmra.mxu0 %v2021
  %v2082 = vpop.f32.mrf.mxu0
  %v2083 = vadd.f32 0.0, %v2082
  %v2084 = vpop.f32.mrf.mxu0
  %v2085 = vadd.f32 0.0, %v2084
  %2086 = vmatmul.bf16.gmra.mxu0 %v2024
  %v2087 = vpop.f32.mrf.mxu0
  %v2088 = vadd.f32 0.0, %v2087
  %v2089 = vpop.f32.mrf.mxu0
  %v2090 = vadd.f32 0.0, %v2089
  %2091 = vmatmul.bf16.gmra.mxu0 %v2027
  %v2092 = vpop.f32.mrf.mxu0
  %v2093 = vadd.f32 0.0, %v2092
  %v2094 = vpop.f32.mrf.mxu0
  %v2095 = vadd.f32 0.0, %v2094
  %2096 = vmatmul.bf16.gmra.mxu0 %v2030
  %v2097 = vpop.f32.mrf.mxu0
  %v2098 = vadd.f32 0.0, %v2097
  %v2099 = vpop.f32.mrf.mxu0
  %v2100 = vadd.f32 0.0, %v2099
  %2101 = vmatmul.bf16.gmra.mxu0 %v2033
  %v2102 = vpop.f32.mrf.mxu0
  %v2103 = vadd.f32 0.0, %v2102
  %v2104 = vpop.f32.mrf.mxu0
  %v2105 = vadd.f32 0.0, %v2104
  %2106 = vmatmul.bf16.gmra.mxu0 %v2036
  %v2107 = vpop.f32.mrf.mxu0
  %v2108 = vadd.f32 0.0, %v2107
  %v2109 = vpop.f32.mrf.mxu0
  %2110 = vdwg.mxu0
  %v2111 = vadd.f32 %v1919, %v2048
  %v2112 = vadd.f32 %v1920, %v2050
  %v2113 = vadd.f32 %v1921, %v2053
  %v2114 = vadd.f32 %v1922, %v2055
  %v2115 = vadd.f32 %v1923, %v2058
  %v2116 = vadd.f32 %v1924, %v2060
  %v2117 = vadd.f32 %v1925, %v2063
  %v2118 = vadd.f32 %v1926, %v2065
  %v2119 = vadd.f32 %v1927, %v2068
  %v2120 = vadd.f32 %v1928, %v2070
  %v2121 = vadd.f32 %v1929, %v2073
  %v2122 = vadd.f32 %v1930, %v2075
  %v2123 = vadd.f32 %v1931, %v2078
  %v2124 = vadd.f32 %v1932, %v2080
  %v2125 = vadd.f32 %v1933, %v2083
  %v2126 = vadd.f32 %v1934, %v2085
  %v2127 = vadd.f32 %v1935, %v2088
  %v2128 = vadd.f32 %v1936, %v2090
  %v2129 = vadd.f32 %v1937, %v2093
  %v2130 = vadd.f32 %v1938, %v2095
  %v2131 = vadd.f32 %v1939, %v2098
  %v2132 = vadd.f32 %v1940, %v2100
  %v2133 = vadd.f32 %v1941, %v2103
  %v2134 = vadd.f32 %v1942, %v2105
  %v2135 = vadd.f32 %v1943, %v2108
  %v2136 = vld [vmem:[#allocation2 + $0x1b] sm:$0xff]
  %v2137 = vld [vmem:[#allocation2 + $0x23] sm:$0xff]
  %v2138 = vld [vmem:[#allocation2 + $0x2b] sm:$0xff]
  %v2139 = vld [vmem:[#allocation2 + $0x33] sm:$0xff]
  %v2140 = vld [vmem:[#allocation2 + $0x3b] sm:$0xff]
  %v2141 = vld [vmem:[#allocation2 + $0x43] sm:$0xff]
  %v2142 = vld [vmem:[#allocation2 + $0x4b] sm:$0xff]
  %v2143 = vld [vmem:[#allocation2 + $0x53] sm:$0xff]
  %v2144 = vld [vmem:[#allocation2 + $0x5b] sm:$0xff]
  %v2145 = vld [vmem:[#allocation2 + $0x63] sm:$0xff]
  %v2146 = vld [vmem:[#allocation2 + $0x6b] sm:$0xff]
  %v2147 = vld [vmem:[#allocation2 + $0x73] sm:$0xff]
  %v2148 = vld [vmem:[#allocation2 + $0x7b] sm:$0xff]
  %v2149 = vld [vmem:[#allocation2 + $0x83] sm:$0xff]
  %v2150 = vld [vmem:[#allocation2 + $0x8b] sm:$0xff]
  %v2151 = vld [vmem:[#allocation2 + $0x93] sm:$0xff]
  %v2152 = vld [vmem:[#allocation2 + $0x9b] sm:$0xff]
  %v2153 = vld [vmem:[#allocation2 + $0xa3] sm:$0xff]
  %v2154 = vld [vmem:[#allocation2 + $0xab] sm:$0xff]
  %v2155 = vld [vmem:[#allocation2 + $0xb3] sm:$0xff]
  %v2156 = vld [vmem:[#allocation2 + $0xbb] sm:$0xff]
  %v2157 = vld [vmem:[#allocation2 + $0xc3] sm:$0xff]
  %v2158 = vld [vmem:[#allocation2 + $0xcb] sm:$0xff]
  %v2159 = vld [vmem:[#allocation2 + $0xd3] sm:$0xff]
  %v2160 = vld [vmem:[#allocation2 + $0xdb] sm:$0xff]
  %v2161 = vpack.c.bf16 %v2137, %v2136
  %v2162 = vpack.c.bf16 %v2139, %v2138
  %v2163 = vpack.c.bf16 %v2141, %v2140
  %v2164 = vpack.c.bf16 %v2143, %v2142
  %v2165 = vpack.c.bf16 %v2145, %v2144
  %v2166 = vpack.c.bf16 %v2147, %v2146
  %v2167 = vpack.c.bf16 %v2149, %v2148
  %v2168 = vpack.c.bf16 %v2151, %v2150
  %v2169 = vpack.c.bf16 %v2153, %v2152
  %v2170 = vpack.c.bf16 %v2155, %v2154
  %v2171 = vpack.c.bf16 %v2157, %v2156
  %v2172 = vpack.c.bf16 %v2159, %v2158
  %v2173 = vpack.c.bf16 %v2160, %v2160
  %s2174 = scalar_lea.vmem %s7, 128
  %v2175 = vld [vmem:[%s2174] sm:$0xf]
  %v2176 = vld [vmem:[%s2174 + $0x4] sm:$0xf]
  %v2177 = vld [vmem:[%s2174 + $0x8] sm:$0xf]
  %v2178 = vld [vmem:[%s2174 + $0xc] sm:$0xf]
  %v2183 = vunpack.c.l.b16 %v2175
  %v2184 = vunpack.c.l.b16 %v2176
  %v2185 = vunpack.c.l.b16 %v2177
  %v2186 = vunpack.c.l.b16 %v2178
  %v2187 = vpack.c.b16 %v2184, %v2183
  %v2188 = vpack.c.b16 %v2186, %v2185
  %v2192 = vsel %vm546, %v2161, 0
  %v2195 = vsel %vm546, %v2162, 0
  %v2198 = vsel %vm546, %v2163, 0
  %v2201 = vsel %vm546, %v2164, 0
  %v2204 = vsel %vm546, %v2165, 0
  %v2207 = vsel %vm546, %v2166, 0
  %v2210 = vsel %vm546, %v2167, 0
  %v2213 = vsel %vm546, %v2168, 0
  %v2216 = vsel %vm546, %v2169, 0
  %v2219 = vsel %vm546, %v2170, 0
  %v2222 = vsel %vm546, %v2171, 0
  %v2225 = vsel %vm546, %v2172, 0
  %v2228 = vsel %vm546, %v2173, 0
  %2230 = vmatpush.bf16.msra.mxu0 0
  %2231 = vmatpush.bf16.msra.mxu0 0
  %2232 = vmatpush.bf16.msra.mxu0 0
  %2233 = vmatpush.bf16.msra.mxu0 0
  %2234 = vmatpush.bf16.msra.mxu0 0
  %2235 = vmatpush.bf16.msra.mxu0 0
  %2236 = vmatpush.bf16.msra.mxu0 %v2188
  %2237 = vmatpush.bf16.msra.mxu0 %v2187
  %2238 = vmatmul.bf16.gmra.mxu0 %v2192
  %v2239 = vpop.f32.mrf.mxu0
  %v2240 = vadd.f32 0.0, %v2239
  %v2241 = vpop.f32.mrf.mxu0
  %v2242 = vadd.f32 0.0, %v2241
  %2243 = vmatmul.bf16.gmra.mxu0 %v2195
  %v2244 = vpop.f32.mrf.mxu0
  %v2245 = vadd.f32 0.0, %v2244
  %v2246 = vpop.f32.mrf.mxu0
  %v2247 = vadd.f32 0.0, %v2246
  %2248 = vmatmul.bf16.gmra.mxu0 %v2198
  %v2249 = vpop.f32.mrf.mxu0
  %v2250 = vadd.f32 0.0, %v2249
  %v2251 = vpop.f32.mrf.mxu0
  %v2252 = vadd.f32 0.0, %v2251
  %2253 = vmatmul.bf16.gmra.mxu0 %v2201
  %v2254 = vpop.f32.mrf.mxu0
  %v2255 = vadd.f32 0.0, %v2254
  %v2256 = vpop.f32.mrf.mxu0
  %v2257 = vadd.f32 0.0, %v2256
  %2258 = vmatmul.bf16.gmra.mxu0 %v2204
  %v2259 = vpop.f32.mrf.mxu0
  %v2260 = vadd.f32 0.0, %v2259
  %v2261 = vpop.f32.mrf.mxu0
  %v2262 = vadd.f32 0.0, %v2261
  %2263 = vmatmul.bf16.gmra.mxu0 %v2207
  %v2264 = vpop.f32.mrf.mxu0
  %v2265 = vadd.f32 0.0, %v2264
  %v2266 = vpop.f32.mrf.mxu0
  %v2267 = vadd.f32 0.0, %v2266
  %2268 = vmatmul.bf16.gmra.mxu0 %v2210
  %v2269 = vpop.f32.mrf.mxu0
  %v2270 = vadd.f32 0.0, %v2269
  %v2271 = vpop.f32.mrf.mxu0
  %v2272 = vadd.f32 0.0, %v2271
  %2273 = vmatmul.bf16.gmra.mxu0 %v2213
  %v2274 = vpop.f32.mrf.mxu0
  %v2275 = vadd.f32 0.0, %v2274
  %v2276 = vpop.f32.mrf.mxu0
  %v2277 = vadd.f32 0.0, %v2276
  %2278 = vmatmul.bf16.gmra.mxu0 %v2216
  %v2279 = vpop.f32.mrf.mxu0
  %v2280 = vadd.f32 0.0, %v2279
  %v2281 = vpop.f32.mrf.mxu0
  %v2282 = vadd.f32 0.0, %v2281
  %2283 = vmatmul.bf16.gmra.mxu0 %v2219
  %v2284 = vpop.f32.mrf.mxu0
  %v2285 = vadd.f32 0.0, %v2284
  %v2286 = vpop.f32.mrf.mxu0
  %v2287 = vadd.f32 0.0, %v2286
  %2288 = vmatmul.bf16.gmra.mxu0 %v2222
  %v2289 = vpop.f32.mrf.mxu0
  %v2290 = vadd.f32 0.0, %v2289
  %v2291 = vpop.f32.mrf.mxu0
  %v2292 = vadd.f32 0.0, %v2291
  %2293 = vmatmul.bf16.gmra.mxu0 %v2225
  %v2294 = vpop.f32.mrf.mxu0
  %v2295 = vadd.f32 0.0, %v2294
  %v2296 = vpop.f32.mrf.mxu0
  %v2297 = vadd.f32 0.0, %v2296
  %2298 = vmatmul.bf16.gmra.mxu0 %v2228
  %v2299 = vpop.f32.mrf.mxu0
  %v2300 = vadd.f32 0.0, %v2299
  %v2301 = vpop.f32.mrf.mxu0
  %2302 = vdwg.mxu0
  %v2303 = vadd.f32 %v2111, %v2240
  %v2304 = vadd.f32 %v2112, %v2242
  %v2305 = vadd.f32 %v2113, %v2245
  %v2306 = vadd.f32 %v2114, %v2247
  %v2307 = vadd.f32 %v2115, %v2250
  %v2308 = vadd.f32 %v2116, %v2252
  %v2309 = vadd.f32 %v2117, %v2255
  %v2310 = vadd.f32 %v2118, %v2257
  %v2311 = vadd.f32 %v2119, %v2260
  %v2312 = vadd.f32 %v2120, %v2262
  %v2313 = vadd.f32 %v2121, %v2265
  %v2314 = vadd.f32 %v2122, %v2267
  %v2315 = vadd.f32 %v2123, %v2270
  %v2316 = vadd.f32 %v2124, %v2272
  %v2317 = vadd.f32 %v2125, %v2275
  %v2318 = vadd.f32 %v2126, %v2277
  %v2319 = vadd.f32 %v2127, %v2280
  %v2320 = vadd.f32 %v2128, %v2282
  %v2321 = vadd.f32 %v2129, %v2285
  %v2322 = vadd.f32 %v2130, %v2287
  %v2323 = vadd.f32 %v2131, %v2290
  %v2324 = vadd.f32 %v2132, %v2292
  %v2325 = vadd.f32 %v2133, %v2295
  %v2326 = vadd.f32 %v2134, %v2297
  %v2327 = vadd.f32 %v2135, %v2300
  %2328 = vst [vmem:[%s8] sm:$0xff] %v2303
  %2329 = vst [vmem:[%s8 + $0x8] sm:$0xff] %v2304
  %2330 = vst [vmem:[%s8 + $0x10] sm:$0xff] %v2305
  %2331 = vst [vmem:[%s8 + $0x18] sm:$0xff] %v2306
  %2332 = vst [vmem:[%s8 + $0x20] sm:$0xff] %v2307
  %2333 = vst [vmem:[%s8 + $0x28] sm:$0xff] %v2308
  %2334 = vst [vmem:[%s8 + $0x30] sm:$0xff] %v2309
  %2335 = vst [vmem:[%s8 + $0x38] sm:$0xff] %v2310
  %2336 = vst [vmem:[%s8 + $0x40] sm:$0xff] %v2311
  %2337 = vst [vmem:[%s8 + $0x48] sm:$0xff] %v2312
  %2338 = vst [vmem:[%s8 + $0x50] sm:$0xff] %v2313
  %2339 = vst [vmem:[%s8 + $0x58] sm:$0xff] %v2314
  %2340 = vst [vmem:[%s8 + $0x60] sm:$0xff] %v2315
  %2341 = vst [vmem:[%s8 + $0x68] sm:$0xff] %v2316
  %2342 = vst [vmem:[%s8 + $0x70] sm:$0xff] %v2317
  %2343 = vst [vmem:[%s8 + $0x78] sm:$0xff] %v2318
  %2344 = vst [vmem:[%s8 + $0x80] sm:$0xff] %v2319
  %2345 = vst [vmem:[%s8 + $0x88] sm:$0xff] %v2320
  %2346 = vst [vmem:[%s8 + $0x90] sm:$0xff] %v2321
  %2347 = vst [vmem:[%s8 + $0x98] sm:$0xff] %v2322
  %2348 = vst [vmem:[%s8 + $0xa0] sm:$0xff] %v2323
  %2349 = vst [vmem:[%s8 + $0xa8] sm:$0xff] %v2324
  %2350 = vst [vmem:[%s8 + $0xb0] sm:$0xff] %v2325
  %2351 = vst [vmem:[%s8 + $0xb8] sm:$0xff] %v2326
  %2352 = vst [vmem:[%s8 + $0xc0] sm:$0xff] %v2327
  // Predicated region
  $region34: #{rsna24_forward.8} parent=0 // pred_check
    _
  $region35: #{rsna24_forward.8} parent=0 // pred_check_branch
    %2354 = sbr.rel (0) target = $region37
  $region36: #{rsna24_forward.8} parent=0 // pred_region
    _
  $region37: #{rsna24_forward.8} parent=0 // pred_fallthru
    _
  // Predicated region
  $region38: #{rsna24_forward.8} parent=0 // pred_check
    _
  $region39: #{rsna24_forward.8} parent=0 // pred_check_branch
    %2356 = sbr.rel (0) target = $region41
  $region40: #{rsna24_forward.8} parent=0 // pred_region
    _
  $region41: #{rsna24_forward.8} parent=0 // pred_fallthru
    _

// kernel: rsna24_forward.13
$region0: #{rsna24_forward.13}
  #allocation0 [shape = 'u32[]', space=smem, size = 0x4, offset = 0x4, fixed_abs, tag = 'smem constant byte address 0x4 - core index']
  #allocation1 [shape = 'u32[72,128]{1,0:T(1,128)}', space=vmem, size = 0x9000, scoped, tag = 'internal scratch']
  #allocation2 [shape = 'f32[2,128]{1,0:T(2,128)}', space=vmem, size = 0x400, scoped, tag = 'scratch operand']
  %s0 = inlined_call_operand.vmem [shape: f32[2,16,128], index: 0, kind: input, shape index: {}]
  %s1 = inlined_call_operand.vmem [shape: f32[1,128], index: 1, kind: input, shape index: {}]
  %s2 = inlined_call_operand.vmem [shape: f32[1,128], index: 2, kind: input, shape index: {}]
  %s3 = inlined_call_operand.vmem [shape: bf16[128,128], index: 3, kind: input, shape index: {}]
  %s4 = inlined_call_operand.vmem [shape: f32[1,128], index: 4, kind: input, shape index: {}]
  %s5 = inlined_call_operand.hbm [shape: f32[2,128], index: 5, kind: output, shape index: {}]
  %s6 = sld [smem:[#allocation0]]
  $region38: #{rsna24_forward.13} parent=0
    _
  %s8 = ssub.s32 1, %s6
  %s9 = scalar_select 0, %s8, %s6
  $region1: #{rsna24_forward.13} parent=0
    #allocation3 [shape = 'u8[1024]{0}', space=vmem, size = 0x400, scoped, tag = 'output window, operand 0, single buffered']
    #allocation4 [shape = 's32[1]{0}', space=sflag, size = 0x4, scoped, tag = 'scoped memory for rsna24_forward.13']
    %10 = vsyncpa [#allocation4], 0
    // Predicated region
    $region2: #{rsna24_forward.13} parent=1 // pred_check
      _
    $region3: #{rsna24_forward.13} parent=1 // pred_check_branch
      %12 = sbr.rel (0) target = $region5
    $region4: #{rsna24_forward.13} parent=1 // pred_region
      _
    $region5: #{rsna24_forward.13} parent=1 // pred_fallthru
      _
    // Predicated region
    $region6: #{rsna24_forward.13} parent=1 // pred_check
      _
    $region7: #{rsna24_forward.13} parent=1 // pred_check_branch
      %14 = sbr.rel (0) target = $region9
    $region8: #{rsna24_forward.13} parent=1 // pred_region
      _
    $region9: #{rsna24_forward.13} parent=1 // pred_fallthru
      _
    // Predicated region
    $region10: #{rsna24_forward.13} parent=1 // pred_check
      _
    $region11: #{rsna24_forward.13} parent=1 // pred_check_branch
      %16 = sbr.rel (0) target = $region13
    $region12: #{rsna24_forward.13} parent=1 // pred_region
      _
    $region13: #{rsna24_forward.13} parent=1 // pred_fallthru
      _
    // Predicated region
    $region14: #{rsna24_forward.13} parent=1 // pred_check
      _
    $region15: #{rsna24_forward.13} parent=1 // pred_check_branch
      %18 = sbr.rel (0) target = $region17
    $region16: #{rsna24_forward.13} parent=1 // pred_region
      _
    $region17: #{rsna24_forward.13} parent=1 // pred_fallthru
      _
    // Predicated region
    $region18: #{rsna24_forward.13} parent=1 // pred_check
      _
    $region19: #{rsna24_forward.13} parent=1 // pred_check_branch
      %20 = sbr.rel (0) target = $region21
    $region20: #{rsna24_forward.13} parent=1 // pred_region
      _
    $region21: #{rsna24_forward.13} parent=1 // pred_fallthru
      _
    %p21 = scmp.eq.s32.totalorder 0, 0
    // Predicated region
    $region22: #{rsna24_forward.13} parent=1 // pred_check
      %p22 = pneg %p21
    $region23: #{rsna24_forward.13} parent=1 // pred_check_branch
      %24 = sbr.rel (%p22) target = $region25
    $region24: #{rsna24_forward.13} parent=1 // pred_region
      %25 = vst [vmem:[#allocation2] sm:$0x3] 0.0
    $region25: #{rsna24_forward.13} parent=1 // pred_fallthru
      _
    %v26 = vld [vmem:[%s0] sm:$0xff]
    %v27 = vld [vmem:[%s0 + $0x8] sm:$0xff]
    %v28 = vld [vmem:[%s0 + $0x10] sm:$0xff]
    %v29 = vld [vmem:[%s0 + $0x18] sm:$0xff]
    %v30 = vld [vmem:[%s1] sm:$0x1]
    %v32 = vperm.slane %v30, 0
    %v34 = vmul.f32 %v26, %v32
    %v35 = vmul.f32 %v27, %v32
    %v36 = vmul.f32 %v28, %v32
    %v37 = vmul.f32 %v29, %v32
    %v38 = vld [vmem:[%s2] sm:$0x1]
    %v40 = vperm.slane %v38, 0
    %v42 = vadd.f32 %v34, %v40
    %v43 = vadd.f32 %v35, %v40
    %v44 = vadd.f32 %v36, %v40
    %v45 = vadd.f32 %v37, %v40
    %v46 = vmax.f32 %v42, 0.0
    %v47 = vmax.f32 %v43, 0.0
    %v48 = vmax.f32 %v44, 0.0
    %v49 = vmax.f32 %v45, 0.0
    %v50 = vld [vmem:[#allocation2] sm:$0x3]
    %v51 = vadd.f32 %v46, %v47
    %v52 = vrot.slane %v51, 4
    %v53 = vadd.f32 %v51, %v52
    %v54 = vrot.slane %v53, 2
    %v55 = vadd.f32 %v53, %v54
    %v56 = vrot.slane %v55, 1
    %v57 = vadd.f32 %v55, %v56
    %v58 = vadd.f32 %v48, %v49
    %v59 = vrot.slane %v58, 4
    %v60 = vadd.f32 %v58, %v59
    %v61 = vrot.slane %v60, 2
    %v62 = vadd.f32 %v60, %v61
    %v63 = vrot.slane %v62, 1
    %v64 = vadd.f32 %v62, %v63
    %vm67 = vcmask 1041409
    %v68 = vsel %vm67, %v64, %v57
    %v70 = vadd.f32 %v50, %v68
    %71 = vst [vmem:[#allocation2] sm:$0x3] %v70
    // Predicated region
    $region26: #{rsna24_forward.13} parent=1 // pred_check
      %p72 = pneg %p21
    $region27: #{rsna24_forward.13} parent=1 // pred_check_branch
      %74 = sbr.rel (%p72) target = $region29
    $region28: #{rsna24_forward.13} parent=1 // pred_region
      %v75 = vld [vmem:[#allocation2] sm:$0x3]
      %v76 = vmul.f32 %v75, 0.0625
      %v77 = vpack.c.bf16 %v76, %v76
      %v78 = vld [vmem:[%s3] sm:$0xf]
      %v79 = vld [vmem:[%s3 + $0x4] sm:$0xf]
      %v80 = vld [vmem:[%s3 + $0x8] sm:$0xf]
      %v81 = vld [vmem:[%s3 + $0xc] sm:$0xf]
      %v82 = vld [vmem:[%s3 + $0x10] sm:$0xf]
      %v83 = vld [vmem:[%s3 + $0x14] sm:$0xf]
      %v84 = vld [vmem:[%s3 + $0x18] sm:$0xf]
      %v85 = vld [vmem:[%s3 + $0x1c] sm:$0xf]
      %v86 = vld [vmem:[%s3 + $0x20] sm:$0xf]
      %v87 = vld [vmem:[%s3 + $0x24] sm:$0xf]
      %v88 = vld [vmem:[%s3 + $0x28] sm:$0xf]
      %v89 = vld [vmem:[%s3 + $0x2c] sm:$0xf]
      %v90 = vld [vmem:[%s3 + $0x30] sm:$0xf]
      %v91 = vld [vmem:[%s3 + $0x34] sm:$0xf]
      %v92 = vld [vmem:[%s3 + $0x38] sm:$0xf]
      %v93 = vld [vmem:[%s3 + $0x3c] sm:$0xf]
      %v94 = vld [vmem:[%s4] sm:$0x1]
      %v96 = vperm.slane %v94, 0
      %v114 = vunpack.c.l.b16 %v78
      %v115 = vunpack.c.l.b16 %v79
      %v116 = vunpack.c.l.b16 %v80
      %v117 = vunpack.c.l.b16 %v81
      %v118 = vunpack.c.l.b16 %v82
      %v119 = vunpack.c.l.b16 %v83
      %v120 = vunpack.c.l.b16 %v84
      %v121 = vunpack.c.l.b16 %v85
      %v122 = vunpack.c.l.b16 %v86
      %v123 = vunpack.c.l.b16 %v87
      %v124 = vunpack.c.l.b16 %v88
      %v125 = vunpack.c.l.b16 %v89
      %v126 = vunpack.c.l.b16 %v90
      %v127 = vunpack.c.l.b16 %v91
      %v128 = vunpack.c.l.b16 %v92
      %v129 = vunpack.c.l.b16 %v93
      %v130 = vpack.c.b16 %v115, %v114
      %v131 = vpack.c.b16 %v117, %v116
      %v132 = vpack.c.b16 %v119, %v118
      %v133 = vpack.c.b16 %v121, %v120
      %v134 = vpack.c.b16 %v123, %v122
      %v135 = vpack.c.b16 %v125, %v124
      %v136 = vpack.c.b16 %v127, %v126
      %v137 = vpack.c.b16 %v129, %v128
      %146 = vmatpush.bf16.msra.mxu0 %v137
      %147 = vmatpush.bf16.msra.mxu0 %v136
      %148 = vmatpush.bf16.msra.mxu0 %v135
      %149 = vmatpush.bf16.msra.mxu0 %v134
      %150 = vmatpush.bf16.msra.mxu0 %v133
      %151 = vmatpush.bf16.msra.mxu0 %v132
      %152 = vmatpush.bf16.msra.mxu0 %v131
      %153 = vmatpush.bf16.msra.mxu0 %v130
      %154 = vmatmul.bf16.gmra.mxu0 %v77
      %v155 = vpop.f32.mrf.mxu0
      %v156 = vadd.f32 %v96, %v155
      %v157 = vpop.f32.mrf.mxu0
      %158 = vdwg.mxu0
      %159 = vst [vmem:[#allocation3] sm:$0x3] %v156
    $region29: #{rsna24_forward.13} parent=1 // pred_fallthru
      _
    // Predicated region
    $region30: #{rsna24_forward.13} parent=1 // pred_check
      _
    $region31: #{rsna24_forward.13} parent=1 // pred_check_branch
      %161 = sbr.rel (0) target = $region33
    $region32: #{rsna24_forward.13} parent=1 // pred_region
      %163 = vsyncadd [#allocation4], 0
      %s165 = sshll.u32 [#allocation3], 4
      %s166 = int_to_ptr.vmem [resolvable:$true] %s165
      %s167 = sshll.u32 %s5, 4
      %s168 = int_to_ptr.hbm [resolvable:$true] %s167
      %170 = dma.vmem_to_hbm [thread:$0]  %s166, 32, %s168, [#allocation4]
    $region33: #{rsna24_forward.13} parent=1 // pred_fallthru
      _
    // Predicated region
    $region34: #{rsna24_forward.13} parent=1 // pred_check
      _
    $region35: #{rsna24_forward.13} parent=1 // pred_check_branch
      %172 = sbr.rel (0) target = $region37
    $region36: #{rsna24_forward.13} parent=1 // pred_region
      %174 = dma.done [#allocation4], 32
    $region37: #{rsna24_forward.13} parent=1 // pred_fallthru
      _
    %175 = vsyncpa [#allocation4], 1

// kernel: rsna24_forward.11
$region0: #{rsna24_forward.11}
  #allocation0 [shape = 'u32[]', space=smem, size = 0x4, offset = 0x4, fixed_abs, tag = 'smem constant byte address 0x4 - core index']
  #allocation1 [shape = 'u32[72,128]{1,0:T(1,128)}', space=vmem, size = 0x9000, scoped, tag = 'internal scratch']
  #allocation2 [shape = 'f32[88,32]{1,0:T(8,128)}', space=vmem, size = 0xb000, scoped, tag = 'scratch operand']
  %s0 = inlined_call_operand.vmem [shape: f32[72,128], index: 0, kind: input, shape index: {}, may-alias: {0,8}]
  %s1 = inlined_call_operand.vmem [shape: f32[72,1], index: 1, kind: input, shape index: {}]
  %s2 = inlined_call_operand.vmem [shape: bf16[128,32], index: 2, kind: input, shape index: {}]
  %s3 = inlined_call_operand.vmem [shape: f32[1,128], index: 3, kind: input, shape index: {}]
  %s4 = inlined_call_operand.vmem [shape: f32[1,128], index: 4, kind: input, shape index: {}]
  %s5 = inlined_call_operand.vmem [shape: f32[1,32], index: 5, kind: input, shape index: {}]
  %s6 = inlined_call_operand.vmem [shape: f32[1,32], index: 6, kind: input, shape index: {}]
  %s7 = inlined_call_operand.vmem [shape: bf16[9,32,128], index: 7, kind: input, shape index: {}]
  %s8 = inlined_call_operand.vmem [shape: f32[72,128], index: 8, kind: output, shape index: {}, may-alias: {0,8}]
  %s9 = sld [smem:[#allocation0]]
  $region42: #{rsna24_forward.11} parent=0
    _
  %s11 = ssub.s32 1, %s9
  %s12 = scalar_select 0, %s11, %s9
  // Predicated region
  $region2: #{rsna24_forward.11} parent=0 // pred_check
    _
  $region3: #{rsna24_forward.11} parent=0 // pred_check_branch
    %14 = sbr.rel (0) target = $region5
  $region4: #{rsna24_forward.11} parent=0 // pred_region
    _
  $region5: #{rsna24_forward.11} parent=0 // pred_fallthru
    _
  // Predicated region
  $region6: #{rsna24_forward.11} parent=0 // pred_check
    _
  $region7: #{rsna24_forward.11} parent=0 // pred_check_branch
    %16 = sbr.rel (0) target = $region9
  $region8: #{rsna24_forward.11} parent=0 // pred_region
    _
  $region9: #{rsna24_forward.11} parent=0 // pred_fallthru
    _
  // Predicated region
  $region10: #{rsna24_forward.11} parent=0 // pred_check
    _
  $region11: #{rsna24_forward.11} parent=0 // pred_check_branch
    %18 = sbr.rel (0) target = $region13
  $region12: #{rsna24_forward.11} parent=0 // pred_region
    _
  $region13: #{rsna24_forward.11} parent=0 // pred_fallthru
    _
  // Predicated region
  $region14: #{rsna24_forward.11} parent=0 // pred_check
    _
  $region15: #{rsna24_forward.11} parent=0 // pred_check_branch
    %20 = sbr.rel (0) target = $region17
  $region16: #{rsna24_forward.11} parent=0 // pred_region
    _
  $region17: #{rsna24_forward.11} parent=0 // pred_fallthru
    _
  // Predicated region
  $region18: #{rsna24_forward.11} parent=0 // pred_check
    _
  $region19: #{rsna24_forward.11} parent=0 // pred_check_branch
    %22 = sbr.rel (0) target = $region21
  $region20: #{rsna24_forward.11} parent=0 // pred_region
    _
  $region21: #{rsna24_forward.11} parent=0 // pred_fallthru
    _
  // Predicated region
  $region22: #{rsna24_forward.11} parent=0 // pred_check
    _
  $region23: #{rsna24_forward.11} parent=0 // pred_check_branch
    %24 = sbr.rel (0) target = $region25
  $region24: #{rsna24_forward.11} parent=0 // pred_region
    _
  $region25: #{rsna24_forward.11} parent=0 // pred_fallthru
    _
  // Predicated region
  $region26: #{rsna24_forward.11} parent=0 // pred_check
    _
  $region27: #{rsna24_forward.11} parent=0 // pred_check_branch
    %26 = sbr.rel (0) target = $region29
  $region28: #{rsna24_forward.11} parent=0 // pred_region
    _
  $region29: #{rsna24_forward.11} parent=0 // pred_fallthru
    _
  // Predicated region
  $region30: #{rsna24_forward.11} parent=0 // pred_check
    _
  $region31: #{rsna24_forward.11} parent=0 // pred_check_branch
    %28 = sbr.rel (0) target = $region33
  $region32: #{rsna24_forward.11} parent=0 // pred_region
    _
  $region33: #{rsna24_forward.11} parent=0 // pred_fallthru
    _
  %v30 = vld [vmem:[%s0] sm:$0xff]
  %v31 = vld [vmem:[%s0 + $0x8] sm:$0xff]
  %v32 = vld [vmem:[%s0 + $0x10] sm:$0xff]
  %v33 = vld [vmem:[%s0 + $0x18] sm:$0xff]
  %v34 = vld [vmem:[%s0 + $0x20] sm:$0xff]
  %v35 = vld [vmem:[%s0 + $0x28] sm:$0xff]
  %v36 = vld [vmem:[%s0 + $0x30] sm:$0xff]
  %v37 = vld [vmem:[%s0 + $0x38] sm:$0xff]
  %v38 = vld [vmem:[%s0 + $0x40] sm:$0xff]
  %v39 = vld [vmem:[%s3] sm:$0x1]
  %v41 = vperm.slane %v39, 0
  %v43 = vmul.f32 %v30, %v41
  %v44 = vmul.f32 %v31, %v41
  %v45 = vmul.f32 %v32, %v41
  %v46 = vmul.f32 %v33, %v41
  %v47 = vmul.f32 %v34, %v41
  %v48 = vmul.f32 %v35, %v41
  %v49 = vmul.f32 %v36, %v41
  %v50 = vmul.f32 %v37, %v41
  %v51 = vmul.f32 %v38, %v41
  %v52 = vld [vmem:[%s4] sm:$0x1]
  %v54 = vperm.slane %v52, 0
  %v56 = vadd.f32 %v43, %v54
  %v57 = vadd.f32 %v44, %v54
  %v58 = vadd.f32 %v45, %v54
  %v59 = vadd.f32 %v46, %v54
  %v60 = vadd.f32 %v47, %v54
  %v61 = vadd.f32 %v48, %v54
  %v62 = vadd.f32 %v49, %v54
  %v63 = vadd.f32 %v50, %v54
  %v64 = vadd.f32 %v51, %v54
  %v65 = vmax.f32 %v56, 0.0
  %v66 = vmax.f32 %v57, 0.0
  %v67 = vmax.f32 %v58, 0.0
  %v68 = vmax.f32 %v59, 0.0
  %v69 = vmax.f32 %v60, 0.0
  %v70 = vmax.f32 %v61, 0.0
  %v71 = vmax.f32 %v62, 0.0
  %v72 = vmax.f32 %v63, 0.0
  %v73 = vmax.f32 %v64, 0.0
  %v74 = vpack.c.bf16 %v66, %v65
  %v75 = vpack.c.bf16 %v68, %v67
  %v76 = vpack.c.bf16 %v70, %v69
  %v77 = vpack.c.bf16 %v72, %v71
  %v78 = vpack.c.bf16 %v73, %v73
  %v79 = vld [vmem:[%s2] sm:$0xf]
  %v80 = vld [vmem:[%s2 + $0x4] sm:$0xf]
  %v81 = vld [vmem:[%s2 + $0x8] sm:$0xf]
  %v82 = vld [vmem:[%s2 + $0xc] sm:$0xf]
  %v83 = vld [vmem:[%s2 + $0x10] sm:$0xf]
  %v84 = vld [vmem:[%s2 + $0x14] sm:$0xf]
  %v85 = vld [vmem:[%s2 + $0x18] sm:$0xf]
  %v86 = vld [vmem:[%s2 + $0x1c] sm:$0xf]
  %v87 = vld [vmem:[%s2 + $0x20] sm:$0xf]
  %v88 = vld [vmem:[%s2 + $0x24] sm:$0xf]
  %v89 = vld [vmem:[%s2 + $0x28] sm:$0xf]
  %v90 = vld [vmem:[%s2 + $0x2c] sm:$0xf]
  %v91 = vld [vmem:[%s2 + $0x30] sm:$0xf]
  %v92 = vld [vmem:[%s2 + $0x34] sm:$0xf]
  %v93 = vld [vmem:[%s2 + $0x38] sm:$0xf]
  %v94 = vld [vmem:[%s2 + $0x3c] sm:$0xf]
  %v111 = vunpack.c.l.b16 %v79
  %v112 = vunpack.c.l.b16 %v80
  %v113 = vunpack.c.l.b16 %v81
  %v114 = vunpack.c.l.b16 %v82
  %v115 = vunpack.c.l.b16 %v83
  %v116 = vunpack.c.l.b16 %v84
  %v117 = vunpack.c.l.b16 %v85
  %v118 = vunpack.c.l.b16 %v86
  %v119 = vunpack.c.l.b16 %v87
  %v120 = vunpack.c.l.b16 %v88
  %v121 = vunpack.c.l.b16 %v89
  %v122 = vunpack.c.l.b16 %v90
  %v123 = vunpack.c.l.b16 %v91
  %v124 = vunpack.c.l.b16 %v92
  %v125 = vunpack.c.l.b16 %v93
  %v126 = vunpack.c.l.b16 %v94
  %v127 = vpack.c.b16 %v112, %v111
  %v128 = vpack.c.b16 %v114, %v113
  %v129 = vpack.c.b16 %v116, %v115
  %v130 = vpack.c.b16 %v118, %v117
  %v131 = vpack.c.b16 %v120, %v119
  %v132 = vpack.c.b16 %v122, %v121
  %v133 = vpack.c.b16 %v124, %v123
  %v134 = vpack.c.b16 %v126, %v125
  %143 = vmatpush.bf16.msra.mxu0 %v134
  %144 = vmatpush.bf16.msra.mxu0 %v133
  %145 = vmatpush.bf16.msra.mxu0 %v132
  %146 = vmatpush.bf16.msra.mxu0 %v131
  %147 = vmatpush.bf16.msra.mxu0 %v130
  %148 = vmatpush.bf16.msra.mxu0 %v129
  %149 = vmatpush.bf16.msra.mxu0 %v128
  %150 = vmatpush.bf16.msra.mxu0 %v127
  %151 = vmatmul.bf16.gmra.mxu0 %v74
  %v152 = vpop.f32.mrf.mxu0
  %v153 = vadd.f32 0.0, %v152
  %v154 = vpop.f32.mrf.mxu0
  %v155 = vadd.f32 0.0, %v154
  %156 = vmatmul.bf16.gmra.mxu0 %v75
  %v157 = vpop.f32.mrf.mxu0
  %v158 = vadd.f32 0.0, %v157
  %v159 = vpop.f32.mrf.mxu0
  %v160 = vadd.f32 0.0, %v159
  %161 = vmatmul.bf16.gmra.mxu0 %v76
  %v162 = vpop.f32.mrf.mxu0
  %v163 = vadd.f32 0.0, %v162
  %v164 = vpop.f32.mrf.mxu0
  %v165 = vadd.f32 0.0, %v164
  %166 = vmatmul.bf16.gmra.mxu0 %v77
  %v167 = vpop.f32.mrf.mxu0
  %v168 = vadd.f32 0.0, %v167
  %v169 = vpop.f32.mrf.mxu0
  %v170 = vadd.f32 0.0, %v169
  %171 = vmatmul.bf16.gmra.mxu0 %v78
  %v172 = vpop.f32.mrf.mxu0
  %v173 = vadd.f32 0.0, %v172
  %v174 = vpop.f32.mrf.mxu0
  %175 = vdwg.mxu0
  %v176 = vld [vmem:[%s5] sm:$0x1]
  %v178 = vperm.slane %v176, 0
  %v180 = vmul.f32 %v153, %v178
  %v181 = vmul.f32 %v155, %v178
  %v182 = vmul.f32 %v158, %v178
  %v183 = vmul.f32 %v160, %v178
  %v184 = vmul.f32 %v163, %v178
  %v185 = vmul.f32 %v165, %v178
  %v186 = vmul.f32 %v168, %v178
  %v187 = vmul.f32 %v170, %v178
  %v188 = vmul.f32 %v173, %v178
  %v189 = vld [vmem:[%s6] sm:$0x1]
  %v191 = vperm.slane %v189, 0
  %v193 = vadd.f32 %v180, %v191
  %v194 = vadd.f32 %v181, %v191
  %v195 = vadd.f32 %v182, %v191
  %v196 = vadd.f32 %v183, %v191
  %v197 = vadd.f32 %v184, %v191
  %v198 = vadd.f32 %v185, %v191
  %v199 = vadd.f32 %v186, %v191
  %v200 = vadd.f32 %v187, %v191
  %v201 = vadd.f32 %v188, %v191
  %v202 = vmax.f32 %v193, 0.0
  %v203 = vmax.f32 %v194, 0.0
  %v204 = vmax.f32 %v195, 0.0
  %v205 = vmax.f32 %v196, 0.0
  %v206 = vmax.f32 %v197, 0.0
  %v207 = vmax.f32 %v198, 0.0
  %v208 = vmax.f32 %v199, 0.0
  %v209 = vmax.f32 %v200, 0.0
  %v210 = vmax.f32 %v201, 0.0
  %v211 = vld [vmem:[%s1] sm:$0xff]
  %v212 = vld [vmem:[%s1 + $0x8] sm:$0xff]
  %v213 = vld [vmem:[%s1 + $0x10] sm:$0xff]
  %v214 = vld [vmem:[%s1 + $0x18] sm:$0xff]
  %v215 = vld [vmem:[%s1 + $0x20] sm:$0xff]
  %v216 = vld [vmem:[%s1 + $0x28] sm:$0xff]
  %v217 = vld [vmem:[%s1 + $0x30] sm:$0xff]
  %v218 = vld [vmem:[%s1 + $0x38] sm:$0xff]
  %v219 = vld [vmem:[%s1 + $0x40] sm:$0xff]
  %221 = vset.pattern.permute.xlu0 0
  %222 = vperm.xlu0 %221, %v211
  %v223 = vpop.permute.xlu0 %222
  %226 = vset.pattern.permute.xlu0 0
  %227 = vperm.xlu0 %226, %v212
  %v228 = vpop.permute.xlu0 %227
  %231 = vset.pattern.permute.xlu0 0
  %232 = vperm.xlu0 %231, %v213
  %v233 = vpop.permute.xlu0 %232
  %236 = vset.pattern.permute.xlu0 0
  %237 = vperm.xlu0 %236, %v214
  %v238 = vpop.permute.xlu0 %237
  %241 = vset.pattern.permute.xlu0 0
  %242 = vperm.xlu0 %241, %v215
  %v243 = vpop.permute.xlu0 %242
  %246 = vset.pattern.permute.xlu0 0
  %247 = vperm.xlu0 %246, %v216
  %v248 = vpop.permute.xlu0 %247
  %251 = vset.pattern.permute.xlu0 0
  %252 = vperm.xlu0 %251, %v217
  %v253 = vpop.permute.xlu0 %252
  %256 = vset.pattern.permute.xlu0 0
  %257 = vperm.xlu0 %256, %v218
  %v258 = vpop.permute.xlu0 %257
  %261 = vset.pattern.permute.xlu0 0
  %262 = vperm.xlu0 %261, %v219
  %v263 = vpop.permute.xlu0 %262
  %v265 = vmul.f32 %v202, %v223
  %v266 = vmul.f32 %v203, %v228
  %v267 = vmul.f32 %v204, %v233
  %v268 = vmul.f32 %v205, %v238
  %v269 = vmul.f32 %v206, %v243
  %v270 = vmul.f32 %v207, %v248
  %v271 = vmul.f32 %v208, %v253
  %v272 = vmul.f32 %v209, %v258
  %v273 = vmul.f32 %v210, %v263
  %vm274 = vcmask 261120
  %275 = vst.msk [vmem:[#allocation2] sm:$0xff] %vm274, 0.0
  %276 = vst.msk [vmem:[#allocation2 + $0x8] sm:$0xff] %vm274, 0.0
  %277 = vst.msk [vmem:[#allocation2 + $0x10] sm:$0xff] %vm274, 0.0
  %278 = vst.msk [vmem:[#allocation2 + $0x18] sm:$0xff] %vm274, 0.0
  %279 = vst.msk [vmem:[#allocation2 + $0x20] sm:$0xff] %vm274, 0.0
  %280 = vst.msk [vmem:[#allocation2 + $0x28] sm:$0xff] %vm274, 0.0
  %281 = vst.msk [vmem:[#allocation2 + $0x30] sm:$0xff] %vm274, 0.0
  %282 = vst.msk [vmem:[#allocation2 + $0x38] sm:$0xff] %vm274, 0.0
  %283 = vst.msk [vmem:[#allocation2 + $0x40] sm:$0xff] %vm274, 0.0
  %284 = vst.msk [vmem:[#allocation2 + $0x48] sm:$0xff] %vm274, 0.0
  %285 = vst.msk [vmem:[#allocation2 + $0x50] sm:$0xff] %vm274, 0.0
  %286 = vst.msk [vmem:[#allocation2 + $0x8] sm:$0xff] %vm274, %v265
  %287 = vst.msk [vmem:[#allocation2 + $0x10] sm:$0xff] %vm274, %v266
  %288 = vst.msk [vmem:[#allocation2 + $0x18] sm:$0xff] %vm274, %v267
  %289 = vst.msk [vmem:[#allocation2 + $0x20] sm:$0xff] %vm274, %v268
  %290 = vst.msk [vmem:[#allocation2 + $0x28] sm:$0xff] %vm274, %v269
  %291 = vst.msk [vmem:[#allocation2 + $0x30] sm:$0xff] %vm274, %v270
  %292 = vst.msk [vmem:[#allocation2 + $0x38] sm:$0xff] %vm274, %v271
  %293 = vst.msk [vmem:[#allocation2 + $0x40] sm:$0xff] %vm274, %v272
  %294 = vst.msk [vmem:[#allocation2 + $0x48] sm:$0xff] %vm274, %v273
  %v295 = vld [vmem:[#allocation2 + $0x1] sm:$0xff]
  %v296 = vld [vmem:[#allocation2 + $0x9] sm:$0xff]
  %v297 = vld [vmem:[#allocation2 + $0x11] sm:$0xff]
  %v298 = vld [vmem:[#allocation2 + $0x19] sm:$0xff]
  %v299 = vld [vmem:[#allocation2 + $0x21] sm:$0xff]
  %v300 = vld [vmem:[#allocation2 + $0x29] sm:$0xff]
  %v301 = vld [vmem:[#allocation2 + $0x31] sm:$0xff]
  %v302 = vld [vmem:[#allocation2 + $0x39] sm:$0xff]
  %v303 = vld [vmem:[#allocation2 + $0x41] sm:$0xff]
  %v304 = vpack.c.bf16 %v296, %v295
  %v305 = vpack.c.bf16 %v298, %v297
  %v306 = vpack.c.bf16 %v300, %v299
  %v307 = vpack.c.bf16 %v302, %v301
  %v308 = vpack.c.bf16 %v303, %v303
  %v309 = vld [vmem:[%s7] sm:$0xf]
  %v310 = vld [vmem:[%s7 + $0x4] sm:$0xf]
  %v311 = vld [vmem:[%s7 + $0x8] sm:$0xf]
  %v312 = vld [vmem:[%s7 + $0xc] sm:$0xf]
  %v317 = vunpack.c.l.b16 %v309
  %v318 = vunpack.c.l.b16 %v310
  %v319 = vunpack.c.l.b16 %v311
  %v320 = vunpack.c.l.b16 %v312
  %v321 = vpack.c.b16 %v318, %v317
  %v322 = vpack.c.b16 %v320, %v319
  %v326 = vsel %vm274, %v304, 0
  %v329 = vsel %vm274, %v305, 0
  %v332 = vsel %vm274, %v306, 0
  %v335 = vsel %vm274, %v307, 0
  %v338 = vsel %vm274, %v308, 0
  %340 = vmatpush.bf16.msra.mxu0 0
  %341 = vmatpush.bf16.msra.mxu0 0
  %342 = vmatpush.bf16.msra.mxu0 0
  %343 = vmatpush.bf16.msra.mxu0 0
  %344 = vmatpush.bf16.msra.mxu0 0
  %345 = vmatpush.bf16.msra.mxu0 0
  %346 = vmatpush.bf16.msra.mxu0 %v322
  %347 = vmatpush.bf16.msra.mxu0 %v321
  %348 = vmatmul.bf16.gmra.mxu0 %v326
  %v349 = vpop.f32.mrf.mxu0
  %v350 = vadd.f32 0.0, %v349
  %v351 = vpop.f32.mrf.mxu0
  %v352 = vadd.f32 0.0, %v351
  %353 = vmatmul.bf16.gmra.mxu0 %v329
  %v354 = vpop.f32.mrf.mxu0
  %v355 = vadd.f32 0.0, %v354
  %v356 = vpop.f32.mrf.mxu0
  %v357 = vadd.f32 0.0, %v356
  %358 = vmatmul.bf16.gmra.mxu0 %v332
  %v359 = vpop.f32.mrf.mxu0
  %v360 = vadd.f32 0.0, %v359
  %v361 = vpop.f32.mrf.mxu0
  %v362 = vadd.f32 0.0, %v361
  %363 = vmatmul.bf16.gmra.mxu0 %v335
  %v364 = vpop.f32.mrf.mxu0
  %v365 = vadd.f32 0.0, %v364
  %v366 = vpop.f32.mrf.mxu0
  %v367 = vadd.f32 0.0, %v366
  %368 = vmatmul.bf16.gmra.mxu0 %v338
  %v369 = vpop.f32.mrf.mxu0
  %v370 = vadd.f32 0.0, %v369
  %v371 = vpop.f32.mrf.mxu0
  %372 = vdwg.mxu0
  %v373 = vadd.f32 %v30, %v350
  %v374 = vadd.f32 %v31, %v352
  %v375 = vadd.f32 %v32, %v355
  %v376 = vadd.f32 %v33, %v357
  %v377 = vadd.f32 %v34, %v360
  %v378 = vadd.f32 %v35, %v362
  %v379 = vadd.f32 %v36, %v365
  %v380 = vadd.f32 %v37, %v367
  %v381 = vadd.f32 %v38, %v370
  %v382 = vld [vmem:[#allocation2 + $0x2] sm:$0xff]
  %v383 = vld [vmem:[#allocation2 + $0xa] sm:$0xff]
  %v384 = vld [vmem:[#allocation2 + $0x12] sm:$0xff]
  %v385 = vld [vmem:[#allocation2 + $0x1a] sm:$0xff]
  %v386 = vld [vmem:[#allocation2 + $0x22] sm:$0xff]
  %v387 = vld [vmem:[#allocation2 + $0x2a] sm:$0xff]
  %v388 = vld [vmem:[#allocation2 + $0x32] sm:$0xff]
  %v389 = vld [vmem:[#allocation2 + $0x3a] sm:$0xff]
  %v390 = vld [vmem:[#allocation2 + $0x42] sm:$0xff]
  %v391 = vpack.c.bf16 %v383, %v382
  %v392 = vpack.c.bf16 %v385, %v384
  %v393 = vpack.c.bf16 %v387, %v386
  %v394 = vpack.c.bf16 %v389, %v388
  %v395 = vpack.c.bf16 %v390, %v390
  %s396 = scalar_lea.vmem %s7, 16
  %v397 = vld [vmem:[%s396] sm:$0xf]
  %v398 = vld [vmem:[%s396 + $0x4] sm:$0xf]
  %v399 = vld [vmem:[%s396 + $0x8] sm:$0xf]
  %v400 = vld [vmem:[%s396 + $0xc] sm:$0xf]
  %v405 = vunpack.c.l.b16 %v397
  %v406 = vunpack.c.l.b16 %v398
  %v407 = vunpack.c.l.b16 %v399
  %v408 = vunpack.c.l.b16 %v400
  %v409 = vpack.c.b16 %v406, %v405
  %v410 = vpack.c.b16 %v408, %v407
  %v414 = vsel %vm274, %v391, 0
  %v417 = vsel %vm274, %v392, 0
  %v420 = vsel %vm274, %v393, 0
  %v423 = vsel %vm274, %v394, 0
  %v426 = vsel %vm274, %v395, 0
  %428 = vmatpush.bf16.msra.mxu0 0
  %429 = vmatpush.bf16.msra.mxu0 0
  %430 = vmatpush.bf16.msra.mxu0 0
  %431 = vmatpush.bf16.msra.mxu0 0
  %432 = vmatpush.bf16.msra.mxu0 0
  %433 = vmatpush.bf16.msra.mxu0 0
  %434 = vmatpush.bf16.msra.mxu0 %v410
  %435 = vmatpush.bf16.msra.mxu0 %v409
  %436 = vmatmul.bf16.gmra.mxu0 %v414
  %v437 = vpop.f32.mrf.mxu0
  %v438 = vadd.f32 0.0, %v437
  %v439 = vpop.f32.mrf.mxu0
  %v440 = vadd.f32 0.0, %v439
  %441 = vmatmul.bf16.gmra.mxu0 %v417
  %v442 = vpop.f32.mrf.mxu0
  %v443 = vadd.f32 0.0, %v442
  %v444 = vpop.f32.mrf.mxu0
  %v445 = vadd.f32 0.0, %v444
  %446 = vmatmul.bf16.gmra.mxu0 %v420
  %v447 = vpop.f32.mrf.mxu0
  %v448 = vadd.f32 0.0, %v447
  %v449 = vpop.f32.mrf.mxu0
  %v450 = vadd.f32 0.0, %v449
  %451 = vmatmul.bf16.gmra.mxu0 %v423
  %v452 = vpop.f32.mrf.mxu0
  %v453 = vadd.f32 0.0, %v452
  %v454 = vpop.f32.mrf.mxu0
  %v455 = vadd.f32 0.0, %v454
  %456 = vmatmul.bf16.gmra.mxu0 %v426
  %v457 = vpop.f32.mrf.mxu0
  %v458 = vadd.f32 0.0, %v457
  %v459 = vpop.f32.mrf.mxu0
  %460 = vdwg.mxu0
  %v461 = vadd.f32 %v373, %v438
  %v462 = vadd.f32 %v374, %v440
  %v463 = vadd.f32 %v375, %v443
  %v464 = vadd.f32 %v376, %v445
  %v465 = vadd.f32 %v377, %v448
  %v466 = vadd.f32 %v378, %v450
  %v467 = vadd.f32 %v379, %v453
  %v468 = vadd.f32 %v380, %v455
  %v469 = vadd.f32 %v381, %v458
  %v470 = vld [vmem:[#allocation2 + $0x3] sm:$0xff]
  %v471 = vld [vmem:[#allocation2 + $0xb] sm:$0xff]
  %v472 = vld [vmem:[#allocation2 + $0x13] sm:$0xff]
  %v473 = vld [vmem:[#allocation2 + $0x1b] sm:$0xff]
  %v474 = vld [vmem:[#allocation2 + $0x23] sm:$0xff]
  %v475 = vld [vmem:[#allocation2 + $0x2b] sm:$0xff]
  %v476 = vld [vmem:[#allocation2 + $0x33] sm:$0xff]
  %v477 = vld [vmem:[#allocation2 + $0x3b] sm:$0xff]
  %v478 = vld [vmem:[#allocation2 + $0x43] sm:$0xff]
  %v479 = vpack.c.bf16 %v471, %v470
  %v480 = vpack.c.bf16 %v473, %v472
  %v481 = vpack.c.bf16 %v475, %v474
  %v482 = vpack.c.bf16 %v477, %v476
  %v483 = vpack.c.bf16 %v478, %v478
  %s484 = scalar_lea.vmem %s7, 32
  %v485 = vld [vmem:[%s484] sm:$0xf]
  %v486 = vld [vmem:[%s484 + $0x4] sm:$0xf]
  %v487 = vld [vmem:[%s484 + $0x8] sm:$0xf]
  %v488 = vld [vmem:[%s484 + $0xc] sm:$0xf]
  %v493 = vunpack.c.l.b16 %v485
  %v494 = vunpack.c.l.b16 %v486
  %v495 = vunpack.c.l.b16 %v487
  %v496 = vunpack.c.l.b16 %v488
  %v497 = vpack.c.b16 %v494, %v493
  %v498 = vpack.c.b16 %v496, %v495
  %v502 = vsel %vm274, %v479, 0
  %v505 = vsel %vm274, %v480, 0
  %v508 = vsel %vm274, %v481, 0
  %v511 = vsel %vm274, %v482, 0
  %v514 = vsel %vm274, %v483, 0
  %516 = vmatpush.bf16.msra.mxu0 0
  %517 = vmatpush.bf16.msra.mxu0 0
  %518 = vmatpush.bf16.msra.mxu0 0
  %519 = vmatpush.bf16.msra.mxu0 0
  %520 = vmatpush.bf16.msra.mxu0 0
  %521 = vmatpush.bf16.msra.mxu0 0
  %522 = vmatpush.bf16.msra.mxu0 %v498
  %523 = vmatpush.bf16.msra.mxu0 %v497
  %524 = vmatmul.bf16.gmra.mxu0 %v502
  %v525 = vpop.f32.mrf.mxu0
  %v526 = vadd.f32 0.0, %v525
  %v527 = vpop.f32.mrf.mxu0
  %v528 = vadd.f32 0.0, %v527
  %529 = vmatmul.bf16.gmra.mxu0 %v505
  %v530 = vpop.f32.mrf.mxu0
  %v531 = vadd.f32 0.0, %v530
  %v532 = vpop.f32.mrf.mxu0
  %v533 = vadd.f32 0.0, %v532
  %534 = vmatmul.bf16.gmra.mxu0 %v508
  %v535 = vpop.f32.mrf.mxu0
  %v536 = vadd.f32 0.0, %v535
  %v537 = vpop.f32.mrf.mxu0
  %v538 = vadd.f32 0.0, %v537
  %539 = vmatmul.bf16.gmra.mxu0 %v511
  %v540 = vpop.f32.mrf.mxu0
  %v541 = vadd.f32 0.0, %v540
  %v542 = vpop.f32.mrf.mxu0
  %v543 = vadd.f32 0.0, %v542
  %544 = vmatmul.bf16.gmra.mxu0 %v514
  %v545 = vpop.f32.mrf.mxu0
  %v546 = vadd.f32 0.0, %v545
  %v547 = vpop.f32.mrf.mxu0
  %548 = vdwg.mxu0
  %v549 = vadd.f32 %v461, %v526
  %v550 = vadd.f32 %v462, %v528
  %v551 = vadd.f32 %v463, %v531
  %v552 = vadd.f32 %v464, %v533
  %v553 = vadd.f32 %v465, %v536
  %v554 = vadd.f32 %v466, %v538
  %v555 = vadd.f32 %v467, %v541
  %v556 = vadd.f32 %v468, %v543
  %v557 = vadd.f32 %v469, %v546
  %v558 = vld [vmem:[#allocation2 + $0x7] sm:$0xff]
  %v559 = vld [vmem:[#allocation2 + $0xf] sm:$0xff]
  %v560 = vld [vmem:[#allocation2 + $0x17] sm:$0xff]
  %v561 = vld [vmem:[#allocation2 + $0x1f] sm:$0xff]
  %v562 = vld [vmem:[#allocation2 + $0x27] sm:$0xff]
  %v563 = vld [vmem:[#allocation2 + $0x2f] sm:$0xff]
  %v564 = vld [vmem:[#allocation2 + $0x37] sm:$0xff]
  %v565 = vld [vmem:[#allocation2 + $0x3f] sm:$0xff]
  %v566 = vld [vmem:[#allocation2 + $0x47] sm:$0xff]
  %v567 = vpack.c.bf16 %v559, %v558
  %v568 = vpack.c.bf16 %v561, %v560
  %v569 = vpack.c.bf16 %v563, %v562
  %v570 = vpack.c.bf16 %v565, %v564
  %v571 = vpack.c.bf16 %v566, %v566
  %s572 = scalar_lea.vmem %s7, 48
  %v573 = vld [vmem:[%s572] sm:$0xf]
  %v574 = vld [vmem:[%s572 + $0x4] sm:$0xf]
  %v575 = vld [vmem:[%s572 + $0x8] sm:$0xf]
  %v576 = vld [vmem:[%s572 + $0xc] sm:$0xf]
  %v581 = vunpack.c.l.b16 %v573
  %v582 = vunpack.c.l.b16 %v574
  %v583 = vunpack.c.l.b16 %v575
  %v584 = vunpack.c.l.b16 %v576
  %v585 = vpack.c.b16 %v582, %v581
  %v586 = vpack.c.b16 %v584, %v583
  %v590 = vsel %vm274, %v567, 0
  %v593 = vsel %vm274, %v568, 0
  %v596 = vsel %vm274, %v569, 0
  %v599 = vsel %vm274, %v570, 0
  %v602 = vsel %vm274, %v571, 0
  %604 = vmatpush.bf16.msra.mxu0 0
  %605 = vmatpush.bf16.msra.mxu0 0
  %606 = vmatpush.bf16.msra.mxu0 0
  %607 = vmatpush.bf16.msra.mxu0 0
  %608 = vmatpush.bf16.msra.mxu0 0
  %609 = vmatpush.bf16.msra.mxu0 0
  %610 = vmatpush.bf16.msra.mxu0 %v586
  %611 = vmatpush.bf16.msra.mxu0 %v585
  %612 = vmatmul.bf16.gmra.mxu0 %v590
  %v613 = vpop.f32.mrf.mxu0
  %v614 = vadd.f32 0.0, %v613
  %v615 = vpop.f32.mrf.mxu0
  %v616 = vadd.f32 0.0, %v615
  %617 = vmatmul.bf16.gmra.mxu0 %v593
  %v618 = vpop.f32.mrf.mxu0
  %v619 = vadd.f32 0.0, %v618
  %v620 = vpop.f32.mrf.mxu0
  %v621 = vadd.f32 0.0, %v620
  %622 = vmatmul.bf16.gmra.mxu0 %v596
  %v623 = vpop.f32.mrf.mxu0
  %v624 = vadd.f32 0.0, %v623
  %v625 = vpop.f32.mrf.mxu0
  %v626 = vadd.f32 0.0, %v625
  %627 = vmatmul.bf16.gmra.mxu0 %v599
  %v628 = vpop.f32.mrf.mxu0
  %v629 = vadd.f32 0.0, %v628
  %v630 = vpop.f32.mrf.mxu0
  %v631 = vadd.f32 0.0, %v630
  %632 = vmatmul.bf16.gmra.mxu0 %v602
  %v633 = vpop.f32.mrf.mxu0
  %v634 = vadd.f32 0.0, %v633
  %v635 = vpop.f32.mrf.mxu0
  %636 = vdwg.mxu0
  %v637 = vadd.f32 %v549, %v614
  %v638 = vadd.f32 %v550, %v616
  %v639 = vadd.f32 %v551, %v619
  %v640 = vadd.f32 %v552, %v621
  %v641 = vadd.f32 %v553, %v624
  %v642 = vadd.f32 %v554, %v626
  %v643 = vadd.f32 %v555, %v629
  %v644 = vadd.f32 %v556, %v631
  %v645 = vadd.f32 %v557, %v634
  %v646 = vld [vmem:[#allocation2 + $0x8] sm:$0xff]
  %v647 = vld [vmem:[#allocation2 + $0x10] sm:$0xff]
  %v648 = vld [vmem:[#allocation2 + $0x18] sm:$0xff]
  %v649 = vld [vmem:[#allocation2 + $0x20] sm:$0xff]
  %v650 = vld [vmem:[#allocation2 + $0x28] sm:$0xff]
  %v651 = vld [vmem:[#allocation2 + $0x30] sm:$0xff]
  %v652 = vld [vmem:[#allocation2 + $0x38] sm:$0xff]
  %v653 = vld [vmem:[#allocation2 + $0x40] sm:$0xff]
  %v654 = vld [vmem:[#allocation2 + $0x48] sm:$0xff]
  %v655 = vpack.c.bf16 %v647, %v646
  %v656 = vpack.c.bf16 %v649, %v648
  %v657 = vpack.c.bf16 %v651, %v650
  %v658 = vpack.c.bf16 %v653, %v652
  %v659 = vpack.c.bf16 %v654, %v654
  %s660 = scalar_lea.vmem %s7, 64
  %v661 = vld [vmem:[%s660] sm:$0xf]
  %v662 = vld [vmem:[%s660 + $0x4] sm:$0xf]
  %v663 = vld [vmem:[%s660 + $0x8] sm:$0xf]
  %v664 = vld [vmem:[%s660 + $0xc] sm:$0xf]
  %v669 = vunpack.c.l.b16 %v661
  %v670 = vunpack.c.l.b16 %v662
  %v671 = vunpack.c.l.b16 %v663
  %v672 = vunpack.c.l.b16 %v664
  %v673 = vpack.c.b16 %v670, %v669
  %v674 = vpack.c.b16 %v672, %v671
  %v678 = vsel %vm274, %v655, 0
  %v681 = vsel %vm274, %v656, 0
  %v684 = vsel %vm274, %v657, 0
  %v687 = vsel %vm274, %v658, 0
  %v690 = vsel %vm274, %v659, 0
  %692 = vmatpush.bf16.msra.mxu0 0
  %693 = vmatpush.bf16.msra.mxu0 0
  %694 = vmatpush.bf16.msra.mxu0 0
  %695 = vmatpush.bf16.msra.mxu0 0
  %696 = vmatpush.bf16.msra.mxu0 0
  %697 = vmatpush.bf16.msra.mxu0 0
  %698 = vmatpush.bf16.msra.mxu0 %v674
  %699 = vmatpush.bf16.msra.mxu0 %v673
  %700 = vmatmul.bf16.gmra.mxu0 %v678
  %v701 = vpop.f32.mrf.mxu0
  %v702 = vadd.f32 0.0, %v701
  %v703 = vpop.f32.mrf.mxu0
  %v704 = vadd.f32 0.0, %v703
  %705 = vmatmul.bf16.gmra.mxu0 %v681
  %v706 = vpop.f32.mrf.mxu0
  %v707 = vadd.f32 0.0, %v706
  %v708 = vpop.f32.mrf.mxu0
  %v709 = vadd.f32 0.0, %v708
  %710 = vmatmul.bf16.gmra.mxu0 %v684
  %v711 = vpop.f32.mrf.mxu0
  %v712 = vadd.f32 0.0, %v711
  %v713 = vpop.f32.mrf.mxu0
  %v714 = vadd.f32 0.0, %v713
  %715 = vmatmul.bf16.gmra.mxu0 %v687
  %v716 = vpop.f32.mrf.mxu0
  %v717 = vadd.f32 0.0, %v716
  %v718 = vpop.f32.mrf.mxu0
  %v719 = vadd.f32 0.0, %v718
  %720 = vmatmul.bf16.gmra.mxu0 %v690
  %v721 = vpop.f32.mrf.mxu0
  %v722 = vadd.f32 0.0, %v721
  %v723 = vpop.f32.mrf.mxu0
  %724 = vdwg.mxu0
  %v725 = vadd.f32 %v637, %v702
  %v726 = vadd.f32 %v638, %v704
  %v727 = vadd.f32 %v639, %v707
  %v728 = vadd.f32 %v640, %v709
  %v729 = vadd.f32 %v641, %v712
  %v730 = vadd.f32 %v642, %v714
  %v731 = vadd.f32 %v643, %v717
  %v732 = vadd.f32 %v644, %v719
  %v733 = vadd.f32 %v645, %v722
  %v734 = vld [vmem:[#allocation2 + $0x9] sm:$0xff]
  %v735 = vld [vmem:[#allocation2 + $0x11] sm:$0xff]
  %v736 = vld [vmem:[#allocation2 + $0x19] sm:$0xff]
  %v737 = vld [vmem:[#allocation2 + $0x21] sm:$0xff]
  %v738 = vld [vmem:[#allocation2 + $0x29] sm:$0xff]
  %v739 = vld [vmem:[#allocation2 + $0x31] sm:$0xff]
  %v740 = vld [vmem:[#allocation2 + $0x39] sm:$0xff]
  %v741 = vld [vmem:[#allocation2 + $0x41] sm:$0xff]
  %v742 = vld [vmem:[#allocation2 + $0x49] sm:$0xff]
  %v743 = vpack.c.bf16 %v735, %v734
  %v744 = vpack.c.bf16 %v737, %v736
  %v745 = vpack.c.bf16 %v739, %v738
  %v746 = vpack.c.bf16 %v741, %v740
  %v747 = vpack.c.bf16 %v742, %v742
  %s748 = scalar_lea.vmem %s7, 80
  %v749 = vld [vmem:[%s748] sm:$0xf]
  %v750 = vld [vmem:[%s748 + $0x4] sm:$0xf]
  %v751 = vld [vmem:[%s748 + $0x8] sm:$0xf]
  %v752 = vld [vmem:[%s748 + $0xc] sm:$0xf]
  %v757 = vunpack.c.l.b16 %v749
  %v758 = vunpack.c.l.b16 %v750
  %v759 = vunpack.c.l.b16 %v751
  %v760 = vunpack.c.l.b16 %v752
  %v761 = vpack.c.b16 %v758, %v757
  %v762 = vpack.c.b16 %v760, %v759
  %v766 = vsel %vm274, %v743, 0
  %v769 = vsel %vm274, %v744, 0
  %v772 = vsel %vm274, %v745, 0
  %v775 = vsel %vm274, %v746, 0
  %v778 = vsel %vm274, %v747, 0
  %780 = vmatpush.bf16.msra.mxu0 0
  %781 = vmatpush.bf16.msra.mxu0 0
  %782 = vmatpush.bf16.msra.mxu0 0
  %783 = vmatpush.bf16.msra.mxu0 0
  %784 = vmatpush.bf16.msra.mxu0 0
  %785 = vmatpush.bf16.msra.mxu0 0
  %786 = vmatpush.bf16.msra.mxu0 %v762
  %787 = vmatpush.bf16.msra.mxu0 %v761
  %788 = vmatmul.bf16.gmra.mxu0 %v766
  %v789 = vpop.f32.mrf.mxu0
  %v790 = vadd.f32 0.0, %v789
  %v791 = vpop.f32.mrf.mxu0
  %v792 = vadd.f32 0.0, %v791
  %793 = vmatmul.bf16.gmra.mxu0 %v769
  %v794 = vpop.f32.mrf.mxu0
  %v795 = vadd.f32 0.0, %v794
  %v796 = vpop.f32.mrf.mxu0
  %v797 = vadd.f32 0.0, %v796
  %798 = vmatmul.bf16.gmra.mxu0 %v772
  %v799 = vpop.f32.mrf.mxu0
  %v800 = vadd.f32 0.0, %v799
  %v801 = vpop.f32.mrf.mxu0
  %v802 = vadd.f32 0.0, %v801
  %803 = vmatmul.bf16.gmra.mxu0 %v775
  %v804 = vpop.f32.mrf.mxu0
  %v805 = vadd.f32 0.0, %v804
  %v806 = vpop.f32.mrf.mxu0
  %v807 = vadd.f32 0.0, %v806
  %808 = vmatmul.bf16.gmra.mxu0 %v778
  %v809 = vpop.f32.mrf.mxu0
  %v810 = vadd.f32 0.0, %v809
  %v811 = vpop.f32.mrf.mxu0
  %812 = vdwg.mxu0
  %v813 = vadd.f32 %v725, %v790
  %v814 = vadd.f32 %v726, %v792
  %v815 = vadd.f32 %v727, %v795
  %v816 = vadd.f32 %v728, %v797
  %v817 = vadd.f32 %v729, %v800
  %v818 = vadd.f32 %v730, %v802
  %v819 = vadd.f32 %v731, %v805
  %v820 = vadd.f32 %v732, %v807
  %v821 = vadd.f32 %v733, %v810
  %v822 = vld [vmem:[#allocation2 + $0xd] sm:$0xff]
  %v823 = vld [vmem:[#allocation2 + $0x15] sm:$0xff]
  %v824 = vld [vmem:[#allocation2 + $0x1d] sm:$0xff]
  %v825 = vld [vmem:[#allocation2 + $0x25] sm:$0xff]
  %v826 = vld [vmem:[#allocation2 + $0x2d] sm:$0xff]
  %v827 = vld [vmem:[#allocation2 + $0x35] sm:$0xff]
  %v828 = vld [vmem:[#allocation2 + $0x3d] sm:$0xff]
  %v829 = vld [vmem:[#allocation2 + $0x45] sm:$0xff]
  %v830 = vld [vmem:[#allocation2 + $0x4d] sm:$0xff]
  %v831 = vpack.c.bf16 %v823, %v822
  %v832 = vpack.c.bf16 %v825, %v824
  %v833 = vpack.c.bf16 %v827, %v826
  %v834 = vpack.c.bf16 %v829, %v828
  %v835 = vpack.c.bf16 %v830, %v830
  %s836 = scalar_lea.vmem %s7, 96
  %v837 = vld [vmem:[%s836] sm:$0xf]
  %v838 = vld [vmem:[%s836 + $0x4] sm:$0xf]
  %v839 = vld [vmem:[%s836 + $0x8] sm:$0xf]
  %v840 = vld [vmem:[%s836 + $0xc] sm:$0xf]
  %v845 = vunpack.c.l.b16 %v837
  %v846 = vunpack.c.l.b16 %v838
  %v847 = vunpack.c.l.b16 %v839
  %v848 = vunpack.c.l.b16 %v840
  %v849 = vpack.c.b16 %v846, %v845
  %v850 = vpack.c.b16 %v848, %v847
  %v854 = vsel %vm274, %v831, 0
  %v857 = vsel %vm274, %v832, 0
  %v860 = vsel %vm274, %v833, 0
  %v863 = vsel %vm274, %v834, 0
  %v866 = vsel %vm274, %v835, 0
  %868 = vmatpush.bf16.msra.mxu0 0
  %869 = vmatpush.bf16.msra.mxu0 0
  %870 = vmatpush.bf16.msra.mxu0 0
  %871 = vmatpush.bf16.msra.mxu0 0
  %872 = vmatpush.bf16.msra.mxu0 0
  %873 = vmatpush.bf16.msra.mxu0 0
  %874 = vmatpush.bf16.msra.mxu0 %v850
  %875 = vmatpush.bf16.msra.mxu0 %v849
  %876 = vmatmul.bf16.gmra.mxu0 %v854
  %v877 = vpop.f32.mrf.mxu0
  %v878 = vadd.f32 0.0, %v877
  %v879 = vpop.f32.mrf.mxu0
  %v880 = vadd.f32 0.0, %v879
  %881 = vmatmul.bf16.gmra.mxu0 %v857
  %v882 = vpop.f32.mrf.mxu0
  %v883 = vadd.f32 0.0, %v882
  %v884 = vpop.f32.mrf.mxu0
  %v885 = vadd.f32 0.0, %v884
  %886 = vmatmul.bf16.gmra.mxu0 %v860
  %v887 = vpop.f32.mrf.mxu0
  %v888 = vadd.f32 0.0, %v887
  %v889 = vpop.f32.mrf.mxu0
  %v890 = vadd.f32 0.0, %v889
  %891 = vmatmul.bf16.gmra.mxu0 %v863
  %v892 = vpop.f32.mrf.mxu0
  %v893 = vadd.f32 0.0, %v892
  %v894 = vpop.f32.mrf.mxu0
  %v895 = vadd.f32 0.0, %v894
  %896 = vmatmul.bf16.gmra.mxu0 %v866
  %v897 = vpop.f32.mrf.mxu0
  %v898 = vadd.f32 0.0, %v897
  %v899 = vpop.f32.mrf.mxu0
  %900 = vdwg.mxu0
  %v901 = vadd.f32 %v813, %v878
  %v902 = vadd.f32 %v814, %v880
  %v903 = vadd.f32 %v815, %v883
  %v904 = vadd.f32 %v816, %v885
  %v905 = vadd.f32 %v817, %v888
  %v906 = vadd.f32 %v818, %v890
  %v907 = vadd.f32 %v819, %v893
  %v908 = vadd.f32 %v820, %v895
  %v909 = vadd.f32 %v821, %v898
  %v910 = vld [vmem:[#allocation2 + $0xe] sm:$0xff]
  %v911 = vld [vmem:[#allocation2 + $0x16] sm:$0xff]
  %v912 = vld [vmem:[#allocation2 + $0x1e] sm:$0xff]
  %v913 = vld [vmem:[#allocation2 + $0x26] sm:$0xff]
  %v914 = vld [vmem:[#allocation2 + $0x2e] sm:$0xff]
  %v915 = vld [vmem:[#allocation2 + $0x36] sm:$0xff]
  %v916 = vld [vmem:[#allocation2 + $0x3e] sm:$0xff]
  %v917 = vld [vmem:[#allocation2 + $0x46] sm:$0xff]
  %v918 = vld [vmem:[#allocation2 + $0x4e] sm:$0xff]
  %v919 = vpack.c.bf16 %v911, %v910
  %v920 = vpack.c.bf16 %v913, %v912
  %v921 = vpack.c.bf16 %v915, %v914
  %v922 = vpack.c.bf16 %v917, %v916
  %v923 = vpack.c.bf16 %v918, %v918
  %s924 = scalar_lea.vmem %s7, 112
  %v925 = vld [vmem:[%s924] sm:$0xf]
  %v926 = vld [vmem:[%s924 + $0x4] sm:$0xf]
  %v927 = vld [vmem:[%s924 + $0x8] sm:$0xf]
  %v928 = vld [vmem:[%s924 + $0xc] sm:$0xf]
  %v933 = vunpack.c.l.b16 %v925
  %v934 = vunpack.c.l.b16 %v926
  %v935 = vunpack.c.l.b16 %v927
  %v936 = vunpack.c.l.b16 %v928
  %v937 = vpack.c.b16 %v934, %v933
  %v938 = vpack.c.b16 %v936, %v935
  %v942 = vsel %vm274, %v919, 0
  %v945 = vsel %vm274, %v920, 0
  %v948 = vsel %vm274, %v921, 0
  %v951 = vsel %vm274, %v922, 0
  %v954 = vsel %vm274, %v923, 0
  %956 = vmatpush.bf16.msra.mxu0 0
  %957 = vmatpush.bf16.msra.mxu0 0
  %958 = vmatpush.bf16.msra.mxu0 0
  %959 = vmatpush.bf16.msra.mxu0 0
  %960 = vmatpush.bf16.msra.mxu0 0
  %961 = vmatpush.bf16.msra.mxu0 0
  %962 = vmatpush.bf16.msra.mxu0 %v938
  %963 = vmatpush.bf16.msra.mxu0 %v937
  %964 = vmatmul.bf16.gmra.mxu0 %v942
  %v965 = vpop.f32.mrf.mxu0
  %v966 = vadd.f32 0.0, %v965
  %v967 = vpop.f32.mrf.mxu0
  %v968 = vadd.f32 0.0, %v967
  %969 = vmatmul.bf16.gmra.mxu0 %v945
  %v970 = vpop.f32.mrf.mxu0
  %v971 = vadd.f32 0.0, %v970
  %v972 = vpop.f32.mrf.mxu0
  %v973 = vadd.f32 0.0, %v972
  %974 = vmatmul.bf16.gmra.mxu0 %v948
  %v975 = vpop.f32.mrf.mxu0
  %v976 = vadd.f32 0.0, %v975
  %v977 = vpop.f32.mrf.mxu0
  %v978 = vadd.f32 0.0, %v977
  %979 = vmatmul.bf16.gmra.mxu0 %v951
  %v980 = vpop.f32.mrf.mxu0
  %v981 = vadd.f32 0.0, %v980
  %v982 = vpop.f32.mrf.mxu0
  %v983 = vadd.f32 0.0, %v982
  %984 = vmatmul.bf16.gmra.mxu0 %v954
  %v985 = vpop.f32.mrf.mxu0
  %v986 = vadd.f32 0.0, %v985
  %v987 = vpop.f32.mrf.mxu0
  %988 = vdwg.mxu0
  %v989 = vadd.f32 %v901, %v966
  %v990 = vadd.f32 %v902, %v968
  %v991 = vadd.f32 %v903, %v971
  %v992 = vadd.f32 %v904, %v973
  %v993 = vadd.f32 %v905, %v976
  %v994 = vadd.f32 %v906, %v978
  %v995 = vadd.f32 %v907, %v981
  %v996 = vadd.f32 %v908, %v983
  %v997 = vadd.f32 %v909, %v986
  %v998 = vld [vmem:[#allocation2 + $0xf] sm:$0xff]
  %v999 = vld [vmem:[#allocation2 + $0x17] sm:$0xff]
  %v1000 = vld [vmem:[#allocation2 + $0x1f] sm:$0xff]
  %v1001 = vld [vmem:[#allocation2 + $0x27] sm:$0xff]
  %v1002 = vld [vmem:[#allocation2 + $0x2f] sm:$0xff]
  %v1003 = vld [vmem:[#allocation2 + $0x37] sm:$0xff]
  %v1004 = vld [vmem:[#allocation2 + $0x3f] sm:$0xff]
  %v1005 = vld [vmem:[#allocation2 + $0x47] sm:$0xff]
  %v1006 = vld [vmem:[#allocation2 + $0x4f] sm:$0xff]
  %v1007 = vpack.c.bf16 %v999, %v998
  %v1008 = vpack.c.bf16 %v1001, %v1000
  %v1009 = vpack.c.bf16 %v1003, %v1002
  %v1010 = vpack.c.bf16 %v1005, %v1004
  %v1011 = vpack.c.bf16 %v1006, %v1006
  %s1012 = scalar_lea.vmem %s7, 128
  %v1013 = vld [vmem:[%s1012] sm:$0xf]
  %v1014 = vld [vmem:[%s1012 + $0x4] sm:$0xf]
  %v1015 = vld [vmem:[%s1012 + $0x8] sm:$0xf]
  %v1016 = vld [vmem:[%s1012 + $0xc] sm:$0xf]
  %v1021 = vunpack.c.l.b16 %v1013
  %v1022 = vunpack.c.l.b16 %v1014
  %v1023 = vunpack.c.l.b16 %v1015
  %v1024 = vunpack.c.l.b16 %v1016
  %v1025 = vpack.c.b16 %v1022, %v1021
  %v1026 = vpack.c.b16 %v1024, %v1023
  %v1030 = vsel %vm274, %v1007, 0
  %v1033 = vsel %vm274, %v1008, 0
  %v1036 = vsel %vm274, %v1009, 0
  %v1039 = vsel %vm274, %v1010, 0
  %v1042 = vsel %vm274, %v1011, 0
  %1044 = vmatpush.bf16.msra.mxu0 0
  %1045 = vmatpush.bf16.msra.mxu0 0
  %1046 = vmatpush.bf16.msra.mxu0 0
  %1047 = vmatpush.bf16.msra.mxu0 0
  %1048 = vmatpush.bf16.msra.mxu0 0
  %1049 = vmatpush.bf16.msra.mxu0 0
  %1050 = vmatpush.bf16.msra.mxu0 %v1026
  %1051 = vmatpush.bf16.msra.mxu0 %v1025
  %1052 = vmatmul.bf16.gmra.mxu0 %v1030
  %v1053 = vpop.f32.mrf.mxu0
  %v1054 = vadd.f32 0.0, %v1053
  %v1055 = vpop.f32.mrf.mxu0
  %v1056 = vadd.f32 0.0, %v1055
  %1057 = vmatmul.bf16.gmra.mxu0 %v1033
  %v1058 = vpop.f32.mrf.mxu0
  %v1059 = vadd.f32 0.0, %v1058
  %v1060 = vpop.f32.mrf.mxu0
  %v1061 = vadd.f32 0.0, %v1060
  %1062 = vmatmul.bf16.gmra.mxu0 %v1036
  %v1063 = vpop.f32.mrf.mxu0
  %v1064 = vadd.f32 0.0, %v1063
  %v1065 = vpop.f32.mrf.mxu0
  %v1066 = vadd.f32 0.0, %v1065
  %1067 = vmatmul.bf16.gmra.mxu0 %v1039
  %v1068 = vpop.f32.mrf.mxu0
  %v1069 = vadd.f32 0.0, %v1068
  %v1070 = vpop.f32.mrf.mxu0
  %v1071 = vadd.f32 0.0, %v1070
  %1072 = vmatmul.bf16.gmra.mxu0 %v1042
  %v1073 = vpop.f32.mrf.mxu0
  %v1074 = vadd.f32 0.0, %v1073
  %v1075 = vpop.f32.mrf.mxu0
  %1076 = vdwg.mxu0
  %v1077 = vadd.f32 %v989, %v1054
  %v1078 = vadd.f32 %v990, %v1056
  %v1079 = vadd.f32 %v991, %v1059
  %v1080 = vadd.f32 %v992, %v1061
  %v1081 = vadd.f32 %v993, %v1064
  %v1082 = vadd.f32 %v994, %v1066
  %v1083 = vadd.f32 %v995, %v1069
  %v1084 = vadd.f32 %v996, %v1071
  %v1085 = vadd.f32 %v997, %v1074
  %1086 = vst [vmem:[%s8] sm:$0xff] %v1077
  %1087 = vst [vmem:[%s8 + $0x8] sm:$0xff] %v1078
  %1088 = vst [vmem:[%s8 + $0x10] sm:$0xff] %v1079
  %1089 = vst [vmem:[%s8 + $0x18] sm:$0xff] %v1080
  %1090 = vst [vmem:[%s8 + $0x20] sm:$0xff] %v1081
  %1091 = vst [vmem:[%s8 + $0x28] sm:$0xff] %v1082
  %1092 = vst [vmem:[%s8 + $0x30] sm:$0xff] %v1083
  %1093 = vst [vmem:[%s8 + $0x38] sm:$0xff] %v1084
  %1094 = vst [vmem:[%s8 + $0x40] sm:$0xff] %v1085
  // Predicated region
  $region34: #{rsna24_forward.11} parent=0 // pred_check
    _
  $region35: #{rsna24_forward.11} parent=0 // pred_check_branch
    %1096 = sbr.rel (0) target = $region37
  $region36: #{rsna24_forward.11} parent=0 // pred_region
    _
  $region37: #{rsna24_forward.11} parent=0 // pred_fallthru
    _
  // Predicated region
  $region38: #{rsna24_forward.11} parent=0 // pred_check
    _
  $region39: #{rsna24_forward.11} parent=0 // pred_check_branch
    %1098 = sbr.rel (0) target = $region41
  $region40: #{rsna24_forward.11} parent=0 // pred_region
    _
  $region41: #{rsna24_forward.11} parent=0 // pred_fallthru
    _

</llo_original>
